<compile_context>
chip_gen: v7x
topology: tpu7x:2x2x1
jax: 0.10.0
libtpu: 0.0.40
codegen_flags: <defaults>
</compile_context>

<pallas_src>
import jax
import jax.numpy as jnp
from jax.experimental import pallas as pl
from jax.experimental.pallas import tpu as pltpu

_NEG = -1e9  # mask value for padded softmax / log-softmax lanes


# ----------------------------------------------------------------------------
# Kernel: single grid step, whole decode loop inside.
# ----------------------------------------------------------------------------
def _make_kernel(T, HP, LP):
    f32 = jnp.float32

    def kernel(tok_ref,                                   # scalar-prefetch (SMEM), (T,)
               emb_ref, hid_ref, enc_ref,                 # resident inputs
               wepre_ref, bepre_ref,
               wh_ref, bh_ref,
               wca_ref,
               wih_ref, bih_ref,
               wout_ref, bout_ref,
               logp_ref, hfin_ref, attw_ref,              # outputs (resident blocks)
               eall_sc, epre_sc, hall_sc):                # VMEM scratch
        # ---- gather all T embedding rows (token ids live in SMEM) ----------
        for t in range(T):
            eall_sc[pl.ds(t, 1), :] = emb_ref[tok_ref[t]]          # (1, HP) row gather
        # TODO(synk): nn.Dropout(p) on `embedded` omitted — eval-mode identity.

        # ---- hoisted batched matmul: emb-side of attn + attn_combine -------
        #   epre[:, :LP]  = emb @ wae + b_attn   (padded lanes = -1e9)
        #   epre[:, LP:]  = emb @ wce + b_comb
        epre_sc[...] = (jnp.dot(eall_sc[...], wepre_ref[...],
                                preferred_element_type=f32) + bepre_ref[...])

        # ---- sequential GRU recurrence (fully unrolled, T static) ----------
        h = hid_ref[...]                                   # (1, HP)
        for t in range(T):
            pre = epre_sc[pl.ds(t, 1), :]                  # (1, LP+HP)
            # one fused h-matmul: attention h-part + all three GRU hh gates
            hs = jnp.dot(h, wh_ref[...], preferred_element_type=f32) + bh_ref[...]  # (1, LP+3HP)

            # attention: softmax(Linear(cat(emb, h)))
            logits = pre[:, :LP] + hs[:, :LP]              # (1, LP), padded lanes = -1e9
            m = jnp.max(logits, axis=-1, keepdims=True)
            e = jnp.exp(logits - m)
            u = jnp.dot(e, enc_ref[...], preferred_element_type=f32)  # MXU starts pre-recip
            s = jnp.sum(e, axis=-1, keepdims=True)
            r0 = pl.reciprocal(s, approx=True)             # EUP slot (free-ish)
            rinv = r0 * (2.0 - s * r0)                     # one Newton step -> ~f32 exact
            attw_ref[pl.ds(t, 1), :] = e * rinv            # off the critical path
            attn_applied = u * rinv                        # (1, EP)

            # attn_combine(cat(emb, attn_applied)) + ReLU
            x = jnp.maximum(
                pre[:, LP:] + jnp.dot(attn_applied, wca_ref[...],
                                      preferred_element_type=f32), 0.0)   # (1, HP)

            # GRU gates; gh comes from the fused h-matmul (n-gate kept separate)
            gx = jnp.dot(x, wih_ref[...], preferred_element_type=f32) + bih_ref[...]  # (1, 3HP)
            gh = hs[:, LP:]                                # (1, 3HP)
            r = jax.nn.sigmoid(gx[:, 0:HP] + gh[:, 0:HP])
            z = jax.nn.sigmoid(gx[:, HP:2 * HP] + gh[:, HP:2 * HP])
            n = jnp.tanh(gx[:, 2 * HP:3 * HP] + r * gh[:, 2 * HP:3 * HP])
            h = (1.0 - z) * n + z * h
            hall_sc[pl.ds(t, 1), :] = h
        hfin_ref[...] = h                                  # written once, after last step

        # ---- deferred output projection + batched log-softmax --------------
        lo = (jnp.dot(hall_sc[...], wout_ref[...], preferred_element_type=f32)
              + bout_ref[...])                             # (T, VP), padded lanes = -1e9
        mo = jnp.max(lo, axis=-1, keepdims=True)
        lse = jnp.log(jnp.sum(jnp.exp(lo - mo), axis=-1, keepdims=True)) + mo
        logp_ref[...] = lo - lse

    return kernel


# ----------------------------------------------------------------------------
# Wrapper: pad/pack weights (host-side glue), build specs, run one pallas_call.
# ----------------------------------------------------------------------------
def _rup(n, m=128):
    return ((n + m - 1) // m) * m


def _pad2(a, rows, cols, fill=0.0):
    p = jnp.full((rows, cols), fill, dtype=jnp.float32)
    return p.at[: a.shape[0], : a.shape[1]].set(a.astype(jnp.float32))


def _pack_gate_w(w, H, HP):
    """PyTorch GRU weight (3H, H), rows packed [r; z; n] -> (HP, 3*HP) with each
    gate's output occupying its own 128-lane tile."""
    wt = w.T                                              # (H, 3H) gates along cols
    out = jnp.zeros((HP, 3 * HP), jnp.float32)
    for g in range(3):
        out = out.at[:H, g * HP: g * HP + H].set(
            wt[:, g * H: (g + 1) * H].astype(jnp.float32))
    return out


def _pack_gate_b(b, H, HP):
    out = jnp.zeros((1, 3 * HP), jnp.float32)
    for g in range(3):
        out = out.at[0, g * HP: g * HP + H].set(b[g * H: (g + 1) * H].astype(jnp.float32))
    return out


def attn_decoder_decode(tokens, hidden, encoder_outputs, params):
    """Run T decode steps (teacher-forced token sequence) in ONE pallas_call /
    ONE grid step.  Returns (log_probs (T, V), final_hidden (1, 1, H),
    attn_weights (T, L)); each step is exactly AttnDecoderRNN.forward."""
    tokens = jnp.asarray(tokens, jnp.int32).reshape(-1)
    T = int(tokens.shape[0])
    V, H = params["embedding"].shape
    L = params["w_attn"].shape[0]
    E = encoder_outputs.shape[1]                          # 2H (bidirectional encoder)
    HP, LP, EP, VP = _rup(H), _rup(L), _rup(E), _rup(V)

    # --- pad / split / pre-transpose / fuse weights (done once, host side) ---
    emb_tbl = _pad2(params["embedding"], V, HP).reshape(V, 1, HP)   # leading-axis gather
    hid0 = _pad2(hidden.reshape(1, H), 1, HP)
    enc = _pad2(encoder_outputs, LP, EP)

    w_attn_t = params["w_attn"].T                         # (2H, L)
    wae = _pad2(w_attn_t[:H], HP, LP)
    wah = _pad2(w_attn_t[H:], HP, LP)
    ba = _pad2(params["b_attn"].reshape(1, L), 1, LP, fill=_NEG)

    w_comb_t = params["w_comb"].T                         # (3H, H)
    wce = _pad2(w_comb_t[:H], HP, HP)
    wca = _pad2(w_comb_t[H:], EP, HP)
    bc = _pad2(params["b_comb"].reshape(1, H), 1, HP)

    # fused emb-side slab: [wae | wce] -> (HP, LP+HP), biases folded in
    wepre = jnp.concatenate([wae, wce], axis=1)
    bepre = jnp.concatenate([ba, bc], axis=1)

    # fused h-side slab: [wah | Whh_r | Whh_z | Whh_n] -> (HP, LP+3HP)
    whh = _pack_gate_w(params["w_hh"], H, HP)
    bhh = _pack_gate_b(params["b_hh"], H, HP)
    wh = jnp.concatenate([wah, whh], axis=1)
    bh = jnp.concatenate([jnp.zeros((1, LP), jnp.float32), bhh], axis=1)

    wih = _pack_gate_w(params["w_ih"], H, HP)
    bih = _pack_gate_b(params["b_ih"], H, HP)

    wout = _pad2(params["w_out"].T, HP, VP)
    bout = _pad2(params["b_out"].reshape(1, V), 1, VP, fill=_NEG)

    # --- BlockSpecs: everything resident (constant index), grid=(1,) ---------
    def _const(a):
        return pl.BlockSpec(a.shape, lambda i, tok, nd=a.ndim: (0,) * nd)

    inputs = (emb_tbl, hid0, enc, wepre, bepre, wh, bh, wca, wih, bih, wout, bout)
    in_specs = [_const(a) for a in inputs]

    out_shape = (
        jax.ShapeDtypeStruct((T, VP), jnp.float32),       # per-step log-probs (padded)
        jax.ShapeDtypeStruct((1, HP), jnp.float32),       # final hidden (padded)
        jax.ShapeDtypeStruct((T, LP), jnp.float32),       # per-step attn weights (padded)
    )
    out_specs = (
        pl.BlockSpec((T, VP), lambda i, tok: (0, 0)),
        pl.BlockSpec((1, HP), lambda i, tok: (0, 0)),
        pl.BlockSpec((T, LP), lambda i, tok: (0, 0)),
    )

    grid_spec = pltpu.PrefetchScalarGridSpec(
        num_scalar_prefetch=1,
        grid=(1,),
        in_specs=in_specs,
        out_specs=out_specs,
        scratch_shapes=[
            pltpu.VMEM((T, HP), jnp.float32),             # gathered embedding rows
            pltpu.VMEM((T, LP + HP), jnp.float32),        # hoisted emb-side pre-activations
            pltpu.VMEM((T, HP), jnp.float32),             # per-step hidden states
        ],
    )

    logp_p, hfin_p, attw_p = pl.pallas_call(
        _make_kernel(T, HP, LP),
        out_shape=out_shape,
        grid_spec=grid_spec,
        compiler_params=pltpu.CompilerParams(
            dimension_semantics=("arbitrary",)),          # single sequential grid step
    )(tokens, *inputs)

    return (logp_p[:, :V],
            hfin_p[:, :H].reshape(1, 1, H),
            attw_p[:, :L])


def attn_decoder_forward(token, hidden, encoder_outputs, params):
    """Exact AttnDecoderRNN.forward(input, hidden, encoder_outputs) (one step)."""
    logp, h_new, attw = attn_decoder_decode(
        jnp.asarray(token, jnp.int32).reshape(1), hidden, encoder_outputs, params)
    return logp, h_new, attw


# ----------------------------------------------------------------------------
# Pure-JAX reference (high-precision matmuls) for correctness checking.
# ----------------------------------------------------------------------------
def reference_decode(tokens, hidden, encoder_outputs, params):
    hp = lambda a, b: jnp.dot(a, b, precision=jax.lax.Precision.HIGHEST)
    h = hidden.reshape(1, -1)
    H = h.shape[-1]
    logps, attws = [], []
    for tok in tokens:
        emb = params["embedding"][tok].reshape(1, -1)
        aw = jax.nn.softmax(hp(jnp.concatenate([emb, h], 1), params["w_attn"].T)
                            + params["b_attn"], axis=1)
        applied = hp(aw, encoder_outputs)
        x = jax.nn.relu(hp(jnp.concatenate([emb, applied], 1), params["w_comb"].T)
                        + params["b_comb"])
        gx = hp(x, params["w_ih"].T) + params["b_ih"]
        gh = hp(h, params["w_hh"].T) + params["b_hh"]
        r = jax.nn.sigmoid(gx[:, :H] + gh[:, :H])
        z = jax.nn.sigmoid(gx[:, H:2 * H] + gh[:, H:2 * H])
        n = jnp.tanh(gx[:, 2 * H:] + r * gh[:, 2 * H:])
        h = (1.0 - z) * n + z * h
        logps.append(jax.nn.log_softmax(hp(h, params["w_out"].T) + params["b_out"], axis=1))
        attws.append(aw)
    return jnp.concatenate(logps, 0), h.reshape(1, 1, H), jnp.concatenate(attws, 0)


if __name__ == "__main__":
    H = 32          # hidden_size
    L = 8           # max_length
    V = 50          # lang.n_words (output_size / vocab)
    T = 8           # decode steps fused into one kernel call

    key = jax.random.PRNGKey(0)
    ks = jax.random.split(key, 12)
    s = 0.1
    params = {
        "embedding": s * jax.random.normal(ks[0], (V, H), jnp.float32),
        "w_attn":    s * jax.random.normal(ks[1], (L, 2 * H), jnp.float32),
        "b_attn":    s * jax.random.normal(ks[2], (L,), jnp.float32),
        "w_comb":    s * jax.random.normal(ks[3], (H, 3 * H), jnp.float32),
        "b_comb":    s * jax.random.normal(ks[4], (H,), jnp.float32),
        "w_ih":      s * jax.random.normal(ks[5], (3 * H, H), jnp.float32),
        "b_ih":      s * jax.random.normal(ks[6], (3 * H,), jnp.float32),
        "w_hh":      s * jax.random.normal(ks[7], (3 * H, H), jnp.float32),
        "b_hh":      s * jax.random.normal(ks[8], (3 * H,), jnp.float32),
        "w_out":     s * jax.random.normal(ks[9], (V, H), jnp.float32),
        "b_out":     s * jax.random.normal(ks[10], (V,), jnp.float32),
    }

    tokens = [7, 3, 11, 0, 42, 19, 5, 23]                        # teacher-forced ids < V
    hidden0 = jnp.zeros((1, 1, H), jnp.float32)                  # initHidden()
    encoder_outputs = s * jax.random.normal(ks[11], (L, 2 * H), jnp.float32)  # bidirectional

    # fused T-step decode: one kernel launch, one grid step, weights resident
    logp, h_fin, attw = attn_decoder_decode(jnp.array(tokens, jnp.int32),
                                            hidden0, encoder_outputs, params)
    jax.block_until_ready((logp, h_fin, attw))

    r_logp, r_h, r_attw = reference_decode(tokens, hidden0, encoder_outputs, params)

    assert logp.shape == (T, V) and h_fin.shape == (1, 1, H) and attw.shape == (T, L)
    tol = 2e-3   # all-f32 path
    assert float(jnp.max(jnp.abs(logp - r_logp))) < tol
    assert float(jnp.max(jnp.abs(h_fin - r_h))) < tol
    assert float(jnp.max(jnp.abs(attw - r_attw))) < tol

    # single-step API parity with the PyTorch module's forward()
    lp1, h1, aw1 = attn_decoder_forward(tokens[0], hidden0, encoder_outputs, params)
    jax.block_until_ready((lp1, h1, aw1))
    assert lp1.shape == (1, V) and h1.shape == (1, 1, H) and aw1.shape == (1, L)
    assert float(jnp.max(jnp.abs(lp1 - r_logp[0:1]))) < tol
    assert float(jnp.max(jnp.abs(aw1 - r_attw[0:1]))) < tol

    print("KERNEL_OK")
</pallas_src>

<mosaic_0001>
module attributes {stable_mosaic.version = 11 : i64} {
  func.func @kernel(%arg0: i32, %arg1: memref<8xi32, #tpu.memory_space<smem>>, %arg2: memref<50x1x128xf32, #tpu.memory_space<vmem>>, %arg3: memref<1x128xf32, #tpu.memory_space<vmem>>, %arg4: memref<128x128xf32, #tpu.memory_space<vmem>>, %arg5: memref<128x256xf32, #tpu.memory_space<vmem>>, %arg6: memref<1x256xf32, #tpu.memory_space<vmem>>, %arg7: memref<128x512xf32, #tpu.memory_space<vmem>>, %arg8: memref<1x512xf32, #tpu.memory_space<vmem>>, %arg9: memref<128x128xf32, #tpu.memory_space<vmem>>, %arg10: memref<128x384xf32, #tpu.memory_space<vmem>>, %arg11: memref<1x384xf32, #tpu.memory_space<vmem>>, %arg12: memref<128x128xf32, #tpu.memory_space<vmem>>, %arg13: memref<1x128xf32, #tpu.memory_space<vmem>>, %arg14: memref<8x128xf32, #tpu.memory_space<vmem>>, %arg15: memref<1x128xf32, #tpu.memory_space<vmem>>, %arg16: memref<8x128xf32, #tpu.memory_space<vmem>>, %arg17: memref<8x128xf32, #tpu.memory_space<vmem>>, %arg18: memref<8x256xf32, #tpu.memory_space<vmem>>, %arg19: memref<8x128xf32, #tpu.memory_space<vmem>>) attributes {dimension_semantics = [#tpu.dimension_semantics<arbitrary>], iteration_bounds = array<i64: 1>, scalar_prefetch = 1 : i64, scratch_operands = 3 : i64, tpu.core_type = #tpu.core_type<tc>, window_params = [{pipeline_mode = #tpu.pipeline_mode<synchronous>, transform_indices = @transform_0, window_bounds = array<i64: 50, 1, 128>}, {pipeline_mode = #tpu.pipeline_mode<synchronous>, transform_indices = @transform_1, window_bounds = array<i64: 1, 128>}, {pipeline_mode = #tpu.pipeline_mode<synchronous>, transform_indices = @transform_2, window_bounds = array<i64: 128, 128>}, {pipeline_mode = #tpu.pipeline_mode<synchronous>, transform_indices = @transform_3, window_bounds = array<i64: 128, 256>}, {pipeline_mode = #tpu.pipeline_mode<synchronous>, transform_indices = @transform_4, window_bounds = array<i64: 1, 256>}, {pipeline_mode = #tpu.pipeline_mode<synchronous>, transform_indices = @transform_5, window_bounds = array<i64: 128, 512>}, {pipeline_mode = #tpu.pipeline_mode<synchronous>, transform_indices = @transform_6, window_bounds = array<i64: 1, 512>}, {pipeline_mode = #tpu.pipeline_mode<synchronous>, transform_indices = @transform_7, window_bounds = array<i64: 128, 128>}, {pipeline_mode = #tpu.pipeline_mode<synchronous>, transform_indices = @transform_8, window_bounds = array<i64: 128, 384>}, {pipeline_mode = #tpu.pipeline_mode<synchronous>, transform_indices = @transform_9, window_bounds = array<i64: 1, 384>}, {pipeline_mode = #tpu.pipeline_mode<synchronous>, transform_indices = @transform_10, window_bounds = array<i64: 128, 128>}, {pipeline_mode = #tpu.pipeline_mode<synchronous>, transform_indices = @transform_11, window_bounds = array<i64: 1, 128>}, {pipeline_mode = #tpu.pipeline_mode<synchronous>, transform_indices = @transform_12, window_bounds = array<i64: 8, 128>}, {pipeline_mode = #tpu.pipeline_mode<synchronous>, transform_indices = @transform_13, window_bounds = array<i64: 1, 128>}, {pipeline_mode = #tpu.pipeline_mode<synchronous>, transform_indices = @transform_14, window_bounds = array<i64: 8, 128>}]} {
    %c0 = arith.constant 0 : index
    %0 = memref.load %arg1[%c0] : memref<8xi32, #tpu.memory_space<smem>>
    %1 = arith.index_cast %0 : i32 to index
    %c0_0 = arith.constant 0 : index
    %c0_1 = arith.constant 0 : index
    %2 = vector.load %arg2[%1, %c0_0, %c0_1] : memref<50x1x128xf32, #tpu.memory_space<vmem>>, vector<1x1x128xf32>
    %3 = vector.shape_cast %2 : vector<1x1x128xf32> to vector<1x128xf32>
    %c0_2 = arith.constant 0 : index
    %c0_3 = arith.constant 0 : index
    %4 = vector.load %arg17[%c0_2, %c0_3] : memref<8x128xf32, #tpu.memory_space<vmem>>, vector<1x128xf32>
    tpu.vector_store %arg17[%c0_2, %c0_3], %3 {strides = array<i32>} : memref<8x128xf32, #tpu.memory_space<vmem>>, vector<1x128xf32>,
    %c1 = arith.constant 1 : index
    %5 = memref.load %arg1[%c1] : memref<8xi32, #tpu.memory_space<smem>>
    %6 = arith.index_cast %5 : i32 to index
    %c0_4 = arith.constant 0 : index
    %c0_5 = arith.constant 0 : index
    %7 = vector.load %arg2[%6, %c0_4, %c0_5] : memref<50x1x128xf32, #tpu.memory_space<vmem>>, vector<1x1x128xf32>
    %8 = vector.shape_cast %7 : vector<1x1x128xf32> to vector<1x128xf32>
    %c1_6 = arith.constant 1 : index
    %c0_7 = arith.constant 0 : index
    %9 = vector.load %arg17[%c1_6, %c0_7] : memref<8x128xf32, #tpu.memory_space<vmem>>, vector<1x128xf32>
    tpu.vector_store %arg17[%c1_6, %c0_7], %8 {strides = array<i32>} : memref<8x128xf32, #tpu.memory_space<vmem>>, vector<1x128xf32>,
    %c2 = arith.constant 2 : index
    %10 = memref.load %arg1[%c2] : memref<8xi32, #tpu.memory_space<smem>>
    %11 = arith.index_cast %10 : i32 to index
    %c0_8 = arith.constant 0 : index
    %c0_9 = arith.constant 0 : index
    %12 = vector.load %arg2[%11, %c0_8, %c0_9] : memref<50x1x128xf32, #tpu.memory_space<vmem>>, vector<1x1x128xf32>
    %13 = vector.shape_cast %12 : vector<1x1x128xf32> to vector<1x128xf32>
    %c2_10 = arith.constant 2 : index
    %c0_11 = arith.constant 0 : index
    %14 = vector.load %arg17[%c2_10, %c0_11] : memref<8x128xf32, #tpu.memory_space<vmem>>, vector<1x128xf32>
    tpu.vector_store %arg17[%c2_10, %c0_11], %13 {strides = array<i32>} : memref<8x128xf32, #tpu.memory_space<vmem>>, vector<1x128xf32>,
    %c3 = arith.constant 3 : index
    %15 = memref.load %arg1[%c3] : memref<8xi32, #tpu.memory_space<smem>>
    %16 = arith.index_cast %15 : i32 to index
    %c0_12 = arith.constant 0 : index
    %c0_13 = arith.constant 0 : index
    %17 = vector.load %arg2[%16, %c0_12, %c0_13] : memref<50x1x128xf32, #tpu.memory_space<vmem>>, vector<1x1x128xf32>
    %18 = vector.shape_cast %17 : vector<1x1x128xf32> to vector<1x128xf32>
    %c3_14 = arith.constant 3 : index
    %c0_15 = arith.constant 0 : index
    %19 = vector.load %arg17[%c3_14, %c0_15] : memref<8x128xf32, #tpu.memory_space<vmem>>, vector<1x128xf32>
    tpu.vector_store %arg17[%c3_14, %c0_15], %18 {strides = array<i32>} : memref<8x128xf32, #tpu.memory_space<vmem>>, vector<1x128xf32>,
    %c4 = arith.constant 4 : index
    %20 = memref.load %arg1[%c4] : memref<8xi32, #tpu.memory_space<smem>>
    %21 = arith.index_cast %20 : i32 to index
    %c0_16 = arith.constant 0 : index
    %c0_17 = arith.constant 0 : index
    %22 = vector.load %arg2[%21, %c0_16, %c0_17] : memref<50x1x128xf32, #tpu.memory_space<vmem>>, vector<1x1x128xf32>
    %23 = vector.shape_cast %22 : vector<1x1x128xf32> to vector<1x128xf32>
    %c4_18 = arith.constant 4 : index
    %c0_19 = arith.constant 0 : index
    %24 = vector.load %arg17[%c4_18, %c0_19] : memref<8x128xf32, #tpu.memory_space<vmem>>, vector<1x128xf32>
    tpu.vector_store %arg17[%c4_18, %c0_19], %23 {strides = array<i32>} : memref<8x128xf32, #tpu.memory_space<vmem>>, vector<1x128xf32>,
    %c5 = arith.constant 5 : index
    %25 = memref.load %arg1[%c5] : memref<8xi32, #tpu.memory_space<smem>>
    %26 = arith.index_cast %25 : i32 to index
    %c0_20 = arith.constant 0 : index
    %c0_21 = arith.constant 0 : index
    %27 = vector.load %arg2[%26, %c0_20, %c0_21] : memref<50x1x128xf32, #tpu.memory_space<vmem>>, vector<1x1x128xf32>
    %28 = vector.shape_cast %27 : vector<1x1x128xf32> to vector<1x128xf32>
    %c5_22 = arith.constant 5 : index
    %c0_23 = arith.constant 0 : index
    %29 = vector.load %arg17[%c5_22, %c0_23] : memref<8x128xf32, #tpu.memory_space<vmem>>, vector<1x128xf32>
    tpu.vector_store %arg17[%c5_22, %c0_23], %28 {strides = array<i32>} : memref<8x128xf32, #tpu.memory_space<vmem>>, vector<1x128xf32>,
    %c6 = arith.constant 6 : index
    %30 = memref.load %arg1[%c6] : memref<8xi32, #tpu.memory_space<smem>>
    %31 = arith.index_cast %30 : i32 to index
    %c0_24 = arith.constant 0 : index
    %c0_25 = arith.constant 0 : index
    %32 = vector.load %arg2[%31, %c0_24, %c0_25] : memref<50x1x128xf32, #tpu.memory_space<vmem>>, vector<1x1x128xf32>
    %33 = vector.shape_cast %32 : vector<1x1x128xf32> to vector<1x128xf32>
    %c6_26 = arith.constant 6 : index
    %c0_27 = arith.constant 0 : index
    %34 = vector.load %arg17[%c6_26, %c0_27] : memref<8x128xf32, #tpu.memory_space<vmem>>, vector<1x128xf32>
    tpu.vector_store %arg17[%c6_26, %c0_27], %33 {strides = array<i32>} : memref<8x128xf32, #tpu.memory_space<vmem>>, vector<1x128xf32>,
    %c7 = arith.constant 7 : index
    %35 = memref.load %arg1[%c7] : memref<8xi32, #tpu.memory_space<smem>>
    %36 = arith.index_cast %35 : i32 to index
    %c0_28 = arith.constant 0 : index
    %c0_29 = arith.constant 0 : index
    %37 = vector.load %arg2[%36, %c0_28, %c0_29] : memref<50x1x128xf32, #tpu.memory_space<vmem>>, vector<1x1x128xf32>
    %38 = vector.shape_cast %37 : vector<1x1x128xf32> to vector<1x128xf32>
    %c7_30 = arith.constant 7 : index
    %c0_31 = arith.constant 0 : index
    %39 = vector.load %arg17[%c7_30, %c0_31] : memref<8x128xf32, #tpu.memory_space<vmem>>, vector<1x128xf32>
    tpu.vector_store %arg17[%c7_30, %c0_31], %38 {strides = array<i32>} : memref<8x128xf32, #tpu.memory_space<vmem>>, vector<1x128xf32>,
    %c0_32 = arith.constant 0 : index
    %c0_33 = arith.constant 0 : index
    %40 = vector.load %arg17[%c0_32, %c0_33] : memref<8x128xf32, #tpu.memory_space<vmem>>, vector<8x128xf32>
    %c0_34 = arith.constant 0 : index
    %c0_35 = arith.constant 0 : index
    %41 = vector.load %arg5[%c0_34, %c0_35] : memref<128x256xf32, #tpu.memory_space<vmem>>, vector<128x256xf32>
    %cst = arith.constant dense<0.000000e+00> : vector<8x256xf32>
    %42 = tpu.matmul %40, %41, %cst {dimension_numbers = #tpu.dot_dimension_numbers<[1], [0], [0], [1], [0, 0, 1, 1], [], []>} : vector<8x128xf32>, vector<128x256xf32>, vector<8x256xf32> -> vector<8x256xf32>
    %c0_36 = arith.constant 0 : index
    %c0_37 = arith.constant 0 : index
    %43 = vector.load %arg6[%c0_36, %c0_37] : memref<1x256xf32, #tpu.memory_space<vmem>>, vector<1x256xf32>
    %44 = vector.broadcast %43 : vector<1x256xf32> to vector<8x256xf32>
    %45 = arith.addf %42, %44 : vector<8x256xf32>
    %c0_38 = arith.constant 0 : index
    %c0_39 = arith.constant 0 : index
    %46 = vector.load %arg18[%c0_38, %c0_39] : memref<8x256xf32, #tpu.memory_space<vmem>>, vector<8x256xf32>
    tpu.vector_store %arg18[%c0_38, %c0_39], %45 {strides = array<i32>} : memref<8x256xf32, #tpu.memory_space<vmem>>, vector<8x256xf32>,
    %c0_40 = arith.constant 0 : index
    %c0_41 = arith.constant 0 : index
    %47 = vector.load %arg3[%c0_40, %c0_41] : memref<1x128xf32, #tpu.memory_space<vmem>>, vector<1x128xf32>
    %c0_42 = arith.constant 0 : index
    %c0_43 = arith.constant 0 : index
    %48 = vector.load %arg18[%c0_42, %c0_43] : memref<8x256xf32, #tpu.memory_space<vmem>>, vector<1x256xf32>
    %c0_44 = arith.constant 0 : index
    %c0_45 = arith.constant 0 : index
    %49 = vector.load %arg7[%c0_44, %c0_45] : memref<128x512xf32, #tpu.memory_space<vmem>>, vector<128x512xf32>
    %cst_46 = arith.constant dense<0.000000e+00> : vector<1x512xf32>
    %50 = tpu.matmul %47, %49, %cst_46 {dimension_numbers = #tpu.dot_dimension_numbers<[1], [0], [0], [1], [0, 0, 1, 1], [], []>} : vector<1x128xf32>, vector<128x512xf32>, vector<1x512xf32> -> vector<1x512xf32>
    %c0_47 = arith.constant 0 : index
    %c0_48 = arith.constant 0 : index
    %51 = vector.load %arg8[%c0_47, %c0_48] : memref<1x512xf32, #tpu.memory_space<vmem>>, vector<1x512xf32>
    %52 = arith.addf %50, %51 : vector<1x512xf32>
    %53 = vector.extract_strided_slice %48 {offsets = [0, 0], sizes = [1, 128], strides = [1, 1]} : vector<1x256xf32> to vector<1x128xf32>
    %54 = vector.extract_strided_slice %52 {offsets = [0, 0], sizes = [1, 128], strides = [1, 1]} : vector<1x512xf32> to vector<1x128xf32>
    %55 = arith.addf %53, %54 : vector<1x128xf32>
    %cst_49 = arith.constant dense<0xFF800000> : vector<1xf32>
    %56 = vector.multi_reduction <maximumf>, %55, %cst_49 [1] : vector<1x128xf32> to vector<1xf32>
    %57 = vector.shape_cast %56 : vector<1xf32> to vector<1x1xf32>
    %58 = vector.broadcast %57 : vector<1x1xf32> to vector<1x128xf32>
    %59 = arith.subf %55, %58 : vector<1x128xf32>
    %60 = math.exp %59 : vector<1x128xf32>
    %c0_50 = arith.constant 0 : index
    %c0_51 = arith.constant 0 : index
    %61 = vector.load %arg4[%c0_50, %c0_51] : memref<128x128xf32, #tpu.memory_space<vmem>>, vector<128x128xf32>
    %cst_52 = arith.constant dense<0.000000e+00> : vector<1x128xf32>
    %62 = tpu.matmul %60, %61, %cst_52 {dimension_numbers = #tpu.dot_dimension_numbers<[1], [0], [0], [1], [0, 0, 1, 1], [], []>} : vector<1x128xf32>, vector<128x128xf32>, vector<1x128xf32> -> vector<1x128xf32>
    %cst_53 = arith.constant dense<0.000000e+00> : vector<1xf32>
    %63 = vector.multi_reduction <add>, %60, %cst_53 [1] : vector<1x128xf32> to vector<1xf32>
    %64 = vector.shape_cast %63 : vector<1xf32> to vector<1x1xf32>
    %65 = tpu.reciprocal %64 {approx = true} : vector<1x1xf32> -> vector<1x1xf32>
    %66 = arith.mulf %64, %65 : vector<1x1xf32>
    %cst_54 = arith.constant 2.000000e+00 : f32
    %67 = vector.broadcast %cst_54 : f32 to vector<1x1xf32>
    %68 = arith.subf %67, %66 : vector<1x1xf32>
    %69 = arith.mulf %65, %68 : vector<1x1xf32>
    %70 = vector.broadcast %69 : vector<1x1xf32> to vector<1x128xf32>
    %71 = arith.mulf %60, %70 : vector<1x128xf32>
    %c0_55 = arith.constant 0 : index
    %c0_56 = arith.constant 0 : index
    %72 = vector.load %arg16[%c0_55, %c0_56] : memref<8x128xf32, #tpu.memory_space<vmem>>, vector<1x128xf32>
    tpu.vector_store %arg16[%c0_55, %c0_56], %71 {strides = array<i32>} : memref<8x128xf32, #tpu.memory_space<vmem>>, vector<1x128xf32>,
    %73 = vector.broadcast %69 : vector<1x1xf32> to vector<1x128xf32>
    %74 = arith.mulf %62, %73 : vector<1x128xf32>
    %75 = vector.extract_strided_slice %48 {offsets = [0, 128], sizes = [1, 128], strides = [1, 1]} : vector<1x256xf32> to vector<1x128xf32>
    %c0_57 = arith.constant 0 : index
    %c0_58 = arith.constant 0 : index
    %76 = vector.load %arg9[%c0_57, %c0_58] : memref<128x128xf32, #tpu.memory_space<vmem>>, vector<128x128xf32>
    %cst_59 = arith.constant dense<0.000000e+00> : vector<1x128xf32>
    %77 = tpu.matmul %74, %76, %cst_59 {dimension_numbers = #tpu.dot_dimension_numbers<[1], [0], [0], [1], [0, 0, 1, 1], [], []>} : vector<1x128xf32>, vector<128x128xf32>, vector<1x128xf32> -> vector<1x128xf32>
    %78 = arith.addf %75, %77 : vector<1x128xf32>
    %cst_60 = arith.constant 0.000000e+00 : f32
    %79 = vector.broadcast %cst_60 : f32 to vector<1x128xf32>
    %80 = arith.maximumf %78, %79 : vector<1x128xf32>
    %c0_61 = arith.constant 0 : index
    %c0_62 = arith.constant 0 : index
    %81 = vector.load %arg10[%c0_61, %c0_62] : memref<128x384xf32, #tpu.memory_space<vmem>>, vector<128x384xf32>
    %cst_63 = arith.constant dense<0.000000e+00> : vector<1x384xf32>
    %82 = tpu.matmul %80, %81, %cst_63 {dimension_numbers = #tpu.dot_dimension_numbers<[1], [0], [0], [1], [0, 0, 1, 1], [], []>} : vector<1x128xf32>, vector<128x384xf32>, vector<1x384xf32> -> vector<1x384xf32>
    %c0_64 = arith.constant 0 : index
    %c0_65 = arith.constant 0 : index
    %83 = vector.load %arg11[%c0_64, %c0_65] : memref<1x384xf32, #tpu.memory_space<vmem>>, vector<1x384xf32>
    %84 = arith.addf %82, %83 : vector<1x384xf32>
    %85 = vector.extract_strided_slice %52 {offsets = [0, 128], sizes = [1, 384], strides = [1, 1]} : vector<1x512xf32> to vector<1x384xf32>
    %86 = vector.extract_strided_slice %84 {offsets = [0, 0], sizes = [1, 128], strides = [1, 1]} : vector<1x384xf32> to vector<1x128xf32>
    %87 = vector.extract_strided_slice %85 {offsets = [0, 0], sizes = [1, 128], strides = [1, 1]} : vector<1x384xf32> to vector<1x128xf32>
    %88 = arith.addf %86, %87 : vector<1x128xf32>
    %89 = arith.negf %88 : vector<1x128xf32>
    %90 = math.exp %89 : vector<1x128xf32>
    %cst_66 = arith.constant 1.000000e+00 : f32
    %91 = vector.broadcast %cst_66 : f32 to vector<1x128xf32>
    %92 = arith.addf %91, %90 : vector<1x128xf32>
    %93 = arith.divf %91, %92 : vector<1x128xf32>
    %94 = vector.extract_strided_slice %84 {offsets = [0, 128], sizes = [1, 128], strides = [1, 1]} : vector<1x384xf32> to vector<1x128xf32>
    %95 = vector.extract_strided_slice %85 {offsets = [0, 128], sizes = [1, 128], strides = [1, 1]} : vector<1x384xf32> to vector<1x128xf32>
    %96 = arith.addf %94, %95 : vector<1x128xf32>
    %97 = arith.negf %96 : vector<1x128xf32>
    %98 = math.exp %97 : vector<1x128xf32>
    %cst_67 = arith.constant 1.000000e+00 : f32
    %99 = vector.broadcast %cst_67 : f32 to vector<1x128xf32>
    %100 = arith.addf %99, %98 : vector<1x128xf32>
    %101 = arith.divf %99, %100 : vector<1x128xf32>
    %102 = vector.extract_strided_slice %84 {offsets = [0, 256], sizes = [1, 128], strides = [1, 1]} : vector<1x384xf32> to vector<1x128xf32>
    %103 = vector.extract_strided_slice %85 {offsets = [0, 256], sizes = [1, 128], strides = [1, 1]} : vector<1x384xf32> to vector<1x128xf32>
    %104 = arith.mulf %93, %103 : vector<1x128xf32>
    %105 = arith.addf %102, %104 : vector<1x128xf32>
    %106 = math.tanh %105 : vector<1x128xf32>
    %cst_68 = arith.constant 1.000000e+00 : f32
    %107 = vector.broadcast %cst_68 : f32 to vector<1x128xf32>
    %108 = arith.subf %107, %101 : vector<1x128xf32>
    %109 = arith.mulf %108, %106 : vector<1x128xf32>
    %110 = arith.mulf %101, %47 : vector<1x128xf32>
    %111 = arith.addf %109, %110 : vector<1x128xf32>
    %c0_69 = arith.constant 0 : index
    %c0_70 = arith.constant 0 : index
    %112 = vector.load %arg19[%c0_69, %c0_70] : memref<8x128xf32, #tpu.memory_space<vmem>>, vector<1x128xf32>
    tpu.vector_store %arg19[%c0_69, %c0_70], %111 {strides = array<i32>} : memref<8x128xf32, #tpu.memory_space<vmem>>, vector<1x128xf32>,
    %c1_71 = arith.constant 1 : index
    %c0_72 = arith.constant 0 : index
    %113 = vector.load %arg18[%c1_71, %c0_72] : memref<8x256xf32, #tpu.memory_space<vmem>>, vector<1x256xf32>
    %c0_73 = arith.constant 0 : index
    %c0_74 = arith.constant 0 : index
    %114 = vector.load %arg7[%c0_73, %c0_74] : memref<128x512xf32, #tpu.memory_space<vmem>>, vector<128x512xf32>
    %cst_75 = arith.constant dense<0.000000e+00> : vector<1x512xf32>
    %115 = tpu.matmul %111, %114, %cst_75 {dimension_numbers = #tpu.dot_dimension_numbers<[1], [0], [0], [1], [0, 0, 1, 1], [], []>} : vector<1x128xf32>, vector<128x512xf32>, vector<1x512xf32> -> vector<1x512xf32>
    %c0_76 = arith.constant 0 : index
    %c0_77 = arith.constant 0 : index
    %116 = vector.load %arg8[%c0_76, %c0_77] : memref<1x512xf32, #tpu.memory_space<vmem>>, vector<1x512xf32>
    %117 = arith.addf %115, %116 : vector<1x512xf32>
    %118 = vector.extract_strided_slice %113 {offsets = [0, 0], sizes = [1, 128], strides = [1, 1]} : vector<1x256xf32> to vector<1x128xf32>
    %119 = vector.extract_strided_slice %117 {offsets = [0, 0], sizes = [1, 128], strides = [1, 1]} : vector<1x512xf32> to vector<1x128xf32>
    %120 = arith.addf %118, %119 : vector<1x128xf32>
    %cst_78 = arith.constant dense<0xFF800000> : vector<1xf32>
    %121 = vector.multi_reduction <maximumf>, %120, %cst_78 [1] : vector<1x128xf32> to vector<1xf32>
    %122 = vector.shape_cast %121 : vector<1xf32> to vector<1x1xf32>
    %123 = vector.broadcast %122 : vector<1x1xf32> to vector<1x128xf32>
    %124 = arith.subf %120, %123 : vector<1x128xf32>
    %125 = math.exp %124 : vector<1x128xf32>
    %c0_79 = arith.constant 0 : index
    %c0_80 = arith.constant 0 : index
    %126 = vector.load %arg4[%c0_79, %c0_80] : memref<128x128xf32, #tpu.memory_space<vmem>>, vector<128x128xf32>
    %cst_81 = arith.constant dense<0.000000e+00> : vector<1x128xf32>
    %127 = tpu.matmul %125, %126, %cst_81 {dimension_numbers = #tpu.dot_dimension_numbers<[1], [0], [0], [1], [0, 0, 1, 1], [], []>} : vector<1x128xf32>, vector<128x128xf32>, vector<1x128xf32> -> vector<1x128xf32>
    %cst_82 = arith.constant dense<0.000000e+00> : vector<1xf32>
    %128 = vector.multi_reduction <add>, %125, %cst_82 [1] : vector<1x128xf32> to vector<1xf32>
    %129 = vector.shape_cast %128 : vector<1xf32> to vector<1x1xf32>
    %130 = tpu.reciprocal %129 {approx = true} : vector<1x1xf32> -> vector<1x1xf32>
    %131 = arith.mulf %129, %130 : vector<1x1xf32>
    %cst_83 = arith.constant 2.000000e+00 : f32
    %132 = vector.broadcast %cst_83 : f32 to vector<1x1xf32>
    %133 = arith.subf %132, %131 : vector<1x1xf32>
    %134 = arith.mulf %130, %133 : vector<1x1xf32>
    %135 = vector.broadcast %134 : vector<1x1xf32> to vector<1x128xf32>
    %136 = arith.mulf %125, %135 : vector<1x128xf32>
    %c1_84 = arith.constant 1 : index
    %c0_85 = arith.constant 0 : index
    %137 = vector.load %arg16[%c1_84, %c0_85] : memref<8x128xf32, #tpu.memory_space<vmem>>, vector<1x128xf32>
    tpu.vector_store %arg16[%c1_84, %c0_85], %136 {strides = array<i32>} : memref<8x128xf32, #tpu.memory_space<vmem>>, vector<1x128xf32>,
    %138 = vector.broadcast %134 : vector<1x1xf32> to vector<1x128xf32>
    %139 = arith.mulf %127, %138 : vector<1x128xf32>
    %140 = vector.extract_strided_slice %113 {offsets = [0, 128], sizes = [1, 128], strides = [1, 1]} : vector<1x256xf32> to vector<1x128xf32>
    %c0_86 = arith.constant 0 : index
    %c0_87 = arith.constant 0 : index
    %141 = vector.load %arg9[%c0_86, %c0_87] : memref<128x128xf32, #tpu.memory_space<vmem>>, vector<128x128xf32>
    %cst_88 = arith.constant dense<0.000000e+00> : vector<1x128xf32>
    %142 = tpu.matmul %139, %141, %cst_88 {dimension_numbers = #tpu.dot_dimension_numbers<[1], [0], [0], [1], [0, 0, 1, 1], [], []>} : vector<1x128xf32>, vector<128x128xf32>, vector<1x128xf32> -> vector<1x128xf32>
    %143 = arith.addf %140, %142 : vector<1x128xf32>
    %cst_89 = arith.constant 0.000000e+00 : f32
    %144 = vector.broadcast %cst_89 : f32 to vector<1x128xf32>
    %145 = arith.maximumf %143, %144 : vector<1x128xf32>
    %c0_90 = arith.constant 0 : index
    %c0_91 = arith.constant 0 : index
    %146 = vector.load %arg10[%c0_90, %c0_91] : memref<128x384xf32, #tpu.memory_space<vmem>>, vector<128x384xf32>
    %cst_92 = arith.constant dense<0.000000e+00> : vector<1x384xf32>
    %147 = tpu.matmul %145, %146, %cst_92 {dimension_numbers = #tpu.dot_dimension_numbers<[1], [0], [0], [1], [0, 0, 1, 1], [], []>} : vector<1x128xf32>, vector<128x384xf32>, vector<1x384xf32> -> vector<1x384xf32>
    %c0_93 = arith.constant 0 : index
    %c0_94 = arith.constant 0 : index
    %148 = vector.load %arg11[%c0_93, %c0_94] : memref<1x384xf32, #tpu.memory_space<vmem>>, vector<1x384xf32>
    %149 = arith.addf %147, %148 : vector<1x384xf32>
    %150 = vector.extract_strided_slice %117 {offsets = [0, 128], sizes = [1, 384], strides = [1, 1]} : vector<1x512xf32> to vector<1x384xf32>
    %151 = vector.extract_strided_slice %149 {offsets = [0, 0], sizes = [1, 128], strides = [1, 1]} : vector<1x384xf32> to vector<1x128xf32>
    %152 = vector.extract_strided_slice %150 {offsets = [0, 0], sizes = [1, 128], strides = [1, 1]} : vector<1x384xf32> to vector<1x128xf32>
    %153 = arith.addf %151, %152 : vector<1x128xf32>
    %154 = arith.negf %153 : vector<1x128xf32>
    %155 = math.exp %154 : vector<1x128xf32>
    %cst_95 = arith.constant 1.000000e+00 : f32
    %156 = vector.broadcast %cst_95 : f32 to vector<1x128xf32>
    %157 = arith.addf %156, %155 : vector<1x128xf32>
    %158 = arith.divf %156, %157 : vector<1x128xf32>
    %159 = vector.extract_strided_slice %149 {offsets = [0, 128], sizes = [1, 128], strides = [1, 1]} : vector<1x384xf32> to vector<1x128xf32>
    %160 = vector.extract_strided_slice %150 {offsets = [0, 128], sizes = [1, 128], strides = [1, 1]} : vector<1x384xf32> to vector<1x128xf32>
    %161 = arith.addf %159, %160 : vector<1x128xf32>
    %162 = arith.negf %161 : vector<1x128xf32>
    %163 = math.exp %162 : vector<1x128xf32>
    %cst_96 = arith.constant 1.000000e+00 : f32
    %164 = vector.broadcast %cst_96 : f32 to vector<1x128xf32>
    %165 = arith.addf %164, %163 : vector<1x128xf32>
    %166 = arith.divf %164, %165 : vector<1x128xf32>
    %167 = vector.extract_strided_slice %149 {offsets = [0, 256], sizes = [1, 128], strides = [1, 1]} : vector<1x384xf32> to vector<1x128xf32>
    %168 = vector.extract_strided_slice %150 {offsets = [0, 256], sizes = [1, 128], strides = [1, 1]} : vector<1x384xf32> to vector<1x128xf32>
    %169 = arith.mulf %158, %168 : vector<1x128xf32>
    %170 = arith.addf %167, %169 : vector<1x128xf32>
    %171 = math.tanh %170 : vector<1x128xf32>
    %cst_97 = arith.constant 1.000000e+00 : f32
    %172 = vector.broadcast %cst_97 : f32 to vector<1x128xf32>
    %173 = arith.subf %172, %166 : vector<1x128xf32>
    %174 = arith.mulf %173, %171 : vector<1x128xf32>
    %175 = arith.mulf %166, %111 : vector<1x128xf32>
    %176 = arith.addf %174, %175 : vector<1x128xf32>
    %c1_98 = arith.constant 1 : index
    %c0_99 = arith.constant 0 : index
    %177 = vector.load %arg19[%c1_98, %c0_99] : memref<8x128xf32, #tpu.memory_space<vmem>>, vector<1x128xf32>
    tpu.vector_store %arg19[%c1_98, %c0_99], %176 {strides = array<i32>} : memref<8x128xf32, #tpu.memory_space<vmem>>, vector<1x128xf32>,
    %c2_100 = arith.constant 2 : index
    %c0_101 = arith.constant 0 : index
    %178 = vector.load %arg18[%c2_100, %c0_101] : memref<8x256xf32, #tpu.memory_space<vmem>>, vector<1x256xf32>
    %c0_102 = arith.constant 0 : index
    %c0_103 = arith.constant 0 : index
    %179 = vector.load %arg7[%c0_102, %c0_103] : memref<128x512xf32, #tpu.memory_space<vmem>>, vector<128x512xf32>
    %cst_104 = arith.constant dense<0.000000e+00> : vector<1x512xf32>
    %180 = tpu.matmul %176, %179, %cst_104 {dimension_numbers = #tpu.dot_dimension_numbers<[1], [0], [0], [1], [0, 0, 1, 1], [], []>} : vector<1x128xf32>, vector<128x512xf32>, vector<1x512xf32> -> vector<1x512xf32>
    %c0_105 = arith.constant 0 : index
    %c0_106 = arith.constant 0 : index
    %181 = vector.load %arg8[%c0_105, %c0_106] : memref<1x512xf32, #tpu.memory_space<vmem>>, vector<1x512xf32>
    %182 = arith.addf %180, %181 : vector<1x512xf32>
    %183 = vector.extract_strided_slice %178 {offsets = [0, 0], sizes = [1, 128], strides = [1, 1]} : vector<1x256xf32> to vector<1x128xf32>
    %184 = vector.extract_strided_slice %182 {offsets = [0, 0], sizes = [1, 128], strides = [1, 1]} : vector<1x512xf32> to vector<1x128xf32>
    %185 = arith.addf %183, %184 : vector<1x128xf32>
    %cst_107 = arith.constant dense<0xFF800000> : vector<1xf32>
    %186 = vector.multi_reduction <maximumf>, %185, %cst_107 [1] : vector<1x128xf32> to vector<1xf32>
    %187 = vector.shape_cast %186 : vector<1xf32> to vector<1x1xf32>
    %188 = vector.broadcast %187 : vector<1x1xf32> to vector<1x128xf32>
    %189 = arith.subf %185, %188 : vector<1x128xf32>
    %190 = math.exp %189 : vector<1x128xf32>
    %c0_108 = arith.constant 0 : index
    %c0_109 = arith.constant 0 : index
    %191 = vector.load %arg4[%c0_108, %c0_109] : memref<128x128xf32, #tpu.memory_space<vmem>>, vector<128x128xf32>
    %cst_110 = arith.constant dense<0.000000e+00> : vector<1x128xf32>
    %192 = tpu.matmul %190, %191, %cst_110 {dimension_numbers = #tpu.dot_dimension_numbers<[1], [0], [0], [1], [0, 0, 1, 1], [], []>} : vector<1x128xf32>, vector<128x128xf32>, vector<1x128xf32> -> vector<1x128xf32>
    %cst_111 = arith.constant dense<0.000000e+00> : vector<1xf32>
    %193 = vector.multi_reduction <add>, %190, %cst_111 [1] : vector<1x128xf32> to vector<1xf32>
    %194 = vector.shape_cast %193 : vector<1xf32> to vector<1x1xf32>
    %195 = tpu.reciprocal %194 {approx = true} : vector<1x1xf32> -> vector<1x1xf32>
    %196 = arith.mulf %194, %195 : vector<1x1xf32>
    %cst_112 = arith.constant 2.000000e+00 : f32
    %197 = vector.broadcast %cst_112 : f32 to vector<1x1xf32>
    %198 = arith.subf %197, %196 : vector<1x1xf32>
    %199 = arith.mulf %195, %198 : vector<1x1xf32>
    %200 = vector.broadcast %199 : vector<1x1xf32> to vector<1x128xf32>
    %201 = arith.mulf %190, %200 : vector<1x128xf32>
    %c2_113 = arith.constant 2 : index
    %c0_114 = arith.constant 0 : index
    %202 = vector.load %arg16[%c2_113, %c0_114] : memref<8x128xf32, #tpu.memory_space<vmem>>, vector<1x128xf32>
    tpu.vector_store %arg16[%c2_113, %c0_114], %201 {strides = array<i32>} : memref<8x128xf32, #tpu.memory_space<vmem>>, vector<1x128xf32>,
    %203 = vector.broadcast %199 : vector<1x1xf32> to vector<1x128xf32>
    %204 = arith.mulf %192, %203 : vector<1x128xf32>
    %205 = vector.extract_strided_slice %178 {offsets = [0, 128], sizes = [1, 128], strides = [1, 1]} : vector<1x256xf32> to vector<1x128xf32>
    %c0_115 = arith.constant 0 : index
    %c0_116 = arith.constant 0 : index
    %206 = vector.load %arg9[%c0_115, %c0_116] : memref<128x128xf32, #tpu.memory_space<vmem>>, vector<128x128xf32>
    %cst_117 = arith.constant dense<0.000000e+00> : vector<1x128xf32>
    %207 = tpu.matmul %204, %206, %cst_117 {dimension_numbers = #tpu.dot_dimension_numbers<[1], [0], [0], [1], [0, 0, 1, 1], [], []>} : vector<1x128xf32>, vector<128x128xf32>, vector<1x128xf32> -> vector<1x128xf32>
    %208 = arith.addf %205, %207 : vector<1x128xf32>
    %cst_118 = arith.constant 0.000000e+00 : f32
    %209 = vector.broadcast %cst_118 : f32 to vector<1x128xf32>
    %210 = arith.maximumf %208, %209 : vector<1x128xf32>
    %c0_119 = arith.constant 0 : index
    %c0_120 = arith.constant 0 : index
    %211 = vector.load %arg10[%c0_119, %c0_120] : memref<128x384xf32, #tpu.memory_space<vmem>>, vector<128x384xf32>
    %cst_121 = arith.constant dense<0.000000e+00> : vector<1x384xf32>
    %212 = tpu.matmul %210, %211, %cst_121 {dimension_numbers = #tpu.dot_dimension_numbers<[1], [0], [0], [1], [0, 0, 1, 1], [], []>} : vector<1x128xf32>, vector<128x384xf32>, vector<1x384xf32> -> vector<1x384xf32>
    %c0_122 = arith.constant 0 : index
    %c0_123 = arith.constant 0 : index
    %213 = vector.load %arg11[%c0_122, %c0_123] : memref<1x384xf32, #tpu.memory_space<vmem>>, vector<1x384xf32>
    %214 = arith.addf %212, %213 : vector<1x384xf32>
    %215 = vector.extract_strided_slice %182 {offsets = [0, 128], sizes = [1, 384], strides = [1, 1]} : vector<1x512xf32> to vector<1x384xf32>
    %216 = vector.extract_strided_slice %214 {offsets = [0, 0], sizes = [1, 128], strides = [1, 1]} : vector<1x384xf32> to vector<1x128xf32>
    %217 = vector.extract_strided_slice %215 {offsets = [0, 0], sizes = [1, 128], strides = [1, 1]} : vector<1x384xf32> to vector<1x128xf32>
    %218 = arith.addf %216, %217 : vector<1x128xf32>
    %219 = arith.negf %218 : vector<1x128xf32>
    %220 = math.exp %219 : vector<1x128xf32>
    %cst_124 = arith.constant 1.000000e+00 : f32
    %221 = vector.broadcast %cst_124 : f32 to vector<1x128xf32>
    %222 = arith.addf %221, %220 : vector<1x128xf32>
    %223 = arith.divf %221, %222 : vector<1x128xf32>
    %224 = vector.extract_strided_slice %214 {offsets = [0, 128], sizes = [1, 128], strides = [1, 1]} : vector<1x384xf32> to vector<1x128xf32>
    %225 = vector.extract_strided_slice %215 {offsets = [0, 128], sizes = [1, 128], strides = [1, 1]} : vector<1x384xf32> to vector<1x128xf32>
    %226 = arith.addf %224, %225 : vector<1x128xf32>
    %227 = arith.negf %226 : vector<1x128xf32>
    %228 = math.exp %227 : vector<1x128xf32>
    %cst_125 = arith.constant 1.000000e+00 : f32
    %229 = vector.broadcast %cst_125 : f32 to vector<1x128xf32>
    %230 = arith.addf %229, %228 : vector<1x128xf32>
    %231 = arith.divf %229, %230 : vector<1x128xf32>
    %232 = vector.extract_strided_slice %214 {offsets = [0, 256], sizes = [1, 128], strides = [1, 1]} : vector<1x384xf32> to vector<1x128xf32>
    %233 = vector.extract_strided_slice %215 {offsets = [0, 256], sizes = [1, 128], strides = [1, 1]} : vector<1x384xf32> to vector<1x128xf32>
    %234 = arith.mulf %223, %233 : vector<1x128xf32>
    %235 = arith.addf %232, %234 : vector<1x128xf32>
    %236 = math.tanh %235 : vector<1x128xf32>
    %cst_126 = arith.constant 1.000000e+00 : f32
    %237 = vector.broadcast %cst_126 : f32 to vector<1x128xf32>
    %238 = arith.subf %237, %231 : vector<1x128xf32>
    %239 = arith.mulf %238, %236 : vector<1x128xf32>
    %240 = arith.mulf %231, %176 : vector<1x128xf32>
    %241 = arith.addf %239, %240 : vector<1x128xf32>
    %c2_127 = arith.constant 2 : index
    %c0_128 = arith.constant 0 : index
    %242 = vector.load %arg19[%c2_127, %c0_128] : memref<8x128xf32, #tpu.memory_space<vmem>>, vector<1x128xf32>
    tpu.vector_store %arg19[%c2_127, %c0_128], %241 {strides = array<i32>} : memref<8x128xf32, #tpu.memory_space<vmem>>, vector<1x128xf32>,
    %c3_129 = arith.constant 3 : index
    %c0_130 = arith.constant 0 : index
    %243 = vector.load %arg18[%c3_129, %c0_130] : memref<8x256xf32, #tpu.memory_space<vmem>>, vector<1x256xf32>
    %c0_131 = arith.constant 0 : index
    %c0_132 = arith.constant 0 : index
    %244 = vector.load %arg7[%c0_131, %c0_132] : memref<128x512xf32, #tpu.memory_space<vmem>>, vector<128x512xf32>
    %cst_133 = arith.constant dense<0.000000e+00> : vector<1x512xf32>
    %245 = tpu.matmul %241, %244, %cst_133 {dimension_numbers = #tpu.dot_dimension_numbers<[1], [0], [0], [1], [0, 0, 1, 1], [], []>} : vector<1x128xf32>, vector<128x512xf32>, vector<1x512xf32> -> vector<1x512xf32>
    %c0_134 = arith.constant 0 : index
    %c0_135 = arith.constant 0 : index
    %246 = vector.load %arg8[%c0_134, %c0_135] : memref<1x512xf32, #tpu.memory_space<vmem>>, vector<1x512xf32>
    %247 = arith.addf %245, %246 : vector<1x512xf32>
    %248 = vector.extract_strided_slice %243 {offsets = [0, 0], sizes = [1, 128], strides = [1, 1]} : vector<1x256xf32> to vector<1x128xf32>
    %249 = vector.extract_strided_slice %247 {offsets = [0, 0], sizes = [1, 128], strides = [1, 1]} : vector<1x512xf32> to vector<1x128xf32>
    %250 = arith.addf %248, %249 : vector<1x128xf32>
    %cst_136 = arith.constant dense<0xFF800000> : vector<1xf32>
    %251 = vector.multi_reduction <maximumf>, %250, %cst_136 [1] : vector<1x128xf32> to vector<1xf32>
    %252 = vector.shape_cast %251 : vector<1xf32> to vector<1x1xf32>
    %253 = vector.broadcast %252 : vector<1x1xf32> to vector<1x128xf32>
    %254 = arith.subf %250, %253 : vector<1x128xf32>
    %255 = math.exp %254 : vector<1x128xf32>
    %c0_137 = arith.constant 0 : index
    %c0_138 = arith.constant 0 : index
    %256 = vector.load %arg4[%c0_137, %c0_138] : memref<128x128xf32, #tpu.memory_space<vmem>>, vector<128x128xf32>
    %cst_139 = arith.constant dense<0.000000e+00> : vector<1x128xf32>
    %257 = tpu.matmul %255, %256, %cst_139 {dimension_numbers = #tpu.dot_dimension_numbers<[1], [0], [0], [1], [0, 0, 1, 1], [], []>} : vector<1x128xf32>, vector<128x128xf32>, vector<1x128xf32> -> vector<1x128xf32>
    %cst_140 = arith.constant dense<0.000000e+00> : vector<1xf32>
    %258 = vector.multi_reduction <add>, %255, %cst_140 [1] : vector<1x128xf32> to vector<1xf32>
    %259 = vector.shape_cast %258 : vector<1xf32> to vector<1x1xf32>
    %260 = tpu.reciprocal %259 {approx = true} : vector<1x1xf32> -> vector<1x1xf32>
    %261 = arith.mulf %259, %260 : vector<1x1xf32>
    %cst_141 = arith.constant 2.000000e+00 : f32
    %262 = vector.broadcast %cst_141 : f32 to vector<1x1xf32>
    %263 = arith.subf %262, %261 : vector<1x1xf32>
    %264 = arith.mulf %260, %263 : vector<1x1xf32>
    %265 = vector.broadcast %264 : vector<1x1xf32> to vector<1x128xf32>
    %266 = arith.mulf %255, %265 : vector<1x128xf32>
    %c3_142 = arith.constant 3 : index
    %c0_143 = arith.constant 0 : index
    %267 = vector.load %arg16[%c3_142, %c0_143] : memref<8x128xf32, #tpu.memory_space<vmem>>, vector<1x128xf32>
    tpu.vector_store %arg16[%c3_142, %c0_143], %266 {strides = array<i32>} : memref<8x128xf32, #tpu.memory_space<vmem>>, vector<1x128xf32>,
    %268 = vector.broadcast %264 : vector<1x1xf32> to vector<1x128xf32>
    %269 = arith.mulf %257, %268 : vector<1x128xf32>
    %270 = vector.extract_strided_slice %243 {offsets = [0, 128], sizes = [1, 128], strides = [1, 1]} : vector<1x256xf32> to vector<1x128xf32>
    %c0_144 = arith.constant 0 : index
    %c0_145 = arith.constant 0 : index
    %271 = vector.load %arg9[%c0_144, %c0_145] : memref<128x128xf32, #tpu.memory_space<vmem>>, vector<128x128xf32>
    %cst_146 = arith.constant dense<0.000000e+00> : vector<1x128xf32>
    %272 = tpu.matmul %269, %271, %cst_146 {dimension_numbers = #tpu.dot_dimension_numbers<[1], [0], [0], [1], [0, 0, 1, 1], [], []>} : vector<1x128xf32>, vector<128x128xf32>, vector<1x128xf32> -> vector<1x128xf32>
    %273 = arith.addf %270, %272 : vector<1x128xf32>
    %cst_147 = arith.constant 0.000000e+00 : f32
    %274 = vector.broadcast %cst_147 : f32 to vector<1x128xf32>
    %275 = arith.maximumf %273, %274 : vector<1x128xf32>
    %c0_148 = arith.constant 0 : index
    %c0_149 = arith.constant 0 : index
    %276 = vector.load %arg10[%c0_148, %c0_149] : memref<128x384xf32, #tpu.memory_space<vmem>>, vector<128x384xf32>
    %cst_150 = arith.constant dense<0.000000e+00> : vector<1x384xf32>
    %277 = tpu.matmul %275, %276, %cst_150 {dimension_numbers = #tpu.dot_dimension_numbers<[1], [0], [0], [1], [0, 0, 1, 1], [], []>} : vector<1x128xf32>, vector<128x384xf32>, vector<1x384xf32> -> vector<1x384xf32>
    %c0_151 = arith.constant 0 : index
    %c0_152 = arith.constant 0 : index
    %278 = vector.load %arg11[%c0_151, %c0_152] : memref<1x384xf32, #tpu.memory_space<vmem>>, vector<1x384xf32>
    %279 = arith.addf %277, %278 : vector<1x384xf32>
    %280 = vector.extract_strided_slice %247 {offsets = [0, 128], sizes = [1, 384], strides = [1, 1]} : vector<1x512xf32> to vector<1x384xf32>
    %281 = vector.extract_strided_slice %279 {offsets = [0, 0], sizes = [1, 128], strides = [1, 1]} : vector<1x384xf32> to vector<1x128xf32>
    %282 = vector.extract_strided_slice %280 {offsets = [0, 0], sizes = [1, 128], strides = [1, 1]} : vector<1x384xf32> to vector<1x128xf32>
    %283 = arith.addf %281, %282 : vector<1x128xf32>
    %284 = arith.negf %283 : vector<1x128xf32>
    %285 = math.exp %284 : vector<1x128xf32>
    %cst_153 = arith.constant 1.000000e+00 : f32
    %286 = vector.broadcast %cst_153 : f32 to vector<1x128xf32>
    %287 = arith.addf %286, %285 : vector<1x128xf32>
    %288 = arith.divf %286, %287 : vector<1x128xf32>
    %289 = vector.extract_strided_slice %279 {offsets = [0, 128], sizes = [1, 128], strides = [1, 1]} : vector<1x384xf32> to vector<1x128xf32>
    %290 = vector.extract_strided_slice %280 {offsets = [0, 128], sizes = [1, 128], strides = [1, 1]} : vector<1x384xf32> to vector<1x128xf32>
    %291 = arith.addf %289, %290 : vector<1x128xf32>
    %292 = arith.negf %291 : vector<1x128xf32>
    %293 = math.exp %292 : vector<1x128xf32>
    %cst_154 = arith.constant 1.000000e+00 : f32
    %294 = vector.broadcast %cst_154 : f32 to vector<1x128xf32>
    %295 = arith.addf %294, %293 : vector<1x128xf32>
    %296 = arith.divf %294, %295 : vector<1x128xf32>
    %297 = vector.extract_strided_slice %279 {offsets = [0, 256], sizes = [1, 128], strides = [1, 1]} : vector<1x384xf32> to vector<1x128xf32>
    %298 = vector.extract_strided_slice %280 {offsets = [0, 256], sizes = [1, 128], strides = [1, 1]} : vector<1x384xf32> to vector<1x128xf32>
    %299 = arith.mulf %288, %298 : vector<1x128xf32>
    %300 = arith.addf %297, %299 : vector<1x128xf32>
    %301 = math.tanh %300 : vector<1x128xf32>
    %cst_155 = arith.constant 1.000000e+00 : f32
    %302 = vector.broadcast %cst_155 : f32 to vector<1x128xf32>
    %303 = arith.subf %302, %296 : vector<1x128xf32>
    %304 = arith.mulf %303, %301 : vector<1x128xf32>
    %305 = arith.mulf %296, %241 : vector<1x128xf32>
    %306 = arith.addf %304, %305 : vector<1x128xf32>
    %c3_156 = arith.constant 3 : index
    %c0_157 = arith.constant 0 : index
    %307 = vector.load %arg19[%c3_156, %c0_157] : memref<8x128xf32, #tpu.memory_space<vmem>>, vector<1x128xf32>
    tpu.vector_store %arg19[%c3_156, %c0_157], %306 {strides = array<i32>} : memref<8x128xf32, #tpu.memory_space<vmem>>, vector<1x128xf32>,
    %c4_158 = arith.constant 4 : index
    %c0_159 = arith.constant 0 : index
    %308 = vector.load %arg18[%c4_158, %c0_159] : memref<8x256xf32, #tpu.memory_space<vmem>>, vector<1x256xf32>
    %c0_160 = arith.constant 0 : index
    %c0_161 = arith.constant 0 : index
    %309 = vector.load %arg7[%c0_160, %c0_161] : memref<128x512xf32, #tpu.memory_space<vmem>>, vector<128x512xf32>
    %cst_162 = arith.constant dense<0.000000e+00> : vector<1x512xf32>
    %310 = tpu.matmul %306, %309, %cst_162 {dimension_numbers = #tpu.dot_dimension_numbers<[1], [0], [0], [1], [0, 0, 1, 1], [], []>} : vector<1x128xf32>, vector<128x512xf32>, vector<1x512xf32> -> vector<1x512xf32>
    %c0_163 = arith.constant 0 : index
    %c0_164 = arith.constant 0 : index
    %311 = vector.load %arg8[%c0_163, %c0_164] : memref<1x512xf32, #tpu.memory_space<vmem>>, vector<1x512xf32>
    %312 = arith.addf %310, %311 : vector<1x512xf32>
    %313 = vector.extract_strided_slice %308 {offsets = [0, 0], sizes = [1, 128], strides = [1, 1]} : vector<1x256xf32> to vector<1x128xf32>
    %314 = vector.extract_strided_slice %312 {offsets = [0, 0], sizes = [1, 128], strides = [1, 1]} : vector<1x512xf32> to vector<1x128xf32>
    %315 = arith.addf %313, %314 : vector<1x128xf32>
    %cst_165 = arith.constant dense<0xFF800000> : vector<1xf32>
    %316 = vector.multi_reduction <maximumf>, %315, %cst_165 [1] : vector<1x128xf32> to vector<1xf32>
    %317 = vector.shape_cast %316 : vector<1xf32> to vector<1x1xf32>
    %318 = vector.broadcast %317 : vector<1x1xf32> to vector<1x128xf32>
    %319 = arith.subf %315, %318 : vector<1x128xf32>
    %320 = math.exp %319 : vector<1x128xf32>
    %c0_166 = arith.constant 0 : index
    %c0_167 = arith.constant 0 : index
    %321 = vector.load %arg4[%c0_166, %c0_167] : memref<128x128xf32, #tpu.memory_space<vmem>>, vector<128x128xf32>
    %cst_168 = arith.constant dense<0.000000e+00> : vector<1x128xf32>
    %322 = tpu.matmul %320, %321, %cst_168 {dimension_numbers = #tpu.dot_dimension_numbers<[1], [0], [0], [1], [0, 0, 1, 1], [], []>} : vector<1x128xf32>, vector<128x128xf32>, vector<1x128xf32> -> vector<1x128xf32>
    %cst_169 = arith.constant dense<0.000000e+00> : vector<1xf32>
    %323 = vector.multi_reduction <add>, %320, %cst_169 [1] : vector<1x128xf32> to vector<1xf32>
    %324 = vector.shape_cast %323 : vector<1xf32> to vector<1x1xf32>
    %325 = tpu.reciprocal %324 {approx = true} : vector<1x1xf32> -> vector<1x1xf32>
    %326 = arith.mulf %324, %325 : vector<1x1xf32>
    %cst_170 = arith.constant 2.000000e+00 : f32
    %327 = vector.broadcast %cst_170 : f32 to vector<1x1xf32>
    %328 = arith.subf %327, %326 : vector<1x1xf32>
    %329 = arith.mulf %325, %328 : vector<1x1xf32>
    %330 = vector.broadcast %329 : vector<1x1xf32> to vector<1x128xf32>
    %331 = arith.mulf %320, %330 : vector<1x128xf32>
    %c4_171 = arith.constant 4 : index
    %c0_172 = arith.constant 0 : index
    %332 = vector.load %arg16[%c4_171, %c0_172] : memref<8x128xf32, #tpu.memory_space<vmem>>, vector<1x128xf32>
    tpu.vector_store %arg16[%c4_171, %c0_172], %331 {strides = array<i32>} : memref<8x128xf32, #tpu.memory_space<vmem>>, vector<1x128xf32>,
    %333 = vector.broadcast %329 : vector<1x1xf32> to vector<1x128xf32>
    %334 = arith.mulf %322, %333 : vector<1x128xf32>
    %335 = vector.extract_strided_slice %308 {offsets = [0, 128], sizes = [1, 128], strides = [1, 1]} : vector<1x256xf32> to vector<1x128xf32>
    %c0_173 = arith.constant 0 : index
    %c0_174 = arith.constant 0 : index
    %336 = vector.load %arg9[%c0_173, %c0_174] : memref<128x128xf32, #tpu.memory_space<vmem>>, vector<128x128xf32>
    %cst_175 = arith.constant dense<0.000000e+00> : vector<1x128xf32>
    %337 = tpu.matmul %334, %336, %cst_175 {dimension_numbers = #tpu.dot_dimension_numbers<[1], [0], [0], [1], [0, 0, 1, 1], [], []>} : vector<1x128xf32>, vector<128x128xf32>, vector<1x128xf32> -> vector<1x128xf32>
    %338 = arith.addf %335, %337 : vector<1x128xf32>
    %cst_176 = arith.constant 0.000000e+00 : f32
    %339 = vector.broadcast %cst_176 : f32 to vector<1x128xf32>
    %340 = arith.maximumf %338, %339 : vector<1x128xf32>
    %c0_177 = arith.constant 0 : index
    %c0_178 = arith.constant 0 : index
    %341 = vector.load %arg10[%c0_177, %c0_178] : memref<128x384xf32, #tpu.memory_space<vmem>>, vector<128x384xf32>
    %cst_179 = arith.constant dense<0.000000e+00> : vector<1x384xf32>
    %342 = tpu.matmul %340, %341, %cst_179 {dimension_numbers = #tpu.dot_dimension_numbers<[1], [0], [0], [1], [0, 0, 1, 1], [], []>} : vector<1x128xf32>, vector<128x384xf32>, vector<1x384xf32> -> vector<1x384xf32>
    %c0_180 = arith.constant 0 : index
    %c0_181 = arith.constant 0 : index
    %343 = vector.load %arg11[%c0_180, %c0_181] : memref<1x384xf32, #tpu.memory_space<vmem>>, vector<1x384xf32>
    %344 = arith.addf %342, %343 : vector<1x384xf32>
    %345 = vector.extract_strided_slice %312 {offsets = [0, 128], sizes = [1, 384], strides = [1, 1]} : vector<1x512xf32> to vector<1x384xf32>
    %346 = vector.extract_strided_slice %344 {offsets = [0, 0], sizes = [1, 128], strides = [1, 1]} : vector<1x384xf32> to vector<1x128xf32>
    %347 = vector.extract_strided_slice %345 {offsets = [0, 0], sizes = [1, 128], strides = [1, 1]} : vector<1x384xf32> to vector<1x128xf32>
    %348 = arith.addf %346, %347 : vector<1x128xf32>
    %349 = arith.negf %348 : vector<1x128xf32>
    %350 = math.exp %349 : vector<1x128xf32>
    %cst_182 = arith.constant 1.000000e+00 : f32
    %351 = vector.broadcast %cst_182 : f32 to vector<1x128xf32>
    %352 = arith.addf %351, %350 : vector<1x128xf32>
    %353 = arith.divf %351, %352 : vector<1x128xf32>
    %354 = vector.extract_strided_slice %344 {offsets = [0, 128], sizes = [1, 128], strides = [1, 1]} : vector<1x384xf32> to vector<1x128xf32>
    %355 = vector.extract_strided_slice %345 {offsets = [0, 128], sizes = [1, 128], strides = [1, 1]} : vector<1x384xf32> to vector<1x128xf32>
    %356 = arith.addf %354, %355 : vector<1x128xf32>
    %357 = arith.negf %356 : vector<1x128xf32>
    %358 = math.exp %357 : vector<1x128xf32>
    %cst_183 = arith.constant 1.000000e+00 : f32
    %359 = vector.broadcast %cst_183 : f32 to vector<1x128xf32>
    %360 = arith.addf %359, %358 : vector<1x128xf32>
    %361 = arith.divf %359, %360 : vector<1x128xf32>
    %362 = vector.extract_strided_slice %344 {offsets = [0, 256], sizes = [1, 128], strides = [1, 1]} : vector<1x384xf32> to vector<1x128xf32>
    %363 = vector.extract_strided_slice %345 {offsets = [0, 256], sizes = [1, 128], strides = [1, 1]} : vector<1x384xf32> to vector<1x128xf32>
    %364 = arith.mulf %353, %363 : vector<1x128xf32>
    %365 = arith.addf %362, %364 : vector<1x128xf32>
    %366 = math.tanh %365 : vector<1x128xf32>
    %cst_184 = arith.constant 1.000000e+00 : f32
    %367 = vector.broadcast %cst_184 : f32 to vector<1x128xf32>
    %368 = arith.subf %367, %361 : vector<1x128xf32>
    %369 = arith.mulf %368, %366 : vector<1x128xf32>
    %370 = arith.mulf %361, %306 : vector<1x128xf32>
    %371 = arith.addf %369, %370 : vector<1x128xf32>
    %c4_185 = arith.constant 4 : index
    %c0_186 = arith.constant 0 : index
    %372 = vector.load %arg19[%c4_185, %c0_186] : memref<8x128xf32, #tpu.memory_space<vmem>>, vector<1x128xf32>
    tpu.vector_store %arg19[%c4_185, %c0_186], %371 {strides = array<i32>} : memref<8x128xf32, #tpu.memory_space<vmem>>, vector<1x128xf32>,
    %c5_187 = arith.constant 5 : index
    %c0_188 = arith.constant 0 : index
    %373 = vector.load %arg18[%c5_187, %c0_188] : memref<8x256xf32, #tpu.memory_space<vmem>>, vector<1x256xf32>
    %c0_189 = arith.constant 0 : index
    %c0_190 = arith.constant 0 : index
    %374 = vector.load %arg7[%c0_189, %c0_190] : memref<128x512xf32, #tpu.memory_space<vmem>>, vector<128x512xf32>
    %cst_191 = arith.constant dense<0.000000e+00> : vector<1x512xf32>
    %375 = tpu.matmul %371, %374, %cst_191 {dimension_numbers = #tpu.dot_dimension_numbers<[1], [0], [0], [1], [0, 0, 1, 1], [], []>} : vector<1x128xf32>, vector<128x512xf32>, vector<1x512xf32> -> vector<1x512xf32>
    %c0_192 = arith.constant 0 : index
    %c0_193 = arith.constant 0 : index
    %376 = vector.load %arg8[%c0_192, %c0_193] : memref<1x512xf32, #tpu.memory_space<vmem>>, vector<1x512xf32>
    %377 = arith.addf %375, %376 : vector<1x512xf32>
    %378 = vector.extract_strided_slice %373 {offsets = [0, 0], sizes = [1, 128], strides = [1, 1]} : vector<1x256xf32> to vector<1x128xf32>
    %379 = vector.extract_strided_slice %377 {offsets = [0, 0], sizes = [1, 128], strides = [1, 1]} : vector<1x512xf32> to vector<1x128xf32>
    %380 = arith.addf %378, %379 : vector<1x128xf32>
    %cst_194 = arith.constant dense<0xFF800000> : vector<1xf32>
    %381 = vector.multi_reduction <maximumf>, %380, %cst_194 [1] : vector<1x128xf32> to vector<1xf32>
    %382 = vector.shape_cast %381 : vector<1xf32> to vector<1x1xf32>
    %383 = vector.broadcast %382 : vector<1x1xf32> to vector<1x128xf32>
    %384 = arith.subf %380, %383 : vector<1x128xf32>
    %385 = math.exp %384 : vector<1x128xf32>
    %c0_195 = arith.constant 0 : index
    %c0_196 = arith.constant 0 : index
    %386 = vector.load %arg4[%c0_195, %c0_196] : memref<128x128xf32, #tpu.memory_space<vmem>>, vector<128x128xf32>
    %cst_197 = arith.constant dense<0.000000e+00> : vector<1x128xf32>
    %387 = tpu.matmul %385, %386, %cst_197 {dimension_numbers = #tpu.dot_dimension_numbers<[1], [0], [0], [1], [0, 0, 1, 1], [], []>} : vector<1x128xf32>, vector<128x128xf32>, vector<1x128xf32> -> vector<1x128xf32>
    %cst_198 = arith.constant dense<0.000000e+00> : vector<1xf32>
    %388 = vector.multi_reduction <add>, %385, %cst_198 [1] : vector<1x128xf32> to vector<1xf32>
    %389 = vector.shape_cast %388 : vector<1xf32> to vector<1x1xf32>
    %390 = tpu.reciprocal %389 {approx = true} : vector<1x1xf32> -> vector<1x1xf32>
    %391 = arith.mulf %389, %390 : vector<1x1xf32>
    %cst_199 = arith.constant 2.000000e+00 : f32
    %392 = vector.broadcast %cst_199 : f32 to vector<1x1xf32>
    %393 = arith.subf %392, %391 : vector<1x1xf32>
    %394 = arith.mulf %390, %393 : vector<1x1xf32>
    %395 = vector.broadcast %394 : vector<1x1xf32> to vector<1x128xf32>
    %396 = arith.mulf %385, %395 : vector<1x128xf32>
    %c5_200 = arith.constant 5 : index
    %c0_201 = arith.constant 0 : index
    %397 = vector.load %arg16[%c5_200, %c0_201] : memref<8x128xf32, #tpu.memory_space<vmem>>, vector<1x128xf32>
    tpu.vector_store %arg16[%c5_200, %c0_201], %396 {strides = array<i32>} : memref<8x128xf32, #tpu.memory_space<vmem>>, vector<1x128xf32>,
    %398 = vector.broadcast %394 : vector<1x1xf32> to vector<1x128xf32>
    %399 = arith.mulf %387, %398 : vector<1x128xf32>
    %400 = vector.extract_strided_slice %373 {offsets = [0, 128], sizes = [1, 128], strides = [1, 1]} : vector<1x256xf32> to vector<1x128xf32>
    %c0_202 = arith.constant 0 : index
    %c0_203 = arith.constant 0 : index
    %401 = vector.load %arg9[%c0_202, %c0_203] : memref<128x128xf32, #tpu.memory_space<vmem>>, vector<128x128xf32>
    %cst_204 = arith.constant dense<0.000000e+00> : vector<1x128xf32>
    %402 = tpu.matmul %399, %401, %cst_204 {dimension_numbers = #tpu.dot_dimension_numbers<[1], [0], [0], [1], [0, 0, 1, 1], [], []>} : vector<1x128xf32>, vector<128x128xf32>, vector<1x128xf32> -> vector<1x128xf32>
    %403 = arith.addf %400, %402 : vector<1x128xf32>
    %cst_205 = arith.constant 0.000000e+00 : f32
    %404 = vector.broadcast %cst_205 : f32 to vector<1x128xf32>
    %405 = arith.maximumf %403, %404 : vector<1x128xf32>
    %c0_206 = arith.constant 0 : index
    %c0_207 = arith.constant 0 : index
    %406 = vector.load %arg10[%c0_206, %c0_207] : memref<128x384xf32, #tpu.memory_space<vmem>>, vector<128x384xf32>
    %cst_208 = arith.constant dense<0.000000e+00> : vector<1x384xf32>
    %407 = tpu.matmul %405, %406, %cst_208 {dimension_numbers = #tpu.dot_dimension_numbers<[1], [0], [0], [1], [0, 0, 1, 1], [], []>} : vector<1x128xf32>, vector<128x384xf32>, vector<1x384xf32> -> vector<1x384xf32>
    %c0_209 = arith.constant 0 : index
    %c0_210 = arith.constant 0 : index
    %408 = vector.load %arg11[%c0_209, %c0_210] : memref<1x384xf32, #tpu.memory_space<vmem>>, vector<1x384xf32>
    %409 = arith.addf %407, %408 : vector<1x384xf32>
    %410 = vector.extract_strided_slice %377 {offsets = [0, 128], sizes = [1, 384], strides = [1, 1]} : vector<1x512xf32> to vector<1x384xf32>
    %411 = vector.extract_strided_slice %409 {offsets = [0, 0], sizes = [1, 128], strides = [1, 1]} : vector<1x384xf32> to vector<1x128xf32>
    %412 = vector.extract_strided_slice %410 {offsets = [0, 0], sizes = [1, 128], strides = [1, 1]} : vector<1x384xf32> to vector<1x128xf32>
    %413 = arith.addf %411, %412 : vector<1x128xf32>
    %414 = arith.negf %413 : vector<1x128xf32>
    %415 = math.exp %414 : vector<1x128xf32>
    %cst_211 = arith.constant 1.000000e+00 : f32
    %416 = vector.broadcast %cst_211 : f32 to vector<1x128xf32>
    %417 = arith.addf %416, %415 : vector<1x128xf32>
    %418 = arith.divf %416, %417 : vector<1x128xf32>
    %419 = vector.extract_strided_slice %409 {offsets = [0, 128], sizes = [1, 128], strides = [1, 1]} : vector<1x384xf32> to vector<1x128xf32>
    %420 = vector.extract_strided_slice %410 {offsets = [0, 128], sizes = [1, 128], strides = [1, 1]} : vector<1x384xf32> to vector<1x128xf32>
    %421 = arith.addf %419, %420 : vector<1x128xf32>
    %422 = arith.negf %421 : vector<1x128xf32>
    %423 = math.exp %422 : vector<1x128xf32>
    %cst_212 = arith.constant 1.000000e+00 : f32
    %424 = vector.broadcast %cst_212 : f32 to vector<1x128xf32>
    %425 = arith.addf %424, %423 : vector<1x128xf32>
    %426 = arith.divf %424, %425 : vector<1x128xf32>
    %427 = vector.extract_strided_slice %409 {offsets = [0, 256], sizes = [1, 128], strides = [1, 1]} : vector<1x384xf32> to vector<1x128xf32>
    %428 = vector.extract_strided_slice %410 {offsets = [0, 256], sizes = [1, 128], strides = [1, 1]} : vector<1x384xf32> to vector<1x128xf32>
    %429 = arith.mulf %418, %428 : vector<1x128xf32>
    %430 = arith.addf %427, %429 : vector<1x128xf32>
    %431 = math.tanh %430 : vector<1x128xf32>
    %cst_213 = arith.constant 1.000000e+00 : f32
    %432 = vector.broadcast %cst_213 : f32 to vector<1x128xf32>
    %433 = arith.subf %432, %426 : vector<1x128xf32>
    %434 = arith.mulf %433, %431 : vector<1x128xf32>
    %435 = arith.mulf %426, %371 : vector<1x128xf32>
    %436 = arith.addf %434, %435 : vector<1x128xf32>
    %c5_214 = arith.constant 5 : index
    %c0_215 = arith.constant 0 : index
    %437 = vector.load %arg19[%c5_214, %c0_215] : memref<8x128xf32, #tpu.memory_space<vmem>>, vector<1x128xf32>
    tpu.vector_store %arg19[%c5_214, %c0_215], %436 {strides = array<i32>} : memref<8x128xf32, #tpu.memory_space<vmem>>, vector<1x128xf32>,
    %c6_216 = arith.constant 6 : index
    %c0_217 = arith.constant 0 : index
    %438 = vector.load %arg18[%c6_216, %c0_217] : memref<8x256xf32, #tpu.memory_space<vmem>>, vector<1x256xf32>
    %c0_218 = arith.constant 0 : index
    %c0_219 = arith.constant 0 : index
    %439 = vector.load %arg7[%c0_218, %c0_219] : memref<128x512xf32, #tpu.memory_space<vmem>>, vector<128x512xf32>
    %cst_220 = arith.constant dense<0.000000e+00> : vector<1x512xf32>
    %440 = tpu.matmul %436, %439, %cst_220 {dimension_numbers = #tpu.dot_dimension_numbers<[1], [0], [0], [1], [0, 0, 1, 1], [], []>} : vector<1x128xf32>, vector<128x512xf32>, vector<1x512xf32> -> vector<1x512xf32>
    %c0_221 = arith.constant 0 : index
    %c0_222 = arith.constant 0 : index
    %441 = vector.load %arg8[%c0_221, %c0_222] : memref<1x512xf32, #tpu.memory_space<vmem>>, vector<1x512xf32>
    %442 = arith.addf %440, %441 : vector<1x512xf32>
    %443 = vector.extract_strided_slice %438 {offsets = [0, 0], sizes = [1, 128], strides = [1, 1]} : vector<1x256xf32> to vector<1x128xf32>
    %444 = vector.extract_strided_slice %442 {offsets = [0, 0], sizes = [1, 128], strides = [1, 1]} : vector<1x512xf32> to vector<1x128xf32>
    %445 = arith.addf %443, %444 : vector<1x128xf32>
    %cst_223 = arith.constant dense<0xFF800000> : vector<1xf32>
    %446 = vector.multi_reduction <maximumf>, %445, %cst_223 [1] : vector<1x128xf32> to vector<1xf32>
    %447 = vector.shape_cast %446 : vector<1xf32> to vector<1x1xf32>
    %448 = vector.broadcast %447 : vector<1x1xf32> to vector<1x128xf32>
    %449 = arith.subf %445, %448 : vector<1x128xf32>
    %450 = math.exp %449 : vector<1x128xf32>
    %c0_224 = arith.constant 0 : index
    %c0_225 = arith.constant 0 : index
    %451 = vector.load %arg4[%c0_224, %c0_225] : memref<128x128xf32, #tpu.memory_space<vmem>>, vector<128x128xf32>
    %cst_226 = arith.constant dense<0.000000e+00> : vector<1x128xf32>
    %452 = tpu.matmul %450, %451, %cst_226 {dimension_numbers = #tpu.dot_dimension_numbers<[1], [0], [0], [1], [0, 0, 1, 1], [], []>} : vector<1x128xf32>, vector<128x128xf32>, vector<1x128xf32> -> vector<1x128xf32>
    %cst_227 = arith.constant dense<0.000000e+00> : vector<1xf32>
    %453 = vector.multi_reduction <add>, %450, %cst_227 [1] : vector<1x128xf32> to vector<1xf32>
    %454 = vector.shape_cast %453 : vector<1xf32> to vector<1x1xf32>
    %455 = tpu.reciprocal %454 {approx = true} : vector<1x1xf32> -> vector<1x1xf32>
    %456 = arith.mulf %454, %455 : vector<1x1xf32>
    %cst_228 = arith.constant 2.000000e+00 : f32
    %457 = vector.broadcast %cst_228 : f32 to vector<1x1xf32>
    %458 = arith.subf %457, %456 : vector<1x1xf32>
    %459 = arith.mulf %455, %458 : vector<1x1xf32>
    %460 = vector.broadcast %459 : vector<1x1xf32> to vector<1x128xf32>
    %461 = arith.mulf %450, %460 : vector<1x128xf32>
    %c6_229 = arith.constant 6 : index
    %c0_230 = arith.constant 0 : index
    %462 = vector.load %arg16[%c6_229, %c0_230] : memref<8x128xf32, #tpu.memory_space<vmem>>, vector<1x128xf32>
    tpu.vector_store %arg16[%c6_229, %c0_230], %461 {strides = array<i32>} : memref<8x128xf32, #tpu.memory_space<vmem>>, vector<1x128xf32>,
    %463 = vector.broadcast %459 : vector<1x1xf32> to vector<1x128xf32>
    %464 = arith.mulf %452, %463 : vector<1x128xf32>
    %465 = vector.extract_strided_slice %438 {offsets = [0, 128], sizes = [1, 128], strides = [1, 1]} : vector<1x256xf32> to vector<1x128xf32>
    %c0_231 = arith.constant 0 : index
    %c0_232 = arith.constant 0 : index
    %466 = vector.load %arg9[%c0_231, %c0_232] : memref<128x128xf32, #tpu.memory_space<vmem>>, vector<128x128xf32>
    %cst_233 = arith.constant dense<0.000000e+00> : vector<1x128xf32>
    %467 = tpu.matmul %464, %466, %cst_233 {dimension_numbers = #tpu.dot_dimension_numbers<[1], [0], [0], [1], [0, 0, 1, 1], [], []>} : vector<1x128xf32>, vector<128x128xf32>, vector<1x128xf32> -> vector<1x128xf32>
    %468 = arith.addf %465, %467 : vector<1x128xf32>
    %cst_234 = arith.constant 0.000000e+00 : f32
    %469 = vector.broadcast %cst_234 : f32 to vector<1x128xf32>
    %470 = arith.maximumf %468, %469 : vector<1x128xf32>
    %c0_235 = arith.constant 0 : index
    %c0_236 = arith.constant 0 : index
    %471 = vector.load %arg10[%c0_235, %c0_236] : memref<128x384xf32, #tpu.memory_space<vmem>>, vector<128x384xf32>
    %cst_237 = arith.constant dense<0.000000e+00> : vector<1x384xf32>
    %472 = tpu.matmul %470, %471, %cst_237 {dimension_numbers = #tpu.dot_dimension_numbers<[1], [0], [0], [1], [0, 0, 1, 1], [], []>} : vector<1x128xf32>, vector<128x384xf32>, vector<1x384xf32> -> vector<1x384xf32>
    %c0_238 = arith.constant 0 : index
    %c0_239 = arith.constant 0 : index
    %473 = vector.load %arg11[%c0_238, %c0_239] : memref<1x384xf32, #tpu.memory_space<vmem>>, vector<1x384xf32>
    %474 = arith.addf %472, %473 : vector<1x384xf32>
    %475 = vector.extract_strided_slice %442 {offsets = [0, 128], sizes = [1, 384], strides = [1, 1]} : vector<1x512xf32> to vector<1x384xf32>
    %476 = vector.extract_strided_slice %474 {offsets = [0, 0], sizes = [1, 128], strides = [1, 1]} : vector<1x384xf32> to vector<1x128xf32>
    %477 = vector.extract_strided_slice %475 {offsets = [0, 0], sizes = [1, 128], strides = [1, 1]} : vector<1x384xf32> to vector<1x128xf32>
    %478 = arith.addf %476, %477 : vector<1x128xf32>
    %479 = arith.negf %478 : vector<1x128xf32>
    %480 = math.exp %479 : vector<1x128xf32>
    %cst_240 = arith.constant 1.000000e+00 : f32
    %481 = vector.broadcast %cst_240 : f32 to vector<1x128xf32>
    %482 = arith.addf %481, %480 : vector<1x128xf32>
    %483 = arith.divf %481, %482 : vector<1x128xf32>
    %484 = vector.extract_strided_slice %474 {offsets = [0, 128], sizes = [1, 128], strides = [1, 1]} : vector<1x384xf32> to vector<1x128xf32>
    %485 = vector.extract_strided_slice %475 {offsets = [0, 128], sizes = [1, 128], strides = [1, 1]} : vector<1x384xf32> to vector<1x128xf32>
    %486 = arith.addf %484, %485 : vector<1x128xf32>
    %487 = arith.negf %486 : vector<1x128xf32>
    %488 = math.exp %487 : vector<1x128xf32>
    %cst_241 = arith.constant 1.000000e+00 : f32
    %489 = vector.broadcast %cst_241 : f32 to vector<1x128xf32>
    %490 = arith.addf %489, %488 : vector<1x128xf32>
    %491 = arith.divf %489, %490 : vector<1x128xf32>
    %492 = vector.extract_strided_slice %474 {offsets = [0, 256], sizes = [1, 128], strides = [1, 1]} : vector<1x384xf32> to vector<1x128xf32>
    %493 = vector.extract_strided_slice %475 {offsets = [0, 256], sizes = [1, 128], strides = [1, 1]} : vector<1x384xf32> to vector<1x128xf32>
    %494 = arith.mulf %483, %493 : vector<1x128xf32>
    %495 = arith.addf %492, %494 : vector<1x128xf32>
    %496 = math.tanh %495 : vector<1x128xf32>
    %cst_242 = arith.constant 1.000000e+00 : f32
    %497 = vector.broadcast %cst_242 : f32 to vector<1x128xf32>
    %498 = arith.subf %497, %491 : vector<1x128xf32>
    %499 = arith.mulf %498, %496 : vector<1x128xf32>
    %500 = arith.mulf %491, %436 : vector<1x128xf32>
    %501 = arith.addf %499, %500 : vector<1x128xf32>
    %c6_243 = arith.constant 6 : index
    %c0_244 = arith.constant 0 : index
    %502 = vector.load %arg19[%c6_243, %c0_244] : memref<8x128xf32, #tpu.memory_space<vmem>>, vector<1x128xf32>
    tpu.vector_store %arg19[%c6_243, %c0_244], %501 {strides = array<i32>} : memref<8x128xf32, #tpu.memory_space<vmem>>, vector<1x128xf32>,
    %c7_245 = arith.constant 7 : index
    %c0_246 = arith.constant 0 : index
    %503 = vector.load %arg18[%c7_245, %c0_246] : memref<8x256xf32, #tpu.memory_space<vmem>>, vector<1x256xf32>
    %c0_247 = arith.constant 0 : index
    %c0_248 = arith.constant 0 : index
    %504 = vector.load %arg7[%c0_247, %c0_248] : memref<128x512xf32, #tpu.memory_space<vmem>>, vector<128x512xf32>
    %cst_249 = arith.constant dense<0.000000e+00> : vector<1x512xf32>
    %505 = tpu.matmul %501, %504, %cst_249 {dimension_numbers = #tpu.dot_dimension_numbers<[1], [0], [0], [1], [0, 0, 1, 1], [], []>} : vector<1x128xf32>, vector<128x512xf32>, vector<1x512xf32> -> vector<1x512xf32>
    %c0_250 = arith.constant 0 : index
    %c0_251 = arith.constant 0 : index
    %506 = vector.load %arg8[%c0_250, %c0_251] : memref<1x512xf32, #tpu.memory_space<vmem>>, vector<1x512xf32>
    %507 = arith.addf %505, %506 : vector<1x512xf32>
    %508 = vector.extract_strided_slice %503 {offsets = [0, 0], sizes = [1, 128], strides = [1, 1]} : vector<1x256xf32> to vector<1x128xf32>
    %509 = vector.extract_strided_slice %507 {offsets = [0, 0], sizes = [1, 128], strides = [1, 1]} : vector<1x512xf32> to vector<1x128xf32>
    %510 = arith.addf %508, %509 : vector<1x128xf32>
    %cst_252 = arith.constant dense<0xFF800000> : vector<1xf32>
    %511 = vector.multi_reduction <maximumf>, %510, %cst_252 [1] : vector<1x128xf32> to vector<1xf32>
    %512 = vector.shape_cast %511 : vector<1xf32> to vector<1x1xf32>
    %513 = vector.broadcast %512 : vector<1x1xf32> to vector<1x128xf32>
    %514 = arith.subf %510, %513 : vector<1x128xf32>
    %515 = math.exp %514 : vector<1x128xf32>
    %c0_253 = arith.constant 0 : index
    %c0_254 = arith.constant 0 : index
    %516 = vector.load %arg4[%c0_253, %c0_254] : memref<128x128xf32, #tpu.memory_space<vmem>>, vector<128x128xf32>
    %cst_255 = arith.constant dense<0.000000e+00> : vector<1x128xf32>
    %517 = tpu.matmul %515, %516, %cst_255 {dimension_numbers = #tpu.dot_dimension_numbers<[1], [0], [0], [1], [0, 0, 1, 1], [], []>} : vector<1x128xf32>, vector<128x128xf32>, vector<1x128xf32> -> vector<1x128xf32>
    %cst_256 = arith.constant dense<0.000000e+00> : vector<1xf32>
    %518 = vector.multi_reduction <add>, %515, %cst_256 [1] : vector<1x128xf32> to vector<1xf32>
    %519 = vector.shape_cast %518 : vector<1xf32> to vector<1x1xf32>
    %520 = tpu.reciprocal %519 {approx = true} : vector<1x1xf32> -> vector<1x1xf32>
    %521 = arith.mulf %519, %520 : vector<1x1xf32>
    %cst_257 = arith.constant 2.000000e+00 : f32
    %522 = vector.broadcast %cst_257 : f32 to vector<1x1xf32>
    %523 = arith.subf %522, %521 : vector<1x1xf32>
    %524 = arith.mulf %520, %523 : vector<1x1xf32>
    %525 = vector.broadcast %524 : vector<1x1xf32> to vector<1x128xf32>
    %526 = arith.mulf %515, %525 : vector<1x128xf32>
    %c7_258 = arith.constant 7 : index
    %c0_259 = arith.constant 0 : index
    %527 = vector.load %arg16[%c7_258, %c0_259] : memref<8x128xf32, #tpu.memory_space<vmem>>, vector<1x128xf32>
    tpu.vector_store %arg16[%c7_258, %c0_259], %526 {strides = array<i32>} : memref<8x128xf32, #tpu.memory_space<vmem>>, vector<1x128xf32>,
    %528 = vector.broadcast %524 : vector<1x1xf32> to vector<1x128xf32>
    %529 = arith.mulf %517, %528 : vector<1x128xf32>
    %530 = vector.extract_strided_slice %503 {offsets = [0, 128], sizes = [1, 128], strides = [1, 1]} : vector<1x256xf32> to vector<1x128xf32>
    %c0_260 = arith.constant 0 : index
    %c0_261 = arith.constant 0 : index
    %531 = vector.load %arg9[%c0_260, %c0_261] : memref<128x128xf32, #tpu.memory_space<vmem>>, vector<128x128xf32>
    %cst_262 = arith.constant dense<0.000000e+00> : vector<1x128xf32>
    %532 = tpu.matmul %529, %531, %cst_262 {dimension_numbers = #tpu.dot_dimension_numbers<[1], [0], [0], [1], [0, 0, 1, 1], [], []>} : vector<1x128xf32>, vector<128x128xf32>, vector<1x128xf32> -> vector<1x128xf32>
    %533 = arith.addf %530, %532 : vector<1x128xf32>
    %cst_263 = arith.constant 0.000000e+00 : f32
    %534 = vector.broadcast %cst_263 : f32 to vector<1x128xf32>
    %535 = arith.maximumf %533, %534 : vector<1x128xf32>
    %c0_264 = arith.constant 0 : index
    %c0_265 = arith.constant 0 : index
    %536 = vector.load %arg10[%c0_264, %c0_265] : memref<128x384xf32, #tpu.memory_space<vmem>>, vector<128x384xf32>
    %cst_266 = arith.constant dense<0.000000e+00> : vector<1x384xf32>
    %537 = tpu.matmul %535, %536, %cst_266 {dimension_numbers = #tpu.dot_dimension_numbers<[1], [0], [0], [1], [0, 0, 1, 1], [], []>} : vector<1x128xf32>, vector<128x384xf32>, vector<1x384xf32> -> vector<1x384xf32>
    %c0_267 = arith.constant 0 : index
    %c0_268 = arith.constant 0 : index
    %538 = vector.load %arg11[%c0_267, %c0_268] : memref<1x384xf32, #tpu.memory_space<vmem>>, vector<1x384xf32>
    %539 = arith.addf %537, %538 : vector<1x384xf32>
    %540 = vector.extract_strided_slice %507 {offsets = [0, 128], sizes = [1, 384], strides = [1, 1]} : vector<1x512xf32> to vector<1x384xf32>
    %541 = vector.extract_strided_slice %539 {offsets = [0, 0], sizes = [1, 128], strides = [1, 1]} : vector<1x384xf32> to vector<1x128xf32>
    %542 = vector.extract_strided_slice %540 {offsets = [0, 0], sizes = [1, 128], strides = [1, 1]} : vector<1x384xf32> to vector<1x128xf32>
    %543 = arith.addf %541, %542 : vector<1x128xf32>
    %544 = arith.negf %543 : vector<1x128xf32>
    %545 = math.exp %544 : vector<1x128xf32>
    %cst_269 = arith.constant 1.000000e+00 : f32
    %546 = vector.broadcast %cst_269 : f32 to vector<1x128xf32>
    %547 = arith.addf %546, %545 : vector<1x128xf32>
    %548 = arith.divf %546, %547 : vector<1x128xf32>
    %549 = vector.extract_strided_slice %539 {offsets = [0, 128], sizes = [1, 128], strides = [1, 1]} : vector<1x384xf32> to vector<1x128xf32>
    %550 = vector.extract_strided_slice %540 {offsets = [0, 128], sizes = [1, 128], strides = [1, 1]} : vector<1x384xf32> to vector<1x128xf32>
    %551 = arith.addf %549, %550 : vector<1x128xf32>
    %552 = arith.negf %551 : vector<1x128xf32>
    %553 = math.exp %552 : vector<1x128xf32>
    %cst_270 = arith.constant 1.000000e+00 : f32
    %554 = vector.broadcast %cst_270 : f32 to vector<1x128xf32>
    %555 = arith.addf %554, %553 : vector<1x128xf32>
    %556 = arith.divf %554, %555 : vector<1x128xf32>
    %557 = vector.extract_strided_slice %539 {offsets = [0, 256], sizes = [1, 128], strides = [1, 1]} : vector<1x384xf32> to vector<1x128xf32>
    %558 = vector.extract_strided_slice %540 {offsets = [0, 256], sizes = [1, 128], strides = [1, 1]} : vector<1x384xf32> to vector<1x128xf32>
    %559 = arith.mulf %548, %558 : vector<1x128xf32>
    %560 = arith.addf %557, %559 : vector<1x128xf32>
    %561 = math.tanh %560 : vector<1x128xf32>
    %cst_271 = arith.constant 1.000000e+00 : f32
    %562 = vector.broadcast %cst_271 : f32 to vector<1x128xf32>
    %563 = arith.subf %562, %556 : vector<1x128xf32>
    %564 = arith.mulf %563, %561 : vector<1x128xf32>
    %565 = arith.mulf %556, %501 : vector<1x128xf32>
    %566 = arith.addf %564, %565 : vector<1x128xf32>
    %c7_272 = arith.constant 7 : index
    %c0_273 = arith.constant 0 : index
    %567 = vector.load %arg19[%c7_272, %c0_273] : memref<8x128xf32, #tpu.memory_space<vmem>>, vector<1x128xf32>
    tpu.vector_store %arg19[%c7_272, %c0_273], %566 {strides = array<i32>} : memref<8x128xf32, #tpu.memory_space<vmem>>, vector<1x128xf32>,
    %c0_274 = arith.constant 0 : index
    %c0_275 = arith.constant 0 : index
    %568 = vector.load %arg15[%c0_274, %c0_275] : memref<1x128xf32, #tpu.memory_space<vmem>>, vector<1x128xf32>
    tpu.vector_store %arg15[%c0_274, %c0_275], %566 {strides = array<i32>} : memref<1x128xf32, #tpu.memory_space<vmem>>, vector<1x128xf32>,
    %c0_276 = arith.constant 0 : index
    %c0_277 = arith.constant 0 : index
    %569 = vector.load %arg19[%c0_276, %c0_277] : memref<8x128xf32, #tpu.memory_space<vmem>>, vector<8x128xf32>
    %c0_278 = arith.constant 0 : index
    %c0_279 = arith.constant 0 : index
    %570 = vector.load %arg12[%c0_278, %c0_279] : memref<128x128xf32, #tpu.memory_space<vmem>>, vector<128x128xf32>
    %cst_280 = arith.constant dense<0.000000e+00> : vector<8x128xf32>
    %571 = tpu.matmul %569, %570, %cst_280 {dimension_numbers = #tpu.dot_dimension_numbers<[1], [0], [0], [1], [0, 0, 1, 1], [], []>} : vector<8x128xf32>, vector<128x128xf32>, vector<8x128xf32> -> vector<8x128xf32>
    %c0_281 = arith.constant 0 : index
    %c0_282 = arith.constant 0 : index
    %572 = vector.load %arg13[%c0_281, %c0_282] : memref<1x128xf32, #tpu.memory_space<vmem>>, vector<1x128xf32>
    %573 = vector.broadcast %572 : vector<1x128xf32> to vector<8x128xf32>
    %574 = arith.addf %571, %573 : vector<8x128xf32>
    %cst_283 = arith.constant dense<0xFF800000> : vector<8xf32>
    %575 = vector.multi_reduction <maximumf>, %574, %cst_283 [1] : vector<8x128xf32> to vector<8xf32>
    %576 = vector.shape_cast %575 : vector<8xf32> to vector<8x1xf32>
    %577 = vector.broadcast %576 : vector<8x1xf32> to vector<8x128xf32>
    %578 = arith.subf %574, %577 : vector<8x128xf32>
    %579 = math.exp %578 : vector<8x128xf32>
    %cst_284 = arith.constant dense<0.000000e+00> : vector<8xf32>
    %580 = vector.multi_reduction <add>, %579, %cst_284 [1] : vector<8x128xf32> to vector<8xf32>
    %581 = vector.shape_cast %580 : vector<8xf32> to vector<8x1xf32>
    %582 = math.log %581 : vector<8x1xf32>
    %583 = arith.addf %582, %576 : vector<8x1xf32>
    %584 = vector.broadcast %583 : vector<8x1xf32> to vector<8x128xf32>
    %585 = arith.subf %574, %584 : vector<8x128xf32>
    %c0_285 = arith.constant 0 : index
    %c0_286 = arith.constant 0 : index
    %586 = vector.load %arg14[%c0_285, %c0_286] : memref<8x128xf32, #tpu.memory_space<vmem>>, vector<8x128xf32>
    tpu.vector_store %arg14[%c0_285, %c0_286], %585 {strides = array<i32>} : memref<8x128xf32, #tpu.memory_space<vmem>>, vector<8x128xf32>,
    return
  }
  func.func @transform_0(%arg0: i32, %arg1: memref<8xi32, #tpu.memory_space<smem>>) -> (i32, i32, i32) {
    %c0_i32 = arith.constant 0 : i32
    %c0_i32_0 = arith.constant 0 : i32
    %c0_i32_1 = arith.constant 0 : i32
    %c0_i32_2 = arith.constant 0 : i32
    return %c0_i32, %c0_i32_0, %c0_i32_1 : i32, i32, i32
  }
  func.func @transform_1(%arg0: i32, %arg1: memref<8xi32, #tpu.memory_space<smem>>) -> (i32, i32) {
    %c0_i32 = arith.constant 0 : i32
    %c0_i32_0 = arith.constant 0 : i32
    %c0_i32_1 = arith.constant 0 : i32
    return %c0_i32, %c0_i32_0 : i32, i32
  }
  func.func @transform_2(%arg0: i32, %arg1: memref<8xi32, #tpu.memory_space<smem>>) -> (i32, i32) {
    %c0_i32 = arith.constant 0 : i32
    %c0_i32_0 = arith.constant 0 : i32
    %c0_i32_1 = arith.constant 0 : i32
    return %c0_i32, %c0_i32_0 : i32, i32
  }
  func.func @transform_3(%arg0: i32, %arg1: memref<8xi32, #tpu.memory_space<smem>>) -> (i32, i32) {
    %c0_i32 = arith.constant 0 : i32
    %c0_i32_0 = arith.constant 0 : i32
    %c0_i32_1 = arith.constant 0 : i32
    return %c0_i32, %c0_i32_0 : i32, i32
  }
  func.func @transform_4(%arg0: i32, %arg1: memref<8xi32, #tpu.memory_space<smem>>) -> (i32, i32) {
    %c0_i32 = arith.constant 0 : i32
    %c0_i32_0 = arith.constant 0 : i32
    %c0_i32_1 = arith.constant 0 : i32
    return %c0_i32, %c0_i32_0 : i32, i32
  }
  func.func @transform_5(%arg0: i32, %arg1: memref<8xi32, #tpu.memory_space<smem>>) -> (i32, i32) {
    %c0_i32 = arith.constant 0 : i32
    %c0_i32_0 = arith.constant 0 : i32
    %c0_i32_1 = arith.constant 0 : i32
    return %c0_i32, %c0_i32_0 : i32, i32
  }
  func.func @transform_6(%arg0: i32, %arg1: memref<8xi32, #tpu.memory_space<smem>>) -> (i32, i32) {
    %c0_i32 = arith.constant 0 : i32
    %c0_i32_0 = arith.constant 0 : i32
    %c0_i32_1 = arith.constant 0 : i32
    return %c0_i32, %c0_i32_0 : i32, i32
  }
  func.func @transform_7(%arg0: i32, %arg1: memref<8xi32, #tpu.memory_space<smem>>) -> (i32, i32) {
    %c0_i32 = arith.constant 0 : i32
    %c0_i32_0 = arith.constant 0 : i32
    %c0_i32_1 = arith.constant 0 : i32
    return %c0_i32, %c0_i32_0 : i32, i32
  }
  func.func @transform_8(%arg0: i32, %arg1: memref<8xi32, #tpu.memory_space<smem>>) -> (i32, i32) {
    %c0_i32 = arith.constant 0 : i32
    %c0_i32_0 = arith.constant 0 : i32
    %c0_i32_1 = arith.constant 0 : i32
    return %c0_i32, %c0_i32_0 : i32, i32
  }
  func.func @transform_9(%arg0: i32, %arg1: memref<8xi32, #tpu.memory_space<smem>>) -> (i32, i32) {
    %c0_i32 = arith.constant 0 : i32
    %c0_i32_0 = arith.constant 0 : i32
    %c0_i32_1 = arith.constant 0 : i32
    return %c0_i32, %c0_i32_0 : i32, i32
  }
  func.func @transform_10(%arg0: i32, %arg1: memref<8xi32, #tpu.memory_space<smem>>) -> (i32, i32) {
    %c0_i32 = arith.constant 0 : i32
    %c0_i32_0 = arith.constant 0 : i32
    %c0_i32_1 = arith.constant 0 : i32
    return %c0_i32, %c0_i32_0 : i32, i32
  }
  func.func @transform_11(%arg0: i32, %arg1: memref<8xi32, #tpu.memory_space<smem>>) -> (i32, i32) {
    %c0_i32 = arith.constant 0 : i32
    %c0_i32_0 = arith.constant 0 : i32
    %c0_i32_1 = arith.constant 0 : i32
    return %c0_i32, %c0_i32_0 : i32, i32
  }
  func.func @transform_12(%arg0: i32, %arg1: memref<8xi32, #tpu.memory_space<smem>>) -> (i32, i32) {
    %c0_i32 = arith.constant 0 : i32
    %c0_i32_0 = arith.constant 0 : i32
    %c0_i32_1 = arith.constant 0 : i32
    return %c0_i32, %c0_i32_0 : i32, i32
  }
  func.func @transform_13(%arg0: i32, %arg1: memref<8xi32, #tpu.memory_space<smem>>) -> (i32, i32) {
    %c0_i32 = arith.constant 0 : i32
    %c0_i32_0 = arith.constant 0 : i32
    %c0_i32_1 = arith.constant 0 : i32
    return %c0_i32, %c0_i32_0 : i32, i32
  }
  func.func @transform_14(%arg0: i32, %arg1: memref<8xi32, #tpu.memory_space<smem>>) -> (i32, i32) {
    %c0_i32 = arith.constant 0 : i32
    %c0_i32_0 = arith.constant 0 : i32
    %c0_i32_1 = arith.constant 0 : i32
    return %c0_i32, %c0_i32_0 : i32, i32
  }
}

</mosaic_0001>

<llo_original>
// kernel: tpu_custom_call.1
$region0: #{tpu_custom_call.1}
  #allocation0 [shape = 'u32[]', space=smem, size = 0x4, offset = 0x4, fixed_abs, tag = 'smem constant byte address 0x4 - core index']
  #allocation1 [shape = 'u32[144,128]{1,0:T(1,128)}', space=vmem, size = 0x12000, scoped, tag = 'internal scratch']
  #allocation2 [shape = 'f32[8,128]{1,0:T(8,128)}', space=vmem, size = 0x1000, scoped, tag = 'scratch operand']
  #allocation3 [shape = 'f32[8,256]{1,0:T(8,128)}', space=vmem, size = 0x2000, scoped, tag = 'scratch operand']
  #allocation4 [shape = 'f32[8,128]{1,0:T(8,128)}', space=vmem, size = 0x1000, scoped, tag = 'scratch operand']
  #allocation5 [shape = 's32[1]{0}', space=sflag, size = 0x4, scoped, tag = 'scoped memory for tpu_custom_call.1']
  #allocation6 [shape = 'u8[512]{0}', space=smem, size = 0x200, scoped, tag = 'prefetched SMEM operand 0']
  %s0 = inlined_call_operand.hbm [shape: s32[8], index: 0, kind: input, shape index: {}]
  %s1 = inlined_call_operand.hbm [shape: f32[50,1,128], index: 1, kind: input, shape index: {}]
  %s2 = inlined_call_operand.hbm [shape: f32[1,128], index: 2, kind: input, shape index: {}]
  %s3 = inlined_call_operand.hbm [shape: f32[128,128], index: 3, kind: input, shape index: {}]
  %s4 = inlined_call_operand.hbm [shape: f32[128,256], index: 4, kind: input, shape index: {}]
  %s5 = inlined_call_operand.vmem [shape: f32[1,256], index: 5, kind: input, shape index: {}]
  %s6 = inlined_call_operand.hbm [shape: f32[128,512], index: 6, kind: input, shape index: {}]
  %s7 = inlined_call_operand.vmem [shape: f32[1,512], index: 7, kind: input, shape index: {}]
  %s8 = inlined_call_operand.hbm [shape: f32[128,128], index: 8, kind: input, shape index: {}]
  %s9 = inlined_call_operand.hbm [shape: f32[128,384], index: 9, kind: input, shape index: {}]
  %s10 = inlined_call_operand.vmem [shape: f32[1,384], index: 10, kind: input, shape index: {}]
  %s11 = inlined_call_operand.hbm [shape: f32[128,128], index: 11, kind: input, shape index: {}]
  %s12 = inlined_call_operand.vmem [shape: f32[1,128], index: 12, kind: input, shape index: {}]
  %s13 = inlined_call_operand.hbm [shape: f32[8,128], index: 13, kind: output, shape index: {0}]
  %s14 = inlined_call_operand.hbm [shape: f32[1,128], index: 14, kind: output, shape index: {1}]
  %s15 = inlined_call_operand.hbm [shape: f32[8,128], index: 15, kind: output, shape index: {2}]
  %16 = xla_tuple %s13, %s14, %s15
  %s17 = sld [smem:[#allocation0]]
  $region106: #{tpu_custom_call.1} parent=0
    _
  %s19 = ssub.s32 1, %s17
  %s20 = scalar_select 0, %s19, %s17
  %22 = dma.hbm_to_smem %s0, 16, [#allocation6], [#allocation5]
  %23 = dma.done [#allocation5], 16
  %24 = sfence
  $region1: #{tpu_custom_call.1} parent=0
    #allocation7 [shape = 'u8[25600]{0}', space=vmem, size = 0x6400, scoped, tag = 'input window, operand 1, single buffered']
    #allocation8 [shape = 's32[1]{0}', space=sflag, size = 0x4, scoped, tag = 'scoped memory for tpu_custom_call.1']
    #allocation9 [shape = 's32[1]{0}', space=sflag, size = 0x4, scoped, tag = 'scoped memory for tpu_custom_call.1']
    #allocation10 [shape = 'u8[512]{0}', space=vmem, size = 0x400, scoped, tag = 'input window, operand 2, single buffered']
    #allocation11 [shape = 's32[1]{0}', space=sflag, size = 0x4, scoped, tag = 'scoped memory for tpu_custom_call.1']
    #allocation12 [shape = 'u8[65536]{0}', space=vmem, size = 0x10000, scoped, tag = 'input window, operand 3, single buffered']
    #allocation13 [shape = 'u8[131072]{0}', space=vmem, size = 0x20000, scoped, tag = 'input window, operand 4, single buffered']
    #allocation14 [shape = 's32[1]{0}', space=sflag, size = 0x4, scoped, tag = 'scoped memory for tpu_custom_call.1']
    #allocation15 [shape = 'u8[262144]{0}', space=vmem, size = 0x40000, scoped, tag = 'input window, operand 6, single buffered']
    #allocation16 [shape = 'u8[65536]{0}', space=vmem, size = 0x10000, scoped, tag = 'input window, operand 8, single buffered']
    #allocation17 [shape = 's32[1]{0}', space=sflag, size = 0x4, scoped, tag = 'scoped memory for tpu_custom_call.1']
    #allocation18 [shape = 'u8[196608]{0}', space=vmem, size = 0x30000, scoped, tag = 'input window, operand 9, single buffered']
    #allocation19 [shape = 'u8[65536]{0}', space=vmem, size = 0x10000, scoped, tag = 'input window, operand 11, single buffered']
    #allocation20 [shape = 's32[1]{0}', space=sflag, size = 0x4, scoped, tag = 'scoped memory for tpu_custom_call.1']
    #allocation21 [shape = 'u8[4096]{0}', space=vmem, size = 0x1000, scoped, tag = 'output window, operand 0, single buffered']
    #allocation22 [shape = 'u8[512]{0}', space=vmem, size = 0x400, scoped, tag = 'output window, operand 1, single buffered']
    #allocation23 [shape = 's32[1]{0}', space=sflag, size = 0x4, scoped, tag = 'scoped memory for tpu_custom_call.1']
    #allocation24 [shape = 'u8[4096]{0}', space=vmem, size = 0x1000, scoped, tag = 'output window, operand 2, single buffered']
    %25 = vsyncpa [#allocation8], 0
    %26 = vsyncpa [#allocation11], 0
    %27 = vsyncpa [#allocation14], 0
    %28 = vsyncpa [#allocation17], 0
    %29 = vsyncpa [#allocation20], 0
    %30 = vsyncpa [#allocation9], 0
    %31 = vsyncpa [#allocation23], 0
    // Predicated region
    $region2: #{tpu_custom_call.1} parent=1 // pred_check
      _
    $region3: #{tpu_custom_call.1} parent=1 // pred_check_branch
      %33 = sbr.rel (0) target = $region5
    $region4: #{tpu_custom_call.1} parent=1 // pred_region
      %s35 = ssub.s32 800, 800
      %36 = vsyncadd [#allocation8], %s35
      %s37 = sshll.u32 [#allocation7], 4
      %s38 = int_to_ptr.vmem [resolvable:$true] %s37
      %43 = dma.hbm_to_vmem [thread:$0]  %s1, 800, %s38, [#allocation8], 16, 16, 1
    $region5: #{tpu_custom_call.1} parent=1 // pred_fallthru
      _
    // Predicated region
    $region6: #{tpu_custom_call.1} parent=1 // pred_check
      _
    $region7: #{tpu_custom_call.1} parent=1 // pred_check_branch
      %45 = sbr.rel (0) target = $region9
    $region8: #{tpu_custom_call.1} parent=1 // pred_region
      %s47 = ssub.s32 16, 16
      %48 = vsyncadd [#allocation11], %s47
      %s50 = sshll.u32 [#allocation10], 4
      %s51 = int_to_ptr.vmem [resolvable:$true] %s50
      %53 = dma.hbm_to_vmem [thread:$0]  %s2, 16, %s51, [#allocation11]
    $region9: #{tpu_custom_call.1} parent=1 // pred_fallthru
      _
    // Predicated region
    $region10: #{tpu_custom_call.1} parent=1 // pred_check
      _
    $region11: #{tpu_custom_call.1} parent=1 // pred_check_branch
      %55 = sbr.rel (0) target = $region13
    $region12: #{tpu_custom_call.1} parent=1 // pred_region
      %s57 = ssub.s32 2048, 2048
      %58 = vsyncadd [#allocation11], %s57
      %s59 = sshll.u32 [#allocation12], 4
      %s60 = int_to_ptr.vmem [resolvable:$true] %s59
      %65 = dma.hbm_to_vmem [thread:$0]  %s3, 2048, %s60, [#allocation11], 128, 128, 8
    $region13: #{tpu_custom_call.1} parent=1 // pred_fallthru
      _
    // Predicated region
    $region14: #{tpu_custom_call.1} parent=1 // pred_check
      _
    $region15: #{tpu_custom_call.1} parent=1 // pred_check_branch
      %67 = sbr.rel (0) target = $region17
    $region16: #{tpu_custom_call.1} parent=1 // pred_region
      %s69 = ssub.s32 4096, 4096
      %70 = vsyncadd [#allocation14], %s69
      %s71 = sshll.u32 [#allocation13], 4
      %s72 = int_to_ptr.vmem [resolvable:$true] %s71
      %77 = dma.hbm_to_vmem [thread:$0]  %s4, 4096, %s72, [#allocation14], 256, 256, 16
    $region17: #{tpu_custom_call.1} parent=1 // pred_fallthru
      _
    // Predicated region
    $region18: #{tpu_custom_call.1} parent=1 // pred_check
      _
    $region19: #{tpu_custom_call.1} parent=1 // pred_check_branch
      %79 = sbr.rel (0) target = $region21
    $region20: #{tpu_custom_call.1} parent=1 // pred_region
      _
    $region21: #{tpu_custom_call.1} parent=1 // pred_fallthru
      _
    // Predicated region
    $region22: #{tpu_custom_call.1} parent=1 // pred_check
      _
    $region23: #{tpu_custom_call.1} parent=1 // pred_check_branch
      %81 = sbr.rel (0) target = $region25
    $region24: #{tpu_custom_call.1} parent=1 // pred_region
      %s83 = ssub.s32 8192, 8192
      %84 = vsyncadd [#allocation14], %s83
      %s85 = sshll.u32 [#allocation15], 4
      %s86 = int_to_ptr.vmem [resolvable:$true] %s85
      %91 = dma.hbm_to_vmem [thread:$0]  %s6, 8192, %s86, [#allocation14], 512, 512, 32
    $region25: #{tpu_custom_call.1} parent=1 // pred_fallthru
      _
    // Predicated region
    $region26: #{tpu_custom_call.1} parent=1 // pred_check
      _
    $region27: #{tpu_custom_call.1} parent=1 // pred_check_branch
      %93 = sbr.rel (0) target = $region29
    $region28: #{tpu_custom_call.1} parent=1 // pred_region
      _
    $region29: #{tpu_custom_call.1} parent=1 // pred_fallthru
      _
    // Predicated region
    $region30: #{tpu_custom_call.1} parent=1 // pred_check
      _
    $region31: #{tpu_custom_call.1} parent=1 // pred_check_branch
      %95 = sbr.rel (0) target = $region33
    $region32: #{tpu_custom_call.1} parent=1 // pred_region
      %s97 = ssub.s32 2048, 2048
      %98 = vsyncadd [#allocation17], %s97
      %s99 = sshll.u32 [#allocation16], 4
      %s100 = int_to_ptr.vmem [resolvable:$true] %s99
      %105 = dma.hbm_to_vmem [thread:$0]  %s8, 2048, %s100, [#allocation17], 128, 128, 8
    $region33: #{tpu_custom_call.1} parent=1 // pred_fallthru
      _
    // Predicated region
    $region34: #{tpu_custom_call.1} parent=1 // pred_check
      _
    $region35: #{tpu_custom_call.1} parent=1 // pred_check_branch
      %107 = sbr.rel (0) target = $region37
    $region36: #{tpu_custom_call.1} parent=1 // pred_region
      %s109 = ssub.s32 6144, 6144
      %110 = vsyncadd [#allocation17], %s109
      %s111 = sshll.u32 [#allocation18], 4
      %s112 = int_to_ptr.vmem [resolvable:$true] %s111
      %117 = dma.hbm_to_vmem [thread:$0]  %s9, 6144, %s112, [#allocation17], 384, 384, 24
    $region37: #{tpu_custom_call.1} parent=1 // pred_fallthru
      _
    // Predicated region
    $region38: #{tpu_custom_call.1} parent=1 // pred_check
      _
    $region39: #{tpu_custom_call.1} parent=1 // pred_check_branch
      %119 = sbr.rel (0) target = $region41
    $region40: #{tpu_custom_call.1} parent=1 // pred_region
      _
    $region41: #{tpu_custom_call.1} parent=1 // pred_fallthru
      _
    // Predicated region
    $region42: #{tpu_custom_call.1} parent=1 // pred_check
      _
    $region43: #{tpu_custom_call.1} parent=1 // pred_check_branch
      %121 = sbr.rel (0) target = $region45
    $region44: #{tpu_custom_call.1} parent=1 // pred_region
      %s123 = ssub.s32 2048, 2048
      %124 = vsyncadd [#allocation20], %s123
      %s125 = sshll.u32 [#allocation19], 4
      %s126 = int_to_ptr.vmem [resolvable:$true] %s125
      %131 = dma.hbm_to_vmem [thread:$0]  %s11, 2048, %s126, [#allocation20], 128, 128, 8
    $region45: #{tpu_custom_call.1} parent=1 // pred_fallthru
      _
    // Predicated region
    $region46: #{tpu_custom_call.1} parent=1 // pred_check
      _
    $region47: #{tpu_custom_call.1} parent=1 // pred_check_branch
      %133 = sbr.rel (0) target = $region49
    $region48: #{tpu_custom_call.1} parent=1 // pred_region
      _
    $region49: #{tpu_custom_call.1} parent=1 // pred_fallthru
      _
    // Predicated region
    $region50: #{tpu_custom_call.1} parent=1 // pred_check
      _
    $region51: #{tpu_custom_call.1} parent=1 // pred_check_branch
      %135 = sbr.rel (0) target = $region53
    $region52: #{tpu_custom_call.1} parent=1 // pred_region
      %136 = dma.done [#allocation8], 800
    $region53: #{tpu_custom_call.1} parent=1 // pred_fallthru
      _
    // Predicated region
    $region54: #{tpu_custom_call.1} parent=1 // pred_check
      _
    $region55: #{tpu_custom_call.1} parent=1 // pred_check_branch
      %138 = sbr.rel (0) target = $region57
    $region56: #{tpu_custom_call.1} parent=1 // pred_region
      %139 = dma.done [#allocation11], 16
    $region57: #{tpu_custom_call.1} parent=1 // pred_fallthru
      _
    // Predicated region
    $region58: #{tpu_custom_call.1} parent=1 // pred_check
      _
    $region59: #{tpu_custom_call.1} parent=1 // pred_check_branch
      %141 = sbr.rel (0) target = $region61
    $region60: #{tpu_custom_call.1} parent=1 // pred_region
      %142 = dma.done [#allocation11], 2048
    $region61: #{tpu_custom_call.1} parent=1 // pred_fallthru
      _
    // Predicated region
    $region62: #{tpu_custom_call.1} parent=1 // pred_check
      _
    $region63: #{tpu_custom_call.1} parent=1 // pred_check_branch
      %144 = sbr.rel (0) target = $region65
    $region64: #{tpu_custom_call.1} parent=1 // pred_region
      %145 = dma.done [#allocation14], 4096
    $region65: #{tpu_custom_call.1} parent=1 // pred_fallthru
      _
    // Predicated region
    $region66: #{tpu_custom_call.1} parent=1 // pred_check
      _
    $region67: #{tpu_custom_call.1} parent=1 // pred_check_branch
      %147 = sbr.rel (0) target = $region69
    $region68: #{tpu_custom_call.1} parent=1 // pred_region
      %148 = dma.done [#allocation14], 8192
    $region69: #{tpu_custom_call.1} parent=1 // pred_fallthru
      _
    // Predicated region
    $region70: #{tpu_custom_call.1} parent=1 // pred_check
      _
    $region71: #{tpu_custom_call.1} parent=1 // pred_check_branch
      %150 = sbr.rel (0) target = $region73
    $region72: #{tpu_custom_call.1} parent=1 // pred_region
      %151 = dma.done [#allocation17], 2048
    $region73: #{tpu_custom_call.1} parent=1 // pred_fallthru
      _
    // Predicated region
    $region74: #{tpu_custom_call.1} parent=1 // pred_check
      _
    $region75: #{tpu_custom_call.1} parent=1 // pred_check_branch
      %153 = sbr.rel (0) target = $region77
    $region76: #{tpu_custom_call.1} parent=1 // pred_region
      %154 = dma.done [#allocation17], 6144
    $region77: #{tpu_custom_call.1} parent=1 // pred_fallthru
      _
    // Predicated region
    $region78: #{tpu_custom_call.1} parent=1 // pred_check
      _
    $region79: #{tpu_custom_call.1} parent=1 // pred_check_branch
      %156 = sbr.rel (0) target = $region81
    $region80: #{tpu_custom_call.1} parent=1 // pred_region
      %157 = dma.done [#allocation20], 2048
    $region81: #{tpu_custom_call.1} parent=1 // pred_fallthru
      _
    %s158 = sld [smem:[#allocation6]]
    %s159 = scalar_lea.vmem [#allocation7], %s158
    %v160 = vld [vmem:[%s159] sm:$0x1]
    %161 = vst [vmem:[#allocation2] sm:$0x1] %v160
    %s162 = sld [smem:[#allocation6 + $0x1]]
    %s163 = scalar_lea.vmem [#allocation7], %s162
    %v164 = vld [vmem:[%s163] sm:$0x1]
    %165 = vst [vmem:[#allocation2 + $0x1] sm:$0x1] %v164
    %s166 = sld [smem:[#allocation6 + $0x2]]
    %s167 = scalar_lea.vmem [#allocation7], %s166
    %v168 = vld [vmem:[%s167] sm:$0x1]
    %169 = vst [vmem:[#allocation2 + $0x2] sm:$0x1] %v168
    %s170 = sld [smem:[#allocation6 + $0x3]]
    %s171 = scalar_lea.vmem [#allocation7], %s170
    %v172 = vld [vmem:[%s171] sm:$0x1]
    %173 = vst [vmem:[#allocation2 + $0x3] sm:$0x1] %v172
    %s174 = sld [smem:[#allocation6 + $0x4]]
    %s175 = scalar_lea.vmem [#allocation7], %s174
    %v176 = vld [vmem:[%s175] sm:$0x1]
    %177 = vst [vmem:[#allocation2 + $0x4] sm:$0x1] %v176
    %s178 = sld [smem:[#allocation6 + $0x5]]
    %s179 = scalar_lea.vmem [#allocation7], %s178
    %v180 = vld [vmem:[%s179] sm:$0x1]
    %181 = vst [vmem:[#allocation2 + $0x5] sm:$0x1] %v180
    %s182 = sld [smem:[#allocation6 + $0x6]]
    %s183 = scalar_lea.vmem [#allocation7], %s182
    %v184 = vld [vmem:[%s183] sm:$0x1]
    %185 = vst [vmem:[#allocation2 + $0x6] sm:$0x1] %v184
    %s186 = sld [smem:[#allocation6 + $0x7]]
    %s187 = scalar_lea.vmem [#allocation7], %s186
    %v188 = vld [vmem:[%s187] sm:$0x1]
    %189 = vst [vmem:[#allocation2 + $0x7] sm:$0x1] %v188
    %v190 = vld [vmem:[#allocation2] sm:$0xff]
    %v191 = vld [vmem:[#allocation13] sm:$0xff]
    %v192 = vld [vmem:[#allocation13 + $0x8] sm:$0xff]
    %v193 = vld [vmem:[#allocation13 + $0x10] sm:$0xff]
    %v194 = vld [vmem:[#allocation13 + $0x18] sm:$0xff]
    %v195 = vld [vmem:[#allocation13 + $0x20] sm:$0xff]
    %v196 = vld [vmem:[#allocation13 + $0x28] sm:$0xff]
    %v197 = vld [vmem:[#allocation13 + $0x30] sm:$0xff]
    %v198 = vld [vmem:[#allocation13 + $0x38] sm:$0xff]
    %v199 = vld [vmem:[#allocation13 + $0x40] sm:$0xff]
    %v200 = vld [vmem:[#allocation13 + $0x48] sm:$0xff]
    %v201 = vld [vmem:[#allocation13 + $0x50] sm:$0xff]
    %v202 = vld [vmem:[#allocation13 + $0x58] sm:$0xff]
    %v203 = vld [vmem:[#allocation13 + $0x60] sm:$0xff]
    %v204 = vld [vmem:[#allocation13 + $0x68] sm:$0xff]
    %v205 = vld [vmem:[#allocation13 + $0x70] sm:$0xff]
    %v206 = vld [vmem:[#allocation13 + $0x78] sm:$0xff]
    %v207 = vld [vmem:[#allocation13 + $0x80] sm:$0xff]
    %v208 = vld [vmem:[#allocation13 + $0x88] sm:$0xff]
    %v209 = vld [vmem:[#allocation13 + $0x90] sm:$0xff]
    %v210 = vld [vmem:[#allocation13 + $0x98] sm:$0xff]
    %v211 = vld [vmem:[#allocation13 + $0xa0] sm:$0xff]
    %v212 = vld [vmem:[#allocation13 + $0xa8] sm:$0xff]
    %v213 = vld [vmem:[#allocation13 + $0xb0] sm:$0xff]
    %v214 = vld [vmem:[#allocation13 + $0xb8] sm:$0xff]
    %v215 = vld [vmem:[#allocation13 + $0xc0] sm:$0xff]
    %v216 = vld [vmem:[#allocation13 + $0xc8] sm:$0xff]
    %v217 = vld [vmem:[#allocation13 + $0xd0] sm:$0xff]
    %v218 = vld [vmem:[#allocation13 + $0xd8] sm:$0xff]
    %v219 = vld [vmem:[#allocation13 + $0xe0] sm:$0xff]
    %v220 = vld [vmem:[#allocation13 + $0xe8] sm:$0xff]
    %v221 = vld [vmem:[#allocation13 + $0xf0] sm:$0xff]
    %v222 = vld [vmem:[#allocation13 + $0xf8] sm:$0xff]
    %v223 = vld [vmem:[%s5] sm:$0x3]
    %v225 = vlaneseq
    %v226 = vshrl.u32 %v225, 7
    %v227 = vsub.s32 0, %v226
    %v228 = vrot.slane %v223, %v227
    %v229 = vlaneseq
    %v230 = vshrl.u32 %v229, 7
    %v231 = vsub.s32 1, %v230
    %v232 = vrot.slane %v223, %v231
    %235 = vmatprep.subr.mxu0 %v192
    %236 = vmatpush1.msra.mxu0 %v191
    %237 = vmatprep.subr.mxu0 %v194
    %238 = vmatpush1.msra.mxu0 %v193
    %239 = vmatprep.subr.mxu0 %v196
    %240 = vmatpush1.msra.mxu0 %v195
    %241 = vmatprep.subr.mxu0 %v198
    %242 = vmatpush1.msra.mxu0 %v197
    %243 = vmatprep.subr.mxu0 %v200
    %244 = vmatpush1.msra.mxu0 %v199
    %245 = vmatprep.subr.mxu0 %v202
    %246 = vmatpush1.msra.mxu0 %v201
    %247 = vmatprep.subr.mxu0 %v204
    %248 = vmatpush1.msra.mxu0 %v203
    %249 = vmatprep.subr.mxu0 %v206
    %250 = vmatpush1.msra.mxu0 %v205
    %251 = vmatprep.subr.mxu0 %v208
    %252 = vmatpush1.msra.mxu0 %v207
    %253 = vmatprep.subr.mxu0 %v210
    %254 = vmatpush1.msra.mxu0 %v209
    %255 = vmatprep.subr.mxu0 %v212
    %256 = vmatpush1.msra.mxu0 %v211
    %257 = vmatprep.subr.mxu0 %v214
    %258 = vmatpush1.msra.mxu0 %v213
    %259 = vmatprep.subr.mxu0 %v216
    %260 = vmatpush1.msra.mxu0 %v215
    %261 = vmatprep.subr.mxu0 %v218
    %262 = vmatpush1.msra.mxu0 %v217
    %263 = vmatprep.subr.mxu0 %v220
    %264 = vmatpush1.msra.mxu0 %v219
    %265 = vmatprep.subr.mxu0 %v222
    %266 = vmatpush1.msra.mxu0 %v221
    %267 = vmatprep.subr.mxu0 0.0
    %268 = vmatpush1.msra.mxu0 0.0
    %269 = vmatprep.subr.mxu0 0.0
    %270 = vmatpush1.msra.mxu0 0.0
    %271 = vmatprep.subr.mxu0 0.0
    %272 = vmatpush1.msra.mxu0 0.0
    %273 = vmatprep.subr.mxu0 0.0
    %274 = vmatpush1.msra.mxu0 0.0
    %275 = vmatprep.subr.mxu0 0.0
    %276 = vmatpush1.msra.mxu0 0.0
    %277 = vmatprep.subr.mxu0 0.0
    %278 = vmatpush1.msra.mxu0 0.0
    %279 = vmatprep.subr.mxu0 0.0
    %280 = vmatpush1.msra.mxu0 0.0
    %281 = vmatprep.subr.mxu0 0.0
    %282 = vmatpush1.msra.mxu0 0.0
    %283 = vmatprep.subr.mxu0 0.0
    %284 = vmatpush1.msra.mxu0 0.0
    %285 = vmatprep.subr.mxu0 0.0
    %286 = vmatpush1.msra.mxu0 0.0
    %287 = vmatprep.subr.mxu0 0.0
    %288 = vmatpush1.msra.mxu0 0.0
    %289 = vmatprep.subr.mxu0 0.0
    %290 = vmatpush1.msra.mxu0 0.0
    %291 = vmatprep.subr.mxu0 0.0
    %292 = vmatpush1.msra.mxu0 0.0
    %293 = vmatprep.subr.mxu0 0.0
    %294 = vmatpush1.msra.mxu0 0.0
    %295 = vmatprep.subr.mxu0 0.0
    %296 = vmatpush1.msra.mxu0 0.0
    %297 = vmatprep.subr.mxu0 0.0
    %298 = vmatpush1.msra.mxu0 0.0
    %299 = vmatprep.mubr.f32.mxu0 0.0
    %300 = vmatmul.mubr.f32.gmra.mrb[0].mxu0 %v190
    %v301 = vpop.f32.mrb[0].mxu0
    %v302 = vadd.f32 %v228, %v301
    %v303 = vpop.f32.mrb[0].mxu0
    %v304 = vadd.f32 %v232, %v303
    %305 = vdwg.mxu0
    %306 = vst [vmem:[#allocation3] sm:$0xff] %v302
    %307 = vst [vmem:[#allocation3 + $0x8] sm:$0xff] %v304
    %v308 = vld [vmem:[#allocation10] sm:$0x1]
    %v309 = vld [vmem:[#allocation3] ss:$8 sm:$0x3]
    %v310 = vld [vmem:[#allocation15] sm:$0xff]
    %v311 = vld [vmem:[#allocation15 + $0x8] sm:$0xff]
    %v312 = vld [vmem:[#allocation15 + $0x10] sm:$0xff]
    %v313 = vld [vmem:[#allocation15 + $0x18] sm:$0xff]
    %v314 = vld [vmem:[#allocation15 + $0x20] sm:$0xff]
    %v315 = vld [vmem:[#allocation15 + $0x28] sm:$0xff]
    %v316 = vld [vmem:[#allocation15 + $0x30] sm:$0xff]
    %v317 = vld [vmem:[#allocation15 + $0x38] sm:$0xff]
    %v318 = vld [vmem:[#allocation15 + $0x40] sm:$0xff]
    %v319 = vld [vmem:[#allocation15 + $0x48] sm:$0xff]
    %v320 = vld [vmem:[#allocation15 + $0x50] sm:$0xff]
    %v321 = vld [vmem:[#allocation15 + $0x58] sm:$0xff]
    %v322 = vld [vmem:[#allocation15 + $0x60] sm:$0xff]
    %v323 = vld [vmem:[#allocation15 + $0x68] sm:$0xff]
    %v324 = vld [vmem:[#allocation15 + $0x70] sm:$0xff]
    %v325 = vld [vmem:[#allocation15 + $0x78] sm:$0xff]
    %v326 = vld [vmem:[#allocation15 + $0x80] sm:$0xff]
    %v327 = vld [vmem:[#allocation15 + $0x88] sm:$0xff]
    %v328 = vld [vmem:[#allocation15 + $0x90] sm:$0xff]
    %v329 = vld [vmem:[#allocation15 + $0x98] sm:$0xff]
    %v330 = vld [vmem:[#allocation15 + $0xa0] sm:$0xff]
    %v331 = vld [vmem:[#allocation15 + $0xa8] sm:$0xff]
    %v332 = vld [vmem:[#allocation15 + $0xb0] sm:$0xff]
    %v333 = vld [vmem:[#allocation15 + $0xb8] sm:$0xff]
    %v334 = vld [vmem:[#allocation15 + $0xc0] sm:$0xff]
    %v335 = vld [vmem:[#allocation15 + $0xc8] sm:$0xff]
    %v336 = vld [vmem:[#allocation15 + $0xd0] sm:$0xff]
    %v337 = vld [vmem:[#allocation15 + $0xd8] sm:$0xff]
    %v338 = vld [vmem:[#allocation15 + $0xe0] sm:$0xff]
    %v339 = vld [vmem:[#allocation15 + $0xe8] sm:$0xff]
    %v340 = vld [vmem:[#allocation15 + $0xf0] sm:$0xff]
    %v341 = vld [vmem:[#allocation15 + $0xf8] sm:$0xff]
    %v342 = vld [vmem:[#allocation15 + $0x100] sm:$0xff]
    %v343 = vld [vmem:[#allocation15 + $0x108] sm:$0xff]
    %v344 = vld [vmem:[#allocation15 + $0x110] sm:$0xff]
    %v345 = vld [vmem:[#allocation15 + $0x118] sm:$0xff]
    %v346 = vld [vmem:[#allocation15 + $0x120] sm:$0xff]
    %v347 = vld [vmem:[#allocation15 + $0x128] sm:$0xff]
    %v348 = vld [vmem:[#allocation15 + $0x130] sm:$0xff]
    %v349 = vld [vmem:[#allocation15 + $0x138] sm:$0xff]
    %v350 = vld [vmem:[#allocation15 + $0x140] sm:$0xff]
    %v351 = vld [vmem:[#allocation15 + $0x148] sm:$0xff]
    %v352 = vld [vmem:[#allocation15 + $0x150] sm:$0xff]
    %v353 = vld [vmem:[#allocation15 + $0x158] sm:$0xff]
    %v354 = vld [vmem:[#allocation15 + $0x160] sm:$0xff]
    %v355 = vld [vmem:[#allocation15 + $0x168] sm:$0xff]
    %v356 = vld [vmem:[#allocation15 + $0x170] sm:$0xff]
    %v357 = vld [vmem:[#allocation15 + $0x178] sm:$0xff]
    %v358 = vld [vmem:[#allocation15 + $0x180] sm:$0xff]
    %v359 = vld [vmem:[#allocation15 + $0x188] sm:$0xff]
    %v360 = vld [vmem:[#allocation15 + $0x190] sm:$0xff]
    %v361 = vld [vmem:[#allocation15 + $0x198] sm:$0xff]
    %v362 = vld [vmem:[#allocation15 + $0x1a0] sm:$0xff]
    %v363 = vld [vmem:[#allocation15 + $0x1a8] sm:$0xff]
    %v364 = vld [vmem:[#allocation15 + $0x1b0] sm:$0xff]
    %v365 = vld [vmem:[#allocation15 + $0x1b8] sm:$0xff]
    %v366 = vld [vmem:[#allocation15 + $0x1c0] sm:$0xff]
    %v367 = vld [vmem:[#allocation15 + $0x1c8] sm:$0xff]
    %v368 = vld [vmem:[#allocation15 + $0x1d0] sm:$0xff]
    %v369 = vld [vmem:[#allocation15 + $0x1d8] sm:$0xff]
    %v370 = vld [vmem:[#allocation15 + $0x1e0] sm:$0xff]
    %v371 = vld [vmem:[#allocation15 + $0x1e8] sm:$0xff]
    %v372 = vld [vmem:[#allocation15 + $0x1f0] sm:$0xff]
    %v373 = vld [vmem:[#allocation15 + $0x1f8] sm:$0xff]
    %v374 = vld [vmem:[%s7] sm:$0xf]
    %v376 = vlaneseq
    %v377 = vshrl.u32 %v376, 7
    %v378 = vsub.s32 0, %v377
    %v379 = vrot.slane %v374, %v378
    %v380 = vlaneseq
    %v381 = vshrl.u32 %v380, 7
    %v382 = vsub.s32 1, %v381
    %v383 = vrot.slane %v374, %v382
    %v384 = vlaneseq
    %v385 = vshrl.u32 %v384, 7
    %v386 = vsub.s32 2, %v385
    %v387 = vrot.slane %v374, %v386
    %v388 = vlaneseq
    %v389 = vshrl.u32 %v388, 7
    %v390 = vsub.s32 3, %v389
    %v391 = vrot.slane %v374, %v390
    %396 = vmatprep.subr.mxu0 %v311
    %397 = vmatpush1.msra.mxu0 %v310
    %398 = vmatprep.subr.mxu0 %v315
    %399 = vmatpush1.msra.mxu0 %v314
    %400 = vmatprep.subr.mxu0 %v319
    %401 = vmatpush1.msra.mxu0 %v318
    %402 = vmatprep.subr.mxu0 %v323
    %403 = vmatpush1.msra.mxu0 %v322
    %404 = vmatprep.subr.mxu0 %v327
    %405 = vmatpush1.msra.mxu0 %v326
    %406 = vmatprep.subr.mxu0 %v331
    %407 = vmatpush1.msra.mxu0 %v330
    %408 = vmatprep.subr.mxu0 %v335
    %409 = vmatpush1.msra.mxu0 %v334
    %410 = vmatprep.subr.mxu0 %v339
    %411 = vmatpush1.msra.mxu0 %v338
    %412 = vmatprep.subr.mxu0 %v343
    %413 = vmatpush1.msra.mxu0 %v342
    %414 = vmatprep.subr.mxu0 %v347
    %415 = vmatpush1.msra.mxu0 %v346
    %416 = vmatprep.subr.mxu0 %v351
    %417 = vmatpush1.msra.mxu0 %v350
    %418 = vmatprep.subr.mxu0 %v355
    %419 = vmatpush1.msra.mxu0 %v354
    %420 = vmatprep.subr.mxu0 %v359
    %421 = vmatpush1.msra.mxu0 %v358
    %422 = vmatprep.subr.mxu0 %v363
    %423 = vmatpush1.msra.mxu0 %v362
    %424 = vmatprep.subr.mxu0 %v367
    %425 = vmatpush1.msra.mxu0 %v366
    %426 = vmatprep.subr.mxu0 %v371
    %427 = vmatpush1.msra.mxu0 %v370
    %428 = vmatprep.subr.mxu0 0.0
    %429 = vmatpush1.msra.mxu0 0.0
    %430 = vmatprep.subr.mxu0 0.0
    %431 = vmatpush1.msra.mxu0 0.0
    %432 = vmatprep.subr.mxu0 0.0
    %433 = vmatpush1.msra.mxu0 0.0
    %434 = vmatprep.subr.mxu0 0.0
    %435 = vmatpush1.msra.mxu0 0.0
    %436 = vmatprep.subr.mxu0 0.0
    %437 = vmatpush1.msra.mxu0 0.0
    %438 = vmatprep.subr.mxu0 0.0
    %439 = vmatpush1.msra.mxu0 0.0
    %440 = vmatprep.subr.mxu0 0.0
    %441 = vmatpush1.msra.mxu0 0.0
    %442 = vmatprep.subr.mxu0 0.0
    %443 = vmatpush1.msra.mxu0 0.0
    %444 = vmatprep.subr.mxu0 0.0
    %445 = vmatpush1.msra.mxu0 0.0
    %446 = vmatprep.subr.mxu0 0.0
    %447 = vmatpush1.msra.mxu0 0.0
    %448 = vmatprep.subr.mxu0 0.0
    %449 = vmatpush1.msra.mxu0 0.0
    %450 = vmatprep.subr.mxu0 0.0
    %451 = vmatpush1.msra.mxu0 0.0
    %452 = vmatprep.subr.mxu0 0.0
    %453 = vmatpush1.msra.mxu0 0.0
    %454 = vmatprep.subr.mxu0 0.0
    %455 = vmatpush1.msra.mxu0 0.0
    %456 = vmatprep.subr.mxu0 0.0
    %457 = vmatpush1.msra.mxu0 0.0
    %458 = vmatprep.subr.mxu0 0.0
    %459 = vmatpush1.msra.mxu0 0.0
    %460 = vmatprep.mubr.f32.mxu0 0.0
    %461 = vmatmul.mubr.f32.gmra.mrb[0].mxu0 %v308
    %v462 = vpop.f32.mrb[0].mxu0
    %v463 = vadd.f32 %v379, %v462
    %v464 = vpop.f32.mrb[0].mxu0
    %v465 = vadd.f32 %v383, %v464
    %466 = vdwg.mxu0
    %467 = vmatprep.subr.mxu0 %v313
    %468 = vmatpush1.msra.mxu0 %v312
    %469 = vmatprep.subr.mxu0 %v317
    %470 = vmatpush1.msra.mxu0 %v316
    %471 = vmatprep.subr.mxu0 %v321
    %472 = vmatpush1.msra.mxu0 %v320
    %473 = vmatprep.subr.mxu0 %v325
    %474 = vmatpush1.msra.mxu0 %v324
    %475 = vmatprep.subr.mxu0 %v329
    %476 = vmatpush1.msra.mxu0 %v328
    %477 = vmatprep.subr.mxu0 %v333
    %478 = vmatpush1.msra.mxu0 %v332
    %479 = vmatprep.subr.mxu0 %v337
    %480 = vmatpush1.msra.mxu0 %v336
    %481 = vmatprep.subr.mxu0 %v341
    %482 = vmatpush1.msra.mxu0 %v340
    %483 = vmatprep.subr.mxu0 %v345
    %484 = vmatpush1.msra.mxu0 %v344
    %485 = vmatprep.subr.mxu0 %v349
    %486 = vmatpush1.msra.mxu0 %v348
    %487 = vmatprep.subr.mxu0 %v353
    %488 = vmatpush1.msra.mxu0 %v352
    %489 = vmatprep.subr.mxu0 %v357
    %490 = vmatpush1.msra.mxu0 %v356
    %491 = vmatprep.subr.mxu0 %v361
    %492 = vmatpush1.msra.mxu0 %v360
    %493 = vmatprep.subr.mxu0 %v365
    %494 = vmatpush1.msra.mxu0 %v364
    %495 = vmatprep.subr.mxu0 %v369
    %496 = vmatpush1.msra.mxu0 %v368
    %497 = vmatprep.subr.mxu0 %v373
    %498 = vmatpush1.msra.mxu0 %v372
    %499 = vmatprep.subr.mxu0 0.0
    %500 = vmatpush1.msra.mxu0 0.0
    %501 = vmatprep.subr.mxu0 0.0
    %502 = vmatpush1.msra.mxu0 0.0
    %503 = vmatprep.subr.mxu0 0.0
    %504 = vmatpush1.msra.mxu0 0.0
    %505 = vmatprep.subr.mxu0 0.0
    %506 = vmatpush1.msra.mxu0 0.0
    %507 = vmatprep.subr.mxu0 0.0
    %508 = vmatpush1.msra.mxu0 0.0
    %509 = vmatprep.subr.mxu0 0.0
    %510 = vmatpush1.msra.mxu0 0.0
    %511 = vmatprep.subr.mxu0 0.0
    %512 = vmatpush1.msra.mxu0 0.0
    %513 = vmatprep.subr.mxu0 0.0
    %514 = vmatpush1.msra.mxu0 0.0
    %515 = vmatprep.subr.mxu0 0.0
    %516 = vmatpush1.msra.mxu0 0.0
    %517 = vmatprep.subr.mxu0 0.0
    %518 = vmatpush1.msra.mxu0 0.0
    %519 = vmatprep.subr.mxu0 0.0
    %520 = vmatpush1.msra.mxu0 0.0
    %521 = vmatprep.subr.mxu0 0.0
    %522 = vmatpush1.msra.mxu0 0.0
    %523 = vmatprep.subr.mxu0 0.0
    %524 = vmatpush1.msra.mxu0 0.0
    %525 = vmatprep.subr.mxu0 0.0
    %526 = vmatpush1.msra.mxu0 0.0
    %527 = vmatprep.subr.mxu0 0.0
    %528 = vmatpush1.msra.mxu0 0.0
    %529 = vmatprep.subr.mxu0 0.0
    %530 = vmatpush1.msra.mxu0 0.0
    %531 = vmatprep.mubr.f32.mxu0 0.0
    %532 = vmatmul.mubr.f32.gmra.mrb[0].mxu0 %v308
    %v533 = vpop.f32.mrb[0].mxu0
    %v534 = vadd.f32 %v387, %v533
    %v535 = vpop.f32.mrb[0].mxu0
    %v536 = vadd.f32 %v391, %v535
    %537 = vdwg.mxu0
    %v538 = vadd.f32 %v309, %v463
    %vm539 = vcmask 1040384
    %v540 = vsel %vm539, %v538, -inf
    %541 = vmax.xlane.f32.xlu0 %v540
    %v542 = vpop.xlane.xlu0 %541
    %v543 = vsub.f32 %v538, %v542
    %v544 = vmul.f32 %v543, 1.442695
    %v545 = vpow.pop %v544
    %v546 = vld [vmem:[#allocation12] sm:$0xff]
    %v547 = vld [vmem:[#allocation12 + $0x8] sm:$0xff]
    %v548 = vld [vmem:[#allocation12 + $0x10] sm:$0xff]
    %v549 = vld [vmem:[#allocation12 + $0x18] sm:$0xff]
    %v550 = vld [vmem:[#allocation12 + $0x20] sm:$0xff]
    %v551 = vld [vmem:[#allocation12 + $0x28] sm:$0xff]
    %v552 = vld [vmem:[#allocation12 + $0x30] sm:$0xff]
    %v553 = vld [vmem:[#allocation12 + $0x38] sm:$0xff]
    %v554 = vld [vmem:[#allocation12 + $0x40] sm:$0xff]
    %v555 = vld [vmem:[#allocation12 + $0x48] sm:$0xff]
    %v556 = vld [vmem:[#allocation12 + $0x50] sm:$0xff]
    %v557 = vld [vmem:[#allocation12 + $0x58] sm:$0xff]
    %v558 = vld [vmem:[#allocation12 + $0x60] sm:$0xff]
    %v559 = vld [vmem:[#allocation12 + $0x68] sm:$0xff]
    %v560 = vld [vmem:[#allocation12 + $0x70] sm:$0xff]
    %v561 = vld [vmem:[#allocation12 + $0x78] sm:$0xff]
    %562 = vmatprep.subr.mxu0 0.0
    %563 = vmatpush1.msra.mxu0 %v546
    %564 = vmatprep.subr.mxu0 0.0
    %565 = vmatpush1.msra.mxu0 %v547
    %566 = vmatprep.subr.mxu0 0.0
    %567 = vmatpush1.msra.mxu0 %v548
    %568 = vmatprep.subr.mxu0 0.0
    %569 = vmatpush1.msra.mxu0 %v549
    %570 = vmatprep.subr.mxu0 0.0
    %571 = vmatpush1.msra.mxu0 %v550
    %572 = vmatprep.subr.mxu0 0.0
    %573 = vmatpush1.msra.mxu0 %v551
    %574 = vmatprep.subr.mxu0 0.0
    %575 = vmatpush1.msra.mxu0 %v552
    %576 = vmatprep.subr.mxu0 0.0
    %577 = vmatpush1.msra.mxu0 %v553
    %578 = vmatprep.subr.mxu0 0.0
    %579 = vmatpush1.msra.mxu0 %v554
    %580 = vmatprep.subr.mxu0 0.0
    %581 = vmatpush1.msra.mxu0 %v555
    %582 = vmatprep.subr.mxu0 0.0
    %583 = vmatpush1.msra.mxu0 %v556
    %584 = vmatprep.subr.mxu0 0.0
    %585 = vmatpush1.msra.mxu0 %v557
    %586 = vmatprep.subr.mxu0 0.0
    %587 = vmatpush1.msra.mxu0 %v558
    %588 = vmatprep.subr.mxu0 0.0
    %589 = vmatpush1.msra.mxu0 %v559
    %590 = vmatprep.subr.mxu0 0.0
    %591 = vmatpush1.msra.mxu0 %v560
    %592 = vmatprep.subr.mxu0 0.0
    %593 = vmatpush1.msra.mxu0 %v561
    %594 = vmatprep.subr.mxu0 0.0
    %595 = vmatpush1.msra.mxu0 0.0
    %596 = vmatprep.subr.mxu0 0.0
    %597 = vmatpush1.msra.mxu0 0.0
    %598 = vmatprep.subr.mxu0 0.0
    %599 = vmatpush1.msra.mxu0 0.0
    %600 = vmatprep.subr.mxu0 0.0
    %601 = vmatpush1.msra.mxu0 0.0
    %602 = vmatprep.subr.mxu0 0.0
    %603 = vmatpush1.msra.mxu0 0.0
    %604 = vmatprep.subr.mxu0 0.0
    %605 = vmatpush1.msra.mxu0 0.0
    %606 = vmatprep.subr.mxu0 0.0
    %607 = vmatpush1.msra.mxu0 0.0
    %608 = vmatprep.subr.mxu0 0.0
    %609 = vmatpush1.msra.mxu0 0.0
    %610 = vmatprep.subr.mxu0 0.0
    %611 = vmatpush1.msra.mxu0 0.0
    %612 = vmatprep.subr.mxu0 0.0
    %613 = vmatpush1.msra.mxu0 0.0
    %614 = vmatprep.subr.mxu0 0.0
    %615 = vmatpush1.msra.mxu0 0.0
    %616 = vmatprep.subr.mxu0 0.0
    %617 = vmatpush1.msra.mxu0 0.0
    %618 = vmatprep.subr.mxu0 0.0
    %619 = vmatpush1.msra.mxu0 0.0
    %620 = vmatprep.subr.mxu0 0.0
    %621 = vmatpush1.msra.mxu0 0.0
    %622 = vmatprep.subr.mxu0 0.0
    %623 = vmatpush1.msra.mxu0 0.0
    %624 = vmatprep.subr.mxu0 0.0
    %625 = vmatpush1.msra.mxu0 0.0
    %626 = vmatprep.mubr.f32.mxu0 0.0
    %627 = vmatmul.mubr.f32.gmra.mrb[0].mxu0 %v545
    %v628 = vpop.f32.mrb[0].mxu0
    %v629 = vadd.f32 0.0, %v628
    %v630 = vpop.f32.mrb[0].mxu0
    %631 = vdwg.mxu0
    %v632 = vsel %vm539, %v545, 0.0
    %633 = vadd.xlane.f32.xlu0 %v632
    %v634 = vpop.xlane.xlu0 %633
    %v635 = vrcp.pop %v634
    %v636 = vmul.f32 %v634, %v635
    %v637 = vsub.f32 2.0, %v636
    %v638 = vmul.f32 %v635, %v637
    %v639 = vmul.f32 %v545, %v638
    %640 = vst [vmem:[#allocation24] sm:$0x1] %v639
    %v641 = vmul.f32 %v629, %v638
    %v642 = vld [vmem:[#allocation16] sm:$0xff]
    %v643 = vld [vmem:[#allocation16 + $0x8] sm:$0xff]
    %v644 = vld [vmem:[#allocation16 + $0x10] sm:$0xff]
    %v645 = vld [vmem:[#allocation16 + $0x18] sm:$0xff]
    %v646 = vld [vmem:[#allocation16 + $0x20] sm:$0xff]
    %v647 = vld [vmem:[#allocation16 + $0x28] sm:$0xff]
    %v648 = vld [vmem:[#allocation16 + $0x30] sm:$0xff]
    %v649 = vld [vmem:[#allocation16 + $0x38] sm:$0xff]
    %v650 = vld [vmem:[#allocation16 + $0x40] sm:$0xff]
    %v651 = vld [vmem:[#allocation16 + $0x48] sm:$0xff]
    %v652 = vld [vmem:[#allocation16 + $0x50] sm:$0xff]
    %v653 = vld [vmem:[#allocation16 + $0x58] sm:$0xff]
    %v654 = vld [vmem:[#allocation16 + $0x60] sm:$0xff]
    %v655 = vld [vmem:[#allocation16 + $0x68] sm:$0xff]
    %v656 = vld [vmem:[#allocation16 + $0x70] sm:$0xff]
    %v657 = vld [vmem:[#allocation16 + $0x78] sm:$0xff]
    %658 = vmatprep.subr.mxu0 0.0
    %659 = vmatpush1.msra.mxu0 %v642
    %660 = vmatprep.subr.mxu0 0.0
    %661 = vmatpush1.msra.mxu0 %v643
    %662 = vmatprep.subr.mxu0 0.0
    %663 = vmatpush1.msra.mxu0 %v644
    %664 = vmatprep.subr.mxu0 0.0
    %665 = vmatpush1.msra.mxu0 %v645
    %666 = vmatprep.subr.mxu0 0.0
    %667 = vmatpush1.msra.mxu0 %v646
    %668 = vmatprep.subr.mxu0 0.0
    %669 = vmatpush1.msra.mxu0 %v647
    %670 = vmatprep.subr.mxu0 0.0
    %671 = vmatpush1.msra.mxu0 %v648
    %672 = vmatprep.subr.mxu0 0.0
    %673 = vmatpush1.msra.mxu0 %v649
    %674 = vmatprep.subr.mxu0 0.0
    %675 = vmatpush1.msra.mxu0 %v650
    %676 = vmatprep.subr.mxu0 0.0
    %677 = vmatpush1.msra.mxu0 %v651
    %678 = vmatprep.subr.mxu0 0.0
    %679 = vmatpush1.msra.mxu0 %v652
    %680 = vmatprep.subr.mxu0 0.0
    %681 = vmatpush1.msra.mxu0 %v653
    %682 = vmatprep.subr.mxu0 0.0
    %683 = vmatpush1.msra.mxu0 %v654
    %684 = vmatprep.subr.mxu0 0.0
    %685 = vmatpush1.msra.mxu0 %v655
    %686 = vmatprep.subr.mxu0 0.0
    %687 = vmatpush1.msra.mxu0 %v656
    %688 = vmatprep.subr.mxu0 0.0
    %689 = vmatpush1.msra.mxu0 %v657
    %690 = vmatprep.subr.mxu0 0.0
    %691 = vmatpush1.msra.mxu0 0.0
    %692 = vmatprep.subr.mxu0 0.0
    %693 = vmatpush1.msra.mxu0 0.0
    %694 = vmatprep.subr.mxu0 0.0
    %695 = vmatpush1.msra.mxu0 0.0
    %696 = vmatprep.subr.mxu0 0.0
    %697 = vmatpush1.msra.mxu0 0.0
    %698 = vmatprep.subr.mxu0 0.0
    %699 = vmatpush1.msra.mxu0 0.0
    %700 = vmatprep.subr.mxu0 0.0
    %701 = vmatpush1.msra.mxu0 0.0
    %702 = vmatprep.subr.mxu0 0.0
    %703 = vmatpush1.msra.mxu0 0.0
    %704 = vmatprep.subr.mxu0 0.0
    %705 = vmatpush1.msra.mxu0 0.0
    %706 = vmatprep.subr.mxu0 0.0
    %707 = vmatpush1.msra.mxu0 0.0
    %708 = vmatprep.subr.mxu0 0.0
    %709 = vmatpush1.msra.mxu0 0.0
    %710 = vmatprep.subr.mxu0 0.0
    %711 = vmatpush1.msra.mxu0 0.0
    %712 = vmatprep.subr.mxu0 0.0
    %713 = vmatpush1.msra.mxu0 0.0
    %714 = vmatprep.subr.mxu0 0.0
    %715 = vmatpush1.msra.mxu0 0.0
    %716 = vmatprep.subr.mxu0 0.0
    %717 = vmatpush1.msra.mxu0 0.0
    %718 = vmatprep.subr.mxu0 0.0
    %719 = vmatpush1.msra.mxu0 0.0
    %720 = vmatprep.subr.mxu0 0.0
    %721 = vmatpush1.msra.mxu0 0.0
    %722 = vmatprep.mubr.f32.mxu0 0.0
    %723 = vmatmul.mubr.f32.gmra.mrb[0].mxu0 %v641
    %v724 = vpop.f32.mrb[0].mxu0
    %v725 = vadd.f32 0.0, %v724
    %v726 = vpop.f32.mrb[0].mxu0
    %727 = vdwg.mxu0
    %v729 = vrot.slane %v309, 1
    %v731 = vadd.f32 %v729, %v725
    %v732 = vmax.f32 %v731, 0.0
    %v733 = vld [vmem:[#allocation18] sm:$0xff]
    %v734 = vld [vmem:[#allocation18 + $0x8] sm:$0xff]
    %v735 = vld [vmem:[#allocation18 + $0x10] sm:$0xff]
    %v736 = vld [vmem:[#allocation18 + $0x18] sm:$0xff]
    %v737 = vld [vmem:[#allocation18 + $0x20] sm:$0xff]
    %v738 = vld [vmem:[#allocation18 + $0x28] sm:$0xff]
    %v739 = vld [vmem:[#allocation18 + $0x30] sm:$0xff]
    %v740 = vld [vmem:[#allocation18 + $0x38] sm:$0xff]
    %v741 = vld [vmem:[#allocation18 + $0x40] sm:$0xff]
    %v742 = vld [vmem:[#allocation18 + $0x48] sm:$0xff]
    %v743 = vld [vmem:[#allocation18 + $0x50] sm:$0xff]
    %v744 = vld [vmem:[#allocation18 + $0x58] sm:$0xff]
    %v745 = vld [vmem:[#allocation18 + $0x60] sm:$0xff]
    %v746 = vld [vmem:[#allocation18 + $0x68] sm:$0xff]
    %v747 = vld [vmem:[#allocation18 + $0x70] sm:$0xff]
    %v748 = vld [vmem:[#allocation18 + $0x78] sm:$0xff]
    %v749 = vld [vmem:[#allocation18 + $0x80] sm:$0xff]
    %v750 = vld [vmem:[#allocation18 + $0x88] sm:$0xff]
    %v751 = vld [vmem:[#allocation18 + $0x90] sm:$0xff]
    %v752 = vld [vmem:[#allocation18 + $0x98] sm:$0xff]
    %v753 = vld [vmem:[#allocation18 + $0xa0] sm:$0xff]
    %v754 = vld [vmem:[#allocation18 + $0xa8] sm:$0xff]
    %v755 = vld [vmem:[#allocation18 + $0xb0] sm:$0xff]
    %v756 = vld [vmem:[#allocation18 + $0xb8] sm:$0xff]
    %v757 = vld [vmem:[#allocation18 + $0xc0] sm:$0xff]
    %v758 = vld [vmem:[#allocation18 + $0xc8] sm:$0xff]
    %v759 = vld [vmem:[#allocation18 + $0xd0] sm:$0xff]
    %v760 = vld [vmem:[#allocation18 + $0xd8] sm:$0xff]
    %v761 = vld [vmem:[#allocation18 + $0xe0] sm:$0xff]
    %v762 = vld [vmem:[#allocation18 + $0xe8] sm:$0xff]
    %v763 = vld [vmem:[#allocation18 + $0xf0] sm:$0xff]
    %v764 = vld [vmem:[#allocation18 + $0xf8] sm:$0xff]
    %v765 = vld [vmem:[#allocation18 + $0x100] sm:$0xff]
    %v766 = vld [vmem:[#allocation18 + $0x108] sm:$0xff]
    %v767 = vld [vmem:[#allocation18 + $0x110] sm:$0xff]
    %v768 = vld [vmem:[#allocation18 + $0x118] sm:$0xff]
    %v769 = vld [vmem:[#allocation18 + $0x120] sm:$0xff]
    %v770 = vld [vmem:[#allocation18 + $0x128] sm:$0xff]
    %v771 = vld [vmem:[#allocation18 + $0x130] sm:$0xff]
    %v772 = vld [vmem:[#allocation18 + $0x138] sm:$0xff]
    %v773 = vld [vmem:[#allocation18 + $0x140] sm:$0xff]
    %v774 = vld [vmem:[#allocation18 + $0x148] sm:$0xff]
    %v775 = vld [vmem:[#allocation18 + $0x150] sm:$0xff]
    %v776 = vld [vmem:[#allocation18 + $0x158] sm:$0xff]
    %v777 = vld [vmem:[#allocation18 + $0x160] sm:$0xff]
    %v778 = vld [vmem:[#allocation18 + $0x168] sm:$0xff]
    %v779 = vld [vmem:[#allocation18 + $0x170] sm:$0xff]
    %v780 = vld [vmem:[#allocation18 + $0x178] sm:$0xff]
    %v781 = vld [vmem:[%s10] sm:$0x7]
    %v783 = vlaneseq
    %v784 = vshrl.u32 %v783, 7
    %v785 = vsub.s32 0, %v784
    %v786 = vrot.slane %v781, %v785
    %v787 = vlaneseq
    %v788 = vshrl.u32 %v787, 7
    %v789 = vsub.s32 1, %v788
    %v790 = vrot.slane %v781, %v789
    %v791 = vlaneseq
    %v792 = vshrl.u32 %v791, 7
    %v793 = vsub.s32 2, %v792
    %v794 = vrot.slane %v781, %v793
    %798 = vmatprep.subr.mxu0 %v734
    %799 = vmatpush1.msra.mxu0 %v733
    %800 = vmatprep.subr.mxu0 %v737
    %801 = vmatpush1.msra.mxu0 %v736
    %802 = vmatprep.subr.mxu0 %v740
    %803 = vmatpush1.msra.mxu0 %v739
    %804 = vmatprep.subr.mxu0 %v743
    %805 = vmatpush1.msra.mxu0 %v742
    %806 = vmatprep.subr.mxu0 %v746
    %807 = vmatpush1.msra.mxu0 %v745
    %808 = vmatprep.subr.mxu0 %v749
    %809 = vmatpush1.msra.mxu0 %v748
    %810 = vmatprep.subr.mxu0 %v752
    %811 = vmatpush1.msra.mxu0 %v751
    %812 = vmatprep.subr.mxu0 %v755
    %813 = vmatpush1.msra.mxu0 %v754
    %814 = vmatprep.subr.mxu0 %v758
    %815 = vmatpush1.msra.mxu0 %v757
    %816 = vmatprep.subr.mxu0 %v761
    %817 = vmatpush1.msra.mxu0 %v760
    %818 = vmatprep.subr.mxu0 %v764
    %819 = vmatpush1.msra.mxu0 %v763
    %820 = vmatprep.subr.mxu0 %v767
    %821 = vmatpush1.msra.mxu0 %v766
    %822 = vmatprep.subr.mxu0 %v770
    %823 = vmatpush1.msra.mxu0 %v769
    %824 = vmatprep.subr.mxu0 %v773
    %825 = vmatpush1.msra.mxu0 %v772
    %826 = vmatprep.subr.mxu0 %v776
    %827 = vmatpush1.msra.mxu0 %v775
    %828 = vmatprep.subr.mxu0 %v779
    %829 = vmatpush1.msra.mxu0 %v778
    %830 = vmatprep.subr.mxu0 0.0
    %831 = vmatpush1.msra.mxu0 0.0
    %832 = vmatprep.subr.mxu0 0.0
    %833 = vmatpush1.msra.mxu0 0.0
    %834 = vmatprep.subr.mxu0 0.0
    %835 = vmatpush1.msra.mxu0 0.0
    %836 = vmatprep.subr.mxu0 0.0
    %837 = vmatpush1.msra.mxu0 0.0
    %838 = vmatprep.subr.mxu0 0.0
    %839 = vmatpush1.msra.mxu0 0.0
    %840 = vmatprep.subr.mxu0 0.0
    %841 = vmatpush1.msra.mxu0 0.0
    %842 = vmatprep.subr.mxu0 0.0
    %843 = vmatpush1.msra.mxu0 0.0
    %844 = vmatprep.subr.mxu0 0.0
    %845 = vmatpush1.msra.mxu0 0.0
    %846 = vmatprep.subr.mxu0 0.0
    %847 = vmatpush1.msra.mxu0 0.0
    %848 = vmatprep.subr.mxu0 0.0
    %849 = vmatpush1.msra.mxu0 0.0
    %850 = vmatprep.subr.mxu0 0.0
    %851 = vmatpush1.msra.mxu0 0.0
    %852 = vmatprep.subr.mxu0 0.0
    %853 = vmatpush1.msra.mxu0 0.0
    %854 = vmatprep.subr.mxu0 0.0
    %855 = vmatpush1.msra.mxu0 0.0
    %856 = vmatprep.subr.mxu0 0.0
    %857 = vmatpush1.msra.mxu0 0.0
    %858 = vmatprep.subr.mxu0 0.0
    %859 = vmatpush1.msra.mxu0 0.0
    %860 = vmatprep.subr.mxu0 0.0
    %861 = vmatpush1.msra.mxu0 0.0
    %862 = vmatprep.mubr.f32.mxu0 0.0
    %863 = vmatmul.mubr.f32.gmra.mrb[0].mxu0 %v732
    %v864 = vpop.f32.mrb[0].mxu0
    %v865 = vadd.f32 %v786, %v864
    %v866 = vpop.f32.mrb[0].mxu0
    %v867 = vadd.f32 %v790, %v866
    %868 = vdwg.mxu0
    %869 = vmatprep.subr.mxu0 0.0
    %870 = vmatpush1.msra.mxu0 %v735
    %871 = vmatprep.subr.mxu0 0.0
    %872 = vmatpush1.msra.mxu0 %v738
    %873 = vmatprep.subr.mxu0 0.0
    %874 = vmatpush1.msra.mxu0 %v741
    %875 = vmatprep.subr.mxu0 0.0
    %876 = vmatpush1.msra.mxu0 %v744
    %877 = vmatprep.subr.mxu0 0.0
    %878 = vmatpush1.msra.mxu0 %v747
    %879 = vmatprep.subr.mxu0 0.0
    %880 = vmatpush1.msra.mxu0 %v750
    %881 = vmatprep.subr.mxu0 0.0
    %882 = vmatpush1.msra.mxu0 %v753
    %883 = vmatprep.subr.mxu0 0.0
    %884 = vmatpush1.msra.mxu0 %v756
    %885 = vmatprep.subr.mxu0 0.0
    %886 = vmatpush1.msra.mxu0 %v759
    %887 = vmatprep.subr.mxu0 0.0
    %888 = vmatpush1.msra.mxu0 %v762
    %889 = vmatprep.subr.mxu0 0.0
    %890 = vmatpush1.msra.mxu0 %v765
    %891 = vmatprep.subr.mxu0 0.0
    %892 = vmatpush1.msra.mxu0 %v768
    %893 = vmatprep.subr.mxu0 0.0
    %894 = vmatpush1.msra.mxu0 %v771
    %895 = vmatprep.subr.mxu0 0.0
    %896 = vmatpush1.msra.mxu0 %v774
    %897 = vmatprep.subr.mxu0 0.0
    %898 = vmatpush1.msra.mxu0 %v777
    %899 = vmatprep.subr.mxu0 0.0
    %900 = vmatpush1.msra.mxu0 %v780
    %901 = vmatprep.subr.mxu0 0.0
    %902 = vmatpush1.msra.mxu0 0.0
    %903 = vmatprep.subr.mxu0 0.0
    %904 = vmatpush1.msra.mxu0 0.0
    %905 = vmatprep.subr.mxu0 0.0
    %906 = vmatpush1.msra.mxu0 0.0
    %907 = vmatprep.subr.mxu0 0.0
    %908 = vmatpush1.msra.mxu0 0.0
    %909 = vmatprep.subr.mxu0 0.0
    %910 = vmatpush1.msra.mxu0 0.0
    %911 = vmatprep.subr.mxu0 0.0
    %912 = vmatpush1.msra.mxu0 0.0
    %913 = vmatprep.subr.mxu0 0.0
    %914 = vmatpush1.msra.mxu0 0.0
    %915 = vmatprep.subr.mxu0 0.0
    %916 = vmatpush1.msra.mxu0 0.0
    %917 = vmatprep.subr.mxu0 0.0
    %918 = vmatpush1.msra.mxu0 0.0
    %919 = vmatprep.subr.mxu0 0.0
    %920 = vmatpush1.msra.mxu0 0.0
    %921 = vmatprep.subr.mxu0 0.0
    %922 = vmatpush1.msra.mxu0 0.0
    %923 = vmatprep.subr.mxu0 0.0
    %924 = vmatpush1.msra.mxu0 0.0
    %925 = vmatprep.subr.mxu0 0.0
    %926 = vmatpush1.msra.mxu0 0.0
    %927 = vmatprep.subr.mxu0 0.0
    %928 = vmatpush1.msra.mxu0 0.0
    %929 = vmatprep.subr.mxu0 0.0
    %930 = vmatpush1.msra.mxu0 0.0
    %931 = vmatprep.subr.mxu0 0.0
    %932 = vmatpush1.msra.mxu0 0.0
    %933 = vmatprep.mubr.f32.mxu0 0.0
    %934 = vmatmul.mubr.f32.gmra.mrb[0].mxu0 %v732
    %v935 = vpop.f32.mrb[0].mxu0
    %v936 = vadd.f32 %v794, %v935
    %v937 = vpop.f32.mrb[0].mxu0
    %938 = vdwg.mxu0
    %v939 = vadd.f32 %v865, %v465
    %v940 = vxor.u32 %v939, 2147483648
    %v941 = vmul.f32 %v940, 1.442695
    %v942 = vpow.pop %v941
    %v943 = vadd.f32 %v942, 1.0
    %v944 = vrcp.pop %v943
    %v945 = vmul.f32 1.0, %v944
    %v946 = vadd.f32 %v867, %v534
    %v947 = vxor.u32 %v946, 2147483648
    %v948 = vmul.f32 %v947, 1.442695
    %v949 = vpow.pop %v948
    %v950 = vadd.f32 %v949, 1.0
    %v951 = vrcp.pop %v950
    %v952 = vmul.f32 1.0, %v951
    %v953 = vmul.f32 %v945, %v536
    %v954 = vadd.f32 %v936, %v953
    %v955 = vtanh.pop %v954
    %v956 = vsub.f32 1.0, %v952
    %v957 = vmul.f32 %v956, %v955
    %v958 = vmul.f32 %v952, %v308
    %v959 = vadd.f32 %v957, %v958
    %960 = vst [vmem:[#allocation4] sm:$0x1] %v959
    %s961 = scalar_lea.vmem [#allocation3], 1
    %v962 = vld [vmem:[%s961] ss:$8 sm:$0x3]
    %v963 = vld [vmem:[#allocation15] sm:$0xff]
    %v964 = vld [vmem:[#allocation15 + $0x8] sm:$0xff]
    %v965 = vld [vmem:[#allocation15 + $0x10] sm:$0xff]
    %v966 = vld [vmem:[#allocation15 + $0x18] sm:$0xff]
    %v967 = vld [vmem:[#allocation15 + $0x20] sm:$0xff]
    %v968 = vld [vmem:[#allocation15 + $0x28] sm:$0xff]
    %v969 = vld [vmem:[#allocation15 + $0x30] sm:$0xff]
    %v970 = vld [vmem:[#allocation15 + $0x38] sm:$0xff]
    %v971 = vld [vmem:[#allocation15 + $0x40] sm:$0xff]
    %v972 = vld [vmem:[#allocation15 + $0x48] sm:$0xff]
    %v973 = vld [vmem:[#allocation15 + $0x50] sm:$0xff]
    %v974 = vld [vmem:[#allocation15 + $0x58] sm:$0xff]
    %v975 = vld [vmem:[#allocation15 + $0x60] sm:$0xff]
    %v976 = vld [vmem:[#allocation15 + $0x68] sm:$0xff]
    %v977 = vld [vmem:[#allocation15 + $0x70] sm:$0xff]
    %v978 = vld [vmem:[#allocation15 + $0x78] sm:$0xff]
    %v979 = vld [vmem:[#allocation15 + $0x80] sm:$0xff]
    %v980 = vld [vmem:[#allocation15 + $0x88] sm:$0xff]
    %v981 = vld [vmem:[#allocation15 + $0x90] sm:$0xff]
    %v982 = vld [vmem:[#allocation15 + $0x98] sm:$0xff]
    %v983 = vld [vmem:[#allocation15 + $0xa0] sm:$0xff]
    %v984 = vld [vmem:[#allocation15 + $0xa8] sm:$0xff]
    %v985 = vld [vmem:[#allocation15 + $0xb0] sm:$0xff]
    %v986 = vld [vmem:[#allocation15 + $0xb8] sm:$0xff]
    %v987 = vld [vmem:[#allocation15 + $0xc0] sm:$0xff]
    %v988 = vld [vmem:[#allocation15 + $0xc8] sm:$0xff]
    %v989 = vld [vmem:[#allocation15 + $0xd0] sm:$0xff]
    %v990 = vld [vmem:[#allocation15 + $0xd8] sm:$0xff]
    %v991 = vld [vmem:[#allocation15 + $0xe0] sm:$0xff]
    %v992 = vld [vmem:[#allocation15 + $0xe8] sm:$0xff]
    %v993 = vld [vmem:[#allocation15 + $0xf0] sm:$0xff]
    %v994 = vld [vmem:[#allocation15 + $0xf8] sm:$0xff]
    %v995 = vld [vmem:[#allocation15 + $0x100] sm:$0xff]
    %v996 = vld [vmem:[#allocation15 + $0x108] sm:$0xff]
    %v997 = vld [vmem:[#allocation15 + $0x110] sm:$0xff]
    %v998 = vld [vmem:[#allocation15 + $0x118] sm:$0xff]
    %v999 = vld [vmem:[#allocation15 + $0x120] sm:$0xff]
    %v1000 = vld [vmem:[#allocation15 + $0x128] sm:$0xff]
    %v1001 = vld [vmem:[#allocation15 + $0x130] sm:$0xff]
    %v1002 = vld [vmem:[#allocation15 + $0x138] sm:$0xff]
    %v1003 = vld [vmem:[#allocation15 + $0x140] sm:$0xff]
    %v1004 = vld [vmem:[#allocation15 + $0x148] sm:$0xff]
    %v1005 = vld [vmem:[#allocation15 + $0x150] sm:$0xff]
    %v1006 = vld [vmem:[#allocation15 + $0x158] sm:$0xff]
    %v1007 = vld [vmem:[#allocation15 + $0x160] sm:$0xff]
    %v1008 = vld [vmem:[#allocation15 + $0x168] sm:$0xff]
    %v1009 = vld [vmem:[#allocation15 + $0x170] sm:$0xff]
    %v1010 = vld [vmem:[#allocation15 + $0x178] sm:$0xff]
    %v1011 = vld [vmem:[#allocation15 + $0x180] sm:$0xff]
    %v1012 = vld [vmem:[#allocation15 + $0x188] sm:$0xff]
    %v1013 = vld [vmem:[#allocation15 + $0x190] sm:$0xff]
    %v1014 = vld [vmem:[#allocation15 + $0x198] sm:$0xff]
    %v1015 = vld [vmem:[#allocation15 + $0x1a0] sm:$0xff]
    %v1016 = vld [vmem:[#allocation15 + $0x1a8] sm:$0xff]
    %v1017 = vld [vmem:[#allocation15 + $0x1b0] sm:$0xff]
    %v1018 = vld [vmem:[#allocation15 + $0x1b8] sm:$0xff]
    %v1019 = vld [vmem:[#allocation15 + $0x1c0] sm:$0xff]
    %v1020 = vld [vmem:[#allocation15 + $0x1c8] sm:$0xff]
    %v1021 = vld [vmem:[#allocation15 + $0x1d0] sm:$0xff]
    %v1022 = vld [vmem:[#allocation15 + $0x1d8] sm:$0xff]
    %v1023 = vld [vmem:[#allocation15 + $0x1e0] sm:$0xff]
    %v1024 = vld [vmem:[#allocation15 + $0x1e8] sm:$0xff]
    %v1025 = vld [vmem:[#allocation15 + $0x1f0] sm:$0xff]
    %v1026 = vld [vmem:[#allocation15 + $0x1f8] sm:$0xff]
    %v1027 = vld [vmem:[%s7] sm:$0xf]
    %v1029 = vlaneseq
    %v1030 = vshrl.u32 %v1029, 7
    %v1031 = vsub.s32 0, %v1030
    %v1032 = vrot.slane %v1027, %v1031
    %v1033 = vlaneseq
    %v1034 = vshrl.u32 %v1033, 7
    %v1035 = vsub.s32 1, %v1034
    %v1036 = vrot.slane %v1027, %v1035
    %v1037 = vlaneseq
    %v1038 = vshrl.u32 %v1037, 7
    %v1039 = vsub.s32 2, %v1038
    %v1040 = vrot.slane %v1027, %v1039
    %v1041 = vlaneseq
    %v1042 = vshrl.u32 %v1041, 7
    %v1043 = vsub.s32 3, %v1042
    %v1044 = vrot.slane %v1027, %v1043
    %1049 = vmatprep.subr.mxu0 %v964
    %1050 = vmatpush1.msra.mxu0 %v963
    %1051 = vmatprep.subr.mxu0 %v968
    %1052 = vmatpush1.msra.mxu0 %v967
    %1053 = vmatprep.subr.mxu0 %v972
    %1054 = vmatpush1.msra.mxu0 %v971
    %1055 = vmatprep.subr.mxu0 %v976
    %1056 = vmatpush1.msra.mxu0 %v975
    %1057 = vmatprep.subr.mxu0 %v980
    %1058 = vmatpush1.msra.mxu0 %v979
    %1059 = vmatprep.subr.mxu0 %v984
    %1060 = vmatpush1.msra.mxu0 %v983
    %1061 = vmatprep.subr.mxu0 %v988
    %1062 = vmatpush1.msra.mxu0 %v987
    %1063 = vmatprep.subr.mxu0 %v992
    %1064 = vmatpush1.msra.mxu0 %v991
    %1065 = vmatprep.subr.mxu0 %v996
    %1066 = vmatpush1.msra.mxu0 %v995
    %1067 = vmatprep.subr.mxu0 %v1000
    %1068 = vmatpush1.msra.mxu0 %v999
    %1069 = vmatprep.subr.mxu0 %v1004
    %1070 = vmatpush1.msra.mxu0 %v1003
    %1071 = vmatprep.subr.mxu0 %v1008
    %1072 = vmatpush1.msra.mxu0 %v1007
    %1073 = vmatprep.subr.mxu0 %v1012
    %1074 = vmatpush1.msra.mxu0 %v1011
    %1075 = vmatprep.subr.mxu0 %v1016
    %1076 = vmatpush1.msra.mxu0 %v1015
    %1077 = vmatprep.subr.mxu0 %v1020
    %1078 = vmatpush1.msra.mxu0 %v1019
    %1079 = vmatprep.subr.mxu0 %v1024
    %1080 = vmatpush1.msra.mxu0 %v1023
    %1081 = vmatprep.subr.mxu0 0.0
    %1082 = vmatpush1.msra.mxu0 0.0
    %1083 = vmatprep.subr.mxu0 0.0
    %1084 = vmatpush1.msra.mxu0 0.0
    %1085 = vmatprep.subr.mxu0 0.0
    %1086 = vmatpush1.msra.mxu0 0.0
    %1087 = vmatprep.subr.mxu0 0.0
    %1088 = vmatpush1.msra.mxu0 0.0
    %1089 = vmatprep.subr.mxu0 0.0
    %1090 = vmatpush1.msra.mxu0 0.0
    %1091 = vmatprep.subr.mxu0 0.0
    %1092 = vmatpush1.msra.mxu0 0.0
    %1093 = vmatprep.subr.mxu0 0.0
    %1094 = vmatpush1.msra.mxu0 0.0
    %1095 = vmatprep.subr.mxu0 0.0
    %1096 = vmatpush1.msra.mxu0 0.0
    %1097 = vmatprep.subr.mxu0 0.0
    %1098 = vmatpush1.msra.mxu0 0.0
    %1099 = vmatprep.subr.mxu0 0.0
    %1100 = vmatpush1.msra.mxu0 0.0
    %1101 = vmatprep.subr.mxu0 0.0
    %1102 = vmatpush1.msra.mxu0 0.0
    %1103 = vmatprep.subr.mxu0 0.0
    %1104 = vmatpush1.msra.mxu0 0.0
    %1105 = vmatprep.subr.mxu0 0.0
    %1106 = vmatpush1.msra.mxu0 0.0
    %1107 = vmatprep.subr.mxu0 0.0
    %1108 = vmatpush1.msra.mxu0 0.0
    %1109 = vmatprep.subr.mxu0 0.0
    %1110 = vmatpush1.msra.mxu0 0.0
    %1111 = vmatprep.subr.mxu0 0.0
    %1112 = vmatpush1.msra.mxu0 0.0
    %1113 = vmatprep.mubr.f32.mxu0 0.0
    %1114 = vmatmul.mubr.f32.gmra.mrb[0].mxu0 %v959
    %v1115 = vpop.f32.mrb[0].mxu0
    %v1116 = vadd.f32 %v1032, %v1115
    %v1117 = vpop.f32.mrb[0].mxu0
    %v1118 = vadd.f32 %v1036, %v1117
    %1119 = vdwg.mxu0
    %1120 = vmatprep.subr.mxu0 %v966
    %1121 = vmatpush1.msra.mxu0 %v965
    %1122 = vmatprep.subr.mxu0 %v970
    %1123 = vmatpush1.msra.mxu0 %v969
    %1124 = vmatprep.subr.mxu0 %v974
    %1125 = vmatpush1.msra.mxu0 %v973
    %1126 = vmatprep.subr.mxu0 %v978
    %1127 = vmatpush1.msra.mxu0 %v977
    %1128 = vmatprep.subr.mxu0 %v982
    %1129 = vmatpush1.msra.mxu0 %v981
    %1130 = vmatprep.subr.mxu0 %v986
    %1131 = vmatpush1.msra.mxu0 %v985
    %1132 = vmatprep.subr.mxu0 %v990
    %1133 = vmatpush1.msra.mxu0 %v989
    %1134 = vmatprep.subr.mxu0 %v994
    %1135 = vmatpush1.msra.mxu0 %v993
    %1136 = vmatprep.subr.mxu0 %v998
    %1137 = vmatpush1.msra.mxu0 %v997
    %1138 = vmatprep.subr.mxu0 %v1002
    %1139 = vmatpush1.msra.mxu0 %v1001
    %1140 = vmatprep.subr.mxu0 %v1006
    %1141 = vmatpush1.msra.mxu0 %v1005
    %1142 = vmatprep.subr.mxu0 %v1010
    %1143 = vmatpush1.msra.mxu0 %v1009
    %1144 = vmatprep.subr.mxu0 %v1014
    %1145 = vmatpush1.msra.mxu0 %v1013
    %1146 = vmatprep.subr.mxu0 %v1018
    %1147 = vmatpush1.msra.mxu0 %v1017
    %1148 = vmatprep.subr.mxu0 %v1022
    %1149 = vmatpush1.msra.mxu0 %v1021
    %1150 = vmatprep.subr.mxu0 %v1026
    %1151 = vmatpush1.msra.mxu0 %v1025
    %1152 = vmatprep.subr.mxu0 0.0
    %1153 = vmatpush1.msra.mxu0 0.0
    %1154 = vmatprep.subr.mxu0 0.0
    %1155 = vmatpush1.msra.mxu0 0.0
    %1156 = vmatprep.subr.mxu0 0.0
    %1157 = vmatpush1.msra.mxu0 0.0
    %1158 = vmatprep.subr.mxu0 0.0
    %1159 = vmatpush1.msra.mxu0 0.0
    %1160 = vmatprep.subr.mxu0 0.0
    %1161 = vmatpush1.msra.mxu0 0.0
    %1162 = vmatprep.subr.mxu0 0.0
    %1163 = vmatpush1.msra.mxu0 0.0
    %1164 = vmatprep.subr.mxu0 0.0
    %1165 = vmatpush1.msra.mxu0 0.0
    %1166 = vmatprep.subr.mxu0 0.0
    %1167 = vmatpush1.msra.mxu0 0.0
    %1168 = vmatprep.subr.mxu0 0.0
    %1169 = vmatpush1.msra.mxu0 0.0
    %1170 = vmatprep.subr.mxu0 0.0
    %1171 = vmatpush1.msra.mxu0 0.0
    %1172 = vmatprep.subr.mxu0 0.0
    %1173 = vmatpush1.msra.mxu0 0.0
    %1174 = vmatprep.subr.mxu0 0.0
    %1175 = vmatpush1.msra.mxu0 0.0
    %1176 = vmatprep.subr.mxu0 0.0
    %1177 = vmatpush1.msra.mxu0 0.0
    %1178 = vmatprep.subr.mxu0 0.0
    %1179 = vmatpush1.msra.mxu0 0.0
    %1180 = vmatprep.subr.mxu0 0.0
    %1181 = vmatpush1.msra.mxu0 0.0
    %1182 = vmatprep.subr.mxu0 0.0
    %1183 = vmatpush1.msra.mxu0 0.0
    %1184 = vmatprep.mubr.f32.mxu0 0.0
    %1185 = vmatmul.mubr.f32.gmra.mrb[0].mxu0 %v959
    %v1186 = vpop.f32.mrb[0].mxu0
    %v1187 = vadd.f32 %v1040, %v1186
    %v1188 = vpop.f32.mrb[0].mxu0
    %v1189 = vadd.f32 %v1044, %v1188
    %1190 = vdwg.mxu0
    %v1191 = vadd.f32 %v962, %v1116
    %v1192 = vsel %vm539, %v1191, -inf
    %1193 = vmax.xlane.f32.xlu0 %v1192
    %v1194 = vpop.xlane.xlu0 %1193
    %v1195 = vsub.f32 %v1191, %v1194
    %v1196 = vmul.f32 %v1195, 1.442695
    %v1197 = vpow.pop %v1196
    %v1198 = vld [vmem:[#allocation12] sm:$0xff]
    %v1199 = vld [vmem:[#allocation12 + $0x8] sm:$0xff]
    %v1200 = vld [vmem:[#allocation12 + $0x10] sm:$0xff]
    %v1201 = vld [vmem:[#allocation12 + $0x18] sm:$0xff]
    %v1202 = vld [vmem:[#allocation12 + $0x20] sm:$0xff]
    %v1203 = vld [vmem:[#allocation12 + $0x28] sm:$0xff]
    %v1204 = vld [vmem:[#allocation12 + $0x30] sm:$0xff]
    %v1205 = vld [vmem:[#allocation12 + $0x38] sm:$0xff]
    %v1206 = vld [vmem:[#allocation12 + $0x40] sm:$0xff]
    %v1207 = vld [vmem:[#allocation12 + $0x48] sm:$0xff]
    %v1208 = vld [vmem:[#allocation12 + $0x50] sm:$0xff]
    %v1209 = vld [vmem:[#allocation12 + $0x58] sm:$0xff]
    %v1210 = vld [vmem:[#allocation12 + $0x60] sm:$0xff]
    %v1211 = vld [vmem:[#allocation12 + $0x68] sm:$0xff]
    %v1212 = vld [vmem:[#allocation12 + $0x70] sm:$0xff]
    %v1213 = vld [vmem:[#allocation12 + $0x78] sm:$0xff]
    %1214 = vmatprep.subr.mxu0 0.0
    %1215 = vmatpush1.msra.mxu0 %v1198
    %1216 = vmatprep.subr.mxu0 0.0
    %1217 = vmatpush1.msra.mxu0 %v1199
    %1218 = vmatprep.subr.mxu0 0.0
    %1219 = vmatpush1.msra.mxu0 %v1200
    %1220 = vmatprep.subr.mxu0 0.0
    %1221 = vmatpush1.msra.mxu0 %v1201
    %1222 = vmatprep.subr.mxu0 0.0
    %1223 = vmatpush1.msra.mxu0 %v1202
    %1224 = vmatprep.subr.mxu0 0.0
    %1225 = vmatpush1.msra.mxu0 %v1203
    %1226 = vmatprep.subr.mxu0 0.0
    %1227 = vmatpush1.msra.mxu0 %v1204
    %1228 = vmatprep.subr.mxu0 0.0
    %1229 = vmatpush1.msra.mxu0 %v1205
    %1230 = vmatprep.subr.mxu0 0.0
    %1231 = vmatpush1.msra.mxu0 %v1206
    %1232 = vmatprep.subr.mxu0 0.0
    %1233 = vmatpush1.msra.mxu0 %v1207
    %1234 = vmatprep.subr.mxu0 0.0
    %1235 = vmatpush1.msra.mxu0 %v1208
    %1236 = vmatprep.subr.mxu0 0.0
    %1237 = vmatpush1.msra.mxu0 %v1209
    %1238 = vmatprep.subr.mxu0 0.0
    %1239 = vmatpush1.msra.mxu0 %v1210
    %1240 = vmatprep.subr.mxu0 0.0
    %1241 = vmatpush1.msra.mxu0 %v1211
    %1242 = vmatprep.subr.mxu0 0.0
    %1243 = vmatpush1.msra.mxu0 %v1212
    %1244 = vmatprep.subr.mxu0 0.0
    %1245 = vmatpush1.msra.mxu0 %v1213
    %1246 = vmatprep.subr.mxu0 0.0
    %1247 = vmatpush1.msra.mxu0 0.0
    %1248 = vmatprep.subr.mxu0 0.0
    %1249 = vmatpush1.msra.mxu0 0.0
    %1250 = vmatprep.subr.mxu0 0.0
    %1251 = vmatpush1.msra.mxu0 0.0
    %1252 = vmatprep.subr.mxu0 0.0
    %1253 = vmatpush1.msra.mxu0 0.0
    %1254 = vmatprep.subr.mxu0 0.0
    %1255 = vmatpush1.msra.mxu0 0.0
    %1256 = vmatprep.subr.mxu0 0.0
    %1257 = vmatpush1.msra.mxu0 0.0
    %1258 = vmatprep.subr.mxu0 0.0
    %1259 = vmatpush1.msra.mxu0 0.0
    %1260 = vmatprep.subr.mxu0 0.0
    %1261 = vmatpush1.msra.mxu0 0.0
    %1262 = vmatprep.subr.mxu0 0.0
    %1263 = vmatpush1.msra.mxu0 0.0
    %1264 = vmatprep.subr.mxu0 0.0
    %1265 = vmatpush1.msra.mxu0 0.0
    %1266 = vmatprep.subr.mxu0 0.0
    %1267 = vmatpush1.msra.mxu0 0.0
    %1268 = vmatprep.subr.mxu0 0.0
    %1269 = vmatpush1.msra.mxu0 0.0
    %1270 = vmatprep.subr.mxu0 0.0
    %1271 = vmatpush1.msra.mxu0 0.0
    %1272 = vmatprep.subr.mxu0 0.0
    %1273 = vmatpush1.msra.mxu0 0.0
    %1274 = vmatprep.subr.mxu0 0.0
    %1275 = vmatpush1.msra.mxu0 0.0
    %1276 = vmatprep.subr.mxu0 0.0
    %1277 = vmatpush1.msra.mxu0 0.0
    %1278 = vmatprep.mubr.f32.mxu0 0.0
    %1279 = vmatmul.mubr.f32.gmra.mrb[0].mxu0 %v1197
    %v1280 = vpop.f32.mrb[0].mxu0
    %v1281 = vadd.f32 0.0, %v1280
    %v1282 = vpop.f32.mrb[0].mxu0
    %1283 = vdwg.mxu0
    %v1284 = vsel %vm539, %v1197, 0.0
    %1285 = vadd.xlane.f32.xlu0 %v1284
    %v1286 = vpop.xlane.xlu0 %1285
    %v1287 = vrcp.pop %v1286
    %v1288 = vmul.f32 %v1286, %v1287
    %v1289 = vsub.f32 2.0, %v1288
    %v1290 = vmul.f32 %v1287, %v1289
    %v1291 = vmul.f32 %v1197, %v1290
    %1292 = vst [vmem:[#allocation24 + $0x1] sm:$0x1] %v1291
    %v1293 = vmul.f32 %v1281, %v1290
    %v1294 = vld [vmem:[#allocation16] sm:$0xff]
    %v1295 = vld [vmem:[#allocation16 + $0x8] sm:$0xff]
    %v1296 = vld [vmem:[#allocation16 + $0x10] sm:$0xff]
    %v1297 = vld [vmem:[#allocation16 + $0x18] sm:$0xff]
    %v1298 = vld [vmem:[#allocation16 + $0x20] sm:$0xff]
    %v1299 = vld [vmem:[#allocation16 + $0x28] sm:$0xff]
    %v1300 = vld [vmem:[#allocation16 + $0x30] sm:$0xff]
    %v1301 = vld [vmem:[#allocation16 + $0x38] sm:$0xff]
    %v1302 = vld [vmem:[#allocation16 + $0x40] sm:$0xff]
    %v1303 = vld [vmem:[#allocation16 + $0x48] sm:$0xff]
    %v1304 = vld [vmem:[#allocation16 + $0x50] sm:$0xff]
    %v1305 = vld [vmem:[#allocation16 + $0x58] sm:$0xff]
    %v1306 = vld [vmem:[#allocation16 + $0x60] sm:$0xff]
    %v1307 = vld [vmem:[#allocation16 + $0x68] sm:$0xff]
    %v1308 = vld [vmem:[#allocation16 + $0x70] sm:$0xff]
    %v1309 = vld [vmem:[#allocation16 + $0x78] sm:$0xff]
    %1310 = vmatprep.subr.mxu0 0.0
    %1311 = vmatpush1.msra.mxu0 %v1294
    %1312 = vmatprep.subr.mxu0 0.0
    %1313 = vmatpush1.msra.mxu0 %v1295
    %1314 = vmatprep.subr.mxu0 0.0
    %1315 = vmatpush1.msra.mxu0 %v1296
    %1316 = vmatprep.subr.mxu0 0.0
    %1317 = vmatpush1.msra.mxu0 %v1297
    %1318 = vmatprep.subr.mxu0 0.0
    %1319 = vmatpush1.msra.mxu0 %v1298
    %1320 = vmatprep.subr.mxu0 0.0
    %1321 = vmatpush1.msra.mxu0 %v1299
    %1322 = vmatprep.subr.mxu0 0.0
    %1323 = vmatpush1.msra.mxu0 %v1300
    %1324 = vmatprep.subr.mxu0 0.0
    %1325 = vmatpush1.msra.mxu0 %v1301
    %1326 = vmatprep.subr.mxu0 0.0
    %1327 = vmatpush1.msra.mxu0 %v1302
    %1328 = vmatprep.subr.mxu0 0.0
    %1329 = vmatpush1.msra.mxu0 %v1303
    %1330 = vmatprep.subr.mxu0 0.0
    %1331 = vmatpush1.msra.mxu0 %v1304
    %1332 = vmatprep.subr.mxu0 0.0
    %1333 = vmatpush1.msra.mxu0 %v1305
    %1334 = vmatprep.subr.mxu0 0.0
    %1335 = vmatpush1.msra.mxu0 %v1306
    %1336 = vmatprep.subr.mxu0 0.0
    %1337 = vmatpush1.msra.mxu0 %v1307
    %1338 = vmatprep.subr.mxu0 0.0
    %1339 = vmatpush1.msra.mxu0 %v1308
    %1340 = vmatprep.subr.mxu0 0.0
    %1341 = vmatpush1.msra.mxu0 %v1309
    %1342 = vmatprep.subr.mxu0 0.0
    %1343 = vmatpush1.msra.mxu0 0.0
    %1344 = vmatprep.subr.mxu0 0.0
    %1345 = vmatpush1.msra.mxu0 0.0
    %1346 = vmatprep.subr.mxu0 0.0
    %1347 = vmatpush1.msra.mxu0 0.0
    %1348 = vmatprep.subr.mxu0 0.0
    %1349 = vmatpush1.msra.mxu0 0.0
    %1350 = vmatprep.subr.mxu0 0.0
    %1351 = vmatpush1.msra.mxu0 0.0
    %1352 = vmatprep.subr.mxu0 0.0
    %1353 = vmatpush1.msra.mxu0 0.0
    %1354 = vmatprep.subr.mxu0 0.0
    %1355 = vmatpush1.msra.mxu0 0.0
    %1356 = vmatprep.subr.mxu0 0.0
    %1357 = vmatpush1.msra.mxu0 0.0
    %1358 = vmatprep.subr.mxu0 0.0
    %1359 = vmatpush1.msra.mxu0 0.0
    %1360 = vmatprep.subr.mxu0 0.0
    %1361 = vmatpush1.msra.mxu0 0.0
    %1362 = vmatprep.subr.mxu0 0.0
    %1363 = vmatpush1.msra.mxu0 0.0
    %1364 = vmatprep.subr.mxu0 0.0
    %1365 = vmatpush1.msra.mxu0 0.0
    %1366 = vmatprep.subr.mxu0 0.0
    %1367 = vmatpush1.msra.mxu0 0.0
    %1368 = vmatprep.subr.mxu0 0.0
    %1369 = vmatpush1.msra.mxu0 0.0
    %1370 = vmatprep.subr.mxu0 0.0
    %1371 = vmatpush1.msra.mxu0 0.0
    %1372 = vmatprep.subr.mxu0 0.0
    %1373 = vmatpush1.msra.mxu0 0.0
    %1374 = vmatprep.mubr.f32.mxu0 0.0
    %1375 = vmatmul.mubr.f32.gmra.mrb[0].mxu0 %v1293
    %v1376 = vpop.f32.mrb[0].mxu0
    %v1377 = vadd.f32 0.0, %v1376
    %v1378 = vpop.f32.mrb[0].mxu0
    %1379 = vdwg.mxu0
    %v1381 = vrot.slane %v962, 1
    %v1383 = vadd.f32 %v1381, %v1377
    %v1384 = vmax.f32 %v1383, 0.0
    %v1385 = vld [vmem:[#allocation18] sm:$0xff]
    %v1386 = vld [vmem:[#allocation18 + $0x8] sm:$0xff]
    %v1387 = vld [vmem:[#allocation18 + $0x10] sm:$0xff]
    %v1388 = vld [vmem:[#allocation18 + $0x18] sm:$0xff]
    %v1389 = vld [vmem:[#allocation18 + $0x20] sm:$0xff]
    %v1390 = vld [vmem:[#allocation18 + $0x28] sm:$0xff]
    %v1391 = vld [vmem:[#allocation18 + $0x30] sm:$0xff]
    %v1392 = vld [vmem:[#allocation18 + $0x38] sm:$0xff]
    %v1393 = vld [vmem:[#allocation18 + $0x40] sm:$0xff]
    %v1394 = vld [vmem:[#allocation18 + $0x48] sm:$0xff]
    %v1395 = vld [vmem:[#allocation18 + $0x50] sm:$0xff]
    %v1396 = vld [vmem:[#allocation18 + $0x58] sm:$0xff]
    %v1397 = vld [vmem:[#allocation18 + $0x60] sm:$0xff]
    %v1398 = vld [vmem:[#allocation18 + $0x68] sm:$0xff]
    %v1399 = vld [vmem:[#allocation18 + $0x70] sm:$0xff]
    %v1400 = vld [vmem:[#allocation18 + $0x78] sm:$0xff]
    %v1401 = vld [vmem:[#allocation18 + $0x80] sm:$0xff]
    %v1402 = vld [vmem:[#allocation18 + $0x88] sm:$0xff]
    %v1403 = vld [vmem:[#allocation18 + $0x90] sm:$0xff]
    %v1404 = vld [vmem:[#allocation18 + $0x98] sm:$0xff]
    %v1405 = vld [vmem:[#allocation18 + $0xa0] sm:$0xff]
    %v1406 = vld [vmem:[#allocation18 + $0xa8] sm:$0xff]
    %v1407 = vld [vmem:[#allocation18 + $0xb0] sm:$0xff]
    %v1408 = vld [vmem:[#allocation18 + $0xb8] sm:$0xff]
    %v1409 = vld [vmem:[#allocation18 + $0xc0] sm:$0xff]
    %v1410 = vld [vmem:[#allocation18 + $0xc8] sm:$0xff]
    %v1411 = vld [vmem:[#allocation18 + $0xd0] sm:$0xff]
    %v1412 = vld [vmem:[#allocation18 + $0xd8] sm:$0xff]
    %v1413 = vld [vmem:[#allocation18 + $0xe0] sm:$0xff]
    %v1414 = vld [vmem:[#allocation18 + $0xe8] sm:$0xff]
    %v1415 = vld [vmem:[#allocation18 + $0xf0] sm:$0xff]
    %v1416 = vld [vmem:[#allocation18 + $0xf8] sm:$0xff]
    %v1417 = vld [vmem:[#allocation18 + $0x100] sm:$0xff]
    %v1418 = vld [vmem:[#allocation18 + $0x108] sm:$0xff]
    %v1419 = vld [vmem:[#allocation18 + $0x110] sm:$0xff]
    %v1420 = vld [vmem:[#allocation18 + $0x118] sm:$0xff]
    %v1421 = vld [vmem:[#allocation18 + $0x120] sm:$0xff]
    %v1422 = vld [vmem:[#allocation18 + $0x128] sm:$0xff]
    %v1423 = vld [vmem:[#allocation18 + $0x130] sm:$0xff]
    %v1424 = vld [vmem:[#allocation18 + $0x138] sm:$0xff]
    %v1425 = vld [vmem:[#allocation18 + $0x140] sm:$0xff]
    %v1426 = vld [vmem:[#allocation18 + $0x148] sm:$0xff]
    %v1427 = vld [vmem:[#allocation18 + $0x150] sm:$0xff]
    %v1428 = vld [vmem:[#allocation18 + $0x158] sm:$0xff]
    %v1429 = vld [vmem:[#allocation18 + $0x160] sm:$0xff]
    %v1430 = vld [vmem:[#allocation18 + $0x168] sm:$0xff]
    %v1431 = vld [vmem:[#allocation18 + $0x170] sm:$0xff]
    %v1432 = vld [vmem:[#allocation18 + $0x178] sm:$0xff]
    %v1433 = vld [vmem:[%s10] sm:$0x7]
    %v1435 = vlaneseq
    %v1436 = vshrl.u32 %v1435, 7
    %v1437 = vsub.s32 0, %v1436
    %v1438 = vrot.slane %v1433, %v1437
    %v1439 = vlaneseq
    %v1440 = vshrl.u32 %v1439, 7
    %v1441 = vsub.s32 1, %v1440
    %v1442 = vrot.slane %v1433, %v1441
    %v1443 = vlaneseq
    %v1444 = vshrl.u32 %v1443, 7
    %v1445 = vsub.s32 2, %v1444
    %v1446 = vrot.slane %v1433, %v1445
    %1450 = vmatprep.subr.mxu0 %v1386
    %1451 = vmatpush1.msra.mxu0 %v1385
    %1452 = vmatprep.subr.mxu0 %v1389
    %1453 = vmatpush1.msra.mxu0 %v1388
    %1454 = vmatprep.subr.mxu0 %v1392
    %1455 = vmatpush1.msra.mxu0 %v1391
    %1456 = vmatprep.subr.mxu0 %v1395
    %1457 = vmatpush1.msra.mxu0 %v1394
    %1458 = vmatprep.subr.mxu0 %v1398
    %1459 = vmatpush1.msra.mxu0 %v1397
    %1460 = vmatprep.subr.mxu0 %v1401
    %1461 = vmatpush1.msra.mxu0 %v1400
    %1462 = vmatprep.subr.mxu0 %v1404
    %1463 = vmatpush1.msra.mxu0 %v1403
    %1464 = vmatprep.subr.mxu0 %v1407
    %1465 = vmatpush1.msra.mxu0 %v1406
    %1466 = vmatprep.subr.mxu0 %v1410
    %1467 = vmatpush1.msra.mxu0 %v1409
    %1468 = vmatprep.subr.mxu0 %v1413
    %1469 = vmatpush1.msra.mxu0 %v1412
    %1470 = vmatprep.subr.mxu0 %v1416
    %1471 = vmatpush1.msra.mxu0 %v1415
    %1472 = vmatprep.subr.mxu0 %v1419
    %1473 = vmatpush1.msra.mxu0 %v1418
    %1474 = vmatprep.subr.mxu0 %v1422
    %1475 = vmatpush1.msra.mxu0 %v1421
    %1476 = vmatprep.subr.mxu0 %v1425
    %1477 = vmatpush1.msra.mxu0 %v1424
    %1478 = vmatprep.subr.mxu0 %v1428
    %1479 = vmatpush1.msra.mxu0 %v1427
    %1480 = vmatprep.subr.mxu0 %v1431
    %1481 = vmatpush1.msra.mxu0 %v1430
    %1482 = vmatprep.subr.mxu0 0.0
    %1483 = vmatpush1.msra.mxu0 0.0
    %1484 = vmatprep.subr.mxu0 0.0
    %1485 = vmatpush1.msra.mxu0 0.0
    %1486 = vmatprep.subr.mxu0 0.0
    %1487 = vmatpush1.msra.mxu0 0.0
    %1488 = vmatprep.subr.mxu0 0.0
    %1489 = vmatpush1.msra.mxu0 0.0
    %1490 = vmatprep.subr.mxu0 0.0
    %1491 = vmatpush1.msra.mxu0 0.0
    %1492 = vmatprep.subr.mxu0 0.0
    %1493 = vmatpush1.msra.mxu0 0.0
    %1494 = vmatprep.subr.mxu0 0.0
    %1495 = vmatpush1.msra.mxu0 0.0
    %1496 = vmatprep.subr.mxu0 0.0
    %1497 = vmatpush1.msra.mxu0 0.0
    %1498 = vmatprep.subr.mxu0 0.0
    %1499 = vmatpush1.msra.mxu0 0.0
    %1500 = vmatprep.subr.mxu0 0.0
    %1501 = vmatpush1.msra.mxu0 0.0
    %1502 = vmatprep.subr.mxu0 0.0
    %1503 = vmatpush1.msra.mxu0 0.0
    %1504 = vmatprep.subr.mxu0 0.0
    %1505 = vmatpush1.msra.mxu0 0.0
    %1506 = vmatprep.subr.mxu0 0.0
    %1507 = vmatpush1.msra.mxu0 0.0
    %1508 = vmatprep.subr.mxu0 0.0
    %1509 = vmatpush1.msra.mxu0 0.0
    %1510 = vmatprep.subr.mxu0 0.0
    %1511 = vmatpush1.msra.mxu0 0.0
    %1512 = vmatprep.subr.mxu0 0.0
    %1513 = vmatpush1.msra.mxu0 0.0
    %1514 = vmatprep.mubr.f32.mxu0 0.0
    %1515 = vmatmul.mubr.f32.gmra.mrb[0].mxu0 %v1384
    %v1516 = vpop.f32.mrb[0].mxu0
    %v1517 = vadd.f32 %v1438, %v1516
    %v1518 = vpop.f32.mrb[0].mxu0
    %v1519 = vadd.f32 %v1442, %v1518
    %1520 = vdwg.mxu0
    %1521 = vmatprep.subr.mxu0 0.0
    %1522 = vmatpush1.msra.mxu0 %v1387
    %1523 = vmatprep.subr.mxu0 0.0
    %1524 = vmatpush1.msra.mxu0 %v1390
    %1525 = vmatprep.subr.mxu0 0.0
    %1526 = vmatpush1.msra.mxu0 %v1393
    %1527 = vmatprep.subr.mxu0 0.0
    %1528 = vmatpush1.msra.mxu0 %v1396
    %1529 = vmatprep.subr.mxu0 0.0
    %1530 = vmatpush1.msra.mxu0 %v1399
    %1531 = vmatprep.subr.mxu0 0.0
    %1532 = vmatpush1.msra.mxu0 %v1402
    %1533 = vmatprep.subr.mxu0 0.0
    %1534 = vmatpush1.msra.mxu0 %v1405
    %1535 = vmatprep.subr.mxu0 0.0
    %1536 = vmatpush1.msra.mxu0 %v1408
    %1537 = vmatprep.subr.mxu0 0.0
    %1538 = vmatpush1.msra.mxu0 %v1411
    %1539 = vmatprep.subr.mxu0 0.0
    %1540 = vmatpush1.msra.mxu0 %v1414
    %1541 = vmatprep.subr.mxu0 0.0
    %1542 = vmatpush1.msra.mxu0 %v1417
    %1543 = vmatprep.subr.mxu0 0.0
    %1544 = vmatpush1.msra.mxu0 %v1420
    %1545 = vmatprep.subr.mxu0 0.0
    %1546 = vmatpush1.msra.mxu0 %v1423
    %1547 = vmatprep.subr.mxu0 0.0
    %1548 = vmatpush1.msra.mxu0 %v1426
    %1549 = vmatprep.subr.mxu0 0.0
    %1550 = vmatpush1.msra.mxu0 %v1429
    %1551 = vmatprep.subr.mxu0 0.0
    %1552 = vmatpush1.msra.mxu0 %v1432
    %1553 = vmatprep.subr.mxu0 0.0
    %1554 = vmatpush1.msra.mxu0 0.0
    %1555 = vmatprep.subr.mxu0 0.0
    %1556 = vmatpush1.msra.mxu0 0.0
    %1557 = vmatprep.subr.mxu0 0.0
    %1558 = vmatpush1.msra.mxu0 0.0
    %1559 = vmatprep.subr.mxu0 0.0
    %1560 = vmatpush1.msra.mxu0 0.0
    %1561 = vmatprep.subr.mxu0 0.0
    %1562 = vmatpush1.msra.mxu0 0.0
    %1563 = vmatprep.subr.mxu0 0.0
    %1564 = vmatpush1.msra.mxu0 0.0
    %1565 = vmatprep.subr.mxu0 0.0
    %1566 = vmatpush1.msra.mxu0 0.0
    %1567 = vmatprep.subr.mxu0 0.0
    %1568 = vmatpush1.msra.mxu0 0.0
    %1569 = vmatprep.subr.mxu0 0.0
    %1570 = vmatpush1.msra.mxu0 0.0
    %1571 = vmatprep.subr.mxu0 0.0
    %1572 = vmatpush1.msra.mxu0 0.0
    %1573 = vmatprep.subr.mxu0 0.0
    %1574 = vmatpush1.msra.mxu0 0.0
    %1575 = vmatprep.subr.mxu0 0.0
    %1576 = vmatpush1.msra.mxu0 0.0
    %1577 = vmatprep.subr.mxu0 0.0
    %1578 = vmatpush1.msra.mxu0 0.0
    %1579 = vmatprep.subr.mxu0 0.0
    %1580 = vmatpush1.msra.mxu0 0.0
    %1581 = vmatprep.subr.mxu0 0.0
    %1582 = vmatpush1.msra.mxu0 0.0
    %1583 = vmatprep.subr.mxu0 0.0
    %1584 = vmatpush1.msra.mxu0 0.0
    %1585 = vmatprep.mubr.f32.mxu0 0.0
    %1586 = vmatmul.mubr.f32.gmra.mrb[0].mxu0 %v1384
    %v1587 = vpop.f32.mrb[0].mxu0
    %v1588 = vadd.f32 %v1446, %v1587
    %v1589 = vpop.f32.mrb[0].mxu0
    %1590 = vdwg.mxu0
    %v1591 = vadd.f32 %v1517, %v1118
    %v1592 = vxor.u32 %v1591, 2147483648
    %v1593 = vmul.f32 %v1592, 1.442695
    %v1594 = vpow.pop %v1593
    %v1595 = vadd.f32 %v1594, 1.0
    %v1596 = vrcp.pop %v1595
    %v1597 = vmul.f32 1.0, %v1596
    %v1598 = vadd.f32 %v1519, %v1187
    %v1599 = vxor.u32 %v1598, 2147483648
    %v1600 = vmul.f32 %v1599, 1.442695
    %v1601 = vpow.pop %v1600
    %v1602 = vadd.f32 %v1601, 1.0
    %v1603 = vrcp.pop %v1602
    %v1604 = vmul.f32 1.0, %v1603
    %v1605 = vmul.f32 %v1597, %v1189
    %v1606 = vadd.f32 %v1588, %v1605
    %v1607 = vtanh.pop %v1606
    %v1608 = vsub.f32 1.0, %v1604
    %v1609 = vmul.f32 %v1608, %v1607
    %v1610 = vmul.f32 %v1604, %v959
    %v1611 = vadd.f32 %v1609, %v1610
    %1612 = vst [vmem:[#allocation4 + $0x1] sm:$0x1] %v1611
    %s1613 = scalar_lea.vmem [#allocation3], 2
    %v1614 = vld [vmem:[%s1613] ss:$8 sm:$0x3]
    %v1615 = vld [vmem:[#allocation15] sm:$0xff]
    %v1616 = vld [vmem:[#allocation15 + $0x8] sm:$0xff]
    %v1617 = vld [vmem:[#allocation15 + $0x10] sm:$0xff]
    %v1618 = vld [vmem:[#allocation15 + $0x18] sm:$0xff]
    %v1619 = vld [vmem:[#allocation15 + $0x20] sm:$0xff]
    %v1620 = vld [vmem:[#allocation15 + $0x28] sm:$0xff]
    %v1621 = vld [vmem:[#allocation15 + $0x30] sm:$0xff]
    %v1622 = vld [vmem:[#allocation15 + $0x38] sm:$0xff]
    %v1623 = vld [vmem:[#allocation15 + $0x40] sm:$0xff]
    %v1624 = vld [vmem:[#allocation15 + $0x48] sm:$0xff]
    %v1625 = vld [vmem:[#allocation15 + $0x50] sm:$0xff]
    %v1626 = vld [vmem:[#allocation15 + $0x58] sm:$0xff]
    %v1627 = vld [vmem:[#allocation15 + $0x60] sm:$0xff]
    %v1628 = vld [vmem:[#allocation15 + $0x68] sm:$0xff]
    %v1629 = vld [vmem:[#allocation15 + $0x70] sm:$0xff]
    %v1630 = vld [vmem:[#allocation15 + $0x78] sm:$0xff]
    %v1631 = vld [vmem:[#allocation15 + $0x80] sm:$0xff]
    %v1632 = vld [vmem:[#allocation15 + $0x88] sm:$0xff]
    %v1633 = vld [vmem:[#allocation15 + $0x90] sm:$0xff]
    %v1634 = vld [vmem:[#allocation15 + $0x98] sm:$0xff]
    %v1635 = vld [vmem:[#allocation15 + $0xa0] sm:$0xff]
    %v1636 = vld [vmem:[#allocation15 + $0xa8] sm:$0xff]
    %v1637 = vld [vmem:[#allocation15 + $0xb0] sm:$0xff]
    %v1638 = vld [vmem:[#allocation15 + $0xb8] sm:$0xff]
    %v1639 = vld [vmem:[#allocation15 + $0xc0] sm:$0xff]
    %v1640 = vld [vmem:[#allocation15 + $0xc8] sm:$0xff]
    %v1641 = vld [vmem:[#allocation15 + $0xd0] sm:$0xff]
    %v1642 = vld [vmem:[#allocation15 + $0xd8] sm:$0xff]
    %v1643 = vld [vmem:[#allocation15 + $0xe0] sm:$0xff]
    %v1644 = vld [vmem:[#allocation15 + $0xe8] sm:$0xff]
    %v1645 = vld [vmem:[#allocation15 + $0xf0] sm:$0xff]
    %v1646 = vld [vmem:[#allocation15 + $0xf8] sm:$0xff]
    %v1647 = vld [vmem:[#allocation15 + $0x100] sm:$0xff]
    %v1648 = vld [vmem:[#allocation15 + $0x108] sm:$0xff]
    %v1649 = vld [vmem:[#allocation15 + $0x110] sm:$0xff]
    %v1650 = vld [vmem:[#allocation15 + $0x118] sm:$0xff]
    %v1651 = vld [vmem:[#allocation15 + $0x120] sm:$0xff]
    %v1652 = vld [vmem:[#allocation15 + $0x128] sm:$0xff]
    %v1653 = vld [vmem:[#allocation15 + $0x130] sm:$0xff]
    %v1654 = vld [vmem:[#allocation15 + $0x138] sm:$0xff]
    %v1655 = vld [vmem:[#allocation15 + $0x140] sm:$0xff]
    %v1656 = vld [vmem:[#allocation15 + $0x148] sm:$0xff]
    %v1657 = vld [vmem:[#allocation15 + $0x150] sm:$0xff]
    %v1658 = vld [vmem:[#allocation15 + $0x158] sm:$0xff]
    %v1659 = vld [vmem:[#allocation15 + $0x160] sm:$0xff]
    %v1660 = vld [vmem:[#allocation15 + $0x168] sm:$0xff]
    %v1661 = vld [vmem:[#allocation15 + $0x170] sm:$0xff]
    %v1662 = vld [vmem:[#allocation15 + $0x178] sm:$0xff]
    %v1663 = vld [vmem:[#allocation15 + $0x180] sm:$0xff]
    %v1664 = vld [vmem:[#allocation15 + $0x188] sm:$0xff]
    %v1665 = vld [vmem:[#allocation15 + $0x190] sm:$0xff]
    %v1666 = vld [vmem:[#allocation15 + $0x198] sm:$0xff]
    %v1667 = vld [vmem:[#allocation15 + $0x1a0] sm:$0xff]
    %v1668 = vld [vmem:[#allocation15 + $0x1a8] sm:$0xff]
    %v1669 = vld [vmem:[#allocation15 + $0x1b0] sm:$0xff]
    %v1670 = vld [vmem:[#allocation15 + $0x1b8] sm:$0xff]
    %v1671 = vld [vmem:[#allocation15 + $0x1c0] sm:$0xff]
    %v1672 = vld [vmem:[#allocation15 + $0x1c8] sm:$0xff]
    %v1673 = vld [vmem:[#allocation15 + $0x1d0] sm:$0xff]
    %v1674 = vld [vmem:[#allocation15 + $0x1d8] sm:$0xff]
    %v1675 = vld [vmem:[#allocation15 + $0x1e0] sm:$0xff]
    %v1676 = vld [vmem:[#allocation15 + $0x1e8] sm:$0xff]
    %v1677 = vld [vmem:[#allocation15 + $0x1f0] sm:$0xff]
    %v1678 = vld [vmem:[#allocation15 + $0x1f8] sm:$0xff]
    %v1679 = vld [vmem:[%s7] sm:$0xf]
    %v1681 = vlaneseq
    %v1682 = vshrl.u32 %v1681, 7
    %v1683 = vsub.s32 0, %v1682
    %v1684 = vrot.slane %v1679, %v1683
    %v1685 = vlaneseq
    %v1686 = vshrl.u32 %v1685, 7
    %v1687 = vsub.s32 1, %v1686
    %v1688 = vrot.slane %v1679, %v1687
    %v1689 = vlaneseq
    %v1690 = vshrl.u32 %v1689, 7
    %v1691 = vsub.s32 2, %v1690
    %v1692 = vrot.slane %v1679, %v1691
    %v1693 = vlaneseq
    %v1694 = vshrl.u32 %v1693, 7
    %v1695 = vsub.s32 3, %v1694
    %v1696 = vrot.slane %v1679, %v1695
    %1701 = vmatprep.subr.mxu0 %v1616
    %1702 = vmatpush1.msra.mxu0 %v1615
    %1703 = vmatprep.subr.mxu0 %v1620
    %1704 = vmatpush1.msra.mxu0 %v1619
    %1705 = vmatprep.subr.mxu0 %v1624
    %1706 = vmatpush1.msra.mxu0 %v1623
    %1707 = vmatprep.subr.mxu0 %v1628
    %1708 = vmatpush1.msra.mxu0 %v1627
    %1709 = vmatprep.subr.mxu0 %v1632
    %1710 = vmatpush1.msra.mxu0 %v1631
    %1711 = vmatprep.subr.mxu0 %v1636
    %1712 = vmatpush1.msra.mxu0 %v1635
    %1713 = vmatprep.subr.mxu0 %v1640
    %1714 = vmatpush1.msra.mxu0 %v1639
    %1715 = vmatprep.subr.mxu0 %v1644
    %1716 = vmatpush1.msra.mxu0 %v1643
    %1717 = vmatprep.subr.mxu0 %v1648
    %1718 = vmatpush1.msra.mxu0 %v1647
    %1719 = vmatprep.subr.mxu0 %v1652
    %1720 = vmatpush1.msra.mxu0 %v1651
    %1721 = vmatprep.subr.mxu0 %v1656
    %1722 = vmatpush1.msra.mxu0 %v1655
    %1723 = vmatprep.subr.mxu0 %v1660
    %1724 = vmatpush1.msra.mxu0 %v1659
    %1725 = vmatprep.subr.mxu0 %v1664
    %1726 = vmatpush1.msra.mxu0 %v1663
    %1727 = vmatprep.subr.mxu0 %v1668
    %1728 = vmatpush1.msra.mxu0 %v1667
    %1729 = vmatprep.subr.mxu0 %v1672
    %1730 = vmatpush1.msra.mxu0 %v1671
    %1731 = vmatprep.subr.mxu0 %v1676
    %1732 = vmatpush1.msra.mxu0 %v1675
    %1733 = vmatprep.subr.mxu0 0.0
    %1734 = vmatpush1.msra.mxu0 0.0
    %1735 = vmatprep.subr.mxu0 0.0
    %1736 = vmatpush1.msra.mxu0 0.0
    %1737 = vmatprep.subr.mxu0 0.0
    %1738 = vmatpush1.msra.mxu0 0.0
    %1739 = vmatprep.subr.mxu0 0.0
    %1740 = vmatpush1.msra.mxu0 0.0
    %1741 = vmatprep.subr.mxu0 0.0
    %1742 = vmatpush1.msra.mxu0 0.0
    %1743 = vmatprep.subr.mxu0 0.0
    %1744 = vmatpush1.msra.mxu0 0.0
    %1745 = vmatprep.subr.mxu0 0.0
    %1746 = vmatpush1.msra.mxu0 0.0
    %1747 = vmatprep.subr.mxu0 0.0
    %1748 = vmatpush1.msra.mxu0 0.0
    %1749 = vmatprep.subr.mxu0 0.0
    %1750 = vmatpush1.msra.mxu0 0.0
    %1751 = vmatprep.subr.mxu0 0.0
    %1752 = vmatpush1.msra.mxu0 0.0
    %1753 = vmatprep.subr.mxu0 0.0
    %1754 = vmatpush1.msra.mxu0 0.0
    %1755 = vmatprep.subr.mxu0 0.0
    %1756 = vmatpush1.msra.mxu0 0.0
    %1757 = vmatprep.subr.mxu0 0.0
    %1758 = vmatpush1.msra.mxu0 0.0
    %1759 = vmatprep.subr.mxu0 0.0
    %1760 = vmatpush1.msra.mxu0 0.0
    %1761 = vmatprep.subr.mxu0 0.0
    %1762 = vmatpush1.msra.mxu0 0.0
    %1763 = vmatprep.subr.mxu0 0.0
    %1764 = vmatpush1.msra.mxu0 0.0
    %1765 = vmatprep.mubr.f32.mxu0 0.0
    %1766 = vmatmul.mubr.f32.gmra.mrb[0].mxu0 %v1611
    %v1767 = vpop.f32.mrb[0].mxu0
    %v1768 = vadd.f32 %v1684, %v1767
    %v1769 = vpop.f32.mrb[0].mxu0
    %v1770 = vadd.f32 %v1688, %v1769
    %1771 = vdwg.mxu0
    %1772 = vmatprep.subr.mxu0 %v1618
    %1773 = vmatpush1.msra.mxu0 %v1617
    %1774 = vmatprep.subr.mxu0 %v1622
    %1775 = vmatpush1.msra.mxu0 %v1621
    %1776 = vmatprep.subr.mxu0 %v1626
    %1777 = vmatpush1.msra.mxu0 %v1625
    %1778 = vmatprep.subr.mxu0 %v1630
    %1779 = vmatpush1.msra.mxu0 %v1629
    %1780 = vmatprep.subr.mxu0 %v1634
    %1781 = vmatpush1.msra.mxu0 %v1633
    %1782 = vmatprep.subr.mxu0 %v1638
    %1783 = vmatpush1.msra.mxu0 %v1637
    %1784 = vmatprep.subr.mxu0 %v1642
    %1785 = vmatpush1.msra.mxu0 %v1641
    %1786 = vmatprep.subr.mxu0 %v1646
    %1787 = vmatpush1.msra.mxu0 %v1645
    %1788 = vmatprep.subr.mxu0 %v1650
    %1789 = vmatpush1.msra.mxu0 %v1649
    %1790 = vmatprep.subr.mxu0 %v1654
    %1791 = vmatpush1.msra.mxu0 %v1653
    %1792 = vmatprep.subr.mxu0 %v1658
    %1793 = vmatpush1.msra.mxu0 %v1657
    %1794 = vmatprep.subr.mxu0 %v1662
    %1795 = vmatpush1.msra.mxu0 %v1661
    %1796 = vmatprep.subr.mxu0 %v1666
    %1797 = vmatpush1.msra.mxu0 %v1665
    %1798 = vmatprep.subr.mxu0 %v1670
    %1799 = vmatpush1.msra.mxu0 %v1669
    %1800 = vmatprep.subr.mxu0 %v1674
    %1801 = vmatpush1.msra.mxu0 %v1673
    %1802 = vmatprep.subr.mxu0 %v1678
    %1803 = vmatpush1.msra.mxu0 %v1677
    %1804 = vmatprep.subr.mxu0 0.0
    %1805 = vmatpush1.msra.mxu0 0.0
    %1806 = vmatprep.subr.mxu0 0.0
    %1807 = vmatpush1.msra.mxu0 0.0
    %1808 = vmatprep.subr.mxu0 0.0
    %1809 = vmatpush1.msra.mxu0 0.0
    %1810 = vmatprep.subr.mxu0 0.0
    %1811 = vmatpush1.msra.mxu0 0.0
    %1812 = vmatprep.subr.mxu0 0.0
    %1813 = vmatpush1.msra.mxu0 0.0
    %1814 = vmatprep.subr.mxu0 0.0
    %1815 = vmatpush1.msra.mxu0 0.0
    %1816 = vmatprep.subr.mxu0 0.0
    %1817 = vmatpush1.msra.mxu0 0.0
    %1818 = vmatprep.subr.mxu0 0.0
    %1819 = vmatpush1.msra.mxu0 0.0
    %1820 = vmatprep.subr.mxu0 0.0
    %1821 = vmatpush1.msra.mxu0 0.0
    %1822 = vmatprep.subr.mxu0 0.0
    %1823 = vmatpush1.msra.mxu0 0.0
    %1824 = vmatprep.subr.mxu0 0.0
    %1825 = vmatpush1.msra.mxu0 0.0
    %1826 = vmatprep.subr.mxu0 0.0
    %1827 = vmatpush1.msra.mxu0 0.0
    %1828 = vmatprep.subr.mxu0 0.0
    %1829 = vmatpush1.msra.mxu0 0.0
    %1830 = vmatprep.subr.mxu0 0.0
    %1831 = vmatpush1.msra.mxu0 0.0
    %1832 = vmatprep.subr.mxu0 0.0
    %1833 = vmatpush1.msra.mxu0 0.0
    %1834 = vmatprep.subr.mxu0 0.0
    %1835 = vmatpush1.msra.mxu0 0.0
    %1836 = vmatprep.mubr.f32.mxu0 0.0
    %1837 = vmatmul.mubr.f32.gmra.mrb[0].mxu0 %v1611
    %v1838 = vpop.f32.mrb[0].mxu0
    %v1839 = vadd.f32 %v1692, %v1838
    %v1840 = vpop.f32.mrb[0].mxu0
    %v1841 = vadd.f32 %v1696, %v1840
    %1842 = vdwg.mxu0
    %v1843 = vadd.f32 %v1614, %v1768
    %v1844 = vsel %vm539, %v1843, -inf
    %1845 = vmax.xlane.f32.xlu0 %v1844
    %v1846 = vpop.xlane.xlu0 %1845
    %v1847 = vsub.f32 %v1843, %v1846
    %v1848 = vmul.f32 %v1847, 1.442695
    %v1849 = vpow.pop %v1848
    %v1850 = vld [vmem:[#allocation12] sm:$0xff]
    %v1851 = vld [vmem:[#allocation12 + $0x8] sm:$0xff]
    %v1852 = vld [vmem:[#allocation12 + $0x10] sm:$0xff]
    %v1853 = vld [vmem:[#allocation12 + $0x18] sm:$0xff]
    %v1854 = vld [vmem:[#allocation12 + $0x20] sm:$0xff]
    %v1855 = vld [vmem:[#allocation12 + $0x28] sm:$0xff]
    %v1856 = vld [vmem:[#allocation12 + $0x30] sm:$0xff]
    %v1857 = vld [vmem:[#allocation12 + $0x38] sm:$0xff]
    %v1858 = vld [vmem:[#allocation12 + $0x40] sm:$0xff]
    %v1859 = vld [vmem:[#allocation12 + $0x48] sm:$0xff]
    %v1860 = vld [vmem:[#allocation12 + $0x50] sm:$0xff]
    %v1861 = vld [vmem:[#allocation12 + $0x58] sm:$0xff]
    %v1862 = vld [vmem:[#allocation12 + $0x60] sm:$0xff]
    %v1863 = vld [vmem:[#allocation12 + $0x68] sm:$0xff]
    %v1864 = vld [vmem:[#allocation12 + $0x70] sm:$0xff]
    %v1865 = vld [vmem:[#allocation12 + $0x78] sm:$0xff]
    %1866 = vmatprep.subr.mxu0 0.0
    %1867 = vmatpush1.msra.mxu0 %v1850
    %1868 = vmatprep.subr.mxu0 0.0
    %1869 = vmatpush1.msra.mxu0 %v1851
    %1870 = vmatprep.subr.mxu0 0.0
    %1871 = vmatpush1.msra.mxu0 %v1852
    %1872 = vmatprep.subr.mxu0 0.0
    %1873 = vmatpush1.msra.mxu0 %v1853
    %1874 = vmatprep.subr.mxu0 0.0
    %1875 = vmatpush1.msra.mxu0 %v1854
    %1876 = vmatprep.subr.mxu0 0.0
    %1877 = vmatpush1.msra.mxu0 %v1855
    %1878 = vmatprep.subr.mxu0 0.0
    %1879 = vmatpush1.msra.mxu0 %v1856
    %1880 = vmatprep.subr.mxu0 0.0
    %1881 = vmatpush1.msra.mxu0 %v1857
    %1882 = vmatprep.subr.mxu0 0.0
    %1883 = vmatpush1.msra.mxu0 %v1858
    %1884 = vmatprep.subr.mxu0 0.0
    %1885 = vmatpush1.msra.mxu0 %v1859
    %1886 = vmatprep.subr.mxu0 0.0
    %1887 = vmatpush1.msra.mxu0 %v1860
    %1888 = vmatprep.subr.mxu0 0.0
    %1889 = vmatpush1.msra.mxu0 %v1861
    %1890 = vmatprep.subr.mxu0 0.0
    %1891 = vmatpush1.msra.mxu0 %v1862
    %1892 = vmatprep.subr.mxu0 0.0
    %1893 = vmatpush1.msra.mxu0 %v1863
    %1894 = vmatprep.subr.mxu0 0.0
    %1895 = vmatpush1.msra.mxu0 %v1864
    %1896 = vmatprep.subr.mxu0 0.0
    %1897 = vmatpush1.msra.mxu0 %v1865
    %1898 = vmatprep.subr.mxu0 0.0
    %1899 = vmatpush1.msra.mxu0 0.0
    %1900 = vmatprep.subr.mxu0 0.0
    %1901 = vmatpush1.msra.mxu0 0.0
    %1902 = vmatprep.subr.mxu0 0.0
    %1903 = vmatpush1.msra.mxu0 0.0
    %1904 = vmatprep.subr.mxu0 0.0
    %1905 = vmatpush1.msra.mxu0 0.0
    %1906 = vmatprep.subr.mxu0 0.0
    %1907 = vmatpush1.msra.mxu0 0.0
    %1908 = vmatprep.subr.mxu0 0.0
    %1909 = vmatpush1.msra.mxu0 0.0
    %1910 = vmatprep.subr.mxu0 0.0
    %1911 = vmatpush1.msra.mxu0 0.0
    %1912 = vmatprep.subr.mxu0 0.0
    %1913 = vmatpush1.msra.mxu0 0.0
    %1914 = vmatprep.subr.mxu0 0.0
    %1915 = vmatpush1.msra.mxu0 0.0
    %1916 = vmatprep.subr.mxu0 0.0
    %1917 = vmatpush1.msra.mxu0 0.0
    %1918 = vmatprep.subr.mxu0 0.0
    %1919 = vmatpush1.msra.mxu0 0.0
    %1920 = vmatprep.subr.mxu0 0.0
    %1921 = vmatpush1.msra.mxu0 0.0
    %1922 = vmatprep.subr.mxu0 0.0
    %1923 = vmatpush1.msra.mxu0 0.0
    %1924 = vmatprep.subr.mxu0 0.0
    %1925 = vmatpush1.msra.mxu0 0.0
    %1926 = vmatprep.subr.mxu0 0.0
    %1927 = vmatpush1.msra.mxu0 0.0
    %1928 = vmatprep.subr.mxu0 0.0
    %1929 = vmatpush1.msra.mxu0 0.0
    %1930 = vmatprep.mubr.f32.mxu0 0.0
    %1931 = vmatmul.mubr.f32.gmra.mrb[0].mxu0 %v1849
    %v1932 = vpop.f32.mrb[0].mxu0
    %v1933 = vadd.f32 0.0, %v1932
    %v1934 = vpop.f32.mrb[0].mxu0
    %1935 = vdwg.mxu0
    %v1936 = vsel %vm539, %v1849, 0.0
    %1937 = vadd.xlane.f32.xlu0 %v1936
    %v1938 = vpop.xlane.xlu0 %1937
    %v1939 = vrcp.pop %v1938
    %v1940 = vmul.f32 %v1938, %v1939
    %v1941 = vsub.f32 2.0, %v1940
    %v1942 = vmul.f32 %v1939, %v1941
    %v1943 = vmul.f32 %v1849, %v1942
    %1944 = vst [vmem:[#allocation24 + $0x2] sm:$0x1] %v1943
    %v1945 = vmul.f32 %v1933, %v1942
    %v1946 = vld [vmem:[#allocation16] sm:$0xff]
    %v1947 = vld [vmem:[#allocation16 + $0x8] sm:$0xff]
    %v1948 = vld [vmem:[#allocation16 + $0x10] sm:$0xff]
    %v1949 = vld [vmem:[#allocation16 + $0x18] sm:$0xff]
    %v1950 = vld [vmem:[#allocation16 + $0x20] sm:$0xff]
    %v1951 = vld [vmem:[#allocation16 + $0x28] sm:$0xff]
    %v1952 = vld [vmem:[#allocation16 + $0x30] sm:$0xff]
    %v1953 = vld [vmem:[#allocation16 + $0x38] sm:$0xff]
    %v1954 = vld [vmem:[#allocation16 + $0x40] sm:$0xff]
    %v1955 = vld [vmem:[#allocation16 + $0x48] sm:$0xff]
    %v1956 = vld [vmem:[#allocation16 + $0x50] sm:$0xff]
    %v1957 = vld [vmem:[#allocation16 + $0x58] sm:$0xff]
    %v1958 = vld [vmem:[#allocation16 + $0x60] sm:$0xff]
    %v1959 = vld [vmem:[#allocation16 + $0x68] sm:$0xff]
    %v1960 = vld [vmem:[#allocation16 + $0x70] sm:$0xff]
    %v1961 = vld [vmem:[#allocation16 + $0x78] sm:$0xff]
    %1962 = vmatprep.subr.mxu0 0.0
    %1963 = vmatpush1.msra.mxu0 %v1946
    %1964 = vmatprep.subr.mxu0 0.0
    %1965 = vmatpush1.msra.mxu0 %v1947
    %1966 = vmatprep.subr.mxu0 0.0
    %1967 = vmatpush1.msra.mxu0 %v1948
    %1968 = vmatprep.subr.mxu0 0.0
    %1969 = vmatpush1.msra.mxu0 %v1949
    %1970 = vmatprep.subr.mxu0 0.0
    %1971 = vmatpush1.msra.mxu0 %v1950
    %1972 = vmatprep.subr.mxu0 0.0
    %1973 = vmatpush1.msra.mxu0 %v1951
    %1974 = vmatprep.subr.mxu0 0.0
    %1975 = vmatpush1.msra.mxu0 %v1952
    %1976 = vmatprep.subr.mxu0 0.0
    %1977 = vmatpush1.msra.mxu0 %v1953
    %1978 = vmatprep.subr.mxu0 0.0
    %1979 = vmatpush1.msra.mxu0 %v1954
    %1980 = vmatprep.subr.mxu0 0.0
    %1981 = vmatpush1.msra.mxu0 %v1955
    %1982 = vmatprep.subr.mxu0 0.0
    %1983 = vmatpush1.msra.mxu0 %v1956
    %1984 = vmatprep.subr.mxu0 0.0
    %1985 = vmatpush1.msra.mxu0 %v1957
    %1986 = vmatprep.subr.mxu0 0.0
    %1987 = vmatpush1.msra.mxu0 %v1958
    %1988 = vmatprep.subr.mxu0 0.0
    %1989 = vmatpush1.msra.mxu0 %v1959
    %1990 = vmatprep.subr.mxu0 0.0
    %1991 = vmatpush1.msra.mxu0 %v1960
    %1992 = vmatprep.subr.mxu0 0.0
    %1993 = vmatpush1.msra.mxu0 %v1961
    %1994 = vmatprep.subr.mxu0 0.0
    %1995 = vmatpush1.msra.mxu0 0.0
    %1996 = vmatprep.subr.mxu0 0.0
    %1997 = vmatpush1.msra.mxu0 0.0
    %1998 = vmatprep.subr.mxu0 0.0
    %1999 = vmatpush1.msra.mxu0 0.0
    %2000 = vmatprep.subr.mxu0 0.0
    %2001 = vmatpush1.msra.mxu0 0.0
    %2002 = vmatprep.subr.mxu0 0.0
    %2003 = vmatpush1.msra.mxu0 0.0
    %2004 = vmatprep.subr.mxu0 0.0
    %2005 = vmatpush1.msra.mxu0 0.0
    %2006 = vmatprep.subr.mxu0 0.0
    %2007 = vmatpush1.msra.mxu0 0.0
    %2008 = vmatprep.subr.mxu0 0.0
    %2009 = vmatpush1.msra.mxu0 0.0
    %2010 = vmatprep.subr.mxu0 0.0
    %2011 = vmatpush1.msra.mxu0 0.0
    %2012 = vmatprep.subr.mxu0 0.0
    %2013 = vmatpush1.msra.mxu0 0.0
    %2014 = vmatprep.subr.mxu0 0.0
    %2015 = vmatpush1.msra.mxu0 0.0
    %2016 = vmatprep.subr.mxu0 0.0
    %2017 = vmatpush1.msra.mxu0 0.0
    %2018 = vmatprep.subr.mxu0 0.0
    %2019 = vmatpush1.msra.mxu0 0.0
    %2020 = vmatprep.subr.mxu0 0.0
    %2021 = vmatpush1.msra.mxu0 0.0
    %2022 = vmatprep.subr.mxu0 0.0
    %2023 = vmatpush1.msra.mxu0 0.0
    %2024 = vmatprep.subr.mxu0 0.0
    %2025 = vmatpush1.msra.mxu0 0.0
    %2026 = vmatprep.mubr.f32.mxu0 0.0
    %2027 = vmatmul.mubr.f32.gmra.mrb[0].mxu0 %v1945
    %v2028 = vpop.f32.mrb[0].mxu0
    %v2029 = vadd.f32 0.0, %v2028
    %v2030 = vpop.f32.mrb[0].mxu0
    %2031 = vdwg.mxu0
    %v2033 = vrot.slane %v1614, 1
    %v2035 = vadd.f32 %v2033, %v2029
    %v2036 = vmax.f32 %v2035, 0.0
    %v2037 = vld [vmem:[#allocation18] sm:$0xff]
    %v2038 = vld [vmem:[#allocation18 + $0x8] sm:$0xff]
    %v2039 = vld [vmem:[#allocation18 + $0x10] sm:$0xff]
    %v2040 = vld [vmem:[#allocation18 + $0x18] sm:$0xff]
    %v2041 = vld [vmem:[#allocation18 + $0x20] sm:$0xff]
    %v2042 = vld [vmem:[#allocation18 + $0x28] sm:$0xff]
    %v2043 = vld [vmem:[#allocation18 + $0x30] sm:$0xff]
    %v2044 = vld [vmem:[#allocation18 + $0x38] sm:$0xff]
    %v2045 = vld [vmem:[#allocation18 + $0x40] sm:$0xff]
    %v2046 = vld [vmem:[#allocation18 + $0x48] sm:$0xff]
    %v2047 = vld [vmem:[#allocation18 + $0x50] sm:$0xff]
    %v2048 = vld [vmem:[#allocation18 + $0x58] sm:$0xff]
    %v2049 = vld [vmem:[#allocation18 + $0x60] sm:$0xff]
    %v2050 = vld [vmem:[#allocation18 + $0x68] sm:$0xff]
    %v2051 = vld [vmem:[#allocation18 + $0x70] sm:$0xff]
    %v2052 = vld [vmem:[#allocation18 + $0x78] sm:$0xff]
    %v2053 = vld [vmem:[#allocation18 + $0x80] sm:$0xff]
    %v2054 = vld [vmem:[#allocation18 + $0x88] sm:$0xff]
    %v2055 = vld [vmem:[#allocation18 + $0x90] sm:$0xff]
    %v2056 = vld [vmem:[#allocation18 + $0x98] sm:$0xff]
    %v2057 = vld [vmem:[#allocation18 + $0xa0] sm:$0xff]
    %v2058 = vld [vmem:[#allocation18 + $0xa8] sm:$0xff]
    %v2059 = vld [vmem:[#allocation18 + $0xb0] sm:$0xff]
    %v2060 = vld [vmem:[#allocation18 + $0xb8] sm:$0xff]
    %v2061 = vld [vmem:[#allocation18 + $0xc0] sm:$0xff]
    %v2062 = vld [vmem:[#allocation18 + $0xc8] sm:$0xff]
    %v2063 = vld [vmem:[#allocation18 + $0xd0] sm:$0xff]
    %v2064 = vld [vmem:[#allocation18 + $0xd8] sm:$0xff]
    %v2065 = vld [vmem:[#allocation18 + $0xe0] sm:$0xff]
    %v2066 = vld [vmem:[#allocation18 + $0xe8] sm:$0xff]
    %v2067 = vld [vmem:[#allocation18 + $0xf0] sm:$0xff]
    %v2068 = vld [vmem:[#allocation18 + $0xf8] sm:$0xff]
    %v2069 = vld [vmem:[#allocation18 + $0x100] sm:$0xff]
    %v2070 = vld [vmem:[#allocation18 + $0x108] sm:$0xff]
    %v2071 = vld [vmem:[#allocation18 + $0x110] sm:$0xff]
    %v2072 = vld [vmem:[#allocation18 + $0x118] sm:$0xff]
    %v2073 = vld [vmem:[#allocation18 + $0x120] sm:$0xff]
    %v2074 = vld [vmem:[#allocation18 + $0x128] sm:$0xff]
    %v2075 = vld [vmem:[#allocation18 + $0x130] sm:$0xff]
    %v2076 = vld [vmem:[#allocation18 + $0x138] sm:$0xff]
    %v2077 = vld [vmem:[#allocation18 + $0x140] sm:$0xff]
    %v2078 = vld [vmem:[#allocation18 + $0x148] sm:$0xff]
    %v2079 = vld [vmem:[#allocation18 + $0x150] sm:$0xff]
    %v2080 = vld [vmem:[#allocation18 + $0x158] sm:$0xff]
    %v2081 = vld [vmem:[#allocation18 + $0x160] sm:$0xff]
    %v2082 = vld [vmem:[#allocation18 + $0x168] sm:$0xff]
    %v2083 = vld [vmem:[#allocation18 + $0x170] sm:$0xff]
    %v2084 = vld [vmem:[#allocation18 + $0x178] sm:$0xff]
    %v2085 = vld [vmem:[%s10] sm:$0x7]
    %v2087 = vlaneseq
    %v2088 = vshrl.u32 %v2087, 7
    %v2089 = vsub.s32 0, %v2088
    %v2090 = vrot.slane %v2085, %v2089
    %v2091 = vlaneseq
    %v2092 = vshrl.u32 %v2091, 7
    %v2093 = vsub.s32 1, %v2092
    %v2094 = vrot.slane %v2085, %v2093
    %v2095 = vlaneseq
    %v2096 = vshrl.u32 %v2095, 7
    %v2097 = vsub.s32 2, %v2096
    %v2098 = vrot.slane %v2085, %v2097
    %2102 = vmatprep.subr.mxu0 %v2038
    %2103 = vmatpush1.msra.mxu0 %v2037
    %2104 = vmatprep.subr.mxu0 %v2041
    %2105 = vmatpush1.msra.mxu0 %v2040
    %2106 = vmatprep.subr.mxu0 %v2044
    %2107 = vmatpush1.msra.mxu0 %v2043
    %2108 = vmatprep.subr.mxu0 %v2047
    %2109 = vmatpush1.msra.mxu0 %v2046
    %2110 = vmatprep.subr.mxu0 %v2050
    %2111 = vmatpush1.msra.mxu0 %v2049
    %2112 = vmatprep.subr.mxu0 %v2053
    %2113 = vmatpush1.msra.mxu0 %v2052
    %2114 = vmatprep.subr.mxu0 %v2056
    %2115 = vmatpush1.msra.mxu0 %v2055
    %2116 = vmatprep.subr.mxu0 %v2059
    %2117 = vmatpush1.msra.mxu0 %v2058
    %2118 = vmatprep.subr.mxu0 %v2062
    %2119 = vmatpush1.msra.mxu0 %v2061
    %2120 = vmatprep.subr.mxu0 %v2065
    %2121 = vmatpush1.msra.mxu0 %v2064
    %2122 = vmatprep.subr.mxu0 %v2068
    %2123 = vmatpush1.msra.mxu0 %v2067
    %2124 = vmatprep.subr.mxu0 %v2071
    %2125 = vmatpush1.msra.mxu0 %v2070
    %2126 = vmatprep.subr.mxu0 %v2074
    %2127 = vmatpush1.msra.mxu0 %v2073
    %2128 = vmatprep.subr.mxu0 %v2077
    %2129 = vmatpush1.msra.mxu0 %v2076
    %2130 = vmatprep.subr.mxu0 %v2080
    %2131 = vmatpush1.msra.mxu0 %v2079
    %2132 = vmatprep.subr.mxu0 %v2083
    %2133 = vmatpush1.msra.mxu0 %v2082
    %2134 = vmatprep.subr.mxu0 0.0
    %2135 = vmatpush1.msra.mxu0 0.0
    %2136 = vmatprep.subr.mxu0 0.0
    %2137 = vmatpush1.msra.mxu0 0.0
    %2138 = vmatprep.subr.mxu0 0.0
    %2139 = vmatpush1.msra.mxu0 0.0
    %2140 = vmatprep.subr.mxu0 0.0
    %2141 = vmatpush1.msra.mxu0 0.0
    %2142 = vmatprep.subr.mxu0 0.0
    %2143 = vmatpush1.msra.mxu0 0.0
    %2144 = vmatprep.subr.mxu0 0.0
    %2145 = vmatpush1.msra.mxu0 0.0
    %2146 = vmatprep.subr.mxu0 0.0
    %2147 = vmatpush1.msra.mxu0 0.0
    %2148 = vmatprep.subr.mxu0 0.0
    %2149 = vmatpush1.msra.mxu0 0.0
    %2150 = vmatprep.subr.mxu0 0.0
    %2151 = vmatpush1.msra.mxu0 0.0
    %2152 = vmatprep.subr.mxu0 0.0
    %2153 = vmatpush1.msra.mxu0 0.0
    %2154 = vmatprep.subr.mxu0 0.0
    %2155 = vmatpush1.msra.mxu0 0.0
    %2156 = vmatprep.subr.mxu0 0.0
    %2157 = vmatpush1.msra.mxu0 0.0
    %2158 = vmatprep.subr.mxu0 0.0
    %2159 = vmatpush1.msra.mxu0 0.0
    %2160 = vmatprep.subr.mxu0 0.0
    %2161 = vmatpush1.msra.mxu0 0.0
    %2162 = vmatprep.subr.mxu0 0.0
    %2163 = vmatpush1.msra.mxu0 0.0
    %2164 = vmatprep.subr.mxu0 0.0
    %2165 = vmatpush1.msra.mxu0 0.0
    %2166 = vmatprep.mubr.f32.mxu0 0.0
    %2167 = vmatmul.mubr.f32.gmra.mrb[0].mxu0 %v2036
    %v2168 = vpop.f32.mrb[0].mxu0
    %v2169 = vadd.f32 %v2090, %v2168
    %v2170 = vpop.f32.mrb[0].mxu0
    %v2171 = vadd.f32 %v2094, %v2170
    %2172 = vdwg.mxu0
    %2173 = vmatprep.subr.mxu0 0.0
    %2174 = vmatpush1.msra.mxu0 %v2039
    %2175 = vmatprep.subr.mxu0 0.0
    %2176 = vmatpush1.msra.mxu0 %v2042
    %2177 = vmatprep.subr.mxu0 0.0
    %2178 = vmatpush1.msra.mxu0 %v2045
    %2179 = vmatprep.subr.mxu0 0.0
    %2180 = vmatpush1.msra.mxu0 %v2048
    %2181 = vmatprep.subr.mxu0 0.0
    %2182 = vmatpush1.msra.mxu0 %v2051
    %2183 = vmatprep.subr.mxu0 0.0
    %2184 = vmatpush1.msra.mxu0 %v2054
    %2185 = vmatprep.subr.mxu0 0.0
    %2186 = vmatpush1.msra.mxu0 %v2057
    %2187 = vmatprep.subr.mxu0 0.0
    %2188 = vmatpush1.msra.mxu0 %v2060
    %2189 = vmatprep.subr.mxu0 0.0
    %2190 = vmatpush1.msra.mxu0 %v2063
    %2191 = vmatprep.subr.mxu0 0.0
    %2192 = vmatpush1.msra.mxu0 %v2066
    %2193 = vmatprep.subr.mxu0 0.0
    %2194 = vmatpush1.msra.mxu0 %v2069
    %2195 = vmatprep.subr.mxu0 0.0
    %2196 = vmatpush1.msra.mxu0 %v2072
    %2197 = vmatprep.subr.mxu0 0.0
    %2198 = vmatpush1.msra.mxu0 %v2075
    %2199 = vmatprep.subr.mxu0 0.0
    %2200 = vmatpush1.msra.mxu0 %v2078
    %2201 = vmatprep.subr.mxu0 0.0
    %2202 = vmatpush1.msra.mxu0 %v2081
    %2203 = vmatprep.subr.mxu0 0.0
    %2204 = vmatpush1.msra.mxu0 %v2084
    %2205 = vmatprep.subr.mxu0 0.0
    %2206 = vmatpush1.msra.mxu0 0.0
    %2207 = vmatprep.subr.mxu0 0.0
    %2208 = vmatpush1.msra.mxu0 0.0
    %2209 = vmatprep.subr.mxu0 0.0
    %2210 = vmatpush1.msra.mxu0 0.0
    %2211 = vmatprep.subr.mxu0 0.0
    %2212 = vmatpush1.msra.mxu0 0.0
    %2213 = vmatprep.subr.mxu0 0.0
    %2214 = vmatpush1.msra.mxu0 0.0
    %2215 = vmatprep.subr.mxu0 0.0
    %2216 = vmatpush1.msra.mxu0 0.0
    %2217 = vmatprep.subr.mxu0 0.0
    %2218 = vmatpush1.msra.mxu0 0.0
    %2219 = vmatprep.subr.mxu0 0.0
    %2220 = vmatpush1.msra.mxu0 0.0
    %2221 = vmatprep.subr.mxu0 0.0
    %2222 = vmatpush1.msra.mxu0 0.0
    %2223 = vmatprep.subr.mxu0 0.0
    %2224 = vmatpush1.msra.mxu0 0.0
    %2225 = vmatprep.subr.mxu0 0.0
    %2226 = vmatpush1.msra.mxu0 0.0
    %2227 = vmatprep.subr.mxu0 0.0
    %2228 = vmatpush1.msra.mxu0 0.0
    %2229 = vmatprep.subr.mxu0 0.0
    %2230 = vmatpush1.msra.mxu0 0.0
    %2231 = vmatprep.subr.mxu0 0.0
    %2232 = vmatpush1.msra.mxu0 0.0
    %2233 = vmatprep.subr.mxu0 0.0
    %2234 = vmatpush1.msra.mxu0 0.0
    %2235 = vmatprep.subr.mxu0 0.0
    %2236 = vmatpush1.msra.mxu0 0.0
    %2237 = vmatprep.mubr.f32.mxu0 0.0
    %2238 = vmatmul.mubr.f32.gmra.mrb[0].mxu0 %v2036
    %v2239 = vpop.f32.mrb[0].mxu0
    %v2240 = vadd.f32 %v2098, %v2239
    %v2241 = vpop.f32.mrb[0].mxu0
    %2242 = vdwg.mxu0
    %v2243 = vadd.f32 %v2169, %v1770
    %v2244 = vxor.u32 %v2243, 2147483648
    %v2245 = vmul.f32 %v2244, 1.442695
    %v2246 = vpow.pop %v2245
    %v2247 = vadd.f32 %v2246, 1.0
    %v2248 = vrcp.pop %v2247
    %v2249 = vmul.f32 1.0, %v2248
    %v2250 = vadd.f32 %v2171, %v1839
    %v2251 = vxor.u32 %v2250, 2147483648
    %v2252 = vmul.f32 %v2251, 1.442695
    %v2253 = vpow.pop %v2252
    %v2254 = vadd.f32 %v2253, 1.0
    %v2255 = vrcp.pop %v2254
    %v2256 = vmul.f32 1.0, %v2255
    %v2257 = vmul.f32 %v2249, %v1841
    %v2258 = vadd.f32 %v2240, %v2257
    %v2259 = vtanh.pop %v2258
    %v2260 = vsub.f32 1.0, %v2256
    %v2261 = vmul.f32 %v2260, %v2259
    %v2262 = vmul.f32 %v2256, %v1611
    %v2263 = vadd.f32 %v2261, %v2262
    %2264 = vst [vmem:[#allocation4 + $0x2] sm:$0x1] %v2263
    %s2265 = scalar_lea.vmem [#allocation3], 3
    %v2266 = vld [vmem:[%s2265] ss:$8 sm:$0x3]
    %v2267 = vld [vmem:[#allocation15] sm:$0xff]
    %v2268 = vld [vmem:[#allocation15 + $0x8] sm:$0xff]
    %v2269 = vld [vmem:[#allocation15 + $0x10] sm:$0xff]
    %v2270 = vld [vmem:[#allocation15 + $0x18] sm:$0xff]
    %v2271 = vld [vmem:[#allocation15 + $0x20] sm:$0xff]
    %v2272 = vld [vmem:[#allocation15 + $0x28] sm:$0xff]
    %v2273 = vld [vmem:[#allocation15 + $0x30] sm:$0xff]
    %v2274 = vld [vmem:[#allocation15 + $0x38] sm:$0xff]
    %v2275 = vld [vmem:[#allocation15 + $0x40] sm:$0xff]
    %v2276 = vld [vmem:[#allocation15 + $0x48] sm:$0xff]
    %v2277 = vld [vmem:[#allocation15 + $0x50] sm:$0xff]
    %v2278 = vld [vmem:[#allocation15 + $0x58] sm:$0xff]
    %v2279 = vld [vmem:[#allocation15 + $0x60] sm:$0xff]
    %v2280 = vld [vmem:[#allocation15 + $0x68] sm:$0xff]
    %v2281 = vld [vmem:[#allocation15 + $0x70] sm:$0xff]
    %v2282 = vld [vmem:[#allocation15 + $0x78] sm:$0xff]
    %v2283 = vld [vmem:[#allocation15 + $0x80] sm:$0xff]
    %v2284 = vld [vmem:[#allocation15 + $0x88] sm:$0xff]
    %v2285 = vld [vmem:[#allocation15 + $0x90] sm:$0xff]
    %v2286 = vld [vmem:[#allocation15 + $0x98] sm:$0xff]
    %v2287 = vld [vmem:[#allocation15 + $0xa0] sm:$0xff]
    %v2288 = vld [vmem:[#allocation15 + $0xa8] sm:$0xff]
    %v2289 = vld [vmem:[#allocation15 + $0xb0] sm:$0xff]
    %v2290 = vld [vmem:[#allocation15 + $0xb8] sm:$0xff]
    %v2291 = vld [vmem:[#allocation15 + $0xc0] sm:$0xff]
    %v2292 = vld [vmem:[#allocation15 + $0xc8] sm:$0xff]
    %v2293 = vld [vmem:[#allocation15 + $0xd0] sm:$0xff]
    %v2294 = vld [vmem:[#allocation15 + $0xd8] sm:$0xff]
    %v2295 = vld [vmem:[#allocation15 + $0xe0] sm:$0xff]
    %v2296 = vld [vmem:[#allocation15 + $0xe8] sm:$0xff]
    %v2297 = vld [vmem:[#allocation15 + $0xf0] sm:$0xff]
    %v2298 = vld [vmem:[#allocation15 + $0xf8] sm:$0xff]
    %v2299 = vld [vmem:[#allocation15 + $0x100] sm:$0xff]
    %v2300 = vld [vmem:[#allocation15 + $0x108] sm:$0xff]
    %v2301 = vld [vmem:[#allocation15 + $0x110] sm:$0xff]
    %v2302 = vld [vmem:[#allocation15 + $0x118] sm:$0xff]
    %v2303 = vld [vmem:[#allocation15 + $0x120] sm:$0xff]
    %v2304 = vld [vmem:[#allocation15 + $0x128] sm:$0xff]
    %v2305 = vld [vmem:[#allocation15 + $0x130] sm:$0xff]
    %v2306 = vld [vmem:[#allocation15 + $0x138] sm:$0xff]
    %v2307 = vld [vmem:[#allocation15 + $0x140] sm:$0xff]
    %v2308 = vld [vmem:[#allocation15 + $0x148] sm:$0xff]
    %v2309 = vld [vmem:[#allocation15 + $0x150] sm:$0xff]
    %v2310 = vld [vmem:[#allocation15 + $0x158] sm:$0xff]
    %v2311 = vld [vmem:[#allocation15 + $0x160] sm:$0xff]
    %v2312 = vld [vmem:[#allocation15 + $0x168] sm:$0xff]
    %v2313 = vld [vmem:[#allocation15 + $0x170] sm:$0xff]
    %v2314 = vld [vmem:[#allocation15 + $0x178] sm:$0xff]
    %v2315 = vld [vmem:[#allocation15 + $0x180] sm:$0xff]
    %v2316 = vld [vmem:[#allocation15 + $0x188] sm:$0xff]
    %v2317 = vld [vmem:[#allocation15 + $0x190] sm:$0xff]
    %v2318 = vld [vmem:[#allocation15 + $0x198] sm:$0xff]
    %v2319 = vld [vmem:[#allocation15 + $0x1a0] sm:$0xff]
    %v2320 = vld [vmem:[#allocation15 + $0x1a8] sm:$0xff]
    %v2321 = vld [vmem:[#allocation15 + $0x1b0] sm:$0xff]
    %v2322 = vld [vmem:[#allocation15 + $0x1b8] sm:$0xff]
    %v2323 = vld [vmem:[#allocation15 + $0x1c0] sm:$0xff]
    %v2324 = vld [vmem:[#allocation15 + $0x1c8] sm:$0xff]
    %v2325 = vld [vmem:[#allocation15 + $0x1d0] sm:$0xff]
    %v2326 = vld [vmem:[#allocation15 + $0x1d8] sm:$0xff]
    %v2327 = vld [vmem:[#allocation15 + $0x1e0] sm:$0xff]
    %v2328 = vld [vmem:[#allocation15 + $0x1e8] sm:$0xff]
    %v2329 = vld [vmem:[#allocation15 + $0x1f0] sm:$0xff]
    %v2330 = vld [vmem:[#allocation15 + $0x1f8] sm:$0xff]
    %v2331 = vld [vmem:[%s7] sm:$0xf]
    %v2333 = vlaneseq
    %v2334 = vshrl.u32 %v2333, 7
    %v2335 = vsub.s32 0, %v2334
    %v2336 = vrot.slane %v2331, %v2335
    %v2337 = vlaneseq
    %v2338 = vshrl.u32 %v2337, 7
    %v2339 = vsub.s32 1, %v2338
    %v2340 = vrot.slane %v2331, %v2339
    %v2341 = vlaneseq
    %v2342 = vshrl.u32 %v2341, 7
    %v2343 = vsub.s32 2, %v2342
    %v2344 = vrot.slane %v2331, %v2343
    %v2345 = vlaneseq
    %v2346 = vshrl.u32 %v2345, 7
    %v2347 = vsub.s32 3, %v2346
    %v2348 = vrot.slane %v2331, %v2347
    %2353 = vmatprep.subr.mxu0 %v2268
    %2354 = vmatpush1.msra.mxu0 %v2267
    %2355 = vmatprep.subr.mxu0 %v2272
    %2356 = vmatpush1.msra.mxu0 %v2271
    %2357 = vmatprep.subr.mxu0 %v2276
    %2358 = vmatpush1.msra.mxu0 %v2275
    %2359 = vmatprep.subr.mxu0 %v2280
    %2360 = vmatpush1.msra.mxu0 %v2279
    %2361 = vmatprep.subr.mxu0 %v2284
    %2362 = vmatpush1.msra.mxu0 %v2283
    %2363 = vmatprep.subr.mxu0 %v2288
    %2364 = vmatpush1.msra.mxu0 %v2287
    %2365 = vmatprep.subr.mxu0 %v2292
    %2366 = vmatpush1.msra.mxu0 %v2291
    %2367 = vmatprep.subr.mxu0 %v2296
    %2368 = vmatpush1.msra.mxu0 %v2295
    %2369 = vmatprep.subr.mxu0 %v2300
    %2370 = vmatpush1.msra.mxu0 %v2299
    %2371 = vmatprep.subr.mxu0 %v2304
    %2372 = vmatpush1.msra.mxu0 %v2303
    %2373 = vmatprep.subr.mxu0 %v2308
    %2374 = vmatpush1.msra.mxu0 %v2307
    %2375 = vmatprep.subr.mxu0 %v2312
    %2376 = vmatpush1.msra.mxu0 %v2311
    %2377 = vmatprep.subr.mxu0 %v2316
    %2378 = vmatpush1.msra.mxu0 %v2315
    %2379 = vmatprep.subr.mxu0 %v2320
    %2380 = vmatpush1.msra.mxu0 %v2319
    %2381 = vmatprep.subr.mxu0 %v2324
    %2382 = vmatpush1.msra.mxu0 %v2323
    %2383 = vmatprep.subr.mxu0 %v2328
    %2384 = vmatpush1.msra.mxu0 %v2327
    %2385 = vmatprep.subr.mxu0 0.0
    %2386 = vmatpush1.msra.mxu0 0.0
    %2387 = vmatprep.subr.mxu0 0.0
    %2388 = vmatpush1.msra.mxu0 0.0
    %2389 = vmatprep.subr.mxu0 0.0
    %2390 = vmatpush1.msra.mxu0 0.0
    %2391 = vmatprep.subr.mxu0 0.0
    %2392 = vmatpush1.msra.mxu0 0.0
    %2393 = vmatprep.subr.mxu0 0.0
    %2394 = vmatpush1.msra.mxu0 0.0
    %2395 = vmatprep.subr.mxu0 0.0
    %2396 = vmatpush1.msra.mxu0 0.0
    %2397 = vmatprep.subr.mxu0 0.0
    %2398 = vmatpush1.msra.mxu0 0.0
    %2399 = vmatprep.subr.mxu0 0.0
    %2400 = vmatpush1.msra.mxu0 0.0
    %2401 = vmatprep.subr.mxu0 0.0
    %2402 = vmatpush1.msra.mxu0 0.0
    %2403 = vmatprep.subr.mxu0 0.0
    %2404 = vmatpush1.msra.mxu0 0.0
    %2405 = vmatprep.subr.mxu0 0.0
    %2406 = vmatpush1.msra.mxu0 0.0
    %2407 = vmatprep.subr.mxu0 0.0
    %2408 = vmatpush1.msra.mxu0 0.0
    %2409 = vmatprep.subr.mxu0 0.0
    %2410 = vmatpush1.msra.mxu0 0.0
    %2411 = vmatprep.subr.mxu0 0.0
    %2412 = vmatpush1.msra.mxu0 0.0
    %2413 = vmatprep.subr.mxu0 0.0
    %2414 = vmatpush1.msra.mxu0 0.0
    %2415 = vmatprep.subr.mxu0 0.0
    %2416 = vmatpush1.msra.mxu0 0.0
    %2417 = vmatprep.mubr.f32.mxu0 0.0
    %2418 = vmatmul.mubr.f32.gmra.mrb[0].mxu0 %v2263
    %v2419 = vpop.f32.mrb[0].mxu0
    %v2420 = vadd.f32 %v2336, %v2419
    %v2421 = vpop.f32.mrb[0].mxu0
    %v2422 = vadd.f32 %v2340, %v2421
    %2423 = vdwg.mxu0
    %2424 = vmatprep.subr.mxu0 %v2270
    %2425 = vmatpush1.msra.mxu0 %v2269
    %2426 = vmatprep.subr.mxu0 %v2274
    %2427 = vmatpush1.msra.mxu0 %v2273
    %2428 = vmatprep.subr.mxu0 %v2278
    %2429 = vmatpush1.msra.mxu0 %v2277
    %2430 = vmatprep.subr.mxu0 %v2282
    %2431 = vmatpush1.msra.mxu0 %v2281
    %2432 = vmatprep.subr.mxu0 %v2286
    %2433 = vmatpush1.msra.mxu0 %v2285
    %2434 = vmatprep.subr.mxu0 %v2290
    %2435 = vmatpush1.msra.mxu0 %v2289
    %2436 = vmatprep.subr.mxu0 %v2294
    %2437 = vmatpush1.msra.mxu0 %v2293
    %2438 = vmatprep.subr.mxu0 %v2298
    %2439 = vmatpush1.msra.mxu0 %v2297
    %2440 = vmatprep.subr.mxu0 %v2302
    %2441 = vmatpush1.msra.mxu0 %v2301
    %2442 = vmatprep.subr.mxu0 %v2306
    %2443 = vmatpush1.msra.mxu0 %v2305
    %2444 = vmatprep.subr.mxu0 %v2310
    %2445 = vmatpush1.msra.mxu0 %v2309
    %2446 = vmatprep.subr.mxu0 %v2314
    %2447 = vmatpush1.msra.mxu0 %v2313
    %2448 = vmatprep.subr.mxu0 %v2318
    %2449 = vmatpush1.msra.mxu0 %v2317
    %2450 = vmatprep.subr.mxu0 %v2322
    %2451 = vmatpush1.msra.mxu0 %v2321
    %2452 = vmatprep.subr.mxu0 %v2326
    %2453 = vmatpush1.msra.mxu0 %v2325
    %2454 = vmatprep.subr.mxu0 %v2330
    %2455 = vmatpush1.msra.mxu0 %v2329
    %2456 = vmatprep.subr.mxu0 0.0
    %2457 = vmatpush1.msra.mxu0 0.0
    %2458 = vmatprep.subr.mxu0 0.0
    %2459 = vmatpush1.msra.mxu0 0.0
    %2460 = vmatprep.subr.mxu0 0.0
    %2461 = vmatpush1.msra.mxu0 0.0
    %2462 = vmatprep.subr.mxu0 0.0
    %2463 = vmatpush1.msra.mxu0 0.0
    %2464 = vmatprep.subr.mxu0 0.0
    %2465 = vmatpush1.msra.mxu0 0.0
    %2466 = vmatprep.subr.mxu0 0.0
    %2467 = vmatpush1.msra.mxu0 0.0
    %2468 = vmatprep.subr.mxu0 0.0
    %2469 = vmatpush1.msra.mxu0 0.0
    %2470 = vmatprep.subr.mxu0 0.0
    %2471 = vmatpush1.msra.mxu0 0.0
    %2472 = vmatprep.subr.mxu0 0.0
    %2473 = vmatpush1.msra.mxu0 0.0
    %2474 = vmatprep.subr.mxu0 0.0
    %2475 = vmatpush1.msra.mxu0 0.0
    %2476 = vmatprep.subr.mxu0 0.0
    %2477 = vmatpush1.msra.mxu0 0.0
    %2478 = vmatprep.subr.mxu0 0.0
    %2479 = vmatpush1.msra.mxu0 0.0
    %2480 = vmatprep.subr.mxu0 0.0
    %2481 = vmatpush1.msra.mxu0 0.0
    %2482 = vmatprep.subr.mxu0 0.0
    %2483 = vmatpush1.msra.mxu0 0.0
    %2484 = vmatprep.subr.mxu0 0.0
    %2485 = vmatpush1.msra.mxu0 0.0
    %2486 = vmatprep.subr.mxu0 0.0
    %2487 = vmatpush1.msra.mxu0 0.0
    %2488 = vmatprep.mubr.f32.mxu0 0.0
    %2489 = vmatmul.mubr.f32.gmra.mrb[0].mxu0 %v2263
    %v2490 = vpop.f32.mrb[0].mxu0
    %v2491 = vadd.f32 %v2344, %v2490
    %v2492 = vpop.f32.mrb[0].mxu0
    %v2493 = vadd.f32 %v2348, %v2492
    %2494 = vdwg.mxu0
    %v2495 = vadd.f32 %v2266, %v2420
    %v2496 = vsel %vm539, %v2495, -inf
    %2497 = vmax.xlane.f32.xlu0 %v2496
    %v2498 = vpop.xlane.xlu0 %2497
    %v2499 = vsub.f32 %v2495, %v2498
    %v2500 = vmul.f32 %v2499, 1.442695
    %v2501 = vpow.pop %v2500
    %v2502 = vld [vmem:[#allocation12] sm:$0xff]
    %v2503 = vld [vmem:[#allocation12 + $0x8] sm:$0xff]
    %v2504 = vld [vmem:[#allocation12 + $0x10] sm:$0xff]
    %v2505 = vld [vmem:[#allocation12 + $0x18] sm:$0xff]
    %v2506 = vld [vmem:[#allocation12 + $0x20] sm:$0xff]
    %v2507 = vld [vmem:[#allocation12 + $0x28] sm:$0xff]
    %v2508 = vld [vmem:[#allocation12 + $0x30] sm:$0xff]
    %v2509 = vld [vmem:[#allocation12 + $0x38] sm:$0xff]
    %v2510 = vld [vmem:[#allocation12 + $0x40] sm:$0xff]
    %v2511 = vld [vmem:[#allocation12 + $0x48] sm:$0xff]
    %v2512 = vld [vmem:[#allocation12 + $0x50] sm:$0xff]
    %v2513 = vld [vmem:[#allocation12 + $0x58] sm:$0xff]
    %v2514 = vld [vmem:[#allocation12 + $0x60] sm:$0xff]
    %v2515 = vld [vmem:[#allocation12 + $0x68] sm:$0xff]
    %v2516 = vld [vmem:[#allocation12 + $0x70] sm:$0xff]
    %v2517 = vld [vmem:[#allocation12 + $0x78] sm:$0xff]
    %2518 = vmatprep.subr.mxu0 0.0
    %2519 = vmatpush1.msra.mxu0 %v2502
    %2520 = vmatprep.subr.mxu0 0.0
    %2521 = vmatpush1.msra.mxu0 %v2503
    %2522 = vmatprep.subr.mxu0 0.0
    %2523 = vmatpush1.msra.mxu0 %v2504
    %2524 = vmatprep.subr.mxu0 0.0
    %2525 = vmatpush1.msra.mxu0 %v2505
    %2526 = vmatprep.subr.mxu0 0.0
    %2527 = vmatpush1.msra.mxu0 %v2506
    %2528 = vmatprep.subr.mxu0 0.0
    %2529 = vmatpush1.msra.mxu0 %v2507
    %2530 = vmatprep.subr.mxu0 0.0
    %2531 = vmatpush1.msra.mxu0 %v2508
    %2532 = vmatprep.subr.mxu0 0.0
    %2533 = vmatpush1.msra.mxu0 %v2509
    %2534 = vmatprep.subr.mxu0 0.0
    %2535 = vmatpush1.msra.mxu0 %v2510
    %2536 = vmatprep.subr.mxu0 0.0
    %2537 = vmatpush1.msra.mxu0 %v2511
    %2538 = vmatprep.subr.mxu0 0.0
    %2539 = vmatpush1.msra.mxu0 %v2512
    %2540 = vmatprep.subr.mxu0 0.0
    %2541 = vmatpush1.msra.mxu0 %v2513
    %2542 = vmatprep.subr.mxu0 0.0
    %2543 = vmatpush1.msra.mxu0 %v2514
    %2544 = vmatprep.subr.mxu0 0.0
    %2545 = vmatpush1.msra.mxu0 %v2515
    %2546 = vmatprep.subr.mxu0 0.0
    %2547 = vmatpush1.msra.mxu0 %v2516
    %2548 = vmatprep.subr.mxu0 0.0
    %2549 = vmatpush1.msra.mxu0 %v2517
    %2550 = vmatprep.subr.mxu0 0.0
    %2551 = vmatpush1.msra.mxu0 0.0
    %2552 = vmatprep.subr.mxu0 0.0
    %2553 = vmatpush1.msra.mxu0 0.0
    %2554 = vmatprep.subr.mxu0 0.0
    %2555 = vmatpush1.msra.mxu0 0.0
    %2556 = vmatprep.subr.mxu0 0.0
    %2557 = vmatpush1.msra.mxu0 0.0
    %2558 = vmatprep.subr.mxu0 0.0
    %2559 = vmatpush1.msra.mxu0 0.0
    %2560 = vmatprep.subr.mxu0 0.0
    %2561 = vmatpush1.msra.mxu0 0.0
    %2562 = vmatprep.subr.mxu0 0.0
    %2563 = vmatpush1.msra.mxu0 0.0
    %2564 = vmatprep.subr.mxu0 0.0
    %2565 = vmatpush1.msra.mxu0 0.0
    %2566 = vmatprep.subr.mxu0 0.0
    %2567 = vmatpush1.msra.mxu0 0.0
    %2568 = vmatprep.subr.mxu0 0.0
    %2569 = vmatpush1.msra.mxu0 0.0
    %2570 = vmatprep.subr.mxu0 0.0
    %2571 = vmatpush1.msra.mxu0 0.0
    %2572 = vmatprep.subr.mxu0 0.0
    %2573 = vmatpush1.msra.mxu0 0.0
    %2574 = vmatprep.subr.mxu0 0.0
    %2575 = vmatpush1.msra.mxu0 0.0
    %2576 = vmatprep.subr.mxu0 0.0
    %2577 = vmatpush1.msra.mxu0 0.0
    %2578 = vmatprep.subr.mxu0 0.0
    %2579 = vmatpush1.msra.mxu0 0.0
    %2580 = vmatprep.subr.mxu0 0.0
    %2581 = vmatpush1.msra.mxu0 0.0
    %2582 = vmatprep.mubr.f32.mxu0 0.0
    %2583 = vmatmul.mubr.f32.gmra.mrb[0].mxu0 %v2501
    %v2584 = vpop.f32.mrb[0].mxu0
    %v2585 = vadd.f32 0.0, %v2584
    %v2586 = vpop.f32.mrb[0].mxu0
    %2587 = vdwg.mxu0
    %v2588 = vsel %vm539, %v2501, 0.0
    %2589 = vadd.xlane.f32.xlu0 %v2588
    %v2590 = vpop.xlane.xlu0 %2589
    %v2591 = vrcp.pop %v2590
    %v2592 = vmul.f32 %v2590, %v2591
    %v2593 = vsub.f32 2.0, %v2592
    %v2594 = vmul.f32 %v2591, %v2593
    %v2595 = vmul.f32 %v2501, %v2594
    %2596 = vst [vmem:[#allocation24 + $0x3] sm:$0x1] %v2595
    %v2597 = vmul.f32 %v2585, %v2594
    %v2598 = vld [vmem:[#allocation16] sm:$0xff]
    %v2599 = vld [vmem:[#allocation16 + $0x8] sm:$0xff]
    %v2600 = vld [vmem:[#allocation16 + $0x10] sm:$0xff]
    %v2601 = vld [vmem:[#allocation16 + $0x18] sm:$0xff]
    %v2602 = vld [vmem:[#allocation16 + $0x20] sm:$0xff]
    %v2603 = vld [vmem:[#allocation16 + $0x28] sm:$0xff]
    %v2604 = vld [vmem:[#allocation16 + $0x30] sm:$0xff]
    %v2605 = vld [vmem:[#allocation16 + $0x38] sm:$0xff]
    %v2606 = vld [vmem:[#allocation16 + $0x40] sm:$0xff]
    %v2607 = vld [vmem:[#allocation16 + $0x48] sm:$0xff]
    %v2608 = vld [vmem:[#allocation16 + $0x50] sm:$0xff]
    %v2609 = vld [vmem:[#allocation16 + $0x58] sm:$0xff]
    %v2610 = vld [vmem:[#allocation16 + $0x60] sm:$0xff]
    %v2611 = vld [vmem:[#allocation16 + $0x68] sm:$0xff]
    %v2612 = vld [vmem:[#allocation16 + $0x70] sm:$0xff]
    %v2613 = vld [vmem:[#allocation16 + $0x78] sm:$0xff]
    %2614 = vmatprep.subr.mxu0 0.0
    %2615 = vmatpush1.msra.mxu0 %v2598
    %2616 = vmatprep.subr.mxu0 0.0
    %2617 = vmatpush1.msra.mxu0 %v2599
    %2618 = vmatprep.subr.mxu0 0.0
    %2619 = vmatpush1.msra.mxu0 %v2600
    %2620 = vmatprep.subr.mxu0 0.0
    %2621 = vmatpush1.msra.mxu0 %v2601
    %2622 = vmatprep.subr.mxu0 0.0
    %2623 = vmatpush1.msra.mxu0 %v2602
    %2624 = vmatprep.subr.mxu0 0.0
    %2625 = vmatpush1.msra.mxu0 %v2603
    %2626 = vmatprep.subr.mxu0 0.0
    %2627 = vmatpush1.msra.mxu0 %v2604
    %2628 = vmatprep.subr.mxu0 0.0
    %2629 = vmatpush1.msra.mxu0 %v2605
    %2630 = vmatprep.subr.mxu0 0.0
    %2631 = vmatpush1.msra.mxu0 %v2606
    %2632 = vmatprep.subr.mxu0 0.0
    %2633 = vmatpush1.msra.mxu0 %v2607
    %2634 = vmatprep.subr.mxu0 0.0
    %2635 = vmatpush1.msra.mxu0 %v2608
    %2636 = vmatprep.subr.mxu0 0.0
    %2637 = vmatpush1.msra.mxu0 %v2609
    %2638 = vmatprep.subr.mxu0 0.0
    %2639 = vmatpush1.msra.mxu0 %v2610
    %2640 = vmatprep.subr.mxu0 0.0
    %2641 = vmatpush1.msra.mxu0 %v2611
    %2642 = vmatprep.subr.mxu0 0.0
    %2643 = vmatpush1.msra.mxu0 %v2612
    %2644 = vmatprep.subr.mxu0 0.0
    %2645 = vmatpush1.msra.mxu0 %v2613
    %2646 = vmatprep.subr.mxu0 0.0
    %2647 = vmatpush1.msra.mxu0 0.0
    %2648 = vmatprep.subr.mxu0 0.0
    %2649 = vmatpush1.msra.mxu0 0.0
    %2650 = vmatprep.subr.mxu0 0.0
    %2651 = vmatpush1.msra.mxu0 0.0
    %2652 = vmatprep.subr.mxu0 0.0
    %2653 = vmatpush1.msra.mxu0 0.0
    %2654 = vmatprep.subr.mxu0 0.0
    %2655 = vmatpush1.msra.mxu0 0.0
    %2656 = vmatprep.subr.mxu0 0.0
    %2657 = vmatpush1.msra.mxu0 0.0
    %2658 = vmatprep.subr.mxu0 0.0
    %2659 = vmatpush1.msra.mxu0 0.0
    %2660 = vmatprep.subr.mxu0 0.0
    %2661 = vmatpush1.msra.mxu0 0.0
    %2662 = vmatprep.subr.mxu0 0.0
    %2663 = vmatpush1.msra.mxu0 0.0
    %2664 = vmatprep.subr.mxu0 0.0
    %2665 = vmatpush1.msra.mxu0 0.0
    %2666 = vmatprep.subr.mxu0 0.0
    %2667 = vmatpush1.msra.mxu0 0.0
    %2668 = vmatprep.subr.mxu0 0.0
    %2669 = vmatpush1.msra.mxu0 0.0
    %2670 = vmatprep.subr.mxu0 0.0
    %2671 = vmatpush1.msra.mxu0 0.0
    %2672 = vmatprep.subr.mxu0 0.0
    %2673 = vmatpush1.msra.mxu0 0.0
    %2674 = vmatprep.subr.mxu0 0.0
    %2675 = vmatpush1.msra.mxu0 0.0
    %2676 = vmatprep.subr.mxu0 0.0
    %2677 = vmatpush1.msra.mxu0 0.0
    %2678 = vmatprep.mubr.f32.mxu0 0.0
    %2679 = vmatmul.mubr.f32.gmra.mrb[0].mxu0 %v2597
    %v2680 = vpop.f32.mrb[0].mxu0
    %v2681 = vadd.f32 0.0, %v2680
    %v2682 = vpop.f32.mrb[0].mxu0
    %2683 = vdwg.mxu0
    %v2685 = vrot.slane %v2266, 1
    %v2687 = vadd.f32 %v2685, %v2681
    %v2688 = vmax.f32 %v2687, 0.0
    %v2689 = vld [vmem:[#allocation18] sm:$0xff]
    %v2690 = vld [vmem:[#allocation18 + $0x8] sm:$0xff]
    %v2691 = vld [vmem:[#allocation18 + $0x10] sm:$0xff]
    %v2692 = vld [vmem:[#allocation18 + $0x18] sm:$0xff]
    %v2693 = vld [vmem:[#allocation18 + $0x20] sm:$0xff]
    %v2694 = vld [vmem:[#allocation18 + $0x28] sm:$0xff]
    %v2695 = vld [vmem:[#allocation18 + $0x30] sm:$0xff]
    %v2696 = vld [vmem:[#allocation18 + $0x38] sm:$0xff]
    %v2697 = vld [vmem:[#allocation18 + $0x40] sm:$0xff]
    %v2698 = vld [vmem:[#allocation18 + $0x48] sm:$0xff]
    %v2699 = vld [vmem:[#allocation18 + $0x50] sm:$0xff]
    %v2700 = vld [vmem:[#allocation18 + $0x58] sm:$0xff]
    %v2701 = vld [vmem:[#allocation18 + $0x60] sm:$0xff]
    %v2702 = vld [vmem:[#allocation18 + $0x68] sm:$0xff]
    %v2703 = vld [vmem:[#allocation18 + $0x70] sm:$0xff]
    %v2704 = vld [vmem:[#allocation18 + $0x78] sm:$0xff]
    %v2705 = vld [vmem:[#allocation18 + $0x80] sm:$0xff]
    %v2706 = vld [vmem:[#allocation18 + $0x88] sm:$0xff]
    %v2707 = vld [vmem:[#allocation18 + $0x90] sm:$0xff]
    %v2708 = vld [vmem:[#allocation18 + $0x98] sm:$0xff]
    %v2709 = vld [vmem:[#allocation18 + $0xa0] sm:$0xff]
    %v2710 = vld [vmem:[#allocation18 + $0xa8] sm:$0xff]
    %v2711 = vld [vmem:[#allocation18 + $0xb0] sm:$0xff]
    %v2712 = vld [vmem:[#allocation18 + $0xb8] sm:$0xff]
    %v2713 = vld [vmem:[#allocation18 + $0xc0] sm:$0xff]
    %v2714 = vld [vmem:[#allocation18 + $0xc8] sm:$0xff]
    %v2715 = vld [vmem:[#allocation18 + $0xd0] sm:$0xff]
    %v2716 = vld [vmem:[#allocation18 + $0xd8] sm:$0xff]
    %v2717 = vld [vmem:[#allocation18 + $0xe0] sm:$0xff]
    %v2718 = vld [vmem:[#allocation18 + $0xe8] sm:$0xff]
    %v2719 = vld [vmem:[#allocation18 + $0xf0] sm:$0xff]
    %v2720 = vld [vmem:[#allocation18 + $0xf8] sm:$0xff]
    %v2721 = vld [vmem:[#allocation18 + $0x100] sm:$0xff]
    %v2722 = vld [vmem:[#allocation18 + $0x108] sm:$0xff]
    %v2723 = vld [vmem:[#allocation18 + $0x110] sm:$0xff]
    %v2724 = vld [vmem:[#allocation18 + $0x118] sm:$0xff]
    %v2725 = vld [vmem:[#allocation18 + $0x120] sm:$0xff]
    %v2726 = vld [vmem:[#allocation18 + $0x128] sm:$0xff]
    %v2727 = vld [vmem:[#allocation18 + $0x130] sm:$0xff]
    %v2728 = vld [vmem:[#allocation18 + $0x138] sm:$0xff]
    %v2729 = vld [vmem:[#allocation18 + $0x140] sm:$0xff]
    %v2730 = vld [vmem:[#allocation18 + $0x148] sm:$0xff]
    %v2731 = vld [vmem:[#allocation18 + $0x150] sm:$0xff]
    %v2732 = vld [vmem:[#allocation18 + $0x158] sm:$0xff]
    %v2733 = vld [vmem:[#allocation18 + $0x160] sm:$0xff]
    %v2734 = vld [vmem:[#allocation18 + $0x168] sm:$0xff]
    %v2735 = vld [vmem:[#allocation18 + $0x170] sm:$0xff]
    %v2736 = vld [vmem:[#allocation18 + $0x178] sm:$0xff]
    %v2737 = vld [vmem:[%s10] sm:$0x7]
    %v2739 = vlaneseq
    %v2740 = vshrl.u32 %v2739, 7
    %v2741 = vsub.s32 0, %v2740
    %v2742 = vrot.slane %v2737, %v2741
    %v2743 = vlaneseq
    %v2744 = vshrl.u32 %v2743, 7
    %v2745 = vsub.s32 1, %v2744
    %v2746 = vrot.slane %v2737, %v2745
    %v2747 = vlaneseq
    %v2748 = vshrl.u32 %v2747, 7
    %v2749 = vsub.s32 2, %v2748
    %v2750 = vrot.slane %v2737, %v2749
    %2754 = vmatprep.subr.mxu0 %v2690
    %2755 = vmatpush1.msra.mxu0 %v2689
    %2756 = vmatprep.subr.mxu0 %v2693
    %2757 = vmatpush1.msra.mxu0 %v2692
    %2758 = vmatprep.subr.mxu0 %v2696
    %2759 = vmatpush1.msra.mxu0 %v2695
    %2760 = vmatprep.subr.mxu0 %v2699
    %2761 = vmatpush1.msra.mxu0 %v2698
    %2762 = vmatprep.subr.mxu0 %v2702
    %2763 = vmatpush1.msra.mxu0 %v2701
    %2764 = vmatprep.subr.mxu0 %v2705
    %2765 = vmatpush1.msra.mxu0 %v2704
    %2766 = vmatprep.subr.mxu0 %v2708
    %2767 = vmatpush1.msra.mxu0 %v2707
    %2768 = vmatprep.subr.mxu0 %v2711
    %2769 = vmatpush1.msra.mxu0 %v2710
    %2770 = vmatprep.subr.mxu0 %v2714
    %2771 = vmatpush1.msra.mxu0 %v2713
    %2772 = vmatprep.subr.mxu0 %v2717
    %2773 = vmatpush1.msra.mxu0 %v2716
    %2774 = vmatprep.subr.mxu0 %v2720
    %2775 = vmatpush1.msra.mxu0 %v2719
    %2776 = vmatprep.subr.mxu0 %v2723
    %2777 = vmatpush1.msra.mxu0 %v2722
    %2778 = vmatprep.subr.mxu0 %v2726
    %2779 = vmatpush1.msra.mxu0 %v2725
    %2780 = vmatprep.subr.mxu0 %v2729
    %2781 = vmatpush1.msra.mxu0 %v2728
    %2782 = vmatprep.subr.mxu0 %v2732
    %2783 = vmatpush1.msra.mxu0 %v2731
    %2784 = vmatprep.subr.mxu0 %v2735
    %2785 = vmatpush1.msra.mxu0 %v2734
    %2786 = vmatprep.subr.mxu0 0.0
    %2787 = vmatpush1.msra.mxu0 0.0
    %2788 = vmatprep.subr.mxu0 0.0
    %2789 = vmatpush1.msra.mxu0 0.0
    %2790 = vmatprep.subr.mxu0 0.0
    %2791 = vmatpush1.msra.mxu0 0.0
    %2792 = vmatprep.subr.mxu0 0.0
    %2793 = vmatpush1.msra.mxu0 0.0
    %2794 = vmatprep.subr.mxu0 0.0
    %2795 = vmatpush1.msra.mxu0 0.0
    %2796 = vmatprep.subr.mxu0 0.0
    %2797 = vmatpush1.msra.mxu0 0.0
    %2798 = vmatprep.subr.mxu0 0.0
    %2799 = vmatpush1.msra.mxu0 0.0
    %2800 = vmatprep.subr.mxu0 0.0
    %2801 = vmatpush1.msra.mxu0 0.0
    %2802 = vmatprep.subr.mxu0 0.0
    %2803 = vmatpush1.msra.mxu0 0.0
    %2804 = vmatprep.subr.mxu0 0.0
    %2805 = vmatpush1.msra.mxu0 0.0
    %2806 = vmatprep.subr.mxu0 0.0
    %2807 = vmatpush1.msra.mxu0 0.0
    %2808 = vmatprep.subr.mxu0 0.0
    %2809 = vmatpush1.msra.mxu0 0.0
    %2810 = vmatprep.subr.mxu0 0.0
    %2811 = vmatpush1.msra.mxu0 0.0
    %2812 = vmatprep.subr.mxu0 0.0
    %2813 = vmatpush1.msra.mxu0 0.0
    %2814 = vmatprep.subr.mxu0 0.0
    %2815 = vmatpush1.msra.mxu0 0.0
    %2816 = vmatprep.subr.mxu0 0.0
    %2817 = vmatpush1.msra.mxu0 0.0
    %2818 = vmatprep.mubr.f32.mxu0 0.0
    %2819 = vmatmul.mubr.f32.gmra.mrb[0].mxu0 %v2688
    %v2820 = vpop.f32.mrb[0].mxu0
    %v2821 = vadd.f32 %v2742, %v2820
    %v2822 = vpop.f32.mrb[0].mxu0
    %v2823 = vadd.f32 %v2746, %v2822
    %2824 = vdwg.mxu0
    %2825 = vmatprep.subr.mxu0 0.0
    %2826 = vmatpush1.msra.mxu0 %v2691
    %2827 = vmatprep.subr.mxu0 0.0
    %2828 = vmatpush1.msra.mxu0 %v2694
    %2829 = vmatprep.subr.mxu0 0.0
    %2830 = vmatpush1.msra.mxu0 %v2697
    %2831 = vmatprep.subr.mxu0 0.0
    %2832 = vmatpush1.msra.mxu0 %v2700
    %2833 = vmatprep.subr.mxu0 0.0
    %2834 = vmatpush1.msra.mxu0 %v2703
    %2835 = vmatprep.subr.mxu0 0.0
    %2836 = vmatpush1.msra.mxu0 %v2706
    %2837 = vmatprep.subr.mxu0 0.0
    %2838 = vmatpush1.msra.mxu0 %v2709
    %2839 = vmatprep.subr.mxu0 0.0
    %2840 = vmatpush1.msra.mxu0 %v2712
    %2841 = vmatprep.subr.mxu0 0.0
    %2842 = vmatpush1.msra.mxu0 %v2715
    %2843 = vmatprep.subr.mxu0 0.0
    %2844 = vmatpush1.msra.mxu0 %v2718
    %2845 = vmatprep.subr.mxu0 0.0
    %2846 = vmatpush1.msra.mxu0 %v2721
    %2847 = vmatprep.subr.mxu0 0.0
    %2848 = vmatpush1.msra.mxu0 %v2724
    %2849 = vmatprep.subr.mxu0 0.0
    %2850 = vmatpush1.msra.mxu0 %v2727
    %2851 = vmatprep.subr.mxu0 0.0
    %2852 = vmatpush1.msra.mxu0 %v2730
    %2853 = vmatprep.subr.mxu0 0.0
    %2854 = vmatpush1.msra.mxu0 %v2733
    %2855 = vmatprep.subr.mxu0 0.0
    %2856 = vmatpush1.msra.mxu0 %v2736
    %2857 = vmatprep.subr.mxu0 0.0
    %2858 = vmatpush1.msra.mxu0 0.0
    %2859 = vmatprep.subr.mxu0 0.0
    %2860 = vmatpush1.msra.mxu0 0.0
    %2861 = vmatprep.subr.mxu0 0.0
    %2862 = vmatpush1.msra.mxu0 0.0
    %2863 = vmatprep.subr.mxu0 0.0
    %2864 = vmatpush1.msra.mxu0 0.0
    %2865 = vmatprep.subr.mxu0 0.0
    %2866 = vmatpush1.msra.mxu0 0.0
    %2867 = vmatprep.subr.mxu0 0.0
    %2868 = vmatpush1.msra.mxu0 0.0
    %2869 = vmatprep.subr.mxu0 0.0
    %2870 = vmatpush1.msra.mxu0 0.0
    %2871 = vmatprep.subr.mxu0 0.0
    %2872 = vmatpush1.msra.mxu0 0.0
    %2873 = vmatprep.subr.mxu0 0.0
    %2874 = vmatpush1.msra.mxu0 0.0
    %2875 = vmatprep.subr.mxu0 0.0
    %2876 = vmatpush1.msra.mxu0 0.0
    %2877 = vmatprep.subr.mxu0 0.0
    %2878 = vmatpush1.msra.mxu0 0.0
    %2879 = vmatprep.subr.mxu0 0.0
    %2880 = vmatpush1.msra.mxu0 0.0
    %2881 = vmatprep.subr.mxu0 0.0
    %2882 = vmatpush1.msra.mxu0 0.0
    %2883 = vmatprep.subr.mxu0 0.0
    %2884 = vmatpush1.msra.mxu0 0.0
    %2885 = vmatprep.subr.mxu0 0.0
    %2886 = vmatpush1.msra.mxu0 0.0
    %2887 = vmatprep.subr.mxu0 0.0
    %2888 = vmatpush1.msra.mxu0 0.0
    %2889 = vmatprep.mubr.f32.mxu0 0.0
    %2890 = vmatmul.mubr.f32.gmra.mrb[0].mxu0 %v2688
    %v2891 = vpop.f32.mrb[0].mxu0
    %v2892 = vadd.f32 %v2750, %v2891
    %v2893 = vpop.f32.mrb[0].mxu0
    %2894 = vdwg.mxu0
    %v2895 = vadd.f32 %v2821, %v2422
    %v2896 = vxor.u32 %v2895, 2147483648
    %v2897 = vmul.f32 %v2896, 1.442695
    %v2898 = vpow.pop %v2897
    %v2899 = vadd.f32 %v2898, 1.0
    %v2900 = vrcp.pop %v2899
    %v2901 = vmul.f32 1.0, %v2900
    %v2902 = vadd.f32 %v2823, %v2491
    %v2903 = vxor.u32 %v2902, 2147483648
    %v2904 = vmul.f32 %v2903, 1.442695
    %v2905 = vpow.pop %v2904
    %v2906 = vadd.f32 %v2905, 1.0
    %v2907 = vrcp.pop %v2906
    %v2908 = vmul.f32 1.0, %v2907
    %v2909 = vmul.f32 %v2901, %v2493
    %v2910 = vadd.f32 %v2892, %v2909
    %v2911 = vtanh.pop %v2910
    %v2912 = vsub.f32 1.0, %v2908
    %v2913 = vmul.f32 %v2912, %v2911
    %v2914 = vmul.f32 %v2908, %v2263
    %v2915 = vadd.f32 %v2913, %v2914
    %2916 = vst [vmem:[#allocation4 + $0x3] sm:$0x1] %v2915
    %s2917 = scalar_lea.vmem [#allocation3], 4
    %v2918 = vld [vmem:[%s2917] ss:$8 sm:$0x3]
    %v2919 = vld [vmem:[#allocation15] sm:$0xff]
    %v2920 = vld [vmem:[#allocation15 + $0x8] sm:$0xff]
    %v2921 = vld [vmem:[#allocation15 + $0x10] sm:$0xff]
    %v2922 = vld [vmem:[#allocation15 + $0x18] sm:$0xff]
    %v2923 = vld [vmem:[#allocation15 + $0x20] sm:$0xff]
    %v2924 = vld [vmem:[#allocation15 + $0x28] sm:$0xff]
    %v2925 = vld [vmem:[#allocation15 + $0x30] sm:$0xff]
    %v2926 = vld [vmem:[#allocation15 + $0x38] sm:$0xff]
    %v2927 = vld [vmem:[#allocation15 + $0x40] sm:$0xff]
    %v2928 = vld [vmem:[#allocation15 + $0x48] sm:$0xff]
    %v2929 = vld [vmem:[#allocation15 + $0x50] sm:$0xff]
    %v2930 = vld [vmem:[#allocation15 + $0x58] sm:$0xff]
    %v2931 = vld [vmem:[#allocation15 + $0x60] sm:$0xff]
    %v2932 = vld [vmem:[#allocation15 + $0x68] sm:$0xff]
    %v2933 = vld [vmem:[#allocation15 + $0x70] sm:$0xff]
    %v2934 = vld [vmem:[#allocation15 + $0x78] sm:$0xff]
    %v2935 = vld [vmem:[#allocation15 + $0x80] sm:$0xff]
    %v2936 = vld [vmem:[#allocation15 + $0x88] sm:$0xff]
    %v2937 = vld [vmem:[#allocation15 + $0x90] sm:$0xff]
    %v2938 = vld [vmem:[#allocation15 + $0x98] sm:$0xff]
    %v2939 = vld [vmem:[#allocation15 + $0xa0] sm:$0xff]
    %v2940 = vld [vmem:[#allocation15 + $0xa8] sm:$0xff]
    %v2941 = vld [vmem:[#allocation15 + $0xb0] sm:$0xff]
    %v2942 = vld [vmem:[#allocation15 + $0xb8] sm:$0xff]
    %v2943 = vld [vmem:[#allocation15 + $0xc0] sm:$0xff]
    %v2944 = vld [vmem:[#allocation15 + $0xc8] sm:$0xff]
    %v2945 = vld [vmem:[#allocation15 + $0xd0] sm:$0xff]
    %v2946 = vld [vmem:[#allocation15 + $0xd8] sm:$0xff]
    %v2947 = vld [vmem:[#allocation15 + $0xe0] sm:$0xff]
    %v2948 = vld [vmem:[#allocation15 + $0xe8] sm:$0xff]
    %v2949 = vld [vmem:[#allocation15 + $0xf0] sm:$0xff]
    %v2950 = vld [vmem:[#allocation15 + $0xf8] sm:$0xff]
    %v2951 = vld [vmem:[#allocation15 + $0x100] sm:$0xff]
    %v2952 = vld [vmem:[#allocation15 + $0x108] sm:$0xff]
    %v2953 = vld [vmem:[#allocation15 + $0x110] sm:$0xff]
    %v2954 = vld [vmem:[#allocation15 + $0x118] sm:$0xff]
    %v2955 = vld [vmem:[#allocation15 + $0x120] sm:$0xff]
    %v2956 = vld [vmem:[#allocation15 + $0x128] sm:$0xff]
    %v2957 = vld [vmem:[#allocation15 + $0x130] sm:$0xff]
    %v2958 = vld [vmem:[#allocation15 + $0x138] sm:$0xff]
    %v2959 = vld [vmem:[#allocation15 + $0x140] sm:$0xff]
    %v2960 = vld [vmem:[#allocation15 + $0x148] sm:$0xff]
    %v2961 = vld [vmem:[#allocation15 + $0x150] sm:$0xff]
    %v2962 = vld [vmem:[#allocation15 + $0x158] sm:$0xff]
    %v2963 = vld [vmem:[#allocation15 + $0x160] sm:$0xff]
    %v2964 = vld [vmem:[#allocation15 + $0x168] sm:$0xff]
    %v2965 = vld [vmem:[#allocation15 + $0x170] sm:$0xff]
    %v2966 = vld [vmem:[#allocation15 + $0x178] sm:$0xff]
    %v2967 = vld [vmem:[#allocation15 + $0x180] sm:$0xff]
    %v2968 = vld [vmem:[#allocation15 + $0x188] sm:$0xff]
    %v2969 = vld [vmem:[#allocation15 + $0x190] sm:$0xff]
    %v2970 = vld [vmem:[#allocation15 + $0x198] sm:$0xff]
    %v2971 = vld [vmem:[#allocation15 + $0x1a0] sm:$0xff]
    %v2972 = vld [vmem:[#allocation15 + $0x1a8] sm:$0xff]
    %v2973 = vld [vmem:[#allocation15 + $0x1b0] sm:$0xff]
    %v2974 = vld [vmem:[#allocation15 + $0x1b8] sm:$0xff]
    %v2975 = vld [vmem:[#allocation15 + $0x1c0] sm:$0xff]
    %v2976 = vld [vmem:[#allocation15 + $0x1c8] sm:$0xff]
    %v2977 = vld [vmem:[#allocation15 + $0x1d0] sm:$0xff]
    %v2978 = vld [vmem:[#allocation15 + $0x1d8] sm:$0xff]
    %v2979 = vld [vmem:[#allocation15 + $0x1e0] sm:$0xff]
    %v2980 = vld [vmem:[#allocation15 + $0x1e8] sm:$0xff]
    %v2981 = vld [vmem:[#allocation15 + $0x1f0] sm:$0xff]
    %v2982 = vld [vmem:[#allocation15 + $0x1f8] sm:$0xff]
    %v2983 = vld [vmem:[%s7] sm:$0xf]
    %v2985 = vlaneseq
    %v2986 = vshrl.u32 %v2985, 7
    %v2987 = vsub.s32 0, %v2986
    %v2988 = vrot.slane %v2983, %v2987
    %v2989 = vlaneseq
    %v2990 = vshrl.u32 %v2989, 7
    %v2991 = vsub.s32 1, %v2990
    %v2992 = vrot.slane %v2983, %v2991
    %v2993 = vlaneseq
    %v2994 = vshrl.u32 %v2993, 7
    %v2995 = vsub.s32 2, %v2994
    %v2996 = vrot.slane %v2983, %v2995
    %v2997 = vlaneseq
    %v2998 = vshrl.u32 %v2997, 7
    %v2999 = vsub.s32 3, %v2998
    %v3000 = vrot.slane %v2983, %v2999
    %3005 = vmatprep.subr.mxu0 %v2920
    %3006 = vmatpush1.msra.mxu0 %v2919
    %3007 = vmatprep.subr.mxu0 %v2924
    %3008 = vmatpush1.msra.mxu0 %v2923
    %3009 = vmatprep.subr.mxu0 %v2928
    %3010 = vmatpush1.msra.mxu0 %v2927
    %3011 = vmatprep.subr.mxu0 %v2932
    %3012 = vmatpush1.msra.mxu0 %v2931
    %3013 = vmatprep.subr.mxu0 %v2936
    %3014 = vmatpush1.msra.mxu0 %v2935
    %3015 = vmatprep.subr.mxu0 %v2940
    %3016 = vmatpush1.msra.mxu0 %v2939
    %3017 = vmatprep.subr.mxu0 %v2944
    %3018 = vmatpush1.msra.mxu0 %v2943
    %3019 = vmatprep.subr.mxu0 %v2948
    %3020 = vmatpush1.msra.mxu0 %v2947
    %3021 = vmatprep.subr.mxu0 %v2952
    %3022 = vmatpush1.msra.mxu0 %v2951
    %3023 = vmatprep.subr.mxu0 %v2956
    %3024 = vmatpush1.msra.mxu0 %v2955
    %3025 = vmatprep.subr.mxu0 %v2960
    %3026 = vmatpush1.msra.mxu0 %v2959
    %3027 = vmatprep.subr.mxu0 %v2964
    %3028 = vmatpush1.msra.mxu0 %v2963
    %3029 = vmatprep.subr.mxu0 %v2968
    %3030 = vmatpush1.msra.mxu0 %v2967
    %3031 = vmatprep.subr.mxu0 %v2972
    %3032 = vmatpush1.msra.mxu0 %v2971
    %3033 = vmatprep.subr.mxu0 %v2976
    %3034 = vmatpush1.msra.mxu0 %v2975
    %3035 = vmatprep.subr.mxu0 %v2980
    %3036 = vmatpush1.msra.mxu0 %v2979
    %3037 = vmatprep.subr.mxu0 0.0
    %3038 = vmatpush1.msra.mxu0 0.0
    %3039 = vmatprep.subr.mxu0 0.0
    %3040 = vmatpush1.msra.mxu0 0.0
    %3041 = vmatprep.subr.mxu0 0.0
    %3042 = vmatpush1.msra.mxu0 0.0
    %3043 = vmatprep.subr.mxu0 0.0
    %3044 = vmatpush1.msra.mxu0 0.0
    %3045 = vmatprep.subr.mxu0 0.0
    %3046 = vmatpush1.msra.mxu0 0.0
    %3047 = vmatprep.subr.mxu0 0.0
    %3048 = vmatpush1.msra.mxu0 0.0
    %3049 = vmatprep.subr.mxu0 0.0
    %3050 = vmatpush1.msra.mxu0 0.0
    %3051 = vmatprep.subr.mxu0 0.0
    %3052 = vmatpush1.msra.mxu0 0.0
    %3053 = vmatprep.subr.mxu0 0.0
    %3054 = vmatpush1.msra.mxu0 0.0
    %3055 = vmatprep.subr.mxu0 0.0
    %3056 = vmatpush1.msra.mxu0 0.0
    %3057 = vmatprep.subr.mxu0 0.0
    %3058 = vmatpush1.msra.mxu0 0.0
    %3059 = vmatprep.subr.mxu0 0.0
    %3060 = vmatpush1.msra.mxu0 0.0
    %3061 = vmatprep.subr.mxu0 0.0
    %3062 = vmatpush1.msra.mxu0 0.0
    %3063 = vmatprep.subr.mxu0 0.0
    %3064 = vmatpush1.msra.mxu0 0.0
    %3065 = vmatprep.subr.mxu0 0.0
    %3066 = vmatpush1.msra.mxu0 0.0
    %3067 = vmatprep.subr.mxu0 0.0
    %3068 = vmatpush1.msra.mxu0 0.0
    %3069 = vmatprep.mubr.f32.mxu0 0.0
    %3070 = vmatmul.mubr.f32.gmra.mrb[0].mxu0 %v2915
    %v3071 = vpop.f32.mrb[0].mxu0
    %v3072 = vadd.f32 %v2988, %v3071
    %v3073 = vpop.f32.mrb[0].mxu0
    %v3074 = vadd.f32 %v2992, %v3073
    %3075 = vdwg.mxu0
    %3076 = vmatprep.subr.mxu0 %v2922
    %3077 = vmatpush1.msra.mxu0 %v2921
    %3078 = vmatprep.subr.mxu0 %v2926
    %3079 = vmatpush1.msra.mxu0 %v2925
    %3080 = vmatprep.subr.mxu0 %v2930
    %3081 = vmatpush1.msra.mxu0 %v2929
    %3082 = vmatprep.subr.mxu0 %v2934
    %3083 = vmatpush1.msra.mxu0 %v2933
    %3084 = vmatprep.subr.mxu0 %v2938
    %3085 = vmatpush1.msra.mxu0 %v2937
    %3086 = vmatprep.subr.mxu0 %v2942
    %3087 = vmatpush1.msra.mxu0 %v2941
    %3088 = vmatprep.subr.mxu0 %v2946
    %3089 = vmatpush1.msra.mxu0 %v2945
    %3090 = vmatprep.subr.mxu0 %v2950
    %3091 = vmatpush1.msra.mxu0 %v2949
    %3092 = vmatprep.subr.mxu0 %v2954
    %3093 = vmatpush1.msra.mxu0 %v2953
    %3094 = vmatprep.subr.mxu0 %v2958
    %3095 = vmatpush1.msra.mxu0 %v2957
    %3096 = vmatprep.subr.mxu0 %v2962
    %3097 = vmatpush1.msra.mxu0 %v2961
    %3098 = vmatprep.subr.mxu0 %v2966
    %3099 = vmatpush1.msra.mxu0 %v2965
    %3100 = vmatprep.subr.mxu0 %v2970
    %3101 = vmatpush1.msra.mxu0 %v2969
    %3102 = vmatprep.subr.mxu0 %v2974
    %3103 = vmatpush1.msra.mxu0 %v2973
    %3104 = vmatprep.subr.mxu0 %v2978
    %3105 = vmatpush1.msra.mxu0 %v2977
    %3106 = vmatprep.subr.mxu0 %v2982
    %3107 = vmatpush1.msra.mxu0 %v2981
    %3108 = vmatprep.subr.mxu0 0.0
    %3109 = vmatpush1.msra.mxu0 0.0
    %3110 = vmatprep.subr.mxu0 0.0
    %3111 = vmatpush1.msra.mxu0 0.0
    %3112 = vmatprep.subr.mxu0 0.0
    %3113 = vmatpush1.msra.mxu0 0.0
    %3114 = vmatprep.subr.mxu0 0.0
    %3115 = vmatpush1.msra.mxu0 0.0
    %3116 = vmatprep.subr.mxu0 0.0
    %3117 = vmatpush1.msra.mxu0 0.0
    %3118 = vmatprep.subr.mxu0 0.0
    %3119 = vmatpush1.msra.mxu0 0.0
    %3120 = vmatprep.subr.mxu0 0.0
    %3121 = vmatpush1.msra.mxu0 0.0
    %3122 = vmatprep.subr.mxu0 0.0
    %3123 = vmatpush1.msra.mxu0 0.0
    %3124 = vmatprep.subr.mxu0 0.0
    %3125 = vmatpush1.msra.mxu0 0.0
    %3126 = vmatprep.subr.mxu0 0.0
    %3127 = vmatpush1.msra.mxu0 0.0
    %3128 = vmatprep.subr.mxu0 0.0
    %3129 = vmatpush1.msra.mxu0 0.0
    %3130 = vmatprep.subr.mxu0 0.0
    %3131 = vmatpush1.msra.mxu0 0.0
    %3132 = vmatprep.subr.mxu0 0.0
    %3133 = vmatpush1.msra.mxu0 0.0
    %3134 = vmatprep.subr.mxu0 0.0
    %3135 = vmatpush1.msra.mxu0 0.0
    %3136 = vmatprep.subr.mxu0 0.0
    %3137 = vmatpush1.msra.mxu0 0.0
    %3138 = vmatprep.subr.mxu0 0.0
    %3139 = vmatpush1.msra.mxu0 0.0
    %3140 = vmatprep.mubr.f32.mxu0 0.0
    %3141 = vmatmul.mubr.f32.gmra.mrb[0].mxu0 %v2915
    %v3142 = vpop.f32.mrb[0].mxu0
    %v3143 = vadd.f32 %v2996, %v3142
    %v3144 = vpop.f32.mrb[0].mxu0
    %v3145 = vadd.f32 %v3000, %v3144
    %3146 = vdwg.mxu0
    %v3147 = vadd.f32 %v2918, %v3072
    %v3148 = vsel %vm539, %v3147, -inf
    %3149 = vmax.xlane.f32.xlu0 %v3148
    %v3150 = vpop.xlane.xlu0 %3149
    %v3151 = vsub.f32 %v3147, %v3150
    %v3152 = vmul.f32 %v3151, 1.442695
    %v3153 = vpow.pop %v3152
    %v3154 = vld [vmem:[#allocation12] sm:$0xff]
    %v3155 = vld [vmem:[#allocation12 + $0x8] sm:$0xff]
    %v3156 = vld [vmem:[#allocation12 + $0x10] sm:$0xff]
    %v3157 = vld [vmem:[#allocation12 + $0x18] sm:$0xff]
    %v3158 = vld [vmem:[#allocation12 + $0x20] sm:$0xff]
    %v3159 = vld [vmem:[#allocation12 + $0x28] sm:$0xff]
    %v3160 = vld [vmem:[#allocation12 + $0x30] sm:$0xff]
    %v3161 = vld [vmem:[#allocation12 + $0x38] sm:$0xff]
    %v3162 = vld [vmem:[#allocation12 + $0x40] sm:$0xff]
    %v3163 = vld [vmem:[#allocation12 + $0x48] sm:$0xff]
    %v3164 = vld [vmem:[#allocation12 + $0x50] sm:$0xff]
    %v3165 = vld [vmem:[#allocation12 + $0x58] sm:$0xff]
    %v3166 = vld [vmem:[#allocation12 + $0x60] sm:$0xff]
    %v3167 = vld [vmem:[#allocation12 + $0x68] sm:$0xff]
    %v3168 = vld [vmem:[#allocation12 + $0x70] sm:$0xff]
    %v3169 = vld [vmem:[#allocation12 + $0x78] sm:$0xff]
    %3170 = vmatprep.subr.mxu0 0.0
    %3171 = vmatpush1.msra.mxu0 %v3154
    %3172 = vmatprep.subr.mxu0 0.0
    %3173 = vmatpush1.msra.mxu0 %v3155
    %3174 = vmatprep.subr.mxu0 0.0
    %3175 = vmatpush1.msra.mxu0 %v3156
    %3176 = vmatprep.subr.mxu0 0.0
    %3177 = vmatpush1.msra.mxu0 %v3157
    %3178 = vmatprep.subr.mxu0 0.0
    %3179 = vmatpush1.msra.mxu0 %v3158
    %3180 = vmatprep.subr.mxu0 0.0
    %3181 = vmatpush1.msra.mxu0 %v3159
    %3182 = vmatprep.subr.mxu0 0.0
    %3183 = vmatpush1.msra.mxu0 %v3160
    %3184 = vmatprep.subr.mxu0 0.0
    %3185 = vmatpush1.msra.mxu0 %v3161
    %3186 = vmatprep.subr.mxu0 0.0
    %3187 = vmatpush1.msra.mxu0 %v3162
    %3188 = vmatprep.subr.mxu0 0.0
    %3189 = vmatpush1.msra.mxu0 %v3163
    %3190 = vmatprep.subr.mxu0 0.0
    %3191 = vmatpush1.msra.mxu0 %v3164
    %3192 = vmatprep.subr.mxu0 0.0
    %3193 = vmatpush1.msra.mxu0 %v3165
    %3194 = vmatprep.subr.mxu0 0.0
    %3195 = vmatpush1.msra.mxu0 %v3166
    %3196 = vmatprep.subr.mxu0 0.0
    %3197 = vmatpush1.msra.mxu0 %v3167
    %3198 = vmatprep.subr.mxu0 0.0
    %3199 = vmatpush1.msra.mxu0 %v3168
    %3200 = vmatprep.subr.mxu0 0.0
    %3201 = vmatpush1.msra.mxu0 %v3169
    %3202 = vmatprep.subr.mxu0 0.0
    %3203 = vmatpush1.msra.mxu0 0.0
    %3204 = vmatprep.subr.mxu0 0.0
    %3205 = vmatpush1.msra.mxu0 0.0
    %3206 = vmatprep.subr.mxu0 0.0
    %3207 = vmatpush1.msra.mxu0 0.0
    %3208 = vmatprep.subr.mxu0 0.0
    %3209 = vmatpush1.msra.mxu0 0.0
    %3210 = vmatprep.subr.mxu0 0.0
    %3211 = vmatpush1.msra.mxu0 0.0
    %3212 = vmatprep.subr.mxu0 0.0
    %3213 = vmatpush1.msra.mxu0 0.0
    %3214 = vmatprep.subr.mxu0 0.0
    %3215 = vmatpush1.msra.mxu0 0.0
    %3216 = vmatprep.subr.mxu0 0.0
    %3217 = vmatpush1.msra.mxu0 0.0
    %3218 = vmatprep.subr.mxu0 0.0
    %3219 = vmatpush1.msra.mxu0 0.0
    %3220 = vmatprep.subr.mxu0 0.0
    %3221 = vmatpush1.msra.mxu0 0.0
    %3222 = vmatprep.subr.mxu0 0.0
    %3223 = vmatpush1.msra.mxu0 0.0
    %3224 = vmatprep.subr.mxu0 0.0
    %3225 = vmatpush1.msra.mxu0 0.0
    %3226 = vmatprep.subr.mxu0 0.0
    %3227 = vmatpush1.msra.mxu0 0.0
    %3228 = vmatprep.subr.mxu0 0.0
    %3229 = vmatpush1.msra.mxu0 0.0
    %3230 = vmatprep.subr.mxu0 0.0
    %3231 = vmatpush1.msra.mxu0 0.0
    %3232 = vmatprep.subr.mxu0 0.0
    %3233 = vmatpush1.msra.mxu0 0.0
    %3234 = vmatprep.mubr.f32.mxu0 0.0
    %3235 = vmatmul.mubr.f32.gmra.mrb[0].mxu0 %v3153
    %v3236 = vpop.f32.mrb[0].mxu0
    %v3237 = vadd.f32 0.0, %v3236
    %v3238 = vpop.f32.mrb[0].mxu0
    %3239 = vdwg.mxu0
    %v3240 = vsel %vm539, %v3153, 0.0
    %3241 = vadd.xlane.f32.xlu0 %v3240
    %v3242 = vpop.xlane.xlu0 %3241
    %v3243 = vrcp.pop %v3242
    %v3244 = vmul.f32 %v3242, %v3243
    %v3245 = vsub.f32 2.0, %v3244
    %v3246 = vmul.f32 %v3243, %v3245
    %v3247 = vmul.f32 %v3153, %v3246
    %3248 = vst [vmem:[#allocation24 + $0x4] sm:$0x1] %v3247
    %v3249 = vmul.f32 %v3237, %v3246
    %v3250 = vld [vmem:[#allocation16] sm:$0xff]
    %v3251 = vld [vmem:[#allocation16 + $0x8] sm:$0xff]
    %v3252 = vld [vmem:[#allocation16 + $0x10] sm:$0xff]
    %v3253 = vld [vmem:[#allocation16 + $0x18] sm:$0xff]
    %v3254 = vld [vmem:[#allocation16 + $0x20] sm:$0xff]
    %v3255 = vld [vmem:[#allocation16 + $0x28] sm:$0xff]
    %v3256 = vld [vmem:[#allocation16 + $0x30] sm:$0xff]
    %v3257 = vld [vmem:[#allocation16 + $0x38] sm:$0xff]
    %v3258 = vld [vmem:[#allocation16 + $0x40] sm:$0xff]
    %v3259 = vld [vmem:[#allocation16 + $0x48] sm:$0xff]
    %v3260 = vld [vmem:[#allocation16 + $0x50] sm:$0xff]
    %v3261 = vld [vmem:[#allocation16 + $0x58] sm:$0xff]
    %v3262 = vld [vmem:[#allocation16 + $0x60] sm:$0xff]
    %v3263 = vld [vmem:[#allocation16 + $0x68] sm:$0xff]
    %v3264 = vld [vmem:[#allocation16 + $0x70] sm:$0xff]
    %v3265 = vld [vmem:[#allocation16 + $0x78] sm:$0xff]
    %3266 = vmatprep.subr.mxu0 0.0
    %3267 = vmatpush1.msra.mxu0 %v3250
    %3268 = vmatprep.subr.mxu0 0.0
    %3269 = vmatpush1.msra.mxu0 %v3251
    %3270 = vmatprep.subr.mxu0 0.0
    %3271 = vmatpush1.msra.mxu0 %v3252
    %3272 = vmatprep.subr.mxu0 0.0
    %3273 = vmatpush1.msra.mxu0 %v3253
    %3274 = vmatprep.subr.mxu0 0.0
    %3275 = vmatpush1.msra.mxu0 %v3254
    %3276 = vmatprep.subr.mxu0 0.0
    %3277 = vmatpush1.msra.mxu0 %v3255
    %3278 = vmatprep.subr.mxu0 0.0
    %3279 = vmatpush1.msra.mxu0 %v3256
    %3280 = vmatprep.subr.mxu0 0.0
    %3281 = vmatpush1.msra.mxu0 %v3257
    %3282 = vmatprep.subr.mxu0 0.0
    %3283 = vmatpush1.msra.mxu0 %v3258
    %3284 = vmatprep.subr.mxu0 0.0
    %3285 = vmatpush1.msra.mxu0 %v3259
    %3286 = vmatprep.subr.mxu0 0.0
    %3287 = vmatpush1.msra.mxu0 %v3260
    %3288 = vmatprep.subr.mxu0 0.0
    %3289 = vmatpush1.msra.mxu0 %v3261
    %3290 = vmatprep.subr.mxu0 0.0
    %3291 = vmatpush1.msra.mxu0 %v3262
    %3292 = vmatprep.subr.mxu0 0.0
    %3293 = vmatpush1.msra.mxu0 %v3263
    %3294 = vmatprep.subr.mxu0 0.0
    %3295 = vmatpush1.msra.mxu0 %v3264
    %3296 = vmatprep.subr.mxu0 0.0
    %3297 = vmatpush1.msra.mxu0 %v3265
    %3298 = vmatprep.subr.mxu0 0.0
    %3299 = vmatpush1.msra.mxu0 0.0
    %3300 = vmatprep.subr.mxu0 0.0
    %3301 = vmatpush1.msra.mxu0 0.0
    %3302 = vmatprep.subr.mxu0 0.0
    %3303 = vmatpush1.msra.mxu0 0.0
    %3304 = vmatprep.subr.mxu0 0.0
    %3305 = vmatpush1.msra.mxu0 0.0
    %3306 = vmatprep.subr.mxu0 0.0
    %3307 = vmatpush1.msra.mxu0 0.0
    %3308 = vmatprep.subr.mxu0 0.0
    %3309 = vmatpush1.msra.mxu0 0.0
    %3310 = vmatprep.subr.mxu0 0.0
    %3311 = vmatpush1.msra.mxu0 0.0
    %3312 = vmatprep.subr.mxu0 0.0
    %3313 = vmatpush1.msra.mxu0 0.0
    %3314 = vmatprep.subr.mxu0 0.0
    %3315 = vmatpush1.msra.mxu0 0.0
    %3316 = vmatprep.subr.mxu0 0.0
    %3317 = vmatpush1.msra.mxu0 0.0
    %3318 = vmatprep.subr.mxu0 0.0
    %3319 = vmatpush1.msra.mxu0 0.0
    %3320 = vmatprep.subr.mxu0 0.0
    %3321 = vmatpush1.msra.mxu0 0.0
    %3322 = vmatprep.subr.mxu0 0.0
    %3323 = vmatpush1.msra.mxu0 0.0
    %3324 = vmatprep.subr.mxu0 0.0
    %3325 = vmatpush1.msra.mxu0 0.0
    %3326 = vmatprep.subr.mxu0 0.0
    %3327 = vmatpush1.msra.mxu0 0.0
    %3328 = vmatprep.subr.mxu0 0.0
    %3329 = vmatpush1.msra.mxu0 0.0
    %3330 = vmatprep.mubr.f32.mxu0 0.0
    %3331 = vmatmul.mubr.f32.gmra.mrb[0].mxu0 %v3249
    %v3332 = vpop.f32.mrb[0].mxu0
    %v3333 = vadd.f32 0.0, %v3332
    %v3334 = vpop.f32.mrb[0].mxu0
    %3335 = vdwg.mxu0
    %v3337 = vrot.slane %v2918, 1
    %v3339 = vadd.f32 %v3337, %v3333
    %v3340 = vmax.f32 %v3339, 0.0
    %v3341 = vld [vmem:[#allocation18] sm:$0xff]
    %v3342 = vld [vmem:[#allocation18 + $0x8] sm:$0xff]
    %v3343 = vld [vmem:[#allocation18 + $0x10] sm:$0xff]
    %v3344 = vld [vmem:[#allocation18 + $0x18] sm:$0xff]
    %v3345 = vld [vmem:[#allocation18 + $0x20] sm:$0xff]
    %v3346 = vld [vmem:[#allocation18 + $0x28] sm:$0xff]
    %v3347 = vld [vmem:[#allocation18 + $0x30] sm:$0xff]
    %v3348 = vld [vmem:[#allocation18 + $0x38] sm:$0xff]
    %v3349 = vld [vmem:[#allocation18 + $0x40] sm:$0xff]
    %v3350 = vld [vmem:[#allocation18 + $0x48] sm:$0xff]
    %v3351 = vld [vmem:[#allocation18 + $0x50] sm:$0xff]
    %v3352 = vld [vmem:[#allocation18 + $0x58] sm:$0xff]
    %v3353 = vld [vmem:[#allocation18 + $0x60] sm:$0xff]
    %v3354 = vld [vmem:[#allocation18 + $0x68] sm:$0xff]
    %v3355 = vld [vmem:[#allocation18 + $0x70] sm:$0xff]
    %v3356 = vld [vmem:[#allocation18 + $0x78] sm:$0xff]
    %v3357 = vld [vmem:[#allocation18 + $0x80] sm:$0xff]
    %v3358 = vld [vmem:[#allocation18 + $0x88] sm:$0xff]
    %v3359 = vld [vmem:[#allocation18 + $0x90] sm:$0xff]
    %v3360 = vld [vmem:[#allocation18 + $0x98] sm:$0xff]
    %v3361 = vld [vmem:[#allocation18 + $0xa0] sm:$0xff]
    %v3362 = vld [vmem:[#allocation18 + $0xa8] sm:$0xff]
    %v3363 = vld [vmem:[#allocation18 + $0xb0] sm:$0xff]
    %v3364 = vld [vmem:[#allocation18 + $0xb8] sm:$0xff]
    %v3365 = vld [vmem:[#allocation18 + $0xc0] sm:$0xff]
    %v3366 = vld [vmem:[#allocation18 + $0xc8] sm:$0xff]
    %v3367 = vld [vmem:[#allocation18 + $0xd0] sm:$0xff]
    %v3368 = vld [vmem:[#allocation18 + $0xd8] sm:$0xff]
    %v3369 = vld [vmem:[#allocation18 + $0xe0] sm:$0xff]
    %v3370 = vld [vmem:[#allocation18 + $0xe8] sm:$0xff]
    %v3371 = vld [vmem:[#allocation18 + $0xf0] sm:$0xff]
    %v3372 = vld [vmem:[#allocation18 + $0xf8] sm:$0xff]
    %v3373 = vld [vmem:[#allocation18 + $0x100] sm:$0xff]
    %v3374 = vld [vmem:[#allocation18 + $0x108] sm:$0xff]
    %v3375 = vld [vmem:[#allocation18 + $0x110] sm:$0xff]
    %v3376 = vld [vmem:[#allocation18 + $0x118] sm:$0xff]
    %v3377 = vld [vmem:[#allocation18 + $0x120] sm:$0xff]
    %v3378 = vld [vmem:[#allocation18 + $0x128] sm:$0xff]
    %v3379 = vld [vmem:[#allocation18 + $0x130] sm:$0xff]
    %v3380 = vld [vmem:[#allocation18 + $0x138] sm:$0xff]
    %v3381 = vld [vmem:[#allocation18 + $0x140] sm:$0xff]
    %v3382 = vld [vmem:[#allocation18 + $0x148] sm:$0xff]
    %v3383 = vld [vmem:[#allocation18 + $0x150] sm:$0xff]
    %v3384 = vld [vmem:[#allocation18 + $0x158] sm:$0xff]
    %v3385 = vld [vmem:[#allocation18 + $0x160] sm:$0xff]
    %v3386 = vld [vmem:[#allocation18 + $0x168] sm:$0xff]
    %v3387 = vld [vmem:[#allocation18 + $0x170] sm:$0xff]
    %v3388 = vld [vmem:[#allocation18 + $0x178] sm:$0xff]
    %v3389 = vld [vmem:[%s10] sm:$0x7]
    %v3391 = vlaneseq
    %v3392 = vshrl.u32 %v3391, 7
    %v3393 = vsub.s32 0, %v3392
    %v3394 = vrot.slane %v3389, %v3393
    %v3395 = vlaneseq
    %v3396 = vshrl.u32 %v3395, 7
    %v3397 = vsub.s32 1, %v3396
    %v3398 = vrot.slane %v3389, %v3397
    %v3399 = vlaneseq
    %v3400 = vshrl.u32 %v3399, 7
    %v3401 = vsub.s32 2, %v3400
    %v3402 = vrot.slane %v3389, %v3401
    %3406 = vmatprep.subr.mxu0 %v3342
    %3407 = vmatpush1.msra.mxu0 %v3341
    %3408 = vmatprep.subr.mxu0 %v3345
    %3409 = vmatpush1.msra.mxu0 %v3344
    %3410 = vmatprep.subr.mxu0 %v3348
    %3411 = vmatpush1.msra.mxu0 %v3347
    %3412 = vmatprep.subr.mxu0 %v3351
    %3413 = vmatpush1.msra.mxu0 %v3350
    %3414 = vmatprep.subr.mxu0 %v3354
    %3415 = vmatpush1.msra.mxu0 %v3353
    %3416 = vmatprep.subr.mxu0 %v3357
    %3417 = vmatpush1.msra.mxu0 %v3356
    %3418 = vmatprep.subr.mxu0 %v3360
    %3419 = vmatpush1.msra.mxu0 %v3359
    %3420 = vmatprep.subr.mxu0 %v3363
    %3421 = vmatpush1.msra.mxu0 %v3362
    %3422 = vmatprep.subr.mxu0 %v3366
    %3423 = vmatpush1.msra.mxu0 %v3365
    %3424 = vmatprep.subr.mxu0 %v3369
    %3425 = vmatpush1.msra.mxu0 %v3368
    %3426 = vmatprep.subr.mxu0 %v3372
    %3427 = vmatpush1.msra.mxu0 %v3371
    %3428 = vmatprep.subr.mxu0 %v3375
    %3429 = vmatpush1.msra.mxu0 %v3374
    %3430 = vmatprep.subr.mxu0 %v3378
    %3431 = vmatpush1.msra.mxu0 %v3377
    %3432 = vmatprep.subr.mxu0 %v3381
    %3433 = vmatpush1.msra.mxu0 %v3380
    %3434 = vmatprep.subr.mxu0 %v3384
    %3435 = vmatpush1.msra.mxu0 %v3383
    %3436 = vmatprep.subr.mxu0 %v3387
    %3437 = vmatpush1.msra.mxu0 %v3386
    %3438 = vmatprep.subr.mxu0 0.0
    %3439 = vmatpush1.msra.mxu0 0.0
    %3440 = vmatprep.subr.mxu0 0.0
    %3441 = vmatpush1.msra.mxu0 0.0
    %3442 = vmatprep.subr.mxu0 0.0
    %3443 = vmatpush1.msra.mxu0 0.0
    %3444 = vmatprep.subr.mxu0 0.0
    %3445 = vmatpush1.msra.mxu0 0.0
    %3446 = vmatprep.subr.mxu0 0.0
    %3447 = vmatpush1.msra.mxu0 0.0
    %3448 = vmatprep.subr.mxu0 0.0
    %3449 = vmatpush1.msra.mxu0 0.0
    %3450 = vmatprep.subr.mxu0 0.0
    %3451 = vmatpush1.msra.mxu0 0.0
    %3452 = vmatprep.subr.mxu0 0.0
    %3453 = vmatpush1.msra.mxu0 0.0
    %3454 = vmatprep.subr.mxu0 0.0
    %3455 = vmatpush1.msra.mxu0 0.0
    %3456 = vmatprep.subr.mxu0 0.0
    %3457 = vmatpush1.msra.mxu0 0.0
    %3458 = vmatprep.subr.mxu0 0.0
    %3459 = vmatpush1.msra.mxu0 0.0
    %3460 = vmatprep.subr.mxu0 0.0
    %3461 = vmatpush1.msra.mxu0 0.0
    %3462 = vmatprep.subr.mxu0 0.0
    %3463 = vmatpush1.msra.mxu0 0.0
    %3464 = vmatprep.subr.mxu0 0.0
    %3465 = vmatpush1.msra.mxu0 0.0
    %3466 = vmatprep.subr.mxu0 0.0
    %3467 = vmatpush1.msra.mxu0 0.0
    %3468 = vmatprep.subr.mxu0 0.0
    %3469 = vmatpush1.msra.mxu0 0.0
    %3470 = vmatprep.mubr.f32.mxu0 0.0
    %3471 = vmatmul.mubr.f32.gmra.mrb[0].mxu0 %v3340
    %v3472 = vpop.f32.mrb[0].mxu0
    %v3473 = vadd.f32 %v3394, %v3472
    %v3474 = vpop.f32.mrb[0].mxu0
    %v3475 = vadd.f32 %v3398, %v3474
    %3476 = vdwg.mxu0
    %3477 = vmatprep.subr.mxu0 0.0
    %3478 = vmatpush1.msra.mxu0 %v3343
    %3479 = vmatprep.subr.mxu0 0.0
    %3480 = vmatpush1.msra.mxu0 %v3346
    %3481 = vmatprep.subr.mxu0 0.0
    %3482 = vmatpush1.msra.mxu0 %v3349
    %3483 = vmatprep.subr.mxu0 0.0
    %3484 = vmatpush1.msra.mxu0 %v3352
    %3485 = vmatprep.subr.mxu0 0.0
    %3486 = vmatpush1.msra.mxu0 %v3355
    %3487 = vmatprep.subr.mxu0 0.0
    %3488 = vmatpush1.msra.mxu0 %v3358
    %3489 = vmatprep.subr.mxu0 0.0
    %3490 = vmatpush1.msra.mxu0 %v3361
    %3491 = vmatprep.subr.mxu0 0.0
    %3492 = vmatpush1.msra.mxu0 %v3364
    %3493 = vmatprep.subr.mxu0 0.0
    %3494 = vmatpush1.msra.mxu0 %v3367
    %3495 = vmatprep.subr.mxu0 0.0
    %3496 = vmatpush1.msra.mxu0 %v3370
    %3497 = vmatprep.subr.mxu0 0.0
    %3498 = vmatpush1.msra.mxu0 %v3373
    %3499 = vmatprep.subr.mxu0 0.0
    %3500 = vmatpush1.msra.mxu0 %v3376
    %3501 = vmatprep.subr.mxu0 0.0
    %3502 = vmatpush1.msra.mxu0 %v3379
    %3503 = vmatprep.subr.mxu0 0.0
    %3504 = vmatpush1.msra.mxu0 %v3382
    %3505 = vmatprep.subr.mxu0 0.0
    %3506 = vmatpush1.msra.mxu0 %v3385
    %3507 = vmatprep.subr.mxu0 0.0
    %3508 = vmatpush1.msra.mxu0 %v3388
    %3509 = vmatprep.subr.mxu0 0.0
    %3510 = vmatpush1.msra.mxu0 0.0
    %3511 = vmatprep.subr.mxu0 0.0
    %3512 = vmatpush1.msra.mxu0 0.0
    %3513 = vmatprep.subr.mxu0 0.0
    %3514 = vmatpush1.msra.mxu0 0.0
    %3515 = vmatprep.subr.mxu0 0.0
    %3516 = vmatpush1.msra.mxu0 0.0
    %3517 = vmatprep.subr.mxu0 0.0
    %3518 = vmatpush1.msra.mxu0 0.0
    %3519 = vmatprep.subr.mxu0 0.0
    %3520 = vmatpush1.msra.mxu0 0.0
    %3521 = vmatprep.subr.mxu0 0.0
    %3522 = vmatpush1.msra.mxu0 0.0
    %3523 = vmatprep.subr.mxu0 0.0
    %3524 = vmatpush1.msra.mxu0 0.0
    %3525 = vmatprep.subr.mxu0 0.0
    %3526 = vmatpush1.msra.mxu0 0.0
    %3527 = vmatprep.subr.mxu0 0.0
    %3528 = vmatpush1.msra.mxu0 0.0
    %3529 = vmatprep.subr.mxu0 0.0
    %3530 = vmatpush1.msra.mxu0 0.0
    %3531 = vmatprep.subr.mxu0 0.0
    %3532 = vmatpush1.msra.mxu0 0.0
    %3533 = vmatprep.subr.mxu0 0.0
    %3534 = vmatpush1.msra.mxu0 0.0
    %3535 = vmatprep.subr.mxu0 0.0
    %3536 = vmatpush1.msra.mxu0 0.0
    %3537 = vmatprep.subr.mxu0 0.0
    %3538 = vmatpush1.msra.mxu0 0.0
    %3539 = vmatprep.subr.mxu0 0.0
    %3540 = vmatpush1.msra.mxu0 0.0
    %3541 = vmatprep.mubr.f32.mxu0 0.0
    %3542 = vmatmul.mubr.f32.gmra.mrb[0].mxu0 %v3340
    %v3543 = vpop.f32.mrb[0].mxu0
    %v3544 = vadd.f32 %v3402, %v3543
    %v3545 = vpop.f32.mrb[0].mxu0
    %3546 = vdwg.mxu0
    %v3547 = vadd.f32 %v3473, %v3074
    %v3548 = vxor.u32 %v3547, 2147483648
    %v3549 = vmul.f32 %v3548, 1.442695
    %v3550 = vpow.pop %v3549
    %v3551 = vadd.f32 %v3550, 1.0
    %v3552 = vrcp.pop %v3551
    %v3553 = vmul.f32 1.0, %v3552
    %v3554 = vadd.f32 %v3475, %v3143
    %v3555 = vxor.u32 %v3554, 2147483648
    %v3556 = vmul.f32 %v3555, 1.442695
    %v3557 = vpow.pop %v3556
    %v3558 = vadd.f32 %v3557, 1.0
    %v3559 = vrcp.pop %v3558
    %v3560 = vmul.f32 1.0, %v3559
    %v3561 = vmul.f32 %v3553, %v3145
    %v3562 = vadd.f32 %v3544, %v3561
    %v3563 = vtanh.pop %v3562
    %v3564 = vsub.f32 1.0, %v3560
    %v3565 = vmul.f32 %v3564, %v3563
    %v3566 = vmul.f32 %v3560, %v2915
    %v3567 = vadd.f32 %v3565, %v3566
    %3568 = vst [vmem:[#allocation4 + $0x4] sm:$0x1] %v3567
    %s3569 = scalar_lea.vmem [#allocation3], 5
    %v3570 = vld [vmem:[%s3569] ss:$8 sm:$0x3]
    %v3571 = vld [vmem:[#allocation15] sm:$0xff]
    %v3572 = vld [vmem:[#allocation15 + $0x8] sm:$0xff]
    %v3573 = vld [vmem:[#allocation15 + $0x10] sm:$0xff]
    %v3574 = vld [vmem:[#allocation15 + $0x18] sm:$0xff]
    %v3575 = vld [vmem:[#allocation15 + $0x20] sm:$0xff]
    %v3576 = vld [vmem:[#allocation15 + $0x28] sm:$0xff]
    %v3577 = vld [vmem:[#allocation15 + $0x30] sm:$0xff]
    %v3578 = vld [vmem:[#allocation15 + $0x38] sm:$0xff]
    %v3579 = vld [vmem:[#allocation15 + $0x40] sm:$0xff]
    %v3580 = vld [vmem:[#allocation15 + $0x48] sm:$0xff]
    %v3581 = vld [vmem:[#allocation15 + $0x50] sm:$0xff]
    %v3582 = vld [vmem:[#allocation15 + $0x58] sm:$0xff]
    %v3583 = vld [vmem:[#allocation15 + $0x60] sm:$0xff]
    %v3584 = vld [vmem:[#allocation15 + $0x68] sm:$0xff]
    %v3585 = vld [vmem:[#allocation15 + $0x70] sm:$0xff]
    %v3586 = vld [vmem:[#allocation15 + $0x78] sm:$0xff]
    %v3587 = vld [vmem:[#allocation15 + $0x80] sm:$0xff]
    %v3588 = vld [vmem:[#allocation15 + $0x88] sm:$0xff]
    %v3589 = vld [vmem:[#allocation15 + $0x90] sm:$0xff]
    %v3590 = vld [vmem:[#allocation15 + $0x98] sm:$0xff]
    %v3591 = vld [vmem:[#allocation15 + $0xa0] sm:$0xff]
    %v3592 = vld [vmem:[#allocation15 + $0xa8] sm:$0xff]
    %v3593 = vld [vmem:[#allocation15 + $0xb0] sm:$0xff]
    %v3594 = vld [vmem:[#allocation15 + $0xb8] sm:$0xff]
    %v3595 = vld [vmem:[#allocation15 + $0xc0] sm:$0xff]
    %v3596 = vld [vmem:[#allocation15 + $0xc8] sm:$0xff]
    %v3597 = vld [vmem:[#allocation15 + $0xd0] sm:$0xff]
    %v3598 = vld [vmem:[#allocation15 + $0xd8] sm:$0xff]
    %v3599 = vld [vmem:[#allocation15 + $0xe0] sm:$0xff]
    %v3600 = vld [vmem:[#allocation15 + $0xe8] sm:$0xff]
    %v3601 = vld [vmem:[#allocation15 + $0xf0] sm:$0xff]
    %v3602 = vld [vmem:[#allocation15 + $0xf8] sm:$0xff]
    %v3603 = vld [vmem:[#allocation15 + $0x100] sm:$0xff]
    %v3604 = vld [vmem:[#allocation15 + $0x108] sm:$0xff]
    %v3605 = vld [vmem:[#allocation15 + $0x110] sm:$0xff]
    %v3606 = vld [vmem:[#allocation15 + $0x118] sm:$0xff]
    %v3607 = vld [vmem:[#allocation15 + $0x120] sm:$0xff]
    %v3608 = vld [vmem:[#allocation15 + $0x128] sm:$0xff]
    %v3609 = vld [vmem:[#allocation15 + $0x130] sm:$0xff]
    %v3610 = vld [vmem:[#allocation15 + $0x138] sm:$0xff]
    %v3611 = vld [vmem:[#allocation15 + $0x140] sm:$0xff]
    %v3612 = vld [vmem:[#allocation15 + $0x148] sm:$0xff]
    %v3613 = vld [vmem:[#allocation15 + $0x150] sm:$0xff]
    %v3614 = vld [vmem:[#allocation15 + $0x158] sm:$0xff]
    %v3615 = vld [vmem:[#allocation15 + $0x160] sm:$0xff]
    %v3616 = vld [vmem:[#allocation15 + $0x168] sm:$0xff]
    %v3617 = vld [vmem:[#allocation15 + $0x170] sm:$0xff]
    %v3618 = vld [vmem:[#allocation15 + $0x178] sm:$0xff]
    %v3619 = vld [vmem:[#allocation15 + $0x180] sm:$0xff]
    %v3620 = vld [vmem:[#allocation15 + $0x188] sm:$0xff]
    %v3621 = vld [vmem:[#allocation15 + $0x190] sm:$0xff]
    %v3622 = vld [vmem:[#allocation15 + $0x198] sm:$0xff]
    %v3623 = vld [vmem:[#allocation15 + $0x1a0] sm:$0xff]
    %v3624 = vld [vmem:[#allocation15 + $0x1a8] sm:$0xff]
    %v3625 = vld [vmem:[#allocation15 + $0x1b0] sm:$0xff]
    %v3626 = vld [vmem:[#allocation15 + $0x1b8] sm:$0xff]
    %v3627 = vld [vmem:[#allocation15 + $0x1c0] sm:$0xff]
    %v3628 = vld [vmem:[#allocation15 + $0x1c8] sm:$0xff]
    %v3629 = vld [vmem:[#allocation15 + $0x1d0] sm:$0xff]
    %v3630 = vld [vmem:[#allocation15 + $0x1d8] sm:$0xff]
    %v3631 = vld [vmem:[#allocation15 + $0x1e0] sm:$0xff]
    %v3632 = vld [vmem:[#allocation15 + $0x1e8] sm:$0xff]
    %v3633 = vld [vmem:[#allocation15 + $0x1f0] sm:$0xff]
    %v3634 = vld [vmem:[#allocation15 + $0x1f8] sm:$0xff]
    %v3635 = vld [vmem:[%s7] sm:$0xf]
    %v3637 = vlaneseq
    %v3638 = vshrl.u32 %v3637, 7
    %v3639 = vsub.s32 0, %v3638
    %v3640 = vrot.slane %v3635, %v3639
    %v3641 = vlaneseq
    %v3642 = vshrl.u32 %v3641, 7
    %v3643 = vsub.s32 1, %v3642
    %v3644 = vrot.slane %v3635, %v3643
    %v3645 = vlaneseq
    %v3646 = vshrl.u32 %v3645, 7
    %v3647 = vsub.s32 2, %v3646
    %v3648 = vrot.slane %v3635, %v3647
    %v3649 = vlaneseq
    %v3650 = vshrl.u32 %v3649, 7
    %v3651 = vsub.s32 3, %v3650
    %v3652 = vrot.slane %v3635, %v3651
    %3657 = vmatprep.subr.mxu0 %v3572
    %3658 = vmatpush1.msra.mxu0 %v3571
    %3659 = vmatprep.subr.mxu0 %v3576
    %3660 = vmatpush1.msra.mxu0 %v3575
    %3661 = vmatprep.subr.mxu0 %v3580
    %3662 = vmatpush1.msra.mxu0 %v3579
    %3663 = vmatprep.subr.mxu0 %v3584
    %3664 = vmatpush1.msra.mxu0 %v3583
    %3665 = vmatprep.subr.mxu0 %v3588
    %3666 = vmatpush1.msra.mxu0 %v3587
    %3667 = vmatprep.subr.mxu0 %v3592
    %3668 = vmatpush1.msra.mxu0 %v3591
    %3669 = vmatprep.subr.mxu0 %v3596
    %3670 = vmatpush1.msra.mxu0 %v3595
    %3671 = vmatprep.subr.mxu0 %v3600
    %3672 = vmatpush1.msra.mxu0 %v3599
    %3673 = vmatprep.subr.mxu0 %v3604
    %3674 = vmatpush1.msra.mxu0 %v3603
    %3675 = vmatprep.subr.mxu0 %v3608
    %3676 = vmatpush1.msra.mxu0 %v3607
    %3677 = vmatprep.subr.mxu0 %v3612
    %3678 = vmatpush1.msra.mxu0 %v3611
    %3679 = vmatprep.subr.mxu0 %v3616
    %3680 = vmatpush1.msra.mxu0 %v3615
    %3681 = vmatprep.subr.mxu0 %v3620
    %3682 = vmatpush1.msra.mxu0 %v3619
    %3683 = vmatprep.subr.mxu0 %v3624
    %3684 = vmatpush1.msra.mxu0 %v3623
    %3685 = vmatprep.subr.mxu0 %v3628
    %3686 = vmatpush1.msra.mxu0 %v3627
    %3687 = vmatprep.subr.mxu0 %v3632
    %3688 = vmatpush1.msra.mxu0 %v3631
    %3689 = vmatprep.subr.mxu0 0.0
    %3690 = vmatpush1.msra.mxu0 0.0
    %3691 = vmatprep.subr.mxu0 0.0
    %3692 = vmatpush1.msra.mxu0 0.0
    %3693 = vmatprep.subr.mxu0 0.0
    %3694 = vmatpush1.msra.mxu0 0.0
    %3695 = vmatprep.subr.mxu0 0.0
    %3696 = vmatpush1.msra.mxu0 0.0
    %3697 = vmatprep.subr.mxu0 0.0
    %3698 = vmatpush1.msra.mxu0 0.0
    %3699 = vmatprep.subr.mxu0 0.0
    %3700 = vmatpush1.msra.mxu0 0.0
    %3701 = vmatprep.subr.mxu0 0.0
    %3702 = vmatpush1.msra.mxu0 0.0
    %3703 = vmatprep.subr.mxu0 0.0
    %3704 = vmatpush1.msra.mxu0 0.0
    %3705 = vmatprep.subr.mxu0 0.0
    %3706 = vmatpush1.msra.mxu0 0.0
    %3707 = vmatprep.subr.mxu0 0.0
    %3708 = vmatpush1.msra.mxu0 0.0
    %3709 = vmatprep.subr.mxu0 0.0
    %3710 = vmatpush1.msra.mxu0 0.0
    %3711 = vmatprep.subr.mxu0 0.0
    %3712 = vmatpush1.msra.mxu0 0.0
    %3713 = vmatprep.subr.mxu0 0.0
    %3714 = vmatpush1.msra.mxu0 0.0
    %3715 = vmatprep.subr.mxu0 0.0
    %3716 = vmatpush1.msra.mxu0 0.0
    %3717 = vmatprep.subr.mxu0 0.0
    %3718 = vmatpush1.msra.mxu0 0.0
    %3719 = vmatprep.subr.mxu0 0.0
    %3720 = vmatpush1.msra.mxu0 0.0
    %3721 = vmatprep.mubr.f32.mxu0 0.0
    %3722 = vmatmul.mubr.f32.gmra.mrb[0].mxu0 %v3567
    %v3723 = vpop.f32.mrb[0].mxu0
    %v3724 = vadd.f32 %v3640, %v3723
    %v3725 = vpop.f32.mrb[0].mxu0
    %v3726 = vadd.f32 %v3644, %v3725
    %3727 = vdwg.mxu0
    %3728 = vmatprep.subr.mxu0 %v3574
    %3729 = vmatpush1.msra.mxu0 %v3573
    %3730 = vmatprep.subr.mxu0 %v3578
    %3731 = vmatpush1.msra.mxu0 %v3577
    %3732 = vmatprep.subr.mxu0 %v3582
    %3733 = vmatpush1.msra.mxu0 %v3581
    %3734 = vmatprep.subr.mxu0 %v3586
    %3735 = vmatpush1.msra.mxu0 %v3585
    %3736 = vmatprep.subr.mxu0 %v3590
    %3737 = vmatpush1.msra.mxu0 %v3589
    %3738 = vmatprep.subr.mxu0 %v3594
    %3739 = vmatpush1.msra.mxu0 %v3593
    %3740 = vmatprep.subr.mxu0 %v3598
    %3741 = vmatpush1.msra.mxu0 %v3597
    %3742 = vmatprep.subr.mxu0 %v3602
    %3743 = vmatpush1.msra.mxu0 %v3601
    %3744 = vmatprep.subr.mxu0 %v3606
    %3745 = vmatpush1.msra.mxu0 %v3605
    %3746 = vmatprep.subr.mxu0 %v3610
    %3747 = vmatpush1.msra.mxu0 %v3609
    %3748 = vmatprep.subr.mxu0 %v3614
    %3749 = vmatpush1.msra.mxu0 %v3613
    %3750 = vmatprep.subr.mxu0 %v3618
    %3751 = vmatpush1.msra.mxu0 %v3617
    %3752 = vmatprep.subr.mxu0 %v3622
    %3753 = vmatpush1.msra.mxu0 %v3621
    %3754 = vmatprep.subr.mxu0 %v3626
    %3755 = vmatpush1.msra.mxu0 %v3625
    %3756 = vmatprep.subr.mxu0 %v3630
    %3757 = vmatpush1.msra.mxu0 %v3629
    %3758 = vmatprep.subr.mxu0 %v3634
    %3759 = vmatpush1.msra.mxu0 %v3633
    %3760 = vmatprep.subr.mxu0 0.0
    %3761 = vmatpush1.msra.mxu0 0.0
    %3762 = vmatprep.subr.mxu0 0.0
    %3763 = vmatpush1.msra.mxu0 0.0
    %3764 = vmatprep.subr.mxu0 0.0
    %3765 = vmatpush1.msra.mxu0 0.0
    %3766 = vmatprep.subr.mxu0 0.0
    %3767 = vmatpush1.msra.mxu0 0.0
    %3768 = vmatprep.subr.mxu0 0.0
    %3769 = vmatpush1.msra.mxu0 0.0
    %3770 = vmatprep.subr.mxu0 0.0
    %3771 = vmatpush1.msra.mxu0 0.0
    %3772 = vmatprep.subr.mxu0 0.0
    %3773 = vmatpush1.msra.mxu0 0.0
    %3774 = vmatprep.subr.mxu0 0.0
    %3775 = vmatpush1.msra.mxu0 0.0
    %3776 = vmatprep.subr.mxu0 0.0
    %3777 = vmatpush1.msra.mxu0 0.0
    %3778 = vmatprep.subr.mxu0 0.0
    %3779 = vmatpush1.msra.mxu0 0.0
    %3780 = vmatprep.subr.mxu0 0.0
    %3781 = vmatpush1.msra.mxu0 0.0
    %3782 = vmatprep.subr.mxu0 0.0
    %3783 = vmatpush1.msra.mxu0 0.0
    %3784 = vmatprep.subr.mxu0 0.0
    %3785 = vmatpush1.msra.mxu0 0.0
    %3786 = vmatprep.subr.mxu0 0.0
    %3787 = vmatpush1.msra.mxu0 0.0
    %3788 = vmatprep.subr.mxu0 0.0
    %3789 = vmatpush1.msra.mxu0 0.0
    %3790 = vmatprep.subr.mxu0 0.0
    %3791 = vmatpush1.msra.mxu0 0.0
    %3792 = vmatprep.mubr.f32.mxu0 0.0
    %3793 = vmatmul.mubr.f32.gmra.mrb[0].mxu0 %v3567
    %v3794 = vpop.f32.mrb[0].mxu0
    %v3795 = vadd.f32 %v3648, %v3794
    %v3796 = vpop.f32.mrb[0].mxu0
    %v3797 = vadd.f32 %v3652, %v3796
    %3798 = vdwg.mxu0
    %v3799 = vadd.f32 %v3570, %v3724
    %v3800 = vsel %vm539, %v3799, -inf
    %3801 = vmax.xlane.f32.xlu0 %v3800
    %v3802 = vpop.xlane.xlu0 %3801
    %v3803 = vsub.f32 %v3799, %v3802
    %v3804 = vmul.f32 %v3803, 1.442695
    %v3805 = vpow.pop %v3804
    %v3806 = vld [vmem:[#allocation12] sm:$0xff]
    %v3807 = vld [vmem:[#allocation12 + $0x8] sm:$0xff]
    %v3808 = vld [vmem:[#allocation12 + $0x10] sm:$0xff]
    %v3809 = vld [vmem:[#allocation12 + $0x18] sm:$0xff]
    %v3810 = vld [vmem:[#allocation12 + $0x20] sm:$0xff]
    %v3811 = vld [vmem:[#allocation12 + $0x28] sm:$0xff]
    %v3812 = vld [vmem:[#allocation12 + $0x30] sm:$0xff]
    %v3813 = vld [vmem:[#allocation12 + $0x38] sm:$0xff]
    %v3814 = vld [vmem:[#allocation12 + $0x40] sm:$0xff]
    %v3815 = vld [vmem:[#allocation12 + $0x48] sm:$0xff]
    %v3816 = vld [vmem:[#allocation12 + $0x50] sm:$0xff]
    %v3817 = vld [vmem:[#allocation12 + $0x58] sm:$0xff]
    %v3818 = vld [vmem:[#allocation12 + $0x60] sm:$0xff]
    %v3819 = vld [vmem:[#allocation12 + $0x68] sm:$0xff]
    %v3820 = vld [vmem:[#allocation12 + $0x70] sm:$0xff]
    %v3821 = vld [vmem:[#allocation12 + $0x78] sm:$0xff]
    %3822 = vmatprep.subr.mxu0 0.0
    %3823 = vmatpush1.msra.mxu0 %v3806
    %3824 = vmatprep.subr.mxu0 0.0
    %3825 = vmatpush1.msra.mxu0 %v3807
    %3826 = vmatprep.subr.mxu0 0.0
    %3827 = vmatpush1.msra.mxu0 %v3808
    %3828 = vmatprep.subr.mxu0 0.0
    %3829 = vmatpush1.msra.mxu0 %v3809
    %3830 = vmatprep.subr.mxu0 0.0
    %3831 = vmatpush1.msra.mxu0 %v3810
    %3832 = vmatprep.subr.mxu0 0.0
    %3833 = vmatpush1.msra.mxu0 %v3811
    %3834 = vmatprep.subr.mxu0 0.0
    %3835 = vmatpush1.msra.mxu0 %v3812
    %3836 = vmatprep.subr.mxu0 0.0
    %3837 = vmatpush1.msra.mxu0 %v3813
    %3838 = vmatprep.subr.mxu0 0.0
    %3839 = vmatpush1.msra.mxu0 %v3814
    %3840 = vmatprep.subr.mxu0 0.0
    %3841 = vmatpush1.msra.mxu0 %v3815
    %3842 = vmatprep.subr.mxu0 0.0
    %3843 = vmatpush1.msra.mxu0 %v3816
    %3844 = vmatprep.subr.mxu0 0.0
    %3845 = vmatpush1.msra.mxu0 %v3817
    %3846 = vmatprep.subr.mxu0 0.0
    %3847 = vmatpush1.msra.mxu0 %v3818
    %3848 = vmatprep.subr.mxu0 0.0
    %3849 = vmatpush1.msra.mxu0 %v3819
    %3850 = vmatprep.subr.mxu0 0.0
    %3851 = vmatpush1.msra.mxu0 %v3820
    %3852 = vmatprep.subr.mxu0 0.0
    %3853 = vmatpush1.msra.mxu0 %v3821
    %3854 = vmatprep.subr.mxu0 0.0
    %3855 = vmatpush1.msra.mxu0 0.0
    %3856 = vmatprep.subr.mxu0 0.0
    %3857 = vmatpush1.msra.mxu0 0.0
    %3858 = vmatprep.subr.mxu0 0.0
    %3859 = vmatpush1.msra.mxu0 0.0
    %3860 = vmatprep.subr.mxu0 0.0
    %3861 = vmatpush1.msra.mxu0 0.0
    %3862 = vmatprep.subr.mxu0 0.0
    %3863 = vmatpush1.msra.mxu0 0.0
    %3864 = vmatprep.subr.mxu0 0.0
    %3865 = vmatpush1.msra.mxu0 0.0
    %3866 = vmatprep.subr.mxu0 0.0
    %3867 = vmatpush1.msra.mxu0 0.0
    %3868 = vmatprep.subr.mxu0 0.0
    %3869 = vmatpush1.msra.mxu0 0.0
    %3870 = vmatprep.subr.mxu0 0.0
    %3871 = vmatpush1.msra.mxu0 0.0
    %3872 = vmatprep.subr.mxu0 0.0
    %3873 = vmatpush1.msra.mxu0 0.0
    %3874 = vmatprep.subr.mxu0 0.0
    %3875 = vmatpush1.msra.mxu0 0.0
    %3876 = vmatprep.subr.mxu0 0.0
    %3877 = vmatpush1.msra.mxu0 0.0
    %3878 = vmatprep.subr.mxu0 0.0
    %3879 = vmatpush1.msra.mxu0 0.0
    %3880 = vmatprep.subr.mxu0 0.0
    %3881 = vmatpush1.msra.mxu0 0.0
    %3882 = vmatprep.subr.mxu0 0.0
    %3883 = vmatpush1.msra.mxu0 0.0
    %3884 = vmatprep.subr.mxu0 0.0
    %3885 = vmatpush1.msra.mxu0 0.0
    %3886 = vmatprep.mubr.f32.mxu0 0.0
    %3887 = vmatmul.mubr.f32.gmra.mrb[0].mxu0 %v3805
    %v3888 = vpop.f32.mrb[0].mxu0
    %v3889 = vadd.f32 0.0, %v3888
    %v3890 = vpop.f32.mrb[0].mxu0
    %3891 = vdwg.mxu0
    %v3892 = vsel %vm539, %v3805, 0.0
    %3893 = vadd.xlane.f32.xlu0 %v3892
    %v3894 = vpop.xlane.xlu0 %3893
    %v3895 = vrcp.pop %v3894
    %v3896 = vmul.f32 %v3894, %v3895
    %v3897 = vsub.f32 2.0, %v3896
    %v3898 = vmul.f32 %v3895, %v3897
    %v3899 = vmul.f32 %v3805, %v3898
    %3900 = vst [vmem:[#allocation24 + $0x5] sm:$0x1] %v3899
    %v3901 = vmul.f32 %v3889, %v3898
    %v3902 = vld [vmem:[#allocation16] sm:$0xff]
    %v3903 = vld [vmem:[#allocation16 + $0x8] sm:$0xff]
    %v3904 = vld [vmem:[#allocation16 + $0x10] sm:$0xff]
    %v3905 = vld [vmem:[#allocation16 + $0x18] sm:$0xff]
    %v3906 = vld [vmem:[#allocation16 + $0x20] sm:$0xff]
    %v3907 = vld [vmem:[#allocation16 + $0x28] sm:$0xff]
    %v3908 = vld [vmem:[#allocation16 + $0x30] sm:$0xff]
    %v3909 = vld [vmem:[#allocation16 + $0x38] sm:$0xff]
    %v3910 = vld [vmem:[#allocation16 + $0x40] sm:$0xff]
    %v3911 = vld [vmem:[#allocation16 + $0x48] sm:$0xff]
    %v3912 = vld [vmem:[#allocation16 + $0x50] sm:$0xff]
    %v3913 = vld [vmem:[#allocation16 + $0x58] sm:$0xff]
    %v3914 = vld [vmem:[#allocation16 + $0x60] sm:$0xff]
    %v3915 = vld [vmem:[#allocation16 + $0x68] sm:$0xff]
    %v3916 = vld [vmem:[#allocation16 + $0x70] sm:$0xff]
    %v3917 = vld [vmem:[#allocation16 + $0x78] sm:$0xff]
    %3918 = vmatprep.subr.mxu0 0.0
    %3919 = vmatpush1.msra.mxu0 %v3902
    %3920 = vmatprep.subr.mxu0 0.0
    %3921 = vmatpush1.msra.mxu0 %v3903
    %3922 = vmatprep.subr.mxu0 0.0
    %3923 = vmatpush1.msra.mxu0 %v3904
    %3924 = vmatprep.subr.mxu0 0.0
    %3925 = vmatpush1.msra.mxu0 %v3905
    %3926 = vmatprep.subr.mxu0 0.0
    %3927 = vmatpush1.msra.mxu0 %v3906
    %3928 = vmatprep.subr.mxu0 0.0
    %3929 = vmatpush1.msra.mxu0 %v3907
    %3930 = vmatprep.subr.mxu0 0.0
    %3931 = vmatpush1.msra.mxu0 %v3908
    %3932 = vmatprep.subr.mxu0 0.0
    %3933 = vmatpush1.msra.mxu0 %v3909
    %3934 = vmatprep.subr.mxu0 0.0
    %3935 = vmatpush1.msra.mxu0 %v3910
    %3936 = vmatprep.subr.mxu0 0.0
    %3937 = vmatpush1.msra.mxu0 %v3911
    %3938 = vmatprep.subr.mxu0 0.0
    %3939 = vmatpush1.msra.mxu0 %v3912
    %3940 = vmatprep.subr.mxu0 0.0
    %3941 = vmatpush1.msra.mxu0 %v3913
    %3942 = vmatprep.subr.mxu0 0.0
    %3943 = vmatpush1.msra.mxu0 %v3914
    %3944 = vmatprep.subr.mxu0 0.0
    %3945 = vmatpush1.msra.mxu0 %v3915
    %3946 = vmatprep.subr.mxu0 0.0
    %3947 = vmatpush1.msra.mxu0 %v3916
    %3948 = vmatprep.subr.mxu0 0.0
    %3949 = vmatpush1.msra.mxu0 %v3917
    %3950 = vmatprep.subr.mxu0 0.0
    %3951 = vmatpush1.msra.mxu0 0.0
    %3952 = vmatprep.subr.mxu0 0.0
    %3953 = vmatpush1.msra.mxu0 0.0
    %3954 = vmatprep.subr.mxu0 0.0
    %3955 = vmatpush1.msra.mxu0 0.0
    %3956 = vmatprep.subr.mxu0 0.0
    %3957 = vmatpush1.msra.mxu0 0.0
    %3958 = vmatprep.subr.mxu0 0.0
    %3959 = vmatpush1.msra.mxu0 0.0
    %3960 = vmatprep.subr.mxu0 0.0
    %3961 = vmatpush1.msra.mxu0 0.0
    %3962 = vmatprep.subr.mxu0 0.0
    %3963 = vmatpush1.msra.mxu0 0.0
    %3964 = vmatprep.subr.mxu0 0.0
    %3965 = vmatpush1.msra.mxu0 0.0
    %3966 = vmatprep.subr.mxu0 0.0
    %3967 = vmatpush1.msra.mxu0 0.0
    %3968 = vmatprep.subr.mxu0 0.0
    %3969 = vmatpush1.msra.mxu0 0.0
    %3970 = vmatprep.subr.mxu0 0.0
    %3971 = vmatpush1.msra.mxu0 0.0
    %3972 = vmatprep.subr.mxu0 0.0
    %3973 = vmatpush1.msra.mxu0 0.0
    %3974 = vmatprep.subr.mxu0 0.0
    %3975 = vmatpush1.msra.mxu0 0.0
    %3976 = vmatprep.subr.mxu0 0.0
    %3977 = vmatpush1.msra.mxu0 0.0
    %3978 = vmatprep.subr.mxu0 0.0
    %3979 = vmatpush1.msra.mxu0 0.0
    %3980 = vmatprep.subr.mxu0 0.0
    %3981 = vmatpush1.msra.mxu0 0.0
    %3982 = vmatprep.mubr.f32.mxu0 0.0
    %3983 = vmatmul.mubr.f32.gmra.mrb[0].mxu0 %v3901
    %v3984 = vpop.f32.mrb[0].mxu0
    %v3985 = vadd.f32 0.0, %v3984
    %v3986 = vpop.f32.mrb[0].mxu0
    %3987 = vdwg.mxu0
    %v3989 = vrot.slane %v3570, 1
    %v3991 = vadd.f32 %v3989, %v3985
    %v3992 = vmax.f32 %v3991, 0.0
    %v3993 = vld [vmem:[#allocation18] sm:$0xff]
    %v3994 = vld [vmem:[#allocation18 + $0x8] sm:$0xff]
    %v3995 = vld [vmem:[#allocation18 + $0x10] sm:$0xff]
    %v3996 = vld [vmem:[#allocation18 + $0x18] sm:$0xff]
    %v3997 = vld [vmem:[#allocation18 + $0x20] sm:$0xff]
    %v3998 = vld [vmem:[#allocation18 + $0x28] sm:$0xff]
    %v3999 = vld [vmem:[#allocation18 + $0x30] sm:$0xff]
    %v4000 = vld [vmem:[#allocation18 + $0x38] sm:$0xff]
    %v4001 = vld [vmem:[#allocation18 + $0x40] sm:$0xff]
    %v4002 = vld [vmem:[#allocation18 + $0x48] sm:$0xff]
    %v4003 = vld [vmem:[#allocation18 + $0x50] sm:$0xff]
    %v4004 = vld [vmem:[#allocation18 + $0x58] sm:$0xff]
    %v4005 = vld [vmem:[#allocation18 + $0x60] sm:$0xff]
    %v4006 = vld [vmem:[#allocation18 + $0x68] sm:$0xff]
    %v4007 = vld [vmem:[#allocation18 + $0x70] sm:$0xff]
    %v4008 = vld [vmem:[#allocation18 + $0x78] sm:$0xff]
    %v4009 = vld [vmem:[#allocation18 + $0x80] sm:$0xff]
    %v4010 = vld [vmem:[#allocation18 + $0x88] sm:$0xff]
    %v4011 = vld [vmem:[#allocation18 + $0x90] sm:$0xff]
    %v4012 = vld [vmem:[#allocation18 + $0x98] sm:$0xff]
    %v4013 = vld [vmem:[#allocation18 + $0xa0] sm:$0xff]
    %v4014 = vld [vmem:[#allocation18 + $0xa8] sm:$0xff]
    %v4015 = vld [vmem:[#allocation18 + $0xb0] sm:$0xff]
    %v4016 = vld [vmem:[#allocation18 + $0xb8] sm:$0xff]
    %v4017 = vld [vmem:[#allocation18 + $0xc0] sm:$0xff]
    %v4018 = vld [vmem:[#allocation18 + $0xc8] sm:$0xff]
    %v4019 = vld [vmem:[#allocation18 + $0xd0] sm:$0xff]
    %v4020 = vld [vmem:[#allocation18 + $0xd8] sm:$0xff]
    %v4021 = vld [vmem:[#allocation18 + $0xe0] sm:$0xff]
    %v4022 = vld [vmem:[#allocation18 + $0xe8] sm:$0xff]
    %v4023 = vld [vmem:[#allocation18 + $0xf0] sm:$0xff]
    %v4024 = vld [vmem:[#allocation18 + $0xf8] sm:$0xff]
    %v4025 = vld [vmem:[#allocation18 + $0x100] sm:$0xff]
    %v4026 = vld [vmem:[#allocation18 + $0x108] sm:$0xff]
    %v4027 = vld [vmem:[#allocation18 + $0x110] sm:$0xff]
    %v4028 = vld [vmem:[#allocation18 + $0x118] sm:$0xff]
    %v4029 = vld [vmem:[#allocation18 + $0x120] sm:$0xff]
    %v4030 = vld [vmem:[#allocation18 + $0x128] sm:$0xff]
    %v4031 = vld [vmem:[#allocation18 + $0x130] sm:$0xff]
    %v4032 = vld [vmem:[#allocation18 + $0x138] sm:$0xff]
    %v4033 = vld [vmem:[#allocation18 + $0x140] sm:$0xff]
    %v4034 = vld [vmem:[#allocation18 + $0x148] sm:$0xff]
    %v4035 = vld [vmem:[#allocation18 + $0x150] sm:$0xff]
    %v4036 = vld [vmem:[#allocation18 + $0x158] sm:$0xff]
    %v4037 = vld [vmem:[#allocation18 + $0x160] sm:$0xff]
    %v4038 = vld [vmem:[#allocation18 + $0x168] sm:$0xff]
    %v4039 = vld [vmem:[#allocation18 + $0x170] sm:$0xff]
    %v4040 = vld [vmem:[#allocation18 + $0x178] sm:$0xff]
    %v4041 = vld [vmem:[%s10] sm:$0x7]
    %v4043 = vlaneseq
    %v4044 = vshrl.u32 %v4043, 7
    %v4045 = vsub.s32 0, %v4044
    %v4046 = vrot.slane %v4041, %v4045
    %v4047 = vlaneseq
    %v4048 = vshrl.u32 %v4047, 7
    %v4049 = vsub.s32 1, %v4048
    %v4050 = vrot.slane %v4041, %v4049
    %v4051 = vlaneseq
    %v4052 = vshrl.u32 %v4051, 7
    %v4053 = vsub.s32 2, %v4052
    %v4054 = vrot.slane %v4041, %v4053
    %4058 = vmatprep.subr.mxu0 %v3994
    %4059 = vmatpush1.msra.mxu0 %v3993
    %4060 = vmatprep.subr.mxu0 %v3997
    %4061 = vmatpush1.msra.mxu0 %v3996
    %4062 = vmatprep.subr.mxu0 %v4000
    %4063 = vmatpush1.msra.mxu0 %v3999
    %4064 = vmatprep.subr.mxu0 %v4003
    %4065 = vmatpush1.msra.mxu0 %v4002
    %4066 = vmatprep.subr.mxu0 %v4006
    %4067 = vmatpush1.msra.mxu0 %v4005
    %4068 = vmatprep.subr.mxu0 %v4009
    %4069 = vmatpush1.msra.mxu0 %v4008
    %4070 = vmatprep.subr.mxu0 %v4012
    %4071 = vmatpush1.msra.mxu0 %v4011
    %4072 = vmatprep.subr.mxu0 %v4015
    %4073 = vmatpush1.msra.mxu0 %v4014
    %4074 = vmatprep.subr.mxu0 %v4018
    %4075 = vmatpush1.msra.mxu0 %v4017
    %4076 = vmatprep.subr.mxu0 %v4021
    %4077 = vmatpush1.msra.mxu0 %v4020
    %4078 = vmatprep.subr.mxu0 %v4024
    %4079 = vmatpush1.msra.mxu0 %v4023
    %4080 = vmatprep.subr.mxu0 %v4027
    %4081 = vmatpush1.msra.mxu0 %v4026
    %4082 = vmatprep.subr.mxu0 %v4030
    %4083 = vmatpush1.msra.mxu0 %v4029
    %4084 = vmatprep.subr.mxu0 %v4033
    %4085 = vmatpush1.msra.mxu0 %v4032
    %4086 = vmatprep.subr.mxu0 %v4036
    %4087 = vmatpush1.msra.mxu0 %v4035
    %4088 = vmatprep.subr.mxu0 %v4039
    %4089 = vmatpush1.msra.mxu0 %v4038
    %4090 = vmatprep.subr.mxu0 0.0
    %4091 = vmatpush1.msra.mxu0 0.0
    %4092 = vmatprep.subr.mxu0 0.0
    %4093 = vmatpush1.msra.mxu0 0.0
    %4094 = vmatprep.subr.mxu0 0.0
    %4095 = vmatpush1.msra.mxu0 0.0
    %4096 = vmatprep.subr.mxu0 0.0
    %4097 = vmatpush1.msra.mxu0 0.0
    %4098 = vmatprep.subr.mxu0 0.0
    %4099 = vmatpush1.msra.mxu0 0.0
    %4100 = vmatprep.subr.mxu0 0.0
    %4101 = vmatpush1.msra.mxu0 0.0
    %4102 = vmatprep.subr.mxu0 0.0
    %4103 = vmatpush1.msra.mxu0 0.0
    %4104 = vmatprep.subr.mxu0 0.0
    %4105 = vmatpush1.msra.mxu0 0.0
    %4106 = vmatprep.subr.mxu0 0.0
    %4107 = vmatpush1.msra.mxu0 0.0
    %4108 = vmatprep.subr.mxu0 0.0
    %4109 = vmatpush1.msra.mxu0 0.0
    %4110 = vmatprep.subr.mxu0 0.0
    %4111 = vmatpush1.msra.mxu0 0.0
    %4112 = vmatprep.subr.mxu0 0.0
    %4113 = vmatpush1.msra.mxu0 0.0
    %4114 = vmatprep.subr.mxu0 0.0
    %4115 = vmatpush1.msra.mxu0 0.0
    %4116 = vmatprep.subr.mxu0 0.0
    %4117 = vmatpush1.msra.mxu0 0.0
    %4118 = vmatprep.subr.mxu0 0.0
    %4119 = vmatpush1.msra.mxu0 0.0
    %4120 = vmatprep.subr.mxu0 0.0
    %4121 = vmatpush1.msra.mxu0 0.0
    %4122 = vmatprep.mubr.f32.mxu0 0.0
    %4123 = vmatmul.mubr.f32.gmra.mrb[0].mxu0 %v3992
    %v4124 = vpop.f32.mrb[0].mxu0
    %v4125 = vadd.f32 %v4046, %v4124
    %v4126 = vpop.f32.mrb[0].mxu0
    %v4127 = vadd.f32 %v4050, %v4126
    %4128 = vdwg.mxu0
    %4129 = vmatprep.subr.mxu0 0.0
    %4130 = vmatpush1.msra.mxu0 %v3995
    %4131 = vmatprep.subr.mxu0 0.0
    %4132 = vmatpush1.msra.mxu0 %v3998
    %4133 = vmatprep.subr.mxu0 0.0
    %4134 = vmatpush1.msra.mxu0 %v4001
    %4135 = vmatprep.subr.mxu0 0.0
    %4136 = vmatpush1.msra.mxu0 %v4004
    %4137 = vmatprep.subr.mxu0 0.0
    %4138 = vmatpush1.msra.mxu0 %v4007
    %4139 = vmatprep.subr.mxu0 0.0
    %4140 = vmatpush1.msra.mxu0 %v4010
    %4141 = vmatprep.subr.mxu0 0.0
    %4142 = vmatpush1.msra.mxu0 %v4013
    %4143 = vmatprep.subr.mxu0 0.0
    %4144 = vmatpush1.msra.mxu0 %v4016
    %4145 = vmatprep.subr.mxu0 0.0
    %4146 = vmatpush1.msra.mxu0 %v4019
    %4147 = vmatprep.subr.mxu0 0.0
    %4148 = vmatpush1.msra.mxu0 %v4022
    %4149 = vmatprep.subr.mxu0 0.0
    %4150 = vmatpush1.msra.mxu0 %v4025
    %4151 = vmatprep.subr.mxu0 0.0
    %4152 = vmatpush1.msra.mxu0 %v4028
    %4153 = vmatprep.subr.mxu0 0.0
    %4154 = vmatpush1.msra.mxu0 %v4031
    %4155 = vmatprep.subr.mxu0 0.0
    %4156 = vmatpush1.msra.mxu0 %v4034
    %4157 = vmatprep.subr.mxu0 0.0
    %4158 = vmatpush1.msra.mxu0 %v4037
    %4159 = vmatprep.subr.mxu0 0.0
    %4160 = vmatpush1.msra.mxu0 %v4040
    %4161 = vmatprep.subr.mxu0 0.0
    %4162 = vmatpush1.msra.mxu0 0.0
    %4163 = vmatprep.subr.mxu0 0.0
    %4164 = vmatpush1.msra.mxu0 0.0
    %4165 = vmatprep.subr.mxu0 0.0
    %4166 = vmatpush1.msra.mxu0 0.0
    %4167 = vmatprep.subr.mxu0 0.0
    %4168 = vmatpush1.msra.mxu0 0.0
    %4169 = vmatprep.subr.mxu0 0.0
    %4170 = vmatpush1.msra.mxu0 0.0
    %4171 = vmatprep.subr.mxu0 0.0
    %4172 = vmatpush1.msra.mxu0 0.0
    %4173 = vmatprep.subr.mxu0 0.0
    %4174 = vmatpush1.msra.mxu0 0.0
    %4175 = vmatprep.subr.mxu0 0.0
    %4176 = vmatpush1.msra.mxu0 0.0
    %4177 = vmatprep.subr.mxu0 0.0
    %4178 = vmatpush1.msra.mxu0 0.0
    %4179 = vmatprep.subr.mxu0 0.0
    %4180 = vmatpush1.msra.mxu0 0.0
    %4181 = vmatprep.subr.mxu0 0.0
    %4182 = vmatpush1.msra.mxu0 0.0
    %4183 = vmatprep.subr.mxu0 0.0
    %4184 = vmatpush1.msra.mxu0 0.0
    %4185 = vmatprep.subr.mxu0 0.0
    %4186 = vmatpush1.msra.mxu0 0.0
    %4187 = vmatprep.subr.mxu0 0.0
    %4188 = vmatpush1.msra.mxu0 0.0
    %4189 = vmatprep.subr.mxu0 0.0
    %4190 = vmatpush1.msra.mxu0 0.0
    %4191 = vmatprep.subr.mxu0 0.0
    %4192 = vmatpush1.msra.mxu0 0.0
    %4193 = vmatprep.mubr.f32.mxu0 0.0
    %4194 = vmatmul.mubr.f32.gmra.mrb[0].mxu0 %v3992
    %v4195 = vpop.f32.mrb[0].mxu0
    %v4196 = vadd.f32 %v4054, %v4195
    %v4197 = vpop.f32.mrb[0].mxu0
    %4198 = vdwg.mxu0
    %v4199 = vadd.f32 %v4125, %v3726
    %v4200 = vxor.u32 %v4199, 2147483648
    %v4201 = vmul.f32 %v4200, 1.442695
    %v4202 = vpow.pop %v4201
    %v4203 = vadd.f32 %v4202, 1.0
    %v4204 = vrcp.pop %v4203
    %v4205 = vmul.f32 1.0, %v4204
    %v4206 = vadd.f32 %v4127, %v3795
    %v4207 = vxor.u32 %v4206, 2147483648
    %v4208 = vmul.f32 %v4207, 1.442695
    %v4209 = vpow.pop %v4208
    %v4210 = vadd.f32 %v4209, 1.0
    %v4211 = vrcp.pop %v4210
    %v4212 = vmul.f32 1.0, %v4211
    %v4213 = vmul.f32 %v4205, %v3797
    %v4214 = vadd.f32 %v4196, %v4213
    %v4215 = vtanh.pop %v4214
    %v4216 = vsub.f32 1.0, %v4212
    %v4217 = vmul.f32 %v4216, %v4215
    %v4218 = vmul.f32 %v4212, %v3567
    %v4219 = vadd.f32 %v4217, %v4218
    %4220 = vst [vmem:[#allocation4 + $0x5] sm:$0x1] %v4219
    %s4221 = scalar_lea.vmem [#allocation3], 6
    %v4222 = vld [vmem:[%s4221] ss:$8 sm:$0x3]
    %v4223 = vld [vmem:[#allocation15] sm:$0xff]
    %v4224 = vld [vmem:[#allocation15 + $0x8] sm:$0xff]
    %v4225 = vld [vmem:[#allocation15 + $0x10] sm:$0xff]
    %v4226 = vld [vmem:[#allocation15 + $0x18] sm:$0xff]
    %v4227 = vld [vmem:[#allocation15 + $0x20] sm:$0xff]
    %v4228 = vld [vmem:[#allocation15 + $0x28] sm:$0xff]
    %v4229 = vld [vmem:[#allocation15 + $0x30] sm:$0xff]
    %v4230 = vld [vmem:[#allocation15 + $0x38] sm:$0xff]
    %v4231 = vld [vmem:[#allocation15 + $0x40] sm:$0xff]
    %v4232 = vld [vmem:[#allocation15 + $0x48] sm:$0xff]
    %v4233 = vld [vmem:[#allocation15 + $0x50] sm:$0xff]
    %v4234 = vld [vmem:[#allocation15 + $0x58] sm:$0xff]
    %v4235 = vld [vmem:[#allocation15 + $0x60] sm:$0xff]
    %v4236 = vld [vmem:[#allocation15 + $0x68] sm:$0xff]
    %v4237 = vld [vmem:[#allocation15 + $0x70] sm:$0xff]
    %v4238 = vld [vmem:[#allocation15 + $0x78] sm:$0xff]
    %v4239 = vld [vmem:[#allocation15 + $0x80] sm:$0xff]
    %v4240 = vld [vmem:[#allocation15 + $0x88] sm:$0xff]
    %v4241 = vld [vmem:[#allocation15 + $0x90] sm:$0xff]
    %v4242 = vld [vmem:[#allocation15 + $0x98] sm:$0xff]
    %v4243 = vld [vmem:[#allocation15 + $0xa0] sm:$0xff]
    %v4244 = vld [vmem:[#allocation15 + $0xa8] sm:$0xff]
    %v4245 = vld [vmem:[#allocation15 + $0xb0] sm:$0xff]
    %v4246 = vld [vmem:[#allocation15 + $0xb8] sm:$0xff]
    %v4247 = vld [vmem:[#allocation15 + $0xc0] sm:$0xff]
    %v4248 = vld [vmem:[#allocation15 + $0xc8] sm:$0xff]
    %v4249 = vld [vmem:[#allocation15 + $0xd0] sm:$0xff]
    %v4250 = vld [vmem:[#allocation15 + $0xd8] sm:$0xff]
    %v4251 = vld [vmem:[#allocation15 + $0xe0] sm:$0xff]
    %v4252 = vld [vmem:[#allocation15 + $0xe8] sm:$0xff]
    %v4253 = vld [vmem:[#allocation15 + $0xf0] sm:$0xff]
    %v4254 = vld [vmem:[#allocation15 + $0xf8] sm:$0xff]
    %v4255 = vld [vmem:[#allocation15 + $0x100] sm:$0xff]
    %v4256 = vld [vmem:[#allocation15 + $0x108] sm:$0xff]
    %v4257 = vld [vmem:[#allocation15 + $0x110] sm:$0xff]
    %v4258 = vld [vmem:[#allocation15 + $0x118] sm:$0xff]
    %v4259 = vld [vmem:[#allocation15 + $0x120] sm:$0xff]
    %v4260 = vld [vmem:[#allocation15 + $0x128] sm:$0xff]
    %v4261 = vld [vmem:[#allocation15 + $0x130] sm:$0xff]
    %v4262 = vld [vmem:[#allocation15 + $0x138] sm:$0xff]
    %v4263 = vld [vmem:[#allocation15 + $0x140] sm:$0xff]
    %v4264 = vld [vmem:[#allocation15 + $0x148] sm:$0xff]
    %v4265 = vld [vmem:[#allocation15 + $0x150] sm:$0xff]
    %v4266 = vld [vmem:[#allocation15 + $0x158] sm:$0xff]
    %v4267 = vld [vmem:[#allocation15 + $0x160] sm:$0xff]
    %v4268 = vld [vmem:[#allocation15 + $0x168] sm:$0xff]
    %v4269 = vld [vmem:[#allocation15 + $0x170] sm:$0xff]
    %v4270 = vld [vmem:[#allocation15 + $0x178] sm:$0xff]
    %v4271 = vld [vmem:[#allocation15 + $0x180] sm:$0xff]
    %v4272 = vld [vmem:[#allocation15 + $0x188] sm:$0xff]
    %v4273 = vld [vmem:[#allocation15 + $0x190] sm:$0xff]
    %v4274 = vld [vmem:[#allocation15 + $0x198] sm:$0xff]
    %v4275 = vld [vmem:[#allocation15 + $0x1a0] sm:$0xff]
    %v4276 = vld [vmem:[#allocation15 + $0x1a8] sm:$0xff]
    %v4277 = vld [vmem:[#allocation15 + $0x1b0] sm:$0xff]
    %v4278 = vld [vmem:[#allocation15 + $0x1b8] sm:$0xff]
    %v4279 = vld [vmem:[#allocation15 + $0x1c0] sm:$0xff]
    %v4280 = vld [vmem:[#allocation15 + $0x1c8] sm:$0xff]
    %v4281 = vld [vmem:[#allocation15 + $0x1d0] sm:$0xff]
    %v4282 = vld [vmem:[#allocation15 + $0x1d8] sm:$0xff]
    %v4283 = vld [vmem:[#allocation15 + $0x1e0] sm:$0xff]
    %v4284 = vld [vmem:[#allocation15 + $0x1e8] sm:$0xff]
    %v4285 = vld [vmem:[#allocation15 + $0x1f0] sm:$0xff]
    %v4286 = vld [vmem:[#allocation15 + $0x1f8] sm:$0xff]
    %v4287 = vld [vmem:[%s7] sm:$0xf]
    %v4289 = vlaneseq
    %v4290 = vshrl.u32 %v4289, 7
    %v4291 = vsub.s32 0, %v4290
    %v4292 = vrot.slane %v4287, %v4291
    %v4293 = vlaneseq
    %v4294 = vshrl.u32 %v4293, 7
    %v4295 = vsub.s32 1, %v4294
    %v4296 = vrot.slane %v4287, %v4295
    %v4297 = vlaneseq
    %v4298 = vshrl.u32 %v4297, 7
    %v4299 = vsub.s32 2, %v4298
    %v4300 = vrot.slane %v4287, %v4299
    %v4301 = vlaneseq
    %v4302 = vshrl.u32 %v4301, 7
    %v4303 = vsub.s32 3, %v4302
    %v4304 = vrot.slane %v4287, %v4303
    %4309 = vmatprep.subr.mxu0 %v4224
    %4310 = vmatpush1.msra.mxu0 %v4223
    %4311 = vmatprep.subr.mxu0 %v4228
    %4312 = vmatpush1.msra.mxu0 %v4227
    %4313 = vmatprep.subr.mxu0 %v4232
    %4314 = vmatpush1.msra.mxu0 %v4231
    %4315 = vmatprep.subr.mxu0 %v4236
    %4316 = vmatpush1.msra.mxu0 %v4235
    %4317 = vmatprep.subr.mxu0 %v4240
    %4318 = vmatpush1.msra.mxu0 %v4239
    %4319 = vmatprep.subr.mxu0 %v4244
    %4320 = vmatpush1.msra.mxu0 %v4243
    %4321 = vmatprep.subr.mxu0 %v4248
    %4322 = vmatpush1.msra.mxu0 %v4247
    %4323 = vmatprep.subr.mxu0 %v4252
    %4324 = vmatpush1.msra.mxu0 %v4251
    %4325 = vmatprep.subr.mxu0 %v4256
    %4326 = vmatpush1.msra.mxu0 %v4255
    %4327 = vmatprep.subr.mxu0 %v4260
    %4328 = vmatpush1.msra.mxu0 %v4259
    %4329 = vmatprep.subr.mxu0 %v4264
    %4330 = vmatpush1.msra.mxu0 %v4263
    %4331 = vmatprep.subr.mxu0 %v4268
    %4332 = vmatpush1.msra.mxu0 %v4267
    %4333 = vmatprep.subr.mxu0 %v4272
    %4334 = vmatpush1.msra.mxu0 %v4271
    %4335 = vmatprep.subr.mxu0 %v4276
    %4336 = vmatpush1.msra.mxu0 %v4275
    %4337 = vmatprep.subr.mxu0 %v4280
    %4338 = vmatpush1.msra.mxu0 %v4279
    %4339 = vmatprep.subr.mxu0 %v4284
    %4340 = vmatpush1.msra.mxu0 %v4283
    %4341 = vmatprep.subr.mxu0 0.0
    %4342 = vmatpush1.msra.mxu0 0.0
    %4343 = vmatprep.subr.mxu0 0.0
    %4344 = vmatpush1.msra.mxu0 0.0
    %4345 = vmatprep.subr.mxu0 0.0
    %4346 = vmatpush1.msra.mxu0 0.0
    %4347 = vmatprep.subr.mxu0 0.0
    %4348 = vmatpush1.msra.mxu0 0.0
    %4349 = vmatprep.subr.mxu0 0.0
    %4350 = vmatpush1.msra.mxu0 0.0
    %4351 = vmatprep.subr.mxu0 0.0
    %4352 = vmatpush1.msra.mxu0 0.0
    %4353 = vmatprep.subr.mxu0 0.0
    %4354 = vmatpush1.msra.mxu0 0.0
    %4355 = vmatprep.subr.mxu0 0.0
    %4356 = vmatpush1.msra.mxu0 0.0
    %4357 = vmatprep.subr.mxu0 0.0
    %4358 = vmatpush1.msra.mxu0 0.0
    %4359 = vmatprep.subr.mxu0 0.0
    %4360 = vmatpush1.msra.mxu0 0.0
    %4361 = vmatprep.subr.mxu0 0.0
    %4362 = vmatpush1.msra.mxu0 0.0
    %4363 = vmatprep.subr.mxu0 0.0
    %4364 = vmatpush1.msra.mxu0 0.0
    %4365 = vmatprep.subr.mxu0 0.0
    %4366 = vmatpush1.msra.mxu0 0.0
    %4367 = vmatprep.subr.mxu0 0.0
    %4368 = vmatpush1.msra.mxu0 0.0
    %4369 = vmatprep.subr.mxu0 0.0
    %4370 = vmatpush1.msra.mxu0 0.0
    %4371 = vmatprep.subr.mxu0 0.0
    %4372 = vmatpush1.msra.mxu0 0.0
    %4373 = vmatprep.mubr.f32.mxu0 0.0
    %4374 = vmatmul.mubr.f32.gmra.mrb[0].mxu0 %v4219
    %v4375 = vpop.f32.mrb[0].mxu0
    %v4376 = vadd.f32 %v4292, %v4375
    %v4377 = vpop.f32.mrb[0].mxu0
    %v4378 = vadd.f32 %v4296, %v4377
    %4379 = vdwg.mxu0
    %4380 = vmatprep.subr.mxu0 %v4226
    %4381 = vmatpush1.msra.mxu0 %v4225
    %4382 = vmatprep.subr.mxu0 %v4230
    %4383 = vmatpush1.msra.mxu0 %v4229
    %4384 = vmatprep.subr.mxu0 %v4234
    %4385 = vmatpush1.msra.mxu0 %v4233
    %4386 = vmatprep.subr.mxu0 %v4238
    %4387 = vmatpush1.msra.mxu0 %v4237
    %4388 = vmatprep.subr.mxu0 %v4242
    %4389 = vmatpush1.msra.mxu0 %v4241
    %4390 = vmatprep.subr.mxu0 %v4246
    %4391 = vmatpush1.msra.mxu0 %v4245
    %4392 = vmatprep.subr.mxu0 %v4250
    %4393 = vmatpush1.msra.mxu0 %v4249
    %4394 = vmatprep.subr.mxu0 %v4254
    %4395 = vmatpush1.msra.mxu0 %v4253
    %4396 = vmatprep.subr.mxu0 %v4258
    %4397 = vmatpush1.msra.mxu0 %v4257
    %4398 = vmatprep.subr.mxu0 %v4262
    %4399 = vmatpush1.msra.mxu0 %v4261
    %4400 = vmatprep.subr.mxu0 %v4266
    %4401 = vmatpush1.msra.mxu0 %v4265
    %4402 = vmatprep.subr.mxu0 %v4270
    %4403 = vmatpush1.msra.mxu0 %v4269
    %4404 = vmatprep.subr.mxu0 %v4274
    %4405 = vmatpush1.msra.mxu0 %v4273
    %4406 = vmatprep.subr.mxu0 %v4278
    %4407 = vmatpush1.msra.mxu0 %v4277
    %4408 = vmatprep.subr.mxu0 %v4282
    %4409 = vmatpush1.msra.mxu0 %v4281
    %4410 = vmatprep.subr.mxu0 %v4286
    %4411 = vmatpush1.msra.mxu0 %v4285
    %4412 = vmatprep.subr.mxu0 0.0
    %4413 = vmatpush1.msra.mxu0 0.0
    %4414 = vmatprep.subr.mxu0 0.0
    %4415 = vmatpush1.msra.mxu0 0.0
    %4416 = vmatprep.subr.mxu0 0.0
    %4417 = vmatpush1.msra.mxu0 0.0
    %4418 = vmatprep.subr.mxu0 0.0
    %4419 = vmatpush1.msra.mxu0 0.0
    %4420 = vmatprep.subr.mxu0 0.0
    %4421 = vmatpush1.msra.mxu0 0.0
    %4422 = vmatprep.subr.mxu0 0.0
    %4423 = vmatpush1.msra.mxu0 0.0
    %4424 = vmatprep.subr.mxu0 0.0
    %4425 = vmatpush1.msra.mxu0 0.0
    %4426 = vmatprep.subr.mxu0 0.0
    %4427 = vmatpush1.msra.mxu0 0.0
    %4428 = vmatprep.subr.mxu0 0.0
    %4429 = vmatpush1.msra.mxu0 0.0
    %4430 = vmatprep.subr.mxu0 0.0
    %4431 = vmatpush1.msra.mxu0 0.0
    %4432 = vmatprep.subr.mxu0 0.0
    %4433 = vmatpush1.msra.mxu0 0.0
    %4434 = vmatprep.subr.mxu0 0.0
    %4435 = vmatpush1.msra.mxu0 0.0
    %4436 = vmatprep.subr.mxu0 0.0
    %4437 = vmatpush1.msra.mxu0 0.0
    %4438 = vmatprep.subr.mxu0 0.0
    %4439 = vmatpush1.msra.mxu0 0.0
    %4440 = vmatprep.subr.mxu0 0.0
    %4441 = vmatpush1.msra.mxu0 0.0
    %4442 = vmatprep.subr.mxu0 0.0
    %4443 = vmatpush1.msra.mxu0 0.0
    %4444 = vmatprep.mubr.f32.mxu0 0.0
    %4445 = vmatmul.mubr.f32.gmra.mrb[0].mxu0 %v4219
    %v4446 = vpop.f32.mrb[0].mxu0
    %v4447 = vadd.f32 %v4300, %v4446
    %v4448 = vpop.f32.mrb[0].mxu0
    %v4449 = vadd.f32 %v4304, %v4448
    %4450 = vdwg.mxu0
    %v4451 = vadd.f32 %v4222, %v4376
    %v4452 = vsel %vm539, %v4451, -inf
    %4453 = vmax.xlane.f32.xlu0 %v4452
    %v4454 = vpop.xlane.xlu0 %4453
    %v4455 = vsub.f32 %v4451, %v4454
    %v4456 = vmul.f32 %v4455, 1.442695
    %v4457 = vpow.pop %v4456
    %v4458 = vld [vmem:[#allocation12] sm:$0xff]
    %v4459 = vld [vmem:[#allocation12 + $0x8] sm:$0xff]
    %v4460 = vld [vmem:[#allocation12 + $0x10] sm:$0xff]
    %v4461 = vld [vmem:[#allocation12 + $0x18] sm:$0xff]
    %v4462 = vld [vmem:[#allocation12 + $0x20] sm:$0xff]
    %v4463 = vld [vmem:[#allocation12 + $0x28] sm:$0xff]
    %v4464 = vld [vmem:[#allocation12 + $0x30] sm:$0xff]
    %v4465 = vld [vmem:[#allocation12 + $0x38] sm:$0xff]
    %v4466 = vld [vmem:[#allocation12 + $0x40] sm:$0xff]
    %v4467 = vld [vmem:[#allocation12 + $0x48] sm:$0xff]
    %v4468 = vld [vmem:[#allocation12 + $0x50] sm:$0xff]
    %v4469 = vld [vmem:[#allocation12 + $0x58] sm:$0xff]
    %v4470 = vld [vmem:[#allocation12 + $0x60] sm:$0xff]
    %v4471 = vld [vmem:[#allocation12 + $0x68] sm:$0xff]
    %v4472 = vld [vmem:[#allocation12 + $0x70] sm:$0xff]
    %v4473 = vld [vmem:[#allocation12 + $0x78] sm:$0xff]
    %4474 = vmatprep.subr.mxu0 0.0
    %4475 = vmatpush1.msra.mxu0 %v4458
    %4476 = vmatprep.subr.mxu0 0.0
    %4477 = vmatpush1.msra.mxu0 %v4459
    %4478 = vmatprep.subr.mxu0 0.0
    %4479 = vmatpush1.msra.mxu0 %v4460
    %4480 = vmatprep.subr.mxu0 0.0
    %4481 = vmatpush1.msra.mxu0 %v4461
    %4482 = vmatprep.subr.mxu0 0.0
    %4483 = vmatpush1.msra.mxu0 %v4462
    %4484 = vmatprep.subr.mxu0 0.0
    %4485 = vmatpush1.msra.mxu0 %v4463
    %4486 = vmatprep.subr.mxu0 0.0
    %4487 = vmatpush1.msra.mxu0 %v4464
    %4488 = vmatprep.subr.mxu0 0.0
    %4489 = vmatpush1.msra.mxu0 %v4465
    %4490 = vmatprep.subr.mxu0 0.0
    %4491 = vmatpush1.msra.mxu0 %v4466
    %4492 = vmatprep.subr.mxu0 0.0
    %4493 = vmatpush1.msra.mxu0 %v4467
    %4494 = vmatprep.subr.mxu0 0.0
    %4495 = vmatpush1.msra.mxu0 %v4468
    %4496 = vmatprep.subr.mxu0 0.0
    %4497 = vmatpush1.msra.mxu0 %v4469
    %4498 = vmatprep.subr.mxu0 0.0
    %4499 = vmatpush1.msra.mxu0 %v4470
    %4500 = vmatprep.subr.mxu0 0.0
    %4501 = vmatpush1.msra.mxu0 %v4471
    %4502 = vmatprep.subr.mxu0 0.0
    %4503 = vmatpush1.msra.mxu0 %v4472
    %4504 = vmatprep.subr.mxu0 0.0
    %4505 = vmatpush1.msra.mxu0 %v4473
    %4506 = vmatprep.subr.mxu0 0.0
    %4507 = vmatpush1.msra.mxu0 0.0
    %4508 = vmatprep.subr.mxu0 0.0
    %4509 = vmatpush1.msra.mxu0 0.0
    %4510 = vmatprep.subr.mxu0 0.0
    %4511 = vmatpush1.msra.mxu0 0.0
    %4512 = vmatprep.subr.mxu0 0.0
    %4513 = vmatpush1.msra.mxu0 0.0
    %4514 = vmatprep.subr.mxu0 0.0
    %4515 = vmatpush1.msra.mxu0 0.0
    %4516 = vmatprep.subr.mxu0 0.0
    %4517 = vmatpush1.msra.mxu0 0.0
    %4518 = vmatprep.subr.mxu0 0.0
    %4519 = vmatpush1.msra.mxu0 0.0
    %4520 = vmatprep.subr.mxu0 0.0
    %4521 = vmatpush1.msra.mxu0 0.0
    %4522 = vmatprep.subr.mxu0 0.0
    %4523 = vmatpush1.msra.mxu0 0.0
    %4524 = vmatprep.subr.mxu0 0.0
    %4525 = vmatpush1.msra.mxu0 0.0
    %4526 = vmatprep.subr.mxu0 0.0
    %4527 = vmatpush1.msra.mxu0 0.0
    %4528 = vmatprep.subr.mxu0 0.0
    %4529 = vmatpush1.msra.mxu0 0.0
    %4530 = vmatprep.subr.mxu0 0.0
    %4531 = vmatpush1.msra.mxu0 0.0
    %4532 = vmatprep.subr.mxu0 0.0
    %4533 = vmatpush1.msra.mxu0 0.0
    %4534 = vmatprep.subr.mxu0 0.0
    %4535 = vmatpush1.msra.mxu0 0.0
    %4536 = vmatprep.subr.mxu0 0.0
    %4537 = vmatpush1.msra.mxu0 0.0
    %4538 = vmatprep.mubr.f32.mxu0 0.0
    %4539 = vmatmul.mubr.f32.gmra.mrb[0].mxu0 %v4457
    %v4540 = vpop.f32.mrb[0].mxu0
    %v4541 = vadd.f32 0.0, %v4540
    %v4542 = vpop.f32.mrb[0].mxu0
    %4543 = vdwg.mxu0
    %v4544 = vsel %vm539, %v4457, 0.0
    %4545 = vadd.xlane.f32.xlu0 %v4544
    %v4546 = vpop.xlane.xlu0 %4545
    %v4547 = vrcp.pop %v4546
    %v4548 = vmul.f32 %v4546, %v4547
    %v4549 = vsub.f32 2.0, %v4548
    %v4550 = vmul.f32 %v4547, %v4549
    %v4551 = vmul.f32 %v4457, %v4550
    %4552 = vst [vmem:[#allocation24 + $0x6] sm:$0x1] %v4551
    %v4553 = vmul.f32 %v4541, %v4550
    %v4554 = vld [vmem:[#allocation16] sm:$0xff]
    %v4555 = vld [vmem:[#allocation16 + $0x8] sm:$0xff]
    %v4556 = vld [vmem:[#allocation16 + $0x10] sm:$0xff]
    %v4557 = vld [vmem:[#allocation16 + $0x18] sm:$0xff]
    %v4558 = vld [vmem:[#allocation16 + $0x20] sm:$0xff]
    %v4559 = vld [vmem:[#allocation16 + $0x28] sm:$0xff]
    %v4560 = vld [vmem:[#allocation16 + $0x30] sm:$0xff]
    %v4561 = vld [vmem:[#allocation16 + $0x38] sm:$0xff]
    %v4562 = vld [vmem:[#allocation16 + $0x40] sm:$0xff]
    %v4563 = vld [vmem:[#allocation16 + $0x48] sm:$0xff]
    %v4564 = vld [vmem:[#allocation16 + $0x50] sm:$0xff]
    %v4565 = vld [vmem:[#allocation16 + $0x58] sm:$0xff]
    %v4566 = vld [vmem:[#allocation16 + $0x60] sm:$0xff]
    %v4567 = vld [vmem:[#allocation16 + $0x68] sm:$0xff]
    %v4568 = vld [vmem:[#allocation16 + $0x70] sm:$0xff]
    %v4569 = vld [vmem:[#allocation16 + $0x78] sm:$0xff]
    %4570 = vmatprep.subr.mxu0 0.0
    %4571 = vmatpush1.msra.mxu0 %v4554
    %4572 = vmatprep.subr.mxu0 0.0
    %4573 = vmatpush1.msra.mxu0 %v4555
    %4574 = vmatprep.subr.mxu0 0.0
    %4575 = vmatpush1.msra.mxu0 %v4556
    %4576 = vmatprep.subr.mxu0 0.0
    %4577 = vmatpush1.msra.mxu0 %v4557
    %4578 = vmatprep.subr.mxu0 0.0
    %4579 = vmatpush1.msra.mxu0 %v4558
    %4580 = vmatprep.subr.mxu0 0.0
    %4581 = vmatpush1.msra.mxu0 %v4559
    %4582 = vmatprep.subr.mxu0 0.0
    %4583 = vmatpush1.msra.mxu0 %v4560
    %4584 = vmatprep.subr.mxu0 0.0
    %4585 = vmatpush1.msra.mxu0 %v4561
    %4586 = vmatprep.subr.mxu0 0.0
    %4587 = vmatpush1.msra.mxu0 %v4562
    %4588 = vmatprep.subr.mxu0 0.0
    %4589 = vmatpush1.msra.mxu0 %v4563
    %4590 = vmatprep.subr.mxu0 0.0
    %4591 = vmatpush1.msra.mxu0 %v4564
    %4592 = vmatprep.subr.mxu0 0.0
    %4593 = vmatpush1.msra.mxu0 %v4565
    %4594 = vmatprep.subr.mxu0 0.0
    %4595 = vmatpush1.msra.mxu0 %v4566
    %4596 = vmatprep.subr.mxu0 0.0
    %4597 = vmatpush1.msra.mxu0 %v4567
    %4598 = vmatprep.subr.mxu0 0.0
    %4599 = vmatpush1.msra.mxu0 %v4568
    %4600 = vmatprep.subr.mxu0 0.0
    %4601 = vmatpush1.msra.mxu0 %v4569
    %4602 = vmatprep.subr.mxu0 0.0
    %4603 = vmatpush1.msra.mxu0 0.0
    %4604 = vmatprep.subr.mxu0 0.0
    %4605 = vmatpush1.msra.mxu0 0.0
    %4606 = vmatprep.subr.mxu0 0.0
    %4607 = vmatpush1.msra.mxu0 0.0
    %4608 = vmatprep.subr.mxu0 0.0
    %4609 = vmatpush1.msra.mxu0 0.0
    %4610 = vmatprep.subr.mxu0 0.0
    %4611 = vmatpush1.msra.mxu0 0.0
    %4612 = vmatprep.subr.mxu0 0.0
    %4613 = vmatpush1.msra.mxu0 0.0
    %4614 = vmatprep.subr.mxu0 0.0
    %4615 = vmatpush1.msra.mxu0 0.0
    %4616 = vmatprep.subr.mxu0 0.0
    %4617 = vmatpush1.msra.mxu0 0.0
    %4618 = vmatprep.subr.mxu0 0.0
    %4619 = vmatpush1.msra.mxu0 0.0
    %4620 = vmatprep.subr.mxu0 0.0
    %4621 = vmatpush1.msra.mxu0 0.0
    %4622 = vmatprep.subr.mxu0 0.0
    %4623 = vmatpush1.msra.mxu0 0.0
    %4624 = vmatprep.subr.mxu0 0.0
    %4625 = vmatpush1.msra.mxu0 0.0
    %4626 = vmatprep.subr.mxu0 0.0
    %4627 = vmatpush1.msra.mxu0 0.0
    %4628 = vmatprep.subr.mxu0 0.0
    %4629 = vmatpush1.msra.mxu0 0.0
    %4630 = vmatprep.subr.mxu0 0.0
    %4631 = vmatpush1.msra.mxu0 0.0
    %4632 = vmatprep.subr.mxu0 0.0
    %4633 = vmatpush1.msra.mxu0 0.0
    %4634 = vmatprep.mubr.f32.mxu0 0.0
    %4635 = vmatmul.mubr.f32.gmra.mrb[0].mxu0 %v4553
    %v4636 = vpop.f32.mrb[0].mxu0
    %v4637 = vadd.f32 0.0, %v4636
    %v4638 = vpop.f32.mrb[0].mxu0
    %4639 = vdwg.mxu0
    %v4641 = vrot.slane %v4222, 1
    %v4643 = vadd.f32 %v4641, %v4637
    %v4644 = vmax.f32 %v4643, 0.0
    %v4645 = vld [vmem:[#allocation18] sm:$0xff]
    %v4646 = vld [vmem:[#allocation18 + $0x8] sm:$0xff]
    %v4647 = vld [vmem:[#allocation18 + $0x10] sm:$0xff]
    %v4648 = vld [vmem:[#allocation18 + $0x18] sm:$0xff]
    %v4649 = vld [vmem:[#allocation18 + $0x20] sm:$0xff]
    %v4650 = vld [vmem:[#allocation18 + $0x28] sm:$0xff]
    %v4651 = vld [vmem:[#allocation18 + $0x30] sm:$0xff]
    %v4652 = vld [vmem:[#allocation18 + $0x38] sm:$0xff]
    %v4653 = vld [vmem:[#allocation18 + $0x40] sm:$0xff]
    %v4654 = vld [vmem:[#allocation18 + $0x48] sm:$0xff]
    %v4655 = vld [vmem:[#allocation18 + $0x50] sm:$0xff]
    %v4656 = vld [vmem:[#allocation18 + $0x58] sm:$0xff]
    %v4657 = vld [vmem:[#allocation18 + $0x60] sm:$0xff]
    %v4658 = vld [vmem:[#allocation18 + $0x68] sm:$0xff]
    %v4659 = vld [vmem:[#allocation18 + $0x70] sm:$0xff]
    %v4660 = vld [vmem:[#allocation18 + $0x78] sm:$0xff]
    %v4661 = vld [vmem:[#allocation18 + $0x80] sm:$0xff]
    %v4662 = vld [vmem:[#allocation18 + $0x88] sm:$0xff]
    %v4663 = vld [vmem:[#allocation18 + $0x90] sm:$0xff]
    %v4664 = vld [vmem:[#allocation18 + $0x98] sm:$0xff]
    %v4665 = vld [vmem:[#allocation18 + $0xa0] sm:$0xff]
    %v4666 = vld [vmem:[#allocation18 + $0xa8] sm:$0xff]
    %v4667 = vld [vmem:[#allocation18 + $0xb0] sm:$0xff]
    %v4668 = vld [vmem:[#allocation18 + $0xb8] sm:$0xff]
    %v4669 = vld [vmem:[#allocation18 + $0xc0] sm:$0xff]
    %v4670 = vld [vmem:[#allocation18 + $0xc8] sm:$0xff]
    %v4671 = vld [vmem:[#allocation18 + $0xd0] sm:$0xff]
    %v4672 = vld [vmem:[#allocation18 + $0xd8] sm:$0xff]
    %v4673 = vld [vmem:[#allocation18 + $0xe0] sm:$0xff]
    %v4674 = vld [vmem:[#allocation18 + $0xe8] sm:$0xff]
    %v4675 = vld [vmem:[#allocation18 + $0xf0] sm:$0xff]
    %v4676 = vld [vmem:[#allocation18 + $0xf8] sm:$0xff]
    %v4677 = vld [vmem:[#allocation18 + $0x100] sm:$0xff]
    %v4678 = vld [vmem:[#allocation18 + $0x108] sm:$0xff]
    %v4679 = vld [vmem:[#allocation18 + $0x110] sm:$0xff]
    %v4680 = vld [vmem:[#allocation18 + $0x118] sm:$0xff]
    %v4681 = vld [vmem:[#allocation18 + $0x120] sm:$0xff]
    %v4682 = vld [vmem:[#allocation18 + $0x128] sm:$0xff]
    %v4683 = vld [vmem:[#allocation18 + $0x130] sm:$0xff]
    %v4684 = vld [vmem:[#allocation18 + $0x138] sm:$0xff]
    %v4685 = vld [vmem:[#allocation18 + $0x140] sm:$0xff]
    %v4686 = vld [vmem:[#allocation18 + $0x148] sm:$0xff]
    %v4687 = vld [vmem:[#allocation18 + $0x150] sm:$0xff]
    %v4688 = vld [vmem:[#allocation18 + $0x158] sm:$0xff]
    %v4689 = vld [vmem:[#allocation18 + $0x160] sm:$0xff]
    %v4690 = vld [vmem:[#allocation18 + $0x168] sm:$0xff]
    %v4691 = vld [vmem:[#allocation18 + $0x170] sm:$0xff]
    %v4692 = vld [vmem:[#allocation18 + $0x178] sm:$0xff]
    %v4693 = vld [vmem:[%s10] sm:$0x7]
    %v4695 = vlaneseq
    %v4696 = vshrl.u32 %v4695, 7
    %v4697 = vsub.s32 0, %v4696
    %v4698 = vrot.slane %v4693, %v4697
    %v4699 = vlaneseq
    %v4700 = vshrl.u32 %v4699, 7
    %v4701 = vsub.s32 1, %v4700
    %v4702 = vrot.slane %v4693, %v4701
    %v4703 = vlaneseq
    %v4704 = vshrl.u32 %v4703, 7
    %v4705 = vsub.s32 2, %v4704
    %v4706 = vrot.slane %v4693, %v4705
    %4710 = vmatprep.subr.mxu0 %v4646
    %4711 = vmatpush1.msra.mxu0 %v4645
    %4712 = vmatprep.subr.mxu0 %v4649
    %4713 = vmatpush1.msra.mxu0 %v4648
    %4714 = vmatprep.subr.mxu0 %v4652
    %4715 = vmatpush1.msra.mxu0 %v4651
    %4716 = vmatprep.subr.mxu0 %v4655
    %4717 = vmatpush1.msra.mxu0 %v4654
    %4718 = vmatprep.subr.mxu0 %v4658
    %4719 = vmatpush1.msra.mxu0 %v4657
    %4720 = vmatprep.subr.mxu0 %v4661
    %4721 = vmatpush1.msra.mxu0 %v4660
    %4722 = vmatprep.subr.mxu0 %v4664
    %4723 = vmatpush1.msra.mxu0 %v4663
    %4724 = vmatprep.subr.mxu0 %v4667
    %4725 = vmatpush1.msra.mxu0 %v4666
    %4726 = vmatprep.subr.mxu0 %v4670
    %4727 = vmatpush1.msra.mxu0 %v4669
    %4728 = vmatprep.subr.mxu0 %v4673
    %4729 = vmatpush1.msra.mxu0 %v4672
    %4730 = vmatprep.subr.mxu0 %v4676
    %4731 = vmatpush1.msra.mxu0 %v4675
    %4732 = vmatprep.subr.mxu0 %v4679
    %4733 = vmatpush1.msra.mxu0 %v4678
    %4734 = vmatprep.subr.mxu0 %v4682
    %4735 = vmatpush1.msra.mxu0 %v4681
    %4736 = vmatprep.subr.mxu0 %v4685
    %4737 = vmatpush1.msra.mxu0 %v4684
    %4738 = vmatprep.subr.mxu0 %v4688
    %4739 = vmatpush1.msra.mxu0 %v4687
    %4740 = vmatprep.subr.mxu0 %v4691
    %4741 = vmatpush1.msra.mxu0 %v4690
    %4742 = vmatprep.subr.mxu0 0.0
    %4743 = vmatpush1.msra.mxu0 0.0
    %4744 = vmatprep.subr.mxu0 0.0
    %4745 = vmatpush1.msra.mxu0 0.0
    %4746 = vmatprep.subr.mxu0 0.0
    %4747 = vmatpush1.msra.mxu0 0.0
    %4748 = vmatprep.subr.mxu0 0.0
    %4749 = vmatpush1.msra.mxu0 0.0
    %4750 = vmatprep.subr.mxu0 0.0
    %4751 = vmatpush1.msra.mxu0 0.0
    %4752 = vmatprep.subr.mxu0 0.0
    %4753 = vmatpush1.msra.mxu0 0.0
    %4754 = vmatprep.subr.mxu0 0.0
    %4755 = vmatpush1.msra.mxu0 0.0
    %4756 = vmatprep.subr.mxu0 0.0
    %4757 = vmatpush1.msra.mxu0 0.0
    %4758 = vmatprep.subr.mxu0 0.0
    %4759 = vmatpush1.msra.mxu0 0.0
    %4760 = vmatprep.subr.mxu0 0.0
    %4761 = vmatpush1.msra.mxu0 0.0
    %4762 = vmatprep.subr.mxu0 0.0
    %4763 = vmatpush1.msra.mxu0 0.0
    %4764 = vmatprep.subr.mxu0 0.0
    %4765 = vmatpush1.msra.mxu0 0.0
    %4766 = vmatprep.subr.mxu0 0.0
    %4767 = vmatpush1.msra.mxu0 0.0
    %4768 = vmatprep.subr.mxu0 0.0
    %4769 = vmatpush1.msra.mxu0 0.0
    %4770 = vmatprep.subr.mxu0 0.0
    %4771 = vmatpush1.msra.mxu0 0.0
    %4772 = vmatprep.subr.mxu0 0.0
    %4773 = vmatpush1.msra.mxu0 0.0
    %4774 = vmatprep.mubr.f32.mxu0 0.0
    %4775 = vmatmul.mubr.f32.gmra.mrb[0].mxu0 %v4644
    %v4776 = vpop.f32.mrb[0].mxu0
    %v4777 = vadd.f32 %v4698, %v4776
    %v4778 = vpop.f32.mrb[0].mxu0
    %v4779 = vadd.f32 %v4702, %v4778
    %4780 = vdwg.mxu0
    %4781 = vmatprep.subr.mxu0 0.0
    %4782 = vmatpush1.msra.mxu0 %v4647
    %4783 = vmatprep.subr.mxu0 0.0
    %4784 = vmatpush1.msra.mxu0 %v4650
    %4785 = vmatprep.subr.mxu0 0.0
    %4786 = vmatpush1.msra.mxu0 %v4653
    %4787 = vmatprep.subr.mxu0 0.0
    %4788 = vmatpush1.msra.mxu0 %v4656
    %4789 = vmatprep.subr.mxu0 0.0
    %4790 = vmatpush1.msra.mxu0 %v4659
    %4791 = vmatprep.subr.mxu0 0.0
    %4792 = vmatpush1.msra.mxu0 %v4662
    %4793 = vmatprep.subr.mxu0 0.0
    %4794 = vmatpush1.msra.mxu0 %v4665
    %4795 = vmatprep.subr.mxu0 0.0
    %4796 = vmatpush1.msra.mxu0 %v4668
    %4797 = vmatprep.subr.mxu0 0.0
    %4798 = vmatpush1.msra.mxu0 %v4671
    %4799 = vmatprep.subr.mxu0 0.0
    %4800 = vmatpush1.msra.mxu0 %v4674
    %4801 = vmatprep.subr.mxu0 0.0
    %4802 = vmatpush1.msra.mxu0 %v4677
    %4803 = vmatprep.subr.mxu0 0.0
    %4804 = vmatpush1.msra.mxu0 %v4680
    %4805 = vmatprep.subr.mxu0 0.0
    %4806 = vmatpush1.msra.mxu0 %v4683
    %4807 = vmatprep.subr.mxu0 0.0
    %4808 = vmatpush1.msra.mxu0 %v4686
    %4809 = vmatprep.subr.mxu0 0.0
    %4810 = vmatpush1.msra.mxu0 %v4689
    %4811 = vmatprep.subr.mxu0 0.0
    %4812 = vmatpush1.msra.mxu0 %v4692
    %4813 = vmatprep.subr.mxu0 0.0
    %4814 = vmatpush1.msra.mxu0 0.0
    %4815 = vmatprep.subr.mxu0 0.0
    %4816 = vmatpush1.msra.mxu0 0.0
    %4817 = vmatprep.subr.mxu0 0.0
    %4818 = vmatpush1.msra.mxu0 0.0
    %4819 = vmatprep.subr.mxu0 0.0
    %4820 = vmatpush1.msra.mxu0 0.0
    %4821 = vmatprep.subr.mxu0 0.0
    %4822 = vmatpush1.msra.mxu0 0.0
    %4823 = vmatprep.subr.mxu0 0.0
    %4824 = vmatpush1.msra.mxu0 0.0
    %4825 = vmatprep.subr.mxu0 0.0
    %4826 = vmatpush1.msra.mxu0 0.0
    %4827 = vmatprep.subr.mxu0 0.0
    %4828 = vmatpush1.msra.mxu0 0.0
    %4829 = vmatprep.subr.mxu0 0.0
    %4830 = vmatpush1.msra.mxu0 0.0
    %4831 = vmatprep.subr.mxu0 0.0
    %4832 = vmatpush1.msra.mxu0 0.0
    %4833 = vmatprep.subr.mxu0 0.0
    %4834 = vmatpush1.msra.mxu0 0.0
    %4835 = vmatprep.subr.mxu0 0.0
    %4836 = vmatpush1.msra.mxu0 0.0
    %4837 = vmatprep.subr.mxu0 0.0
    %4838 = vmatpush1.msra.mxu0 0.0
    %4839 = vmatprep.subr.mxu0 0.0
    %4840 = vmatpush1.msra.mxu0 0.0
    %4841 = vmatprep.subr.mxu0 0.0
    %4842 = vmatpush1.msra.mxu0 0.0
    %4843 = vmatprep.subr.mxu0 0.0
    %4844 = vmatpush1.msra.mxu0 0.0
    %4845 = vmatprep.mubr.f32.mxu0 0.0
    %4846 = vmatmul.mubr.f32.gmra.mrb[0].mxu0 %v4644
    %v4847 = vpop.f32.mrb[0].mxu0
    %v4848 = vadd.f32 %v4706, %v4847
    %v4849 = vpop.f32.mrb[0].mxu0
    %4850 = vdwg.mxu0
    %v4851 = vadd.f32 %v4777, %v4378
    %v4852 = vxor.u32 %v4851, 2147483648
    %v4853 = vmul.f32 %v4852, 1.442695
    %v4854 = vpow.pop %v4853
    %v4855 = vadd.f32 %v4854, 1.0
    %v4856 = vrcp.pop %v4855
    %v4857 = vmul.f32 1.0, %v4856
    %v4858 = vadd.f32 %v4779, %v4447
    %v4859 = vxor.u32 %v4858, 2147483648
    %v4860 = vmul.f32 %v4859, 1.442695
    %v4861 = vpow.pop %v4860
    %v4862 = vadd.f32 %v4861, 1.0
    %v4863 = vrcp.pop %v4862
    %v4864 = vmul.f32 1.0, %v4863
    %v4865 = vmul.f32 %v4857, %v4449
    %v4866 = vadd.f32 %v4848, %v4865
    %v4867 = vtanh.pop %v4866
    %v4868 = vsub.f32 1.0, %v4864
    %v4869 = vmul.f32 %v4868, %v4867
    %v4870 = vmul.f32 %v4864, %v4219
    %v4871 = vadd.f32 %v4869, %v4870
    %4872 = vst [vmem:[#allocation4 + $0x6] sm:$0x1] %v4871
    %s4873 = scalar_lea.vmem [#allocation3], 7
    %v4874 = vld [vmem:[%s4873] ss:$8 sm:$0x3]
    %v4875 = vld [vmem:[#allocation15] sm:$0xff]
    %v4876 = vld [vmem:[#allocation15 + $0x8] sm:$0xff]
    %v4877 = vld [vmem:[#allocation15 + $0x10] sm:$0xff]
    %v4878 = vld [vmem:[#allocation15 + $0x18] sm:$0xff]
    %v4879 = vld [vmem:[#allocation15 + $0x20] sm:$0xff]
    %v4880 = vld [vmem:[#allocation15 + $0x28] sm:$0xff]
    %v4881 = vld [vmem:[#allocation15 + $0x30] sm:$0xff]
    %v4882 = vld [vmem:[#allocation15 + $0x38] sm:$0xff]
    %v4883 = vld [vmem:[#allocation15 + $0x40] sm:$0xff]
    %v4884 = vld [vmem:[#allocation15 + $0x48] sm:$0xff]
    %v4885 = vld [vmem:[#allocation15 + $0x50] sm:$0xff]
    %v4886 = vld [vmem:[#allocation15 + $0x58] sm:$0xff]
    %v4887 = vld [vmem:[#allocation15 + $0x60] sm:$0xff]
    %v4888 = vld [vmem:[#allocation15 + $0x68] sm:$0xff]
    %v4889 = vld [vmem:[#allocation15 + $0x70] sm:$0xff]
    %v4890 = vld [vmem:[#allocation15 + $0x78] sm:$0xff]
    %v4891 = vld [vmem:[#allocation15 + $0x80] sm:$0xff]
    %v4892 = vld [vmem:[#allocation15 + $0x88] sm:$0xff]
    %v4893 = vld [vmem:[#allocation15 + $0x90] sm:$0xff]
    %v4894 = vld [vmem:[#allocation15 + $0x98] sm:$0xff]
    %v4895 = vld [vmem:[#allocation15 + $0xa0] sm:$0xff]
    %v4896 = vld [vmem:[#allocation15 + $0xa8] sm:$0xff]
    %v4897 = vld [vmem:[#allocation15 + $0xb0] sm:$0xff]
    %v4898 = vld [vmem:[#allocation15 + $0xb8] sm:$0xff]
    %v4899 = vld [vmem:[#allocation15 + $0xc0] sm:$0xff]
    %v4900 = vld [vmem:[#allocation15 + $0xc8] sm:$0xff]
    %v4901 = vld [vmem:[#allocation15 + $0xd0] sm:$0xff]
    %v4902 = vld [vmem:[#allocation15 + $0xd8] sm:$0xff]
    %v4903 = vld [vmem:[#allocation15 + $0xe0] sm:$0xff]
    %v4904 = vld [vmem:[#allocation15 + $0xe8] sm:$0xff]
    %v4905 = vld [vmem:[#allocation15 + $0xf0] sm:$0xff]
    %v4906 = vld [vmem:[#allocation15 + $0xf8] sm:$0xff]
    %v4907 = vld [vmem:[#allocation15 + $0x100] sm:$0xff]
    %v4908 = vld [vmem:[#allocation15 + $0x108] sm:$0xff]
    %v4909 = vld [vmem:[#allocation15 + $0x110] sm:$0xff]
    %v4910 = vld [vmem:[#allocation15 + $0x118] sm:$0xff]
    %v4911 = vld [vmem:[#allocation15 + $0x120] sm:$0xff]
    %v4912 = vld [vmem:[#allocation15 + $0x128] sm:$0xff]
    %v4913 = vld [vmem:[#allocation15 + $0x130] sm:$0xff]
    %v4914 = vld [vmem:[#allocation15 + $0x138] sm:$0xff]
    %v4915 = vld [vmem:[#allocation15 + $0x140] sm:$0xff]
    %v4916 = vld [vmem:[#allocation15 + $0x148] sm:$0xff]
    %v4917 = vld [vmem:[#allocation15 + $0x150] sm:$0xff]
    %v4918 = vld [vmem:[#allocation15 + $0x158] sm:$0xff]
    %v4919 = vld [vmem:[#allocation15 + $0x160] sm:$0xff]
    %v4920 = vld [vmem:[#allocation15 + $0x168] sm:$0xff]
    %v4921 = vld [vmem:[#allocation15 + $0x170] sm:$0xff]
    %v4922 = vld [vmem:[#allocation15 + $0x178] sm:$0xff]
    %v4923 = vld [vmem:[#allocation15 + $0x180] sm:$0xff]
    %v4924 = vld [vmem:[#allocation15 + $0x188] sm:$0xff]
    %v4925 = vld [vmem:[#allocation15 + $0x190] sm:$0xff]
    %v4926 = vld [vmem:[#allocation15 + $0x198] sm:$0xff]
    %v4927 = vld [vmem:[#allocation15 + $0x1a0] sm:$0xff]
    %v4928 = vld [vmem:[#allocation15 + $0x1a8] sm:$0xff]
    %v4929 = vld [vmem:[#allocation15 + $0x1b0] sm:$0xff]
    %v4930 = vld [vmem:[#allocation15 + $0x1b8] sm:$0xff]
    %v4931 = vld [vmem:[#allocation15 + $0x1c0] sm:$0xff]
    %v4932 = vld [vmem:[#allocation15 + $0x1c8] sm:$0xff]
    %v4933 = vld [vmem:[#allocation15 + $0x1d0] sm:$0xff]
    %v4934 = vld [vmem:[#allocation15 + $0x1d8] sm:$0xff]
    %v4935 = vld [vmem:[#allocation15 + $0x1e0] sm:$0xff]
    %v4936 = vld [vmem:[#allocation15 + $0x1e8] sm:$0xff]
    %v4937 = vld [vmem:[#allocation15 + $0x1f0] sm:$0xff]
    %v4938 = vld [vmem:[#allocation15 + $0x1f8] sm:$0xff]
    %v4939 = vld [vmem:[%s7] sm:$0xf]
    %v4941 = vlaneseq
    %v4942 = vshrl.u32 %v4941, 7
    %v4943 = vsub.s32 0, %v4942
    %v4944 = vrot.slane %v4939, %v4943
    %v4945 = vlaneseq
    %v4946 = vshrl.u32 %v4945, 7
    %v4947 = vsub.s32 1, %v4946
    %v4948 = vrot.slane %v4939, %v4947
    %v4949 = vlaneseq
    %v4950 = vshrl.u32 %v4949, 7
    %v4951 = vsub.s32 2, %v4950
    %v4952 = vrot.slane %v4939, %v4951
    %v4953 = vlaneseq
    %v4954 = vshrl.u32 %v4953, 7
    %v4955 = vsub.s32 3, %v4954
    %v4956 = vrot.slane %v4939, %v4955
    %4961 = vmatprep.subr.mxu0 %v4876
    %4962 = vmatpush1.msra.mxu0 %v4875
    %4963 = vmatprep.subr.mxu0 %v4880
    %4964 = vmatpush1.msra.mxu0 %v4879
    %4965 = vmatprep.subr.mxu0 %v4884
    %4966 = vmatpush1.msra.mxu0 %v4883
    %4967 = vmatprep.subr.mxu0 %v4888
    %4968 = vmatpush1.msra.mxu0 %v4887
    %4969 = vmatprep.subr.mxu0 %v4892
    %4970 = vmatpush1.msra.mxu0 %v4891
    %4971 = vmatprep.subr.mxu0 %v4896
    %4972 = vmatpush1.msra.mxu0 %v4895
    %4973 = vmatprep.subr.mxu0 %v4900
    %4974 = vmatpush1.msra.mxu0 %v4899
    %4975 = vmatprep.subr.mxu0 %v4904
    %4976 = vmatpush1.msra.mxu0 %v4903
    %4977 = vmatprep.subr.mxu0 %v4908
    %4978 = vmatpush1.msra.mxu0 %v4907
    %4979 = vmatprep.subr.mxu0 %v4912
    %4980 = vmatpush1.msra.mxu0 %v4911
    %4981 = vmatprep.subr.mxu0 %v4916
    %4982 = vmatpush1.msra.mxu0 %v4915
    %4983 = vmatprep.subr.mxu0 %v4920
    %4984 = vmatpush1.msra.mxu0 %v4919
    %4985 = vmatprep.subr.mxu0 %v4924
    %4986 = vmatpush1.msra.mxu0 %v4923
    %4987 = vmatprep.subr.mxu0 %v4928
    %4988 = vmatpush1.msra.mxu0 %v4927
    %4989 = vmatprep.subr.mxu0 %v4932
    %4990 = vmatpush1.msra.mxu0 %v4931
    %4991 = vmatprep.subr.mxu0 %v4936
    %4992 = vmatpush1.msra.mxu0 %v4935
    %4993 = vmatprep.subr.mxu0 0.0
    %4994 = vmatpush1.msra.mxu0 0.0
    %4995 = vmatprep.subr.mxu0 0.0
    %4996 = vmatpush1.msra.mxu0 0.0
    %4997 = vmatprep.subr.mxu0 0.0
    %4998 = vmatpush1.msra.mxu0 0.0
    %4999 = vmatprep.subr.mxu0 0.0
    %5000 = vmatpush1.msra.mxu0 0.0
    %5001 = vmatprep.subr.mxu0 0.0
    %5002 = vmatpush1.msra.mxu0 0.0
    %5003 = vmatprep.subr.mxu0 0.0
    %5004 = vmatpush1.msra.mxu0 0.0
    %5005 = vmatprep.subr.mxu0 0.0
    %5006 = vmatpush1.msra.mxu0 0.0
    %5007 = vmatprep.subr.mxu0 0.0
    %5008 = vmatpush1.msra.mxu0 0.0
    %5009 = vmatprep.subr.mxu0 0.0
    %5010 = vmatpush1.msra.mxu0 0.0
    %5011 = vmatprep.subr.mxu0 0.0
    %5012 = vmatpush1.msra.mxu0 0.0
    %5013 = vmatprep.subr.mxu0 0.0
    %5014 = vmatpush1.msra.mxu0 0.0
    %5015 = vmatprep.subr.mxu0 0.0
    %5016 = vmatpush1.msra.mxu0 0.0
    %5017 = vmatprep.subr.mxu0 0.0
    %5018 = vmatpush1.msra.mxu0 0.0
    %5019 = vmatprep.subr.mxu0 0.0
    %5020 = vmatpush1.msra.mxu0 0.0
    %5021 = vmatprep.subr.mxu0 0.0
    %5022 = vmatpush1.msra.mxu0 0.0
    %5023 = vmatprep.subr.mxu0 0.0
    %5024 = vmatpush1.msra.mxu0 0.0
    %5025 = vmatprep.mubr.f32.mxu0 0.0
    %5026 = vmatmul.mubr.f32.gmra.mrb[0].mxu0 %v4871
    %v5027 = vpop.f32.mrb[0].mxu0
    %v5028 = vadd.f32 %v4944, %v5027
    %v5029 = vpop.f32.mrb[0].mxu0
    %v5030 = vadd.f32 %v4948, %v5029
    %5031 = vdwg.mxu0
    %5032 = vmatprep.subr.mxu0 %v4878
    %5033 = vmatpush1.msra.mxu0 %v4877
    %5034 = vmatprep.subr.mxu0 %v4882
    %5035 = vmatpush1.msra.mxu0 %v4881
    %5036 = vmatprep.subr.mxu0 %v4886
    %5037 = vmatpush1.msra.mxu0 %v4885
    %5038 = vmatprep.subr.mxu0 %v4890
    %5039 = vmatpush1.msra.mxu0 %v4889
    %5040 = vmatprep.subr.mxu0 %v4894
    %5041 = vmatpush1.msra.mxu0 %v4893
    %5042 = vmatprep.subr.mxu0 %v4898
    %5043 = vmatpush1.msra.mxu0 %v4897
    %5044 = vmatprep.subr.mxu0 %v4902
    %5045 = vmatpush1.msra.mxu0 %v4901
    %5046 = vmatprep.subr.mxu0 %v4906
    %5047 = vmatpush1.msra.mxu0 %v4905
    %5048 = vmatprep.subr.mxu0 %v4910
    %5049 = vmatpush1.msra.mxu0 %v4909
    %5050 = vmatprep.subr.mxu0 %v4914
    %5051 = vmatpush1.msra.mxu0 %v4913
    %5052 = vmatprep.subr.mxu0 %v4918
    %5053 = vmatpush1.msra.mxu0 %v4917
    %5054 = vmatprep.subr.mxu0 %v4922
    %5055 = vmatpush1.msra.mxu0 %v4921
    %5056 = vmatprep.subr.mxu0 %v4926
    %5057 = vmatpush1.msra.mxu0 %v4925
    %5058 = vmatprep.subr.mxu0 %v4930
    %5059 = vmatpush1.msra.mxu0 %v4929
    %5060 = vmatprep.subr.mxu0 %v4934
    %5061 = vmatpush1.msra.mxu0 %v4933
    %5062 = vmatprep.subr.mxu0 %v4938
    %5063 = vmatpush1.msra.mxu0 %v4937
    %5064 = vmatprep.subr.mxu0 0.0
    %5065 = vmatpush1.msra.mxu0 0.0
    %5066 = vmatprep.subr.mxu0 0.0
    %5067 = vmatpush1.msra.mxu0 0.0
    %5068 = vmatprep.subr.mxu0 0.0
    %5069 = vmatpush1.msra.mxu0 0.0
    %5070 = vmatprep.subr.mxu0 0.0
    %5071 = vmatpush1.msra.mxu0 0.0
    %5072 = vmatprep.subr.mxu0 0.0
    %5073 = vmatpush1.msra.mxu0 0.0
    %5074 = vmatprep.subr.mxu0 0.0
    %5075 = vmatpush1.msra.mxu0 0.0
    %5076 = vmatprep.subr.mxu0 0.0
    %5077 = vmatpush1.msra.mxu0 0.0
    %5078 = vmatprep.subr.mxu0 0.0
    %5079 = vmatpush1.msra.mxu0 0.0
    %5080 = vmatprep.subr.mxu0 0.0
    %5081 = vmatpush1.msra.mxu0 0.0
    %5082 = vmatprep.subr.mxu0 0.0
    %5083 = vmatpush1.msra.mxu0 0.0
    %5084 = vmatprep.subr.mxu0 0.0
    %5085 = vmatpush1.msra.mxu0 0.0
    %5086 = vmatprep.subr.mxu0 0.0
    %5087 = vmatpush1.msra.mxu0 0.0
    %5088 = vmatprep.subr.mxu0 0.0
    %5089 = vmatpush1.msra.mxu0 0.0
    %5090 = vmatprep.subr.mxu0 0.0
    %5091 = vmatpush1.msra.mxu0 0.0
    %5092 = vmatprep.subr.mxu0 0.0
    %5093 = vmatpush1.msra.mxu0 0.0
    %5094 = vmatprep.subr.mxu0 0.0
    %5095 = vmatpush1.msra.mxu0 0.0
    %5096 = vmatprep.mubr.f32.mxu0 0.0
    %5097 = vmatmul.mubr.f32.gmra.mrb[0].mxu0 %v4871
    %v5098 = vpop.f32.mrb[0].mxu0
    %v5099 = vadd.f32 %v4952, %v5098
    %v5100 = vpop.f32.mrb[0].mxu0
    %v5101 = vadd.f32 %v4956, %v5100
    %5102 = vdwg.mxu0
    %v5103 = vadd.f32 %v4874, %v5028
    %v5104 = vsel %vm539, %v5103, -inf
    %5105 = vmax.xlane.f32.xlu0 %v5104
    %v5106 = vpop.xlane.xlu0 %5105
    %v5107 = vsub.f32 %v5103, %v5106
    %v5108 = vmul.f32 %v5107, 1.442695
    %v5109 = vpow.pop %v5108
    %v5110 = vld [vmem:[#allocation12] sm:$0xff]
    %v5111 = vld [vmem:[#allocation12 + $0x8] sm:$0xff]
    %v5112 = vld [vmem:[#allocation12 + $0x10] sm:$0xff]
    %v5113 = vld [vmem:[#allocation12 + $0x18] sm:$0xff]
    %v5114 = vld [vmem:[#allocation12 + $0x20] sm:$0xff]
    %v5115 = vld [vmem:[#allocation12 + $0x28] sm:$0xff]
    %v5116 = vld [vmem:[#allocation12 + $0x30] sm:$0xff]
    %v5117 = vld [vmem:[#allocation12 + $0x38] sm:$0xff]
    %v5118 = vld [vmem:[#allocation12 + $0x40] sm:$0xff]
    %v5119 = vld [vmem:[#allocation12 + $0x48] sm:$0xff]
    %v5120 = vld [vmem:[#allocation12 + $0x50] sm:$0xff]
    %v5121 = vld [vmem:[#allocation12 + $0x58] sm:$0xff]
    %v5122 = vld [vmem:[#allocation12 + $0x60] sm:$0xff]
    %v5123 = vld [vmem:[#allocation12 + $0x68] sm:$0xff]
    %v5124 = vld [vmem:[#allocation12 + $0x70] sm:$0xff]
    %v5125 = vld [vmem:[#allocation12 + $0x78] sm:$0xff]
    %5126 = vmatprep.subr.mxu0 0.0
    %5127 = vmatpush1.msra.mxu0 %v5110
    %5128 = vmatprep.subr.mxu0 0.0
    %5129 = vmatpush1.msra.mxu0 %v5111
    %5130 = vmatprep.subr.mxu0 0.0
    %5131 = vmatpush1.msra.mxu0 %v5112
    %5132 = vmatprep.subr.mxu0 0.0
    %5133 = vmatpush1.msra.mxu0 %v5113
    %5134 = vmatprep.subr.mxu0 0.0
    %5135 = vmatpush1.msra.mxu0 %v5114
    %5136 = vmatprep.subr.mxu0 0.0
    %5137 = vmatpush1.msra.mxu0 %v5115
    %5138 = vmatprep.subr.mxu0 0.0
    %5139 = vmatpush1.msra.mxu0 %v5116
    %5140 = vmatprep.subr.mxu0 0.0
    %5141 = vmatpush1.msra.mxu0 %v5117
    %5142 = vmatprep.subr.mxu0 0.0
    %5143 = vmatpush1.msra.mxu0 %v5118
    %5144 = vmatprep.subr.mxu0 0.0
    %5145 = vmatpush1.msra.mxu0 %v5119
    %5146 = vmatprep.subr.mxu0 0.0
    %5147 = vmatpush1.msra.mxu0 %v5120
    %5148 = vmatprep.subr.mxu0 0.0
    %5149 = vmatpush1.msra.mxu0 %v5121
    %5150 = vmatprep.subr.mxu0 0.0
    %5151 = vmatpush1.msra.mxu0 %v5122
    %5152 = vmatprep.subr.mxu0 0.0
    %5153 = vmatpush1.msra.mxu0 %v5123
    %5154 = vmatprep.subr.mxu0 0.0
    %5155 = vmatpush1.msra.mxu0 %v5124
    %5156 = vmatprep.subr.mxu0 0.0
    %5157 = vmatpush1.msra.mxu0 %v5125
    %5158 = vmatprep.subr.mxu0 0.0
    %5159 = vmatpush1.msra.mxu0 0.0
    %5160 = vmatprep.subr.mxu0 0.0
    %5161 = vmatpush1.msra.mxu0 0.0
    %5162 = vmatprep.subr.mxu0 0.0
    %5163 = vmatpush1.msra.mxu0 0.0
    %5164 = vmatprep.subr.mxu0 0.0
    %5165 = vmatpush1.msra.mxu0 0.0
    %5166 = vmatprep.subr.mxu0 0.0
    %5167 = vmatpush1.msra.mxu0 0.0
    %5168 = vmatprep.subr.mxu0 0.0
    %5169 = vmatpush1.msra.mxu0 0.0
    %5170 = vmatprep.subr.mxu0 0.0
    %5171 = vmatpush1.msra.mxu0 0.0
    %5172 = vmatprep.subr.mxu0 0.0
    %5173 = vmatpush1.msra.mxu0 0.0
    %5174 = vmatprep.subr.mxu0 0.0
    %5175 = vmatpush1.msra.mxu0 0.0
    %5176 = vmatprep.subr.mxu0 0.0
    %5177 = vmatpush1.msra.mxu0 0.0
    %5178 = vmatprep.subr.mxu0 0.0
    %5179 = vmatpush1.msra.mxu0 0.0
    %5180 = vmatprep.subr.mxu0 0.0
    %5181 = vmatpush1.msra.mxu0 0.0
    %5182 = vmatprep.subr.mxu0 0.0
    %5183 = vmatpush1.msra.mxu0 0.0
    %5184 = vmatprep.subr.mxu0 0.0
    %5185 = vmatpush1.msra.mxu0 0.0
    %5186 = vmatprep.subr.mxu0 0.0
    %5187 = vmatpush1.msra.mxu0 0.0
    %5188 = vmatprep.subr.mxu0 0.0
    %5189 = vmatpush1.msra.mxu0 0.0
    %5190 = vmatprep.mubr.f32.mxu0 0.0
    %5191 = vmatmul.mubr.f32.gmra.mrb[0].mxu0 %v5109
    %v5192 = vpop.f32.mrb[0].mxu0
    %v5193 = vadd.f32 0.0, %v5192
    %v5194 = vpop.f32.mrb[0].mxu0
    %5195 = vdwg.mxu0
    %v5196 = vsel %vm539, %v5109, 0.0
    %5197 = vadd.xlane.f32.xlu0 %v5196
    %v5198 = vpop.xlane.xlu0 %5197
    %v5199 = vrcp.pop %v5198
    %v5200 = vmul.f32 %v5198, %v5199
    %v5201 = vsub.f32 2.0, %v5200
    %v5202 = vmul.f32 %v5199, %v5201
    %v5203 = vmul.f32 %v5109, %v5202
    %5204 = vst [vmem:[#allocation24 + $0x7] sm:$0x1] %v5203
    %v5205 = vmul.f32 %v5193, %v5202
    %v5206 = vld [vmem:[#allocation16] sm:$0xff]
    %v5207 = vld [vmem:[#allocation16 + $0x8] sm:$0xff]
    %v5208 = vld [vmem:[#allocation16 + $0x10] sm:$0xff]
    %v5209 = vld [vmem:[#allocation16 + $0x18] sm:$0xff]
    %v5210 = vld [vmem:[#allocation16 + $0x20] sm:$0xff]
    %v5211 = vld [vmem:[#allocation16 + $0x28] sm:$0xff]
    %v5212 = vld [vmem:[#allocation16 + $0x30] sm:$0xff]
    %v5213 = vld [vmem:[#allocation16 + $0x38] sm:$0xff]
    %v5214 = vld [vmem:[#allocation16 + $0x40] sm:$0xff]
    %v5215 = vld [vmem:[#allocation16 + $0x48] sm:$0xff]
    %v5216 = vld [vmem:[#allocation16 + $0x50] sm:$0xff]
    %v5217 = vld [vmem:[#allocation16 + $0x58] sm:$0xff]
    %v5218 = vld [vmem:[#allocation16 + $0x60] sm:$0xff]
    %v5219 = vld [vmem:[#allocation16 + $0x68] sm:$0xff]
    %v5220 = vld [vmem:[#allocation16 + $0x70] sm:$0xff]
    %v5221 = vld [vmem:[#allocation16 + $0x78] sm:$0xff]
    %5222 = vmatprep.subr.mxu0 0.0
    %5223 = vmatpush1.msra.mxu0 %v5206
    %5224 = vmatprep.subr.mxu0 0.0
    %5225 = vmatpush1.msra.mxu0 %v5207
    %5226 = vmatprep.subr.mxu0 0.0
    %5227 = vmatpush1.msra.mxu0 %v5208
    %5228 = vmatprep.subr.mxu0 0.0
    %5229 = vmatpush1.msra.mxu0 %v5209
    %5230 = vmatprep.subr.mxu0 0.0
    %5231 = vmatpush1.msra.mxu0 %v5210
    %5232 = vmatprep.subr.mxu0 0.0
    %5233 = vmatpush1.msra.mxu0 %v5211
    %5234 = vmatprep.subr.mxu0 0.0
    %5235 = vmatpush1.msra.mxu0 %v5212
    %5236 = vmatprep.subr.mxu0 0.0
    %5237 = vmatpush1.msra.mxu0 %v5213
    %5238 = vmatprep.subr.mxu0 0.0
    %5239 = vmatpush1.msra.mxu0 %v5214
    %5240 = vmatprep.subr.mxu0 0.0
    %5241 = vmatpush1.msra.mxu0 %v5215
    %5242 = vmatprep.subr.mxu0 0.0
    %5243 = vmatpush1.msra.mxu0 %v5216
    %5244 = vmatprep.subr.mxu0 0.0
    %5245 = vmatpush1.msra.mxu0 %v5217
    %5246 = vmatprep.subr.mxu0 0.0
    %5247 = vmatpush1.msra.mxu0 %v5218
    %5248 = vmatprep.subr.mxu0 0.0
    %5249 = vmatpush1.msra.mxu0 %v5219
    %5250 = vmatprep.subr.mxu0 0.0
    %5251 = vmatpush1.msra.mxu0 %v5220
    %5252 = vmatprep.subr.mxu0 0.0
    %5253 = vmatpush1.msra.mxu0 %v5221
    %5254 = vmatprep.subr.mxu0 0.0
    %5255 = vmatpush1.msra.mxu0 0.0
    %5256 = vmatprep.subr.mxu0 0.0
    %5257 = vmatpush1.msra.mxu0 0.0
    %5258 = vmatprep.subr.mxu0 0.0
    %5259 = vmatpush1.msra.mxu0 0.0
    %5260 = vmatprep.subr.mxu0 0.0
    %5261 = vmatpush1.msra.mxu0 0.0
    %5262 = vmatprep.subr.mxu0 0.0
    %5263 = vmatpush1.msra.mxu0 0.0
    %5264 = vmatprep.subr.mxu0 0.0
    %5265 = vmatpush1.msra.mxu0 0.0
    %5266 = vmatprep.subr.mxu0 0.0
    %5267 = vmatpush1.msra.mxu0 0.0
    %5268 = vmatprep.subr.mxu0 0.0
    %5269 = vmatpush1.msra.mxu0 0.0
    %5270 = vmatprep.subr.mxu0 0.0
    %5271 = vmatpush1.msra.mxu0 0.0
    %5272 = vmatprep.subr.mxu0 0.0
    %5273 = vmatpush1.msra.mxu0 0.0
    %5274 = vmatprep.subr.mxu0 0.0
    %5275 = vmatpush1.msra.mxu0 0.0
    %5276 = vmatprep.subr.mxu0 0.0
    %5277 = vmatpush1.msra.mxu0 0.0
    %5278 = vmatprep.subr.mxu0 0.0
    %5279 = vmatpush1.msra.mxu0 0.0
    %5280 = vmatprep.subr.mxu0 0.0
    %5281 = vmatpush1.msra.mxu0 0.0
    %5282 = vmatprep.subr.mxu0 0.0
    %5283 = vmatpush1.msra.mxu0 0.0
    %5284 = vmatprep.subr.mxu0 0.0
    %5285 = vmatpush1.msra.mxu0 0.0
    %5286 = vmatprep.mubr.f32.mxu0 0.0
    %5287 = vmatmul.mubr.f32.gmra.mrb[0].mxu0 %v5205
    %v5288 = vpop.f32.mrb[0].mxu0
    %v5289 = vadd.f32 0.0, %v5288
    %v5290 = vpop.f32.mrb[0].mxu0
    %5291 = vdwg.mxu0
    %v5293 = vrot.slane %v4874, 1
    %v5295 = vadd.f32 %v5293, %v5289
    %v5296 = vmax.f32 %v5295, 0.0
    %v5297 = vld [vmem:[#allocation18] sm:$0xff]
    %v5298 = vld [vmem:[#allocation18 + $0x8] sm:$0xff]
    %v5299 = vld [vmem:[#allocation18 + $0x10] sm:$0xff]
    %v5300 = vld [vmem:[#allocation18 + $0x18] sm:$0xff]
    %v5301 = vld [vmem:[#allocation18 + $0x20] sm:$0xff]
    %v5302 = vld [vmem:[#allocation18 + $0x28] sm:$0xff]
    %v5303 = vld [vmem:[#allocation18 + $0x30] sm:$0xff]
    %v5304 = vld [vmem:[#allocation18 + $0x38] sm:$0xff]
    %v5305 = vld [vmem:[#allocation18 + $0x40] sm:$0xff]
    %v5306 = vld [vmem:[#allocation18 + $0x48] sm:$0xff]
    %v5307 = vld [vmem:[#allocation18 + $0x50] sm:$0xff]
    %v5308 = vld [vmem:[#allocation18 + $0x58] sm:$0xff]
    %v5309 = vld [vmem:[#allocation18 + $0x60] sm:$0xff]
    %v5310 = vld [vmem:[#allocation18 + $0x68] sm:$0xff]
    %v5311 = vld [vmem:[#allocation18 + $0x70] sm:$0xff]
    %v5312 = vld [vmem:[#allocation18 + $0x78] sm:$0xff]
    %v5313 = vld [vmem:[#allocation18 + $0x80] sm:$0xff]
    %v5314 = vld [vmem:[#allocation18 + $0x88] sm:$0xff]
    %v5315 = vld [vmem:[#allocation18 + $0x90] sm:$0xff]
    %v5316 = vld [vmem:[#allocation18 + $0x98] sm:$0xff]
    %v5317 = vld [vmem:[#allocation18 + $0xa0] sm:$0xff]
    %v5318 = vld [vmem:[#allocation18 + $0xa8] sm:$0xff]
    %v5319 = vld [vmem:[#allocation18 + $0xb0] sm:$0xff]
    %v5320 = vld [vmem:[#allocation18 + $0xb8] sm:$0xff]
    %v5321 = vld [vmem:[#allocation18 + $0xc0] sm:$0xff]
    %v5322 = vld [vmem:[#allocation18 + $0xc8] sm:$0xff]
    %v5323 = vld [vmem:[#allocation18 + $0xd0] sm:$0xff]
    %v5324 = vld [vmem:[#allocation18 + $0xd8] sm:$0xff]
    %v5325 = vld [vmem:[#allocation18 + $0xe0] sm:$0xff]
    %v5326 = vld [vmem:[#allocation18 + $0xe8] sm:$0xff]
    %v5327 = vld [vmem:[#allocation18 + $0xf0] sm:$0xff]
    %v5328 = vld [vmem:[#allocation18 + $0xf8] sm:$0xff]
    %v5329 = vld [vmem:[#allocation18 + $0x100] sm:$0xff]
    %v5330 = vld [vmem:[#allocation18 + $0x108] sm:$0xff]
    %v5331 = vld [vmem:[#allocation18 + $0x110] sm:$0xff]
    %v5332 = vld [vmem:[#allocation18 + $0x118] sm:$0xff]
    %v5333 = vld [vmem:[#allocation18 + $0x120] sm:$0xff]
    %v5334 = vld [vmem:[#allocation18 + $0x128] sm:$0xff]
    %v5335 = vld [vmem:[#allocation18 + $0x130] sm:$0xff]
    %v5336 = vld [vmem:[#allocation18 + $0x138] sm:$0xff]
    %v5337 = vld [vmem:[#allocation18 + $0x140] sm:$0xff]
    %v5338 = vld [vmem:[#allocation18 + $0x148] sm:$0xff]
    %v5339 = vld [vmem:[#allocation18 + $0x150] sm:$0xff]
    %v5340 = vld [vmem:[#allocation18 + $0x158] sm:$0xff]
    %v5341 = vld [vmem:[#allocation18 + $0x160] sm:$0xff]
    %v5342 = vld [vmem:[#allocation18 + $0x168] sm:$0xff]
    %v5343 = vld [vmem:[#allocation18 + $0x170] sm:$0xff]
    %v5344 = vld [vmem:[#allocation18 + $0x178] sm:$0xff]
    %v5345 = vld [vmem:[%s10] sm:$0x7]
    %v5347 = vlaneseq
    %v5348 = vshrl.u32 %v5347, 7
    %v5349 = vsub.s32 0, %v5348
    %v5350 = vrot.slane %v5345, %v5349
    %v5351 = vlaneseq
    %v5352 = vshrl.u32 %v5351, 7
    %v5353 = vsub.s32 1, %v5352
    %v5354 = vrot.slane %v5345, %v5353
    %v5355 = vlaneseq
    %v5356 = vshrl.u32 %v5355, 7
    %v5357 = vsub.s32 2, %v5356
    %v5358 = vrot.slane %v5345, %v5357
    %5362 = vmatprep.subr.mxu0 %v5298
    %5363 = vmatpush1.msra.mxu0 %v5297
    %5364 = vmatprep.subr.mxu0 %v5301
    %5365 = vmatpush1.msra.mxu0 %v5300
    %5366 = vmatprep.subr.mxu0 %v5304
    %5367 = vmatpush1.msra.mxu0 %v5303
    %5368 = vmatprep.subr.mxu0 %v5307
    %5369 = vmatpush1.msra.mxu0 %v5306
    %5370 = vmatprep.subr.mxu0 %v5310
    %5371 = vmatpush1.msra.mxu0 %v5309
    %5372 = vmatprep.subr.mxu0 %v5313
    %5373 = vmatpush1.msra.mxu0 %v5312
    %5374 = vmatprep.subr.mxu0 %v5316
    %5375 = vmatpush1.msra.mxu0 %v5315
    %5376 = vmatprep.subr.mxu0 %v5319
    %5377 = vmatpush1.msra.mxu0 %v5318
    %5378 = vmatprep.subr.mxu0 %v5322
    %5379 = vmatpush1.msra.mxu0 %v5321
    %5380 = vmatprep.subr.mxu0 %v5325
    %5381 = vmatpush1.msra.mxu0 %v5324
    %5382 = vmatprep.subr.mxu0 %v5328
    %5383 = vmatpush1.msra.mxu0 %v5327
    %5384 = vmatprep.subr.mxu0 %v5331
    %5385 = vmatpush1.msra.mxu0 %v5330
    %5386 = vmatprep.subr.mxu0 %v5334
    %5387 = vmatpush1.msra.mxu0 %v5333
    %5388 = vmatprep.subr.mxu0 %v5337
    %5389 = vmatpush1.msra.mxu0 %v5336
    %5390 = vmatprep.subr.mxu0 %v5340
    %5391 = vmatpush1.msra.mxu0 %v5339
    %5392 = vmatprep.subr.mxu0 %v5343
    %5393 = vmatpush1.msra.mxu0 %v5342
    %5394 = vmatprep.subr.mxu0 0.0
    %5395 = vmatpush1.msra.mxu0 0.0
    %5396 = vmatprep.subr.mxu0 0.0
    %5397 = vmatpush1.msra.mxu0 0.0
    %5398 = vmatprep.subr.mxu0 0.0
    %5399 = vmatpush1.msra.mxu0 0.0
    %5400 = vmatprep.subr.mxu0 0.0
    %5401 = vmatpush1.msra.mxu0 0.0
    %5402 = vmatprep.subr.mxu0 0.0
    %5403 = vmatpush1.msra.mxu0 0.0
    %5404 = vmatprep.subr.mxu0 0.0
    %5405 = vmatpush1.msra.mxu0 0.0
    %5406 = vmatprep.subr.mxu0 0.0
    %5407 = vmatpush1.msra.mxu0 0.0
    %5408 = vmatprep.subr.mxu0 0.0
    %5409 = vmatpush1.msra.mxu0 0.0
    %5410 = vmatprep.subr.mxu0 0.0
    %5411 = vmatpush1.msra.mxu0 0.0
    %5412 = vmatprep.subr.mxu0 0.0
    %5413 = vmatpush1.msra.mxu0 0.0
    %5414 = vmatprep.subr.mxu0 0.0
    %5415 = vmatpush1.msra.mxu0 0.0
    %5416 = vmatprep.subr.mxu0 0.0
    %5417 = vmatpush1.msra.mxu0 0.0
    %5418 = vmatprep.subr.mxu0 0.0
    %5419 = vmatpush1.msra.mxu0 0.0
    %5420 = vmatprep.subr.mxu0 0.0
    %5421 = vmatpush1.msra.mxu0 0.0
    %5422 = vmatprep.subr.mxu0 0.0
    %5423 = vmatpush1.msra.mxu0 0.0
    %5424 = vmatprep.subr.mxu0 0.0
    %5425 = vmatpush1.msra.mxu0 0.0
    %5426 = vmatprep.mubr.f32.mxu0 0.0
    %5427 = vmatmul.mubr.f32.gmra.mrb[0].mxu0 %v5296
    %v5428 = vpop.f32.mrb[0].mxu0
    %v5429 = vadd.f32 %v5350, %v5428
    %v5430 = vpop.f32.mrb[0].mxu0
    %v5431 = vadd.f32 %v5354, %v5430
    %5432 = vdwg.mxu0
    %5433 = vmatprep.subr.mxu0 0.0
    %5434 = vmatpush1.msra.mxu0 %v5299
    %5435 = vmatprep.subr.mxu0 0.0
    %5436 = vmatpush1.msra.mxu0 %v5302
    %5437 = vmatprep.subr.mxu0 0.0
    %5438 = vmatpush1.msra.mxu0 %v5305
    %5439 = vmatprep.subr.mxu0 0.0
    %5440 = vmatpush1.msra.mxu0 %v5308
    %5441 = vmatprep.subr.mxu0 0.0
    %5442 = vmatpush1.msra.mxu0 %v5311
    %5443 = vmatprep.subr.mxu0 0.0
    %5444 = vmatpush1.msra.mxu0 %v5314
    %5445 = vmatprep.subr.mxu0 0.0
    %5446 = vmatpush1.msra.mxu0 %v5317
    %5447 = vmatprep.subr.mxu0 0.0
    %5448 = vmatpush1.msra.mxu0 %v5320
    %5449 = vmatprep.subr.mxu0 0.0
    %5450 = vmatpush1.msra.mxu0 %v5323
    %5451 = vmatprep.subr.mxu0 0.0
    %5452 = vmatpush1.msra.mxu0 %v5326
    %5453 = vmatprep.subr.mxu0 0.0
    %5454 = vmatpush1.msra.mxu0 %v5329
    %5455 = vmatprep.subr.mxu0 0.0
    %5456 = vmatpush1.msra.mxu0 %v5332
    %5457 = vmatprep.subr.mxu0 0.0
    %5458 = vmatpush1.msra.mxu0 %v5335
    %5459 = vmatprep.subr.mxu0 0.0
    %5460 = vmatpush1.msra.mxu0 %v5338
    %5461 = vmatprep.subr.mxu0 0.0
    %5462 = vmatpush1.msra.mxu0 %v5341
    %5463 = vmatprep.subr.mxu0 0.0
    %5464 = vmatpush1.msra.mxu0 %v5344
    %5465 = vmatprep.subr.mxu0 0.0
    %5466 = vmatpush1.msra.mxu0 0.0
    %5467 = vmatprep.subr.mxu0 0.0
    %5468 = vmatpush1.msra.mxu0 0.0
    %5469 = vmatprep.subr.mxu0 0.0
    %5470 = vmatpush1.msra.mxu0 0.0
    %5471 = vmatprep.subr.mxu0 0.0
    %5472 = vmatpush1.msra.mxu0 0.0
    %5473 = vmatprep.subr.mxu0 0.0
    %5474 = vmatpush1.msra.mxu0 0.0
    %5475 = vmatprep.subr.mxu0 0.0
    %5476 = vmatpush1.msra.mxu0 0.0
    %5477 = vmatprep.subr.mxu0 0.0
    %5478 = vmatpush1.msra.mxu0 0.0
    %5479 = vmatprep.subr.mxu0 0.0
    %5480 = vmatpush1.msra.mxu0 0.0
    %5481 = vmatprep.subr.mxu0 0.0
    %5482 = vmatpush1.msra.mxu0 0.0
    %5483 = vmatprep.subr.mxu0 0.0
    %5484 = vmatpush1.msra.mxu0 0.0
    %5485 = vmatprep.subr.mxu0 0.0
    %5486 = vmatpush1.msra.mxu0 0.0
    %5487 = vmatprep.subr.mxu0 0.0
    %5488 = vmatpush1.msra.mxu0 0.0
    %5489 = vmatprep.subr.mxu0 0.0
    %5490 = vmatpush1.msra.mxu0 0.0
    %5491 = vmatprep.subr.mxu0 0.0
    %5492 = vmatpush1.msra.mxu0 0.0
    %5493 = vmatprep.subr.mxu0 0.0
    %5494 = vmatpush1.msra.mxu0 0.0
    %5495 = vmatprep.subr.mxu0 0.0
    %5496 = vmatpush1.msra.mxu0 0.0
    %5497 = vmatprep.mubr.f32.mxu0 0.0
    %5498 = vmatmul.mubr.f32.gmra.mrb[0].mxu0 %v5296
    %v5499 = vpop.f32.mrb[0].mxu0
    %v5500 = vadd.f32 %v5358, %v5499
    %v5501 = vpop.f32.mrb[0].mxu0
    %5502 = vdwg.mxu0
    %v5503 = vadd.f32 %v5429, %v5030
    %v5504 = vxor.u32 %v5503, 2147483648
    %v5505 = vmul.f32 %v5504, 1.442695
    %v5506 = vpow.pop %v5505
    %v5507 = vadd.f32 %v5506, 1.0
    %v5508 = vrcp.pop %v5507
    %v5509 = vmul.f32 1.0, %v5508
    %v5510 = vadd.f32 %v5431, %v5099
    %v5511 = vxor.u32 %v5510, 2147483648
    %v5512 = vmul.f32 %v5511, 1.442695
    %v5513 = vpow.pop %v5512
    %v5514 = vadd.f32 %v5513, 1.0
    %v5515 = vrcp.pop %v5514
    %v5516 = vmul.f32 1.0, %v5515
    %v5517 = vmul.f32 %v5509, %v5101
    %v5518 = vadd.f32 %v5500, %v5517
    %v5519 = vtanh.pop %v5518
    %v5520 = vsub.f32 1.0, %v5516
    %v5521 = vmul.f32 %v5520, %v5519
    %v5522 = vmul.f32 %v5516, %v4871
    %v5523 = vadd.f32 %v5521, %v5522
    %5524 = vst [vmem:[#allocation4 + $0x7] sm:$0x1] %v5523
    %5525 = vst [vmem:[#allocation22] sm:$0x1] %v5523
    %v5526 = vld [vmem:[#allocation4] sm:$0xff]
    %v5527 = vld [vmem:[#allocation19] sm:$0xff]
    %v5528 = vld [vmem:[#allocation19 + $0x8] sm:$0xff]
    %v5529 = vld [vmem:[#allocation19 + $0x10] sm:$0xff]
    %v5530 = vld [vmem:[#allocation19 + $0x18] sm:$0xff]
    %v5531 = vld [vmem:[#allocation19 + $0x20] sm:$0xff]
    %v5532 = vld [vmem:[#allocation19 + $0x28] sm:$0xff]
    %v5533 = vld [vmem:[#allocation19 + $0x30] sm:$0xff]
    %v5534 = vld [vmem:[#allocation19 + $0x38] sm:$0xff]
    %v5535 = vld [vmem:[#allocation19 + $0x40] sm:$0xff]
    %v5536 = vld [vmem:[#allocation19 + $0x48] sm:$0xff]
    %v5537 = vld [vmem:[#allocation19 + $0x50] sm:$0xff]
    %v5538 = vld [vmem:[#allocation19 + $0x58] sm:$0xff]
    %v5539 = vld [vmem:[#allocation19 + $0x60] sm:$0xff]
    %v5540 = vld [vmem:[#allocation19 + $0x68] sm:$0xff]
    %v5541 = vld [vmem:[#allocation19 + $0x70] sm:$0xff]
    %v5542 = vld [vmem:[#allocation19 + $0x78] sm:$0xff]
    %v5543 = vld [vmem:[%s12] sm:$0x1]
    %v5545 = vlaneseq
    %v5546 = vshrl.u32 %v5545, 7
    %v5547 = vsub.s32 0, %v5546
    %v5548 = vrot.slane %v5543, %v5547
    %5550 = vmatprep.subr.mxu0 0.0
    %5551 = vmatpush1.msra.mxu0 %v5527
    %5552 = vmatprep.subr.mxu0 0.0
    %5553 = vmatpush1.msra.mxu0 %v5528
    %5554 = vmatprep.subr.mxu0 0.0
    %5555 = vmatpush1.msra.mxu0 %v5529
    %5556 = vmatprep.subr.mxu0 0.0
    %5557 = vmatpush1.msra.mxu0 %v5530
    %5558 = vmatprep.subr.mxu0 0.0
    %5559 = vmatpush1.msra.mxu0 %v5531
    %5560 = vmatprep.subr.mxu0 0.0
    %5561 = vmatpush1.msra.mxu0 %v5532
    %5562 = vmatprep.subr.mxu0 0.0
    %5563 = vmatpush1.msra.mxu0 %v5533
    %5564 = vmatprep.subr.mxu0 0.0
    %5565 = vmatpush1.msra.mxu0 %v5534
    %5566 = vmatprep.subr.mxu0 0.0
    %5567 = vmatpush1.msra.mxu0 %v5535
    %5568 = vmatprep.subr.mxu0 0.0
    %5569 = vmatpush1.msra.mxu0 %v5536
    %5570 = vmatprep.subr.mxu0 0.0
    %5571 = vmatpush1.msra.mxu0 %v5537
    %5572 = vmatprep.subr.mxu0 0.0
    %5573 = vmatpush1.msra.mxu0 %v5538
    %5574 = vmatprep.subr.mxu0 0.0
    %5575 = vmatpush1.msra.mxu0 %v5539
    %5576 = vmatprep.subr.mxu0 0.0
    %5577 = vmatpush1.msra.mxu0 %v5540
    %5578 = vmatprep.subr.mxu0 0.0
    %5579 = vmatpush1.msra.mxu0 %v5541
    %5580 = vmatprep.subr.mxu0 0.0
    %5581 = vmatpush1.msra.mxu0 %v5542
    %5582 = vmatprep.subr.mxu0 0.0
    %5583 = vmatpush1.msra.mxu0 0.0
    %5584 = vmatprep.subr.mxu0 0.0
    %5585 = vmatpush1.msra.mxu0 0.0
    %5586 = vmatprep.subr.mxu0 0.0
    %5587 = vmatpush1.msra.mxu0 0.0
    %5588 = vmatprep.subr.mxu0 0.0
    %5589 = vmatpush1.msra.mxu0 0.0
    %5590 = vmatprep.subr.mxu0 0.0
    %5591 = vmatpush1.msra.mxu0 0.0
    %5592 = vmatprep.subr.mxu0 0.0
    %5593 = vmatpush1.msra.mxu0 0.0
    %5594 = vmatprep.subr.mxu0 0.0
    %5595 = vmatpush1.msra.mxu0 0.0
    %5596 = vmatprep.subr.mxu0 0.0
    %5597 = vmatpush1.msra.mxu0 0.0
    %5598 = vmatprep.subr.mxu0 0.0
    %5599 = vmatpush1.msra.mxu0 0.0
    %5600 = vmatprep.subr.mxu0 0.0
    %5601 = vmatpush1.msra.mxu0 0.0
    %5602 = vmatprep.subr.mxu0 0.0
    %5603 = vmatpush1.msra.mxu0 0.0
    %5604 = vmatprep.subr.mxu0 0.0
    %5605 = vmatpush1.msra.mxu0 0.0
    %5606 = vmatprep.subr.mxu0 0.0
    %5607 = vmatpush1.msra.mxu0 0.0
    %5608 = vmatprep.subr.mxu0 0.0
    %5609 = vmatpush1.msra.mxu0 0.0
    %5610 = vmatprep.subr.mxu0 0.0
    %5611 = vmatpush1.msra.mxu0 0.0
    %5612 = vmatprep.subr.mxu0 0.0
    %5613 = vmatpush1.msra.mxu0 0.0
    %5614 = vmatprep.mubr.f32.mxu0 0.0
    %5615 = vmatmul.mubr.f32.gmra.mrb[0].mxu0 %v5526
    %v5616 = vpop.f32.mrb[0].mxu0
    %v5617 = vadd.f32 %v5548, %v5616
    %v5618 = vpop.f32.mrb[0].mxu0
    %5619 = vdwg.mxu0
    %5620 = vmax.xlane.f32.xlu0 %v5617
    %v5621 = vpop.xlane.xlu0 %5620
    %v5622 = vsub.f32 %v5617, %v5621
    %v5623 = vmul.f32 %v5622, 1.442695
    %v5624 = vpow.pop %v5623
    %5625 = vadd.xlane.f32.xlu0 %v5624
    %v5626 = vpop.xlane.xlu0 %5625
    %v5627 = vlog2.pop %v5626
    %v5628 = vmul.f32 %v5627, 0.6931472
    %v5629 = vadd.f32 %v5628, %v5621
    %v5630 = vsub.f32 %v5617, %v5629
    %5631 = vst [vmem:[#allocation21] sm:$0xff] %v5630
    // Predicated region
    $region82: #{tpu_custom_call.1} parent=1 // pred_check
      _
    $region83: #{tpu_custom_call.1} parent=1 // pred_check_branch
      %5633 = sbr.rel (0) target = $region85
    $region84: #{tpu_custom_call.1} parent=1 // pred_region
      %s5635 = ssub.s32 128, 128
      %5636 = vsyncadd [#allocation9], %s5635
      %s5638 = sshll.u32 [#allocation21], 4
      %s5639 = int_to_ptr.vmem [resolvable:$true] %s5638
      %5641 = dma.vmem_to_hbm [thread:$0]  %s5639, 128, %s13, [#allocation9]
    $region85: #{tpu_custom_call.1} parent=1 // pred_fallthru
      _
    // Predicated region
    $region86: #{tpu_custom_call.1} parent=1 // pred_check
      _
    $region87: #{tpu_custom_call.1} parent=1 // pred_check_branch
      %5643 = sbr.rel (0) target = $region89
    $region88: #{tpu_custom_call.1} parent=1 // pred_region
      %s5645 = ssub.s32 16, 16
      %5646 = vsyncadd [#allocation23], %s5645
      %s5648 = sshll.u32 [#allocation22], 4
      %s5649 = int_to_ptr.vmem [resolvable:$true] %s5648
      %5651 = dma.vmem_to_hbm [thread:$0]  %s5649, 16, %s14, [#allocation23]
    $region89: #{tpu_custom_call.1} parent=1 // pred_fallthru
      _
    // Predicated region
    $region90: #{tpu_custom_call.1} parent=1 // pred_check
      _
    $region91: #{tpu_custom_call.1} parent=1 // pred_check_branch
      %5653 = sbr.rel (0) target = $region93
    $region92: #{tpu_custom_call.1} parent=1 // pred_region
      %s5655 = ssub.s32 128, 128
      %5656 = vsyncadd [#allocation23], %s5655
      %s5658 = sshll.u32 [#allocation24], 4
      %s5659 = int_to_ptr.vmem [resolvable:$true] %s5658
      %5661 = dma.vmem_to_hbm [thread:$0]  %s5659, 128, %s15, [#allocation23]
    $region93: #{tpu_custom_call.1} parent=1 // pred_fallthru
      _
    // Predicated region
    $region94: #{tpu_custom_call.1} parent=1 // pred_check
      _
    $region95: #{tpu_custom_call.1} parent=1 // pred_check_branch
      %5663 = sbr.rel (0) target = $region97
    $region96: #{tpu_custom_call.1} parent=1 // pred_region
      %5664 = dma.done [#allocation9], 128
    $region97: #{tpu_custom_call.1} parent=1 // pred_fallthru
      _
    // Predicated region
    $region98: #{tpu_custom_call.1} parent=1 // pred_check
      _
    $region99: #{tpu_custom_call.1} parent=1 // pred_check_branch
      %5666 = sbr.rel (0) target = $region101
    $region100: #{tpu_custom_call.1} parent=1 // pred_region
      %5667 = dma.done [#allocation23], 16
    $region101: #{tpu_custom_call.1} parent=1 // pred_fallthru
      _
    // Predicated region
    $region102: #{tpu_custom_call.1} parent=1 // pred_check
      _
    $region103: #{tpu_custom_call.1} parent=1 // pred_check_branch
      %5669 = sbr.rel (0) target = $region105
    $region104: #{tpu_custom_call.1} parent=1 // pred_region
      %5670 = dma.done [#allocation23], 128
    $region105: #{tpu_custom_call.1} parent=1 // pred_fallthru
      _
    %5671 = vsyncpa [#allocation8], 1
    %5672 = vsyncpa [#allocation11], 1
    %5673 = vsyncpa [#allocation14], 1
    %5674 = vsyncpa [#allocation17], 1
    %5675 = vsyncpa [#allocation20], 1
    %5676 = vsyncpa [#allocation9], 1
    %5677 = vsyncpa [#allocation23], 1

</llo_original>
